<compile_context>
chip_gen: v6e
topology: v6e:2x2x1
jax: 0.10.0
libtpu: 0.0.40
codegen_flags: <defaults>
</compile_context>

<pallas_src>
import math

import jax
import jax.numpy as jnp
import numpy as np
from jax.experimental import pallas as pl
from jax.experimental.pallas import tpu as pltpu


# ----------------------------- Pallas kernel ------------------------------

def _layernorm(x, g, b, eps=1e-5):
    mu = jnp.mean(x, axis=-1, keepdims=True)
    var = jnp.mean((x - mu) ** 2, axis=-1, keepdims=True)
    return (x - mu) * jax.lax.rsqrt(var + eps) * g + b


def make_context_encoder_kernel(nhead, nlayer):
    H, L = nhead, nlayer

    def kernel(traj_ref, posb_ref, mask_ref, pmat_ref,
               w_in_ref, wqkv_ref, bqkv_ref, wo_ref, bo_ref,
               ln1g_ref, ln1b_ref, ln2g_ref, ln2b_ref,
               w1_ref, b1_ref, w2_ref, b2_ref,
               ctx_ref, pool_ref):
        D = w_in_ref.shape[1]
        hd = D // H
        bf = jnp.bfloat16
        trans_b = (((1,), (1,)), ((), ()))      # q @ k^T (contract last dims)

        mask = mask_ref[...]                    # (M, M) additive f32, block-
                                                # diagonal over stacked scenes

        # input_fc + (b_in + positional encoding); rows = SB stacked scenes
        x = jnp.dot(traj_ref[...].astype(bf), w_in_ref[...],
                    preferred_element_type=jnp.float32) + posb_ref[...]

        # Static unroll: fine for nlayer<=3.
        # TODO(synk): switch to lax.fori_loop with dynamic ref[l] indexing if
        #             nlayer grows (vreg pressure / code size guard).
        for l in range(L):
            # ---- fused QKV projection (1/sqrt(hd) folded into wq/bq) ----
            qkv = jnp.dot(x.astype(bf), wqkv_ref[l],
                          preferred_element_type=jnp.float32) + bqkv_ref[l]
            q = qkv[:, :D].astype(bf)
            k = qkv[:, D:2 * D].astype(bf)
            v = qkv[:, 2 * D:].astype(bf)

            # ---- multi-head attention via static lane slices (no relayout)
            heads = []
            for h in range(H):
                sl = slice(h * hd, (h + 1) * hd)
                s = jax.lax.dot_general(q[:, sl], k[:, sl], trans_b,
                                        preferred_element_type=jnp.float32)
                s = s + mask
                s = s - jnp.max(s, axis=-1, keepdims=True)
                p = jnp.exp(s)
                # divide -> EUP approximate reciprocal (frees VALU slots)
                p = p * pl.reciprocal(jnp.sum(p, axis=-1, keepdims=True),
                                      approx=True)
                heads.append(jnp.dot(p.astype(bf), v[:, sl],
                                     preferred_element_type=jnp.float32))
            attn = jnp.concatenate(heads, axis=-1)            # (M, D)
            attn = jnp.dot(attn.astype(bf), wo_ref[l],
                           preferred_element_type=jnp.float32) + bo_ref[l]
            x = _layernorm(x + attn, ln1g_ref[l], ln1b_ref[l])

            # ---- feed-forward (ReLU) ----
            h1 = jnp.maximum(
                jnp.dot(x.astype(bf), w1_ref[l],
                        preferred_element_type=jnp.float32) + b1_ref[l], 0.0)
            ff = jnp.dot(h1.astype(bf), w2_ref[l],
                         preferred_element_type=jnp.float32) + b2_ref[l]
            x = _layernorm(x + ff, ln2g_ref[l], ln2b_ref[l])

        # ---- natural-layout context store: (M, D), no in-kernel repack
        ctx_ref[...] = x

        # ---- mean pooling over time: constant block-diag averaging matrix
        #      (MXU dot, zero XLU traffic)
        pool_ref[...] = jnp.dot(pmat_ref[...], x.astype(bf),
                                preferred_element_type=jnp.float32)

    return kernel


# ----------------------------- JAX wrapper --------------------------------

def build_pos_enc(max_len, d_model):
    """Sinusoidal PE table, same as PositionalAgentEncoding.build_pos_enc."""
    position = jnp.arange(max_len, dtype=jnp.float32)[:, None]
    div_term = jnp.exp(jnp.arange(0, d_model, 2, dtype=jnp.float32)
                       * (-np.log(10000.0) / d_model))
    pe = jnp.zeros((max_len, d_model), dtype=jnp.float32)
    pe = pe.at[:, 0::2].set(jnp.sin(position * div_term))
    pe = pe.at[:, 1::2].set(jnp.cos(position * div_term))
    return pe


def context_encoder_forward(params, data, *, model_dim, nhead, nlayer,
                            input_type=('pos', 'vel'), scenes_per_step=4):
    """Batched over independent scenes (leading B axis); per-scene semantics
    match the PyTorch ContextEncoder.forward (batch dim of 1 squeezed).
    `scenes_per_step` (SB) scenes are stacked per grid step; tune per TPU
    generation if S / ff_dim grow (v7x has 64 MiB VMEM)."""
    pre_motion = data['pre_motion']                 # (B, T, A, motion_dim)
    B, T, A, _ = pre_motion.shape
    D = model_dim
    SB = min(scenes_per_step, B)
    assert B % SB == 0, "batch must be divisible by scenes_per_step"
    G = B // SB                                     # grid length
    S = T * A                                       # rows per scene (t*A + a)
    M = SB * S                                      # rows per grid step
    assert M % 8 == 0, "stacked rows must be a multiple of 8 sublanes"

    # ---- build traj_in (glue, matches the PyTorch key loop) ----
    traj_in = []
    for key in input_type:
        if key == 'pos':
            traj_in.append(pre_motion)
        elif key == 'vel':
            vel = data['pre_vel']                   # (B, T-1, A, motion_dim)
            if len(input_type) > 1:
                vel = jnp.concatenate([vel[:, 0:1], vel], axis=1)
            traj_in.append(vel)
        else:
            raise ValueError('unsupported input_type in this synthetic script')
    traj_in = jnp.concatenate(traj_in, axis=-1)     # (B, T, A, in_dim)
    in_dim = traj_in.shape[-1]
    traj_flat = traj_in.reshape(B * S, in_dim).astype(jnp.float32)

    # ---- (b_in + positional encoding) pre-combined additive table,
    #      tiled over the SB stacked scenes (pe[t] repeat_interleave'd per
    #      agent => time-major rows, same ordering as traj_flat).
    pe = build_pos_enc(200, D)
    pos_scene = jnp.repeat(pe[:T], A, axis=0)                       # (S, D)
    posb = (jnp.tile(pos_scene, (SB, 1)) + params['b_in']).astype(jnp.float32)

    # ---- additive mask: per-scene tile of the (A, A) agent mask
    #      (torch Tensor.repeat == jnp.tile; row = t*A + a so mask[r,c] =
    #      agent_mask[r%A, c%A]) + -1e9 between the SB scenes of a grid step.
    NEG = jnp.float32(-1e9)
    scene_masks = jnp.tile(data['agent_mask'].astype(jnp.float32), (1, T, T))
    sm = scene_masks.reshape(G, SB, S, S)
    same = (jnp.arange(SB)[:, None] == jnp.arange(SB)[None, :])     # (SB, SB)
    mask_all = jnp.where(same[None, :, None, :, None],
                         sm[:, :, :, None, :], NEG)        # (G, SB, S, SB, S)
    mask_all = mask_all.reshape(B * S, M)

    # ---- constant block-diag time-averaging matrix: pool = P @ x ----
    P_scene = np.zeros((A, S), np.float32)
    for a in range(A):
        P_scene[a, a::A] = 1.0 / T                  # columns t*A + a
    pool_mat = jnp.asarray(np.kron(np.eye(SB, dtype=np.float32), P_scene),
                           dtype=jnp.bfloat16)      # (SB*A, M)

    # ---- fuse QKV, fold attention scale, cast MXU weights to bf16 ----
    hd = D // nhead
    scale = 1.0 / math.sqrt(hd)
    bf = jnp.bfloat16
    wqkv = jnp.concatenate([params['wq'] * scale, params['wk'], params['wv']],
                           axis=-1).astype(bf)                       # (L,D,3D)
    bqkv = jnp.concatenate([params['bq'] * scale, params['bk'], params['bv']],
                           axis=-1).astype(jnp.float32)              # (L,1,3D)
    w_in = params['w_in'].astype(bf)
    wo = params['wo'].astype(bf)
    w1 = params['w1'].astype(bf)
    w2 = params['w2'].astype(bf)
    F_dim = params['w1'].shape[-1]

    inputs = (traj_flat, posb, mask_all, pool_mat,
              w_in, wqkv, bqkv, wo, params['bo'],
              params['ln1g'], params['ln1b'], params['ln2g'], params['ln2b'],
              w1, params['b1'], w2, params['b2'])

    def per_group(rows, cols):
        return pl.BlockSpec((rows, cols), lambda g: (g, 0))

    def shared(arr):
        shape = tuple(arr.shape)
        zeros = (0,) * len(shape)
        return pl.BlockSpec(shape, lambda g, _z=zeros: _z)   # fetched once

    in_specs = ([per_group(M, in_dim), shared(posb), per_group(M, M),
                 shared(pool_mat)]
                + [shared(a) for a in inputs[4:]])
    out_specs = (per_group(M, D), per_group(SB * A, D))

    # advisory cost so XLA schedules sensibly around the tiny custom call
    attn_fl = 2 * (2 * M * M * D)                        # scores + AV
    proj_fl = 2 * M * D * (3 * D) + 2 * M * D * D        # qkv + out proj
    ffn_fl = 2 * (2 * M * D * F_dim)
    flops = G * (2 * M * in_dim * D + nlayer * (attn_fl + proj_fl + ffn_fl)
                 + 2 * SB * A * M * D)
    transc = G * nlayer * nhead * M * M
    bytes_acc = ((traj_flat.size + posb.size + mask_all.size
                  + B * S * D + B * A * D) * 4
                 + (wqkv.size + wo.size + w1.size + w2.size) * 2)

    kernel = make_context_encoder_kernel(nhead, nlayer)
    ctx, pool = pl.pallas_call(
        kernel,
        grid=(G,),
        out_shape=(jax.ShapeDtypeStruct((B * S, D), jnp.float32),
                   jax.ShapeDtypeStruct((B * A, D), jnp.float32)),
        in_specs=in_specs,
        out_specs=out_specs,
        compiler_params=pltpu.CompilerParams(
            dimension_semantics=("parallel",)),
        cost_estimate=pl.CostEstimate(flops=int(flops),
                                      transcendentals=int(transc),
                                      bytes_accessed=int(bytes_acc)),
    )(*inputs)

    # data['context_enc'] has shape (T*A, 1, model_dim) per scene in PyTorch
    return ctx.reshape(B, S, 1, D), pool.reshape(B, A, D)


def init_params(key, in_dim, model_dim, ff_dim, nlayer):
    ks = jax.random.split(key, 16)
    n = lambda k, shape, s=0.1: (jax.random.normal(k, shape, jnp.float32) * s)
    L, D, F = nlayer, model_dim, ff_dim
    return {
        'w_in': n(ks[0], (in_dim, D)),
        'b_in': n(ks[1], (1, D)),
        'wq': n(ks[2], (L, D, D)), 'bq': n(ks[3], (L, 1, D)),
        'wk': n(ks[4], (L, D, D)), 'bk': n(ks[5], (L, 1, D)),
        'wv': n(ks[6], (L, D, D)), 'bv': n(ks[7], (L, 1, D)),
        'wo': n(ks[8], (L, D, D)), 'bo': n(ks[9], (L, 1, D)),
        'ln1g': jnp.ones((L, 1, D), jnp.float32),
        'ln1b': jnp.zeros((L, 1, D), jnp.float32),
        'ln2g': jnp.ones((L, 1, D), jnp.float32),
        'ln2b': jnp.zeros((L, 1, D), jnp.float32),
        'w1': n(ks[10], (L, D, F)), 'b1': n(ks[11], (L, 1, F)),
        'w2': n(ks[12], (L, F, D)), 'b2': n(ks[13], (L, 1, D)),
    }


# --------------------------------- main ------------------------------------

if __name__ == "__main__":
    # synthetic config (ctx): motion_dim=2, tf_model_dim=32, tf_ff_dim=64,
    # tf_nhead=4, tf_dropout=0 (eval), input_type=['pos','vel'], nlayer=2,
    # pooling='mean', pos_concat=False, use_agent_enc=False.
    # B=8 scenes, 4 scenes stacked per grid step -> grid=(2,): fills MXU M /
    # sublanes and keeps the grid even so both v7x TensorCores get work.
    B, T, A = 8, 8, 4
    motion_dim = 2
    model_dim, ff_dim, nhead, nlayer = 32, 64, 4, 2
    input_type = ('pos', 'vel')
    in_dim = motion_dim * len(input_type)

    key = jax.random.PRNGKey(0)
    k_pm, k_pv, k_params = jax.random.split(key, 3)

    data = {
        'pre_motion': jax.random.normal(k_pm, (B, T, A, motion_dim), jnp.float32),
        'pre_vel': jax.random.normal(k_pv, (B, T - 1, A, motion_dim), jnp.float32),
        'agent_mask': jnp.zeros((B, A, A), jnp.float32),  # additive float mask
        'agent_num': A,
    }

    params = init_params(k_params, in_dim, model_dim, ff_dim, nlayer)

    context_enc, agent_context = context_encoder_forward(
        params, data, model_dim=model_dim, nhead=nhead, nlayer=nlayer,
        input_type=input_type, scenes_per_step=4)

    context_enc = jax.block_until_ready(context_enc)
    agent_context = jax.block_until_ready(agent_context)

    assert context_enc.shape == (B, T * A, 1, model_dim)
    assert agent_context.shape == (B, A, model_dim)
    assert bool(jnp.all(jnp.isfinite(context_enc)))
    assert bool(jnp.all(jnp.isfinite(agent_context)))

    print("KERNEL_OK")
</pallas_src>

<mosaic_0001>
module attributes {stable_mosaic.version = 11 : i64} {
  func.func @kernel(%arg0: i32, %arg1: memref<128x4xf32, #tpu.memory_space<vmem>>, %arg2: memref<128x32xf32, #tpu.memory_space<vmem>>, %arg3: memref<128x128xf32, #tpu.memory_space<vmem>>, %arg4: memref<16x128xbf16, #tpu.memory_space<vmem>>, %arg5: memref<4x32xbf16, #tpu.memory_space<vmem>>, %arg6: memref<2x32x96xbf16, #tpu.memory_space<vmem>>, %arg7: memref<2x1x96xf32, #tpu.memory_space<vmem>>, %arg8: memref<2x32x32xbf16, #tpu.memory_space<vmem>>, %arg9: memref<2x1x32xf32, #tpu.memory_space<vmem>>, %arg10: memref<2x1x32xf32, #tpu.memory_space<vmem>>, %arg11: memref<2x1x32xf32, #tpu.memory_space<vmem>>, %arg12: memref<2x1x32xf32, #tpu.memory_space<vmem>>, %arg13: memref<2x1x32xf32, #tpu.memory_space<vmem>>, %arg14: memref<2x32x64xbf16, #tpu.memory_space<vmem>>, %arg15: memref<2x1x64xf32, #tpu.memory_space<vmem>>, %arg16: memref<2x64x32xbf16, #tpu.memory_space<vmem>>, %arg17: memref<2x1x32xf32, #tpu.memory_space<vmem>>, %arg18: memref<128x32xf32, #tpu.memory_space<vmem>>, %arg19: memref<16x32xf32, #tpu.memory_space<vmem>>) attributes {dimension_semantics = [#tpu.dimension_semantics<parallel>], iteration_bounds = array<i64: 2>, scalar_prefetch = 0 : i64, scratch_operands = 0 : i64, tpu.core_type = #tpu.core_type<tc>, window_params = [{transform_indices = @transform_0, window_bounds = array<i64: 128, 4>}, {pipeline_mode = #tpu.pipeline_mode<synchronous>, transform_indices = @transform_1, window_bounds = array<i64: 128, 32>}, {transform_indices = @transform_2, window_bounds = array<i64: 128, 128>}, {pipeline_mode = #tpu.pipeline_mode<synchronous>, transform_indices = @transform_3, window_bounds = array<i64: 16, 128>}, {pipeline_mode = #tpu.pipeline_mode<synchronous>, transform_indices = @transform_4, window_bounds = array<i64: 4, 32>}, {pipeline_mode = #tpu.pipeline_mode<synchronous>, transform_indices = @transform_5, window_bounds = array<i64: 2, 32, 96>}, {pipeline_mode = #tpu.pipeline_mode<synchronous>, transform_indices = @transform_6, window_bounds = array<i64: 2, 1, 96>}, {pipeline_mode = #tpu.pipeline_mode<synchronous>, transform_indices = @transform_7, window_bounds = array<i64: 2, 32, 32>}, {pipeline_mode = #tpu.pipeline_mode<synchronous>, transform_indices = @transform_8, window_bounds = array<i64: 2, 1, 32>}, {pipeline_mode = #tpu.pipeline_mode<synchronous>, transform_indices = @transform_9, window_bounds = array<i64: 2, 1, 32>}, {pipeline_mode = #tpu.pipeline_mode<synchronous>, transform_indices = @transform_10, window_bounds = array<i64: 2, 1, 32>}, {pipeline_mode = #tpu.pipeline_mode<synchronous>, transform_indices = @transform_11, window_bounds = array<i64: 2, 1, 32>}, {pipeline_mode = #tpu.pipeline_mode<synchronous>, transform_indices = @transform_12, window_bounds = array<i64: 2, 1, 32>}, {pipeline_mode = #tpu.pipeline_mode<synchronous>, transform_indices = @transform_13, window_bounds = array<i64: 2, 32, 64>}, {pipeline_mode = #tpu.pipeline_mode<synchronous>, transform_indices = @transform_14, window_bounds = array<i64: 2, 1, 64>}, {pipeline_mode = #tpu.pipeline_mode<synchronous>, transform_indices = @transform_15, window_bounds = array<i64: 2, 64, 32>}, {pipeline_mode = #tpu.pipeline_mode<synchronous>, transform_indices = @transform_16, window_bounds = array<i64: 2, 1, 32>}, {transform_indices = @transform_17, window_bounds = array<i64: 128, 32>}, {transform_indices = @transform_18, window_bounds = array<i64: 16, 32>}]} {
    %c0 = arith.constant 0 : index
    %c0_0 = arith.constant 0 : index
    %0 = vector.load %arg3[%c0, %c0_0] : memref<128x128xf32, #tpu.memory_space<vmem>>, vector<128x128xf32>
    %c0_1 = arith.constant 0 : index
    %c0_2 = arith.constant 0 : index
    %1 = vector.load %arg1[%c0_1, %c0_2] : memref<128x4xf32, #tpu.memory_space<vmem>>, vector<128x4xf32>
    %2 = arith.truncf %1 : vector<128x4xf32> to vector<128x4xbf16>
    %c0_3 = arith.constant 0 : index
    %c0_4 = arith.constant 0 : index
    %3 = vector.load %arg5[%c0_3, %c0_4] : memref<4x32xbf16, #tpu.memory_space<vmem>>, vector<4x32xbf16>
    %cst = arith.constant dense<0.000000e+00> : vector<128x32xf32>
    %4 = tpu.matmul %2, %3, %cst {dimension_numbers = #tpu.dot_dimension_numbers<[1], [0], [0], [1], [0, 0, 1, 1], [], []>} : vector<128x4xbf16>, vector<4x32xbf16>, vector<128x32xf32> -> vector<128x32xf32>
    %c0_5 = arith.constant 0 : index
    %c0_6 = arith.constant 0 : index
    %5 = vector.load %arg2[%c0_5, %c0_6] : memref<128x32xf32, #tpu.memory_space<vmem>>, vector<128x32xf32>
    %6 = arith.addf %4, %5 : vector<128x32xf32>
    %7 = arith.truncf %6 : vector<128x32xf32> to vector<128x32xbf16>
    %c0_7 = arith.constant 0 : index
    %c0_8 = arith.constant 0 : index
    %c0_9 = arith.constant 0 : index
    %8 = vector.load %arg6[%c0_7, %c0_8, %c0_9] : memref<2x32x96xbf16, #tpu.memory_space<vmem>>, vector<1x32x96xbf16>
    %9 = vector.shape_cast %8 : vector<1x32x96xbf16> to vector<32x96xbf16>
    %cst_10 = arith.constant dense<0.000000e+00> : vector<128x96xf32>
    %10 = tpu.matmul %7, %9, %cst_10 {dimension_numbers = #tpu.dot_dimension_numbers<[1], [0], [0], [1], [0, 0, 1, 1], [], []>} : vector<128x32xbf16>, vector<32x96xbf16>, vector<128x96xf32> -> vector<128x96xf32>
    %c0_11 = arith.constant 0 : index
    %c0_12 = arith.constant 0 : index
    %c0_13 = arith.constant 0 : index
    %11 = vector.load %arg7[%c0_11, %c0_12, %c0_13] : memref<2x1x96xf32, #tpu.memory_space<vmem>>, vector<1x1x96xf32>
    %12 = vector.shape_cast %11 : vector<1x1x96xf32> to vector<1x96xf32>
    %13 = vector.broadcast %12 : vector<1x96xf32> to vector<128x96xf32>
    %14 = arith.addf %10, %13 : vector<128x96xf32>
    %15 = vector.extract_strided_slice %14 {offsets = [0, 0], sizes = [128, 32], strides = [1, 1]} : vector<128x96xf32> to vector<128x32xf32>
    %16 = arith.truncf %15 : vector<128x32xf32> to vector<128x32xbf16>
    %17 = vector.extract_strided_slice %14 {offsets = [0, 32], sizes = [128, 32], strides = [1, 1]} : vector<128x96xf32> to vector<128x32xf32>
    %18 = arith.truncf %17 : vector<128x32xf32> to vector<128x32xbf16>
    %19 = vector.extract_strided_slice %14 {offsets = [0, 64], sizes = [128, 32], strides = [1, 1]} : vector<128x96xf32> to vector<128x32xf32>
    %20 = arith.truncf %19 : vector<128x32xf32> to vector<128x32xbf16>
    %21 = vector.extract_strided_slice %16 {offsets = [0, 0], sizes = [128, 8], strides = [1, 1]} : vector<128x32xbf16> to vector<128x8xbf16>
    %22 = vector.extract_strided_slice %18 {offsets = [0, 0], sizes = [128, 8], strides = [1, 1]} : vector<128x32xbf16> to vector<128x8xbf16>
    %cst_14 = arith.constant dense<0.000000e+00> : vector<128x128xf32>
    %23 = tpu.matmul %21, %22, %cst_14 {dimension_numbers = #tpu.dot_dimension_numbers<[1], [1], [0], [0], [0, 0, 1, 0], [], []>} : vector<128x8xbf16>, vector<128x8xbf16>, vector<128x128xf32> -> vector<128x128xf32>
    %24 = arith.addf %23, %0 : vector<128x128xf32>
    %cst_15 = arith.constant dense<0xFF800000> : vector<128xf32>
    %25 = vector.multi_reduction <maximumf>, %24, %cst_15 [1] : vector<128x128xf32> to vector<128xf32>
    %26 = vector.shape_cast %25 : vector<128xf32> to vector<128x1xf32>
    %27 = vector.broadcast %26 : vector<128x1xf32> to vector<128x128xf32>
    %28 = arith.subf %24, %27 : vector<128x128xf32>
    %29 = math.exp %28 : vector<128x128xf32>
    %cst_16 = arith.constant dense<0.000000e+00> : vector<128xf32>
    %30 = vector.multi_reduction <add>, %29, %cst_16 [1] : vector<128x128xf32> to vector<128xf32>
    %31 = vector.shape_cast %30 : vector<128xf32> to vector<128x1xf32>
    %32 = tpu.reciprocal %31 {approx = true} : vector<128x1xf32> -> vector<128x1xf32>
    %33 = vector.broadcast %32 : vector<128x1xf32> to vector<128x128xf32>
    %34 = arith.mulf %29, %33 : vector<128x128xf32>
    %35 = arith.truncf %34 : vector<128x128xf32> to vector<128x128xbf16>
    %36 = vector.extract_strided_slice %20 {offsets = [0, 0], sizes = [128, 8], strides = [1, 1]} : vector<128x32xbf16> to vector<128x8xbf16>
    %cst_17 = arith.constant dense<0.000000e+00> : vector<128x8xf32>
    %37 = tpu.matmul %35, %36, %cst_17 {dimension_numbers = #tpu.dot_dimension_numbers<[1], [0], [0], [1], [0, 0, 1, 1], [], []>} : vector<128x128xbf16>, vector<128x8xbf16>, vector<128x8xf32> -> vector<128x8xf32>
    %38 = vector.extract_strided_slice %16 {offsets = [0, 8], sizes = [128, 8], strides = [1, 1]} : vector<128x32xbf16> to vector<128x8xbf16>
    %39 = vector.extract_strided_slice %18 {offsets = [0, 8], sizes = [128, 8], strides = [1, 1]} : vector<128x32xbf16> to vector<128x8xbf16>
    %cst_18 = arith.constant dense<0.000000e+00> : vector<128x128xf32>
    %40 = tpu.matmul %38, %39, %cst_18 {dimension_numbers = #tpu.dot_dimension_numbers<[1], [1], [0], [0], [0, 0, 1, 0], [], []>} : vector<128x8xbf16>, vector<128x8xbf16>, vector<128x128xf32> -> vector<128x128xf32>
    %41 = arith.addf %40, %0 : vector<128x128xf32>
    %cst_19 = arith.constant dense<0xFF800000> : vector<128xf32>
    %42 = vector.multi_reduction <maximumf>, %41, %cst_19 [1] : vector<128x128xf32> to vector<128xf32>
    %43 = vector.shape_cast %42 : vector<128xf32> to vector<128x1xf32>
    %44 = vector.broadcast %43 : vector<128x1xf32> to vector<128x128xf32>
    %45 = arith.subf %41, %44 : vector<128x128xf32>
    %46 = math.exp %45 : vector<128x128xf32>
    %cst_20 = arith.constant dense<0.000000e+00> : vector<128xf32>
    %47 = vector.multi_reduction <add>, %46, %cst_20 [1] : vector<128x128xf32> to vector<128xf32>
    %48 = vector.shape_cast %47 : vector<128xf32> to vector<128x1xf32>
    %49 = tpu.reciprocal %48 {approx = true} : vector<128x1xf32> -> vector<128x1xf32>
    %50 = vector.broadcast %49 : vector<128x1xf32> to vector<128x128xf32>
    %51 = arith.mulf %46, %50 : vector<128x128xf32>
    %52 = arith.truncf %51 : vector<128x128xf32> to vector<128x128xbf16>
    %53 = vector.extract_strided_slice %20 {offsets = [0, 8], sizes = [128, 8], strides = [1, 1]} : vector<128x32xbf16> to vector<128x8xbf16>
    %cst_21 = arith.constant dense<0.000000e+00> : vector<128x8xf32>
    %54 = tpu.matmul %52, %53, %cst_21 {dimension_numbers = #tpu.dot_dimension_numbers<[1], [0], [0], [1], [0, 0, 1, 1], [], []>} : vector<128x128xbf16>, vector<128x8xbf16>, vector<128x8xf32> -> vector<128x8xf32>
    %55 = vector.extract_strided_slice %16 {offsets = [0, 16], sizes = [128, 8], strides = [1, 1]} : vector<128x32xbf16> to vector<128x8xbf16>
    %56 = vector.extract_strided_slice %18 {offsets = [0, 16], sizes = [128, 8], strides = [1, 1]} : vector<128x32xbf16> to vector<128x8xbf16>
    %cst_22 = arith.constant dense<0.000000e+00> : vector<128x128xf32>
    %57 = tpu.matmul %55, %56, %cst_22 {dimension_numbers = #tpu.dot_dimension_numbers<[1], [1], [0], [0], [0, 0, 1, 0], [], []>} : vector<128x8xbf16>, vector<128x8xbf16>, vector<128x128xf32> -> vector<128x128xf32>
    %58 = arith.addf %57, %0 : vector<128x128xf32>
    %cst_23 = arith.constant dense<0xFF800000> : vector<128xf32>
    %59 = vector.multi_reduction <maximumf>, %58, %cst_23 [1] : vector<128x128xf32> to vector<128xf32>
    %60 = vector.shape_cast %59 : vector<128xf32> to vector<128x1xf32>
    %61 = vector.broadcast %60 : vector<128x1xf32> to vector<128x128xf32>
    %62 = arith.subf %58, %61 : vector<128x128xf32>
    %63 = math.exp %62 : vector<128x128xf32>
    %cst_24 = arith.constant dense<0.000000e+00> : vector<128xf32>
    %64 = vector.multi_reduction <add>, %63, %cst_24 [1] : vector<128x128xf32> to vector<128xf32>
    %65 = vector.shape_cast %64 : vector<128xf32> to vector<128x1xf32>
    %66 = tpu.reciprocal %65 {approx = true} : vector<128x1xf32> -> vector<128x1xf32>
    %67 = vector.broadcast %66 : vector<128x1xf32> to vector<128x128xf32>
    %68 = arith.mulf %63, %67 : vector<128x128xf32>
    %69 = arith.truncf %68 : vector<128x128xf32> to vector<128x128xbf16>
    %70 = vector.extract_strided_slice %20 {offsets = [0, 16], sizes = [128, 8], strides = [1, 1]} : vector<128x32xbf16> to vector<128x8xbf16>
    %cst_25 = arith.constant dense<0.000000e+00> : vector<128x8xf32>
    %71 = tpu.matmul %69, %70, %cst_25 {dimension_numbers = #tpu.dot_dimension_numbers<[1], [0], [0], [1], [0, 0, 1, 1], [], []>} : vector<128x128xbf16>, vector<128x8xbf16>, vector<128x8xf32> -> vector<128x8xf32>
    %72 = vector.extract_strided_slice %16 {offsets = [0, 24], sizes = [128, 8], strides = [1, 1]} : vector<128x32xbf16> to vector<128x8xbf16>
    %73 = vector.extract_strided_slice %18 {offsets = [0, 24], sizes = [128, 8], strides = [1, 1]} : vector<128x32xbf16> to vector<128x8xbf16>
    %cst_26 = arith.constant dense<0.000000e+00> : vector<128x128xf32>
    %74 = tpu.matmul %72, %73, %cst_26 {dimension_numbers = #tpu.dot_dimension_numbers<[1], [1], [0], [0], [0, 0, 1, 0], [], []>} : vector<128x8xbf16>, vector<128x8xbf16>, vector<128x128xf32> -> vector<128x128xf32>
    %75 = arith.addf %74, %0 : vector<128x128xf32>
    %cst_27 = arith.constant dense<0xFF800000> : vector<128xf32>
    %76 = vector.multi_reduction <maximumf>, %75, %cst_27 [1] : vector<128x128xf32> to vector<128xf32>
    %77 = vector.shape_cast %76 : vector<128xf32> to vector<128x1xf32>
    %78 = vector.broadcast %77 : vector<128x1xf32> to vector<128x128xf32>
    %79 = arith.subf %75, %78 : vector<128x128xf32>
    %80 = math.exp %79 : vector<128x128xf32>
    %cst_28 = arith.constant dense<0.000000e+00> : vector<128xf32>
    %81 = vector.multi_reduction <add>, %80, %cst_28 [1] : vector<128x128xf32> to vector<128xf32>
    %82 = vector.shape_cast %81 : vector<128xf32> to vector<128x1xf32>
    %83 = tpu.reciprocal %82 {approx = true} : vector<128x1xf32> -> vector<128x1xf32>
    %84 = vector.broadcast %83 : vector<128x1xf32> to vector<128x128xf32>
    %85 = arith.mulf %80, %84 : vector<128x128xf32>
    %86 = arith.truncf %85 : vector<128x128xf32> to vector<128x128xbf16>
    %87 = vector.extract_strided_slice %20 {offsets = [0, 24], sizes = [128, 8], strides = [1, 1]} : vector<128x32xbf16> to vector<128x8xbf16>
    %cst_29 = arith.constant dense<0.000000e+00> : vector<128x8xf32>
    %88 = tpu.matmul %86, %87, %cst_29 {dimension_numbers = #tpu.dot_dimension_numbers<[1], [0], [0], [1], [0, 0, 1, 1], [], []>} : vector<128x128xbf16>, vector<128x8xbf16>, vector<128x8xf32> -> vector<128x8xf32>
    %89 = tpu.concatenate %37, %54, %71, %88 in 1 : vector<128x8xf32>, vector<128x8xf32>, vector<128x8xf32>, vector<128x8xf32> -> vector<128x32xf32>
    %90 = arith.truncf %89 : vector<128x32xf32> to vector<128x32xbf16>
    %c0_30 = arith.constant 0 : index
    %c0_31 = arith.constant 0 : index
    %c0_32 = arith.constant 0 : index
    %91 = vector.load %arg8[%c0_30, %c0_31, %c0_32] : memref<2x32x32xbf16, #tpu.memory_space<vmem>>, vector<1x32x32xbf16>
    %92 = vector.shape_cast %91 : vector<1x32x32xbf16> to vector<32x32xbf16>
    %cst_33 = arith.constant dense<0.000000e+00> : vector<128x32xf32>
    %93 = tpu.matmul %90, %92, %cst_33 {dimension_numbers = #tpu.dot_dimension_numbers<[1], [0], [0], [1], [0, 0, 1, 1], [], []>} : vector<128x32xbf16>, vector<32x32xbf16>, vector<128x32xf32> -> vector<128x32xf32>
    %c0_34 = arith.constant 0 : index
    %c0_35 = arith.constant 0 : index
    %c0_36 = arith.constant 0 : index
    %94 = vector.load %arg9[%c0_34, %c0_35, %c0_36] : memref<2x1x32xf32, #tpu.memory_space<vmem>>, vector<1x1x32xf32>
    %95 = vector.shape_cast %94 : vector<1x1x32xf32> to vector<1x32xf32>
    %96 = vector.broadcast %95 : vector<1x32xf32> to vector<128x32xf32>
    %97 = arith.addf %93, %96 : vector<128x32xf32>
    %98 = arith.addf %6, %97 : vector<128x32xf32>
    %c0_37 = arith.constant 0 : index
    %c0_38 = arith.constant 0 : index
    %c0_39 = arith.constant 0 : index
    %99 = vector.load %arg10[%c0_37, %c0_38, %c0_39] : memref<2x1x32xf32, #tpu.memory_space<vmem>>, vector<1x1x32xf32>
    %100 = vector.shape_cast %99 : vector<1x1x32xf32> to vector<1x32xf32>
    %c0_40 = arith.constant 0 : index
    %c0_41 = arith.constant 0 : index
    %c0_42 = arith.constant 0 : index
    %101 = vector.load %arg11[%c0_40, %c0_41, %c0_42] : memref<2x1x32xf32, #tpu.memory_space<vmem>>, vector<1x1x32xf32>
    %102 = vector.shape_cast %101 : vector<1x1x32xf32> to vector<1x32xf32>
    %cst_43 = arith.constant dense<0.000000e+00> : vector<128xf32>
    %103 = vector.multi_reduction <add>, %98, %cst_43 [1] : vector<128x32xf32> to vector<128xf32>
    %104 = vector.shape_cast %103 : vector<128xf32> to vector<128x1xf32>
    %cst_44 = arith.constant 3.200000e+01 : f32
    %105 = vector.broadcast %cst_44 : f32 to vector<128x1xf32>
    %106 = arith.divf %104, %105 : vector<128x1xf32>
    %107 = vector.broadcast %106 : vector<128x1xf32> to vector<128x32xf32>
    %108 = arith.subf %98, %107 : vector<128x32xf32>
    %109 = arith.mulf %108, %108 : vector<128x32xf32>
    %cst_45 = arith.constant dense<0.000000e+00> : vector<128xf32>
    %110 = vector.multi_reduction <add>, %109, %cst_45 [1] : vector<128x32xf32> to vector<128xf32>
    %111 = vector.shape_cast %110 : vector<128xf32> to vector<128x1xf32>
    %cst_46 = arith.constant 3.200000e+01 : f32
    %112 = vector.broadcast %cst_46 : f32 to vector<128x1xf32>
    %113 = arith.divf %111, %112 : vector<128x1xf32>
    %114 = vector.broadcast %106 : vector<128x1xf32> to vector<128x32xf32>
    %115 = arith.subf %98, %114 : vector<128x32xf32>
    %cst_47 = arith.constant 9.99999974E-6 : f32
    %116 = vector.broadcast %cst_47 : f32 to vector<128x1xf32>
    %117 = arith.addf %113, %116 : vector<128x1xf32>
    %118 = math.rsqrt %117 : vector<128x1xf32>
    %119 = vector.broadcast %118 : vector<128x1xf32> to vector<128x32xf32>
    %120 = arith.mulf %115, %119 : vector<128x32xf32>
    %121 = vector.broadcast %100 : vector<1x32xf32> to vector<128x32xf32>
    %122 = arith.mulf %120, %121 : vector<128x32xf32>
    %123 = vector.broadcast %102 : vector<1x32xf32> to vector<128x32xf32>
    %124 = arith.addf %122, %123 : vector<128x32xf32>
    %125 = arith.truncf %124 : vector<128x32xf32> to vector<128x32xbf16>
    %c0_48 = arith.constant 0 : index
    %c0_49 = arith.constant 0 : index
    %c0_50 = arith.constant 0 : index
    %126 = vector.load %arg14[%c0_48, %c0_49, %c0_50] : memref<2x32x64xbf16, #tpu.memory_space<vmem>>, vector<1x32x64xbf16>
    %127 = vector.shape_cast %126 : vector<1x32x64xbf16> to vector<32x64xbf16>
    %cst_51 = arith.constant dense<0.000000e+00> : vector<128x64xf32>
    %128 = tpu.matmul %125, %127, %cst_51 {dimension_numbers = #tpu.dot_dimension_numbers<[1], [0], [0], [1], [0, 0, 1, 1], [], []>} : vector<128x32xbf16>, vector<32x64xbf16>, vector<128x64xf32> -> vector<128x64xf32>
    %c0_52 = arith.constant 0 : index
    %c0_53 = arith.constant 0 : index
    %c0_54 = arith.constant 0 : index
    %129 = vector.load %arg15[%c0_52, %c0_53, %c0_54] : memref<2x1x64xf32, #tpu.memory_space<vmem>>, vector<1x1x64xf32>
    %130 = vector.shape_cast %129 : vector<1x1x64xf32> to vector<1x64xf32>
    %131 = vector.broadcast %130 : vector<1x64xf32> to vector<128x64xf32>
    %132 = arith.addf %128, %131 : vector<128x64xf32>
    %cst_55 = arith.constant 0.000000e+00 : f32
    %133 = vector.broadcast %cst_55 : f32 to vector<128x64xf32>
    %134 = arith.maximumf %132, %133 : vector<128x64xf32>
    %135 = arith.truncf %134 : vector<128x64xf32> to vector<128x64xbf16>
    %c0_56 = arith.constant 0 : index
    %c0_57 = arith.constant 0 : index
    %c0_58 = arith.constant 0 : index
    %136 = vector.load %arg16[%c0_56, %c0_57, %c0_58] : memref<2x64x32xbf16, #tpu.memory_space<vmem>>, vector<1x64x32xbf16>
    %137 = vector.shape_cast %136 : vector<1x64x32xbf16> to vector<64x32xbf16>
    %cst_59 = arith.constant dense<0.000000e+00> : vector<128x32xf32>
    %138 = tpu.matmul %135, %137, %cst_59 {dimension_numbers = #tpu.dot_dimension_numbers<[1], [0], [0], [1], [0, 0, 1, 1], [], []>} : vector<128x64xbf16>, vector<64x32xbf16>, vector<128x32xf32> -> vector<128x32xf32>
    %c0_60 = arith.constant 0 : index
    %c0_61 = arith.constant 0 : index
    %c0_62 = arith.constant 0 : index
    %139 = vector.load %arg17[%c0_60, %c0_61, %c0_62] : memref<2x1x32xf32, #tpu.memory_space<vmem>>, vector<1x1x32xf32>
    %140 = vector.shape_cast %139 : vector<1x1x32xf32> to vector<1x32xf32>
    %141 = vector.broadcast %140 : vector<1x32xf32> to vector<128x32xf32>
    %142 = arith.addf %138, %141 : vector<128x32xf32>
    %143 = arith.addf %124, %142 : vector<128x32xf32>
    %c0_63 = arith.constant 0 : index
    %c0_64 = arith.constant 0 : index
    %c0_65 = arith.constant 0 : index
    %144 = vector.load %arg12[%c0_63, %c0_64, %c0_65] : memref<2x1x32xf32, #tpu.memory_space<vmem>>, vector<1x1x32xf32>
    %145 = vector.shape_cast %144 : vector<1x1x32xf32> to vector<1x32xf32>
    %c0_66 = arith.constant 0 : index
    %c0_67 = arith.constant 0 : index
    %c0_68 = arith.constant 0 : index
    %146 = vector.load %arg13[%c0_66, %c0_67, %c0_68] : memref<2x1x32xf32, #tpu.memory_space<vmem>>, vector<1x1x32xf32>
    %147 = vector.shape_cast %146 : vector<1x1x32xf32> to vector<1x32xf32>
    %cst_69 = arith.constant dense<0.000000e+00> : vector<128xf32>
    %148 = vector.multi_reduction <add>, %143, %cst_69 [1] : vector<128x32xf32> to vector<128xf32>
    %149 = vector.shape_cast %148 : vector<128xf32> to vector<128x1xf32>
    %cst_70 = arith.constant 3.200000e+01 : f32
    %150 = vector.broadcast %cst_70 : f32 to vector<128x1xf32>
    %151 = arith.divf %149, %150 : vector<128x1xf32>
    %152 = vector.broadcast %151 : vector<128x1xf32> to vector<128x32xf32>
    %153 = arith.subf %143, %152 : vector<128x32xf32>
    %154 = arith.mulf %153, %153 : vector<128x32xf32>
    %cst_71 = arith.constant dense<0.000000e+00> : vector<128xf32>
    %155 = vector.multi_reduction <add>, %154, %cst_71 [1] : vector<128x32xf32> to vector<128xf32>
    %156 = vector.shape_cast %155 : vector<128xf32> to vector<128x1xf32>
    %cst_72 = arith.constant 3.200000e+01 : f32
    %157 = vector.broadcast %cst_72 : f32 to vector<128x1xf32>
    %158 = arith.divf %156, %157 : vector<128x1xf32>
    %159 = vector.broadcast %151 : vector<128x1xf32> to vector<128x32xf32>
    %160 = arith.subf %143, %159 : vector<128x32xf32>
    %cst_73 = arith.constant 9.99999974E-6 : f32
    %161 = vector.broadcast %cst_73 : f32 to vector<128x1xf32>
    %162 = arith.addf %158, %161 : vector<128x1xf32>
    %163 = math.rsqrt %162 : vector<128x1xf32>
    %164 = vector.broadcast %163 : vector<128x1xf32> to vector<128x32xf32>
    %165 = arith.mulf %160, %164 : vector<128x32xf32>
    %166 = vector.broadcast %145 : vector<1x32xf32> to vector<128x32xf32>
    %167 = arith.mulf %165, %166 : vector<128x32xf32>
    %168 = vector.broadcast %147 : vector<1x32xf32> to vector<128x32xf32>
    %169 = arith.addf %167, %168 : vector<128x32xf32>
    %170 = arith.truncf %169 : vector<128x32xf32> to vector<128x32xbf16>
    %c1 = arith.constant 1 : index
    %c0_74 = arith.constant 0 : index
    %c0_75 = arith.constant 0 : index
    %171 = vector.load %arg6[%c1, %c0_74, %c0_75] : memref<2x32x96xbf16, #tpu.memory_space<vmem>>, vector<1x32x96xbf16>
    %172 = vector.shape_cast %171 : vector<1x32x96xbf16> to vector<32x96xbf16>
    %cst_76 = arith.constant dense<0.000000e+00> : vector<128x96xf32>
    %173 = tpu.matmul %170, %172, %cst_76 {dimension_numbers = #tpu.dot_dimension_numbers<[1], [0], [0], [1], [0, 0, 1, 1], [], []>} : vector<128x32xbf16>, vector<32x96xbf16>, vector<128x96xf32> -> vector<128x96xf32>
    %c1_77 = arith.constant 1 : index
    %c0_78 = arith.constant 0 : index
    %c0_79 = arith.constant 0 : index
    %174 = vector.load %arg7[%c1_77, %c0_78, %c0_79] : memref<2x1x96xf32, #tpu.memory_space<vmem>>, vector<1x1x96xf32>
    %175 = vector.shape_cast %174 : vector<1x1x96xf32> to vector<1x96xf32>
    %176 = vector.broadcast %175 : vector<1x96xf32> to vector<128x96xf32>
    %177 = arith.addf %173, %176 : vector<128x96xf32>
    %178 = vector.extract_strided_slice %177 {offsets = [0, 0], sizes = [128, 32], strides = [1, 1]} : vector<128x96xf32> to vector<128x32xf32>
    %179 = arith.truncf %178 : vector<128x32xf32> to vector<128x32xbf16>
    %180 = vector.extract_strided_slice %177 {offsets = [0, 32], sizes = [128, 32], strides = [1, 1]} : vector<128x96xf32> to vector<128x32xf32>
    %181 = arith.truncf %180 : vector<128x32xf32> to vector<128x32xbf16>
    %182 = vector.extract_strided_slice %177 {offsets = [0, 64], sizes = [128, 32], strides = [1, 1]} : vector<128x96xf32> to vector<128x32xf32>
    %183 = arith.truncf %182 : vector<128x32xf32> to vector<128x32xbf16>
    %184 = vector.extract_strided_slice %179 {offsets = [0, 0], sizes = [128, 8], strides = [1, 1]} : vector<128x32xbf16> to vector<128x8xbf16>
    %185 = vector.extract_strided_slice %181 {offsets = [0, 0], sizes = [128, 8], strides = [1, 1]} : vector<128x32xbf16> to vector<128x8xbf16>
    %cst_80 = arith.constant dense<0.000000e+00> : vector<128x128xf32>
    %186 = tpu.matmul %184, %185, %cst_80 {dimension_numbers = #tpu.dot_dimension_numbers<[1], [1], [0], [0], [0, 0, 1, 0], [], []>} : vector<128x8xbf16>, vector<128x8xbf16>, vector<128x128xf32> -> vector<128x128xf32>
    %187 = arith.addf %186, %0 : vector<128x128xf32>
    %cst_81 = arith.constant dense<0xFF800000> : vector<128xf32>
    %188 = vector.multi_reduction <maximumf>, %187, %cst_81 [1] : vector<128x128xf32> to vector<128xf32>
    %189 = vector.shape_cast %188 : vector<128xf32> to vector<128x1xf32>
    %190 = vector.broadcast %189 : vector<128x1xf32> to vector<128x128xf32>
    %191 = arith.subf %187, %190 : vector<128x128xf32>
    %192 = math.exp %191 : vector<128x128xf32>
    %cst_82 = arith.constant dense<0.000000e+00> : vector<128xf32>
    %193 = vector.multi_reduction <add>, %192, %cst_82 [1] : vector<128x128xf32> to vector<128xf32>
    %194 = vector.shape_cast %193 : vector<128xf32> to vector<128x1xf32>
    %195 = tpu.reciprocal %194 {approx = true} : vector<128x1xf32> -> vector<128x1xf32>
    %196 = vector.broadcast %195 : vector<128x1xf32> to vector<128x128xf32>
    %197 = arith.mulf %192, %196 : vector<128x128xf32>
    %198 = arith.truncf %197 : vector<128x128xf32> to vector<128x128xbf16>
    %199 = vector.extract_strided_slice %183 {offsets = [0, 0], sizes = [128, 8], strides = [1, 1]} : vector<128x32xbf16> to vector<128x8xbf16>
    %cst_83 = arith.constant dense<0.000000e+00> : vector<128x8xf32>
    %200 = tpu.matmul %198, %199, %cst_83 {dimension_numbers = #tpu.dot_dimension_numbers<[1], [0], [0], [1], [0, 0, 1, 1], [], []>} : vector<128x128xbf16>, vector<128x8xbf16>, vector<128x8xf32> -> vector<128x8xf32>
    %201 = vector.extract_strided_slice %179 {offsets = [0, 8], sizes = [128, 8], strides = [1, 1]} : vector<128x32xbf16> to vector<128x8xbf16>
    %202 = vector.extract_strided_slice %181 {offsets = [0, 8], sizes = [128, 8], strides = [1, 1]} : vector<128x32xbf16> to vector<128x8xbf16>
    %cst_84 = arith.constant dense<0.000000e+00> : vector<128x128xf32>
    %203 = tpu.matmul %201, %202, %cst_84 {dimension_numbers = #tpu.dot_dimension_numbers<[1], [1], [0], [0], [0, 0, 1, 0], [], []>} : vector<128x8xbf16>, vector<128x8xbf16>, vector<128x128xf32> -> vector<128x128xf32>
    %204 = arith.addf %203, %0 : vector<128x128xf32>
    %cst_85 = arith.constant dense<0xFF800000> : vector<128xf32>
    %205 = vector.multi_reduction <maximumf>, %204, %cst_85 [1] : vector<128x128xf32> to vector<128xf32>
    %206 = vector.shape_cast %205 : vector<128xf32> to vector<128x1xf32>
    %207 = vector.broadcast %206 : vector<128x1xf32> to vector<128x128xf32>
    %208 = arith.subf %204, %207 : vector<128x128xf32>
    %209 = math.exp %208 : vector<128x128xf32>
    %cst_86 = arith.constant dense<0.000000e+00> : vector<128xf32>
    %210 = vector.multi_reduction <add>, %209, %cst_86 [1] : vector<128x128xf32> to vector<128xf32>
    %211 = vector.shape_cast %210 : vector<128xf32> to vector<128x1xf32>
    %212 = tpu.reciprocal %211 {approx = true} : vector<128x1xf32> -> vector<128x1xf32>
    %213 = vector.broadcast %212 : vector<128x1xf32> to vector<128x128xf32>
    %214 = arith.mulf %209, %213 : vector<128x128xf32>
    %215 = arith.truncf %214 : vector<128x128xf32> to vector<128x128xbf16>
    %216 = vector.extract_strided_slice %183 {offsets = [0, 8], sizes = [128, 8], strides = [1, 1]} : vector<128x32xbf16> to vector<128x8xbf16>
    %cst_87 = arith.constant dense<0.000000e+00> : vector<128x8xf32>
    %217 = tpu.matmul %215, %216, %cst_87 {dimension_numbers = #tpu.dot_dimension_numbers<[1], [0], [0], [1], [0, 0, 1, 1], [], []>} : vector<128x128xbf16>, vector<128x8xbf16>, vector<128x8xf32> -> vector<128x8xf32>
    %218 = vector.extract_strided_slice %179 {offsets = [0, 16], sizes = [128, 8], strides = [1, 1]} : vector<128x32xbf16> to vector<128x8xbf16>
    %219 = vector.extract_strided_slice %181 {offsets = [0, 16], sizes = [128, 8], strides = [1, 1]} : vector<128x32xbf16> to vector<128x8xbf16>
    %cst_88 = arith.constant dense<0.000000e+00> : vector<128x128xf32>
    %220 = tpu.matmul %218, %219, %cst_88 {dimension_numbers = #tpu.dot_dimension_numbers<[1], [1], [0], [0], [0, 0, 1, 0], [], []>} : vector<128x8xbf16>, vector<128x8xbf16>, vector<128x128xf32> -> vector<128x128xf32>
    %221 = arith.addf %220, %0 : vector<128x128xf32>
    %cst_89 = arith.constant dense<0xFF800000> : vector<128xf32>
    %222 = vector.multi_reduction <maximumf>, %221, %cst_89 [1] : vector<128x128xf32> to vector<128xf32>
    %223 = vector.shape_cast %222 : vector<128xf32> to vector<128x1xf32>
    %224 = vector.broadcast %223 : vector<128x1xf32> to vector<128x128xf32>
    %225 = arith.subf %221, %224 : vector<128x128xf32>
    %226 = math.exp %225 : vector<128x128xf32>
    %cst_90 = arith.constant dense<0.000000e+00> : vector<128xf32>
    %227 = vector.multi_reduction <add>, %226, %cst_90 [1] : vector<128x128xf32> to vector<128xf32>
    %228 = vector.shape_cast %227 : vector<128xf32> to vector<128x1xf32>
    %229 = tpu.reciprocal %228 {approx = true} : vector<128x1xf32> -> vector<128x1xf32>
    %230 = vector.broadcast %229 : vector<128x1xf32> to vector<128x128xf32>
    %231 = arith.mulf %226, %230 : vector<128x128xf32>
    %232 = arith.truncf %231 : vector<128x128xf32> to vector<128x128xbf16>
    %233 = vector.extract_strided_slice %183 {offsets = [0, 16], sizes = [128, 8], strides = [1, 1]} : vector<128x32xbf16> to vector<128x8xbf16>
    %cst_91 = arith.constant dense<0.000000e+00> : vector<128x8xf32>
    %234 = tpu.matmul %232, %233, %cst_91 {dimension_numbers = #tpu.dot_dimension_numbers<[1], [0], [0], [1], [0, 0, 1, 1], [], []>} : vector<128x128xbf16>, vector<128x8xbf16>, vector<128x8xf32> -> vector<128x8xf32>
    %235 = vector.extract_strided_slice %179 {offsets = [0, 24], sizes = [128, 8], strides = [1, 1]} : vector<128x32xbf16> to vector<128x8xbf16>
    %236 = vector.extract_strided_slice %181 {offsets = [0, 24], sizes = [128, 8], strides = [1, 1]} : vector<128x32xbf16> to vector<128x8xbf16>
    %cst_92 = arith.constant dense<0.000000e+00> : vector<128x128xf32>
    %237 = tpu.matmul %235, %236, %cst_92 {dimension_numbers = #tpu.dot_dimension_numbers<[1], [1], [0], [0], [0, 0, 1, 0], [], []>} : vector<128x8xbf16>, vector<128x8xbf16>, vector<128x128xf32> -> vector<128x128xf32>
    %238 = arith.addf %237, %0 : vector<128x128xf32>
    %cst_93 = arith.constant dense<0xFF800000> : vector<128xf32>
    %239 = vector.multi_reduction <maximumf>, %238, %cst_93 [1] : vector<128x128xf32> to vector<128xf32>
    %240 = vector.shape_cast %239 : vector<128xf32> to vector<128x1xf32>
    %241 = vector.broadcast %240 : vector<128x1xf32> to vector<128x128xf32>
    %242 = arith.subf %238, %241 : vector<128x128xf32>
    %243 = math.exp %242 : vector<128x128xf32>
    %cst_94 = arith.constant dense<0.000000e+00> : vector<128xf32>
    %244 = vector.multi_reduction <add>, %243, %cst_94 [1] : vector<128x128xf32> to vector<128xf32>
    %245 = vector.shape_cast %244 : vector<128xf32> to vector<128x1xf32>
    %246 = tpu.reciprocal %245 {approx = true} : vector<128x1xf32> -> vector<128x1xf32>
    %247 = vector.broadcast %246 : vector<128x1xf32> to vector<128x128xf32>
    %248 = arith.mulf %243, %247 : vector<128x128xf32>
    %249 = arith.truncf %248 : vector<128x128xf32> to vector<128x128xbf16>
    %250 = vector.extract_strided_slice %183 {offsets = [0, 24], sizes = [128, 8], strides = [1, 1]} : vector<128x32xbf16> to vector<128x8xbf16>
    %cst_95 = arith.constant dense<0.000000e+00> : vector<128x8xf32>
    %251 = tpu.matmul %249, %250, %cst_95 {dimension_numbers = #tpu.dot_dimension_numbers<[1], [0], [0], [1], [0, 0, 1, 1], [], []>} : vector<128x128xbf16>, vector<128x8xbf16>, vector<128x8xf32> -> vector<128x8xf32>
    %252 = tpu.concatenate %200, %217, %234, %251 in 1 : vector<128x8xf32>, vector<128x8xf32>, vector<128x8xf32>, vector<128x8xf32> -> vector<128x32xf32>
    %253 = arith.truncf %252 : vector<128x32xf32> to vector<128x32xbf16>
    %c1_96 = arith.constant 1 : index
    %c0_97 = arith.constant 0 : index
    %c0_98 = arith.constant 0 : index
    %254 = vector.load %arg8[%c1_96, %c0_97, %c0_98] : memref<2x32x32xbf16, #tpu.memory_space<vmem>>, vector<1x32x32xbf16>
    %255 = vector.shape_cast %254 : vector<1x32x32xbf16> to vector<32x32xbf16>
    %cst_99 = arith.constant dense<0.000000e+00> : vector<128x32xf32>
    %256 = tpu.matmul %253, %255, %cst_99 {dimension_numbers = #tpu.dot_dimension_numbers<[1], [0], [0], [1], [0, 0, 1, 1], [], []>} : vector<128x32xbf16>, vector<32x32xbf16>, vector<128x32xf32> -> vector<128x32xf32>
    %c1_100 = arith.constant 1 : index
    %c0_101 = arith.constant 0 : index
    %c0_102 = arith.constant 0 : index
    %257 = vector.load %arg9[%c1_100, %c0_101, %c0_102] : memref<2x1x32xf32, #tpu.memory_space<vmem>>, vector<1x1x32xf32>
    %258 = vector.shape_cast %257 : vector<1x1x32xf32> to vector<1x32xf32>
    %259 = vector.broadcast %258 : vector<1x32xf32> to vector<128x32xf32>
    %260 = arith.addf %256, %259 : vector<128x32xf32>
    %261 = arith.addf %169, %260 : vector<128x32xf32>
    %c1_103 = arith.constant 1 : index
    %c0_104 = arith.constant 0 : index
    %c0_105 = arith.constant 0 : index
    %262 = vector.load %arg10[%c1_103, %c0_104, %c0_105] : memref<2x1x32xf32, #tpu.memory_space<vmem>>, vector<1x1x32xf32>
    %263 = vector.shape_cast %262 : vector<1x1x32xf32> to vector<1x32xf32>
    %c1_106 = arith.constant 1 : index
    %c0_107 = arith.constant 0 : index
    %c0_108 = arith.constant 0 : index
    %264 = vector.load %arg11[%c1_106, %c0_107, %c0_108] : memref<2x1x32xf32, #tpu.memory_space<vmem>>, vector<1x1x32xf32>
    %265 = vector.shape_cast %264 : vector<1x1x32xf32> to vector<1x32xf32>
    %cst_109 = arith.constant dense<0.000000e+00> : vector<128xf32>
    %266 = vector.multi_reduction <add>, %261, %cst_109 [1] : vector<128x32xf32> to vector<128xf32>
    %267 = vector.shape_cast %266 : vector<128xf32> to vector<128x1xf32>
    %cst_110 = arith.constant 3.200000e+01 : f32
    %268 = vector.broadcast %cst_110 : f32 to vector<128x1xf32>
    %269 = arith.divf %267, %268 : vector<128x1xf32>
    %270 = vector.broadcast %269 : vector<128x1xf32> to vector<128x32xf32>
    %271 = arith.subf %261, %270 : vector<128x32xf32>
    %272 = arith.mulf %271, %271 : vector<128x32xf32>
    %cst_111 = arith.constant dense<0.000000e+00> : vector<128xf32>
    %273 = vector.multi_reduction <add>, %272, %cst_111 [1] : vector<128x32xf32> to vector<128xf32>
    %274 = vector.shape_cast %273 : vector<128xf32> to vector<128x1xf32>
    %cst_112 = arith.constant 3.200000e+01 : f32
    %275 = vector.broadcast %cst_112 : f32 to vector<128x1xf32>
    %276 = arith.divf %274, %275 : vector<128x1xf32>
    %277 = vector.broadcast %269 : vector<128x1xf32> to vector<128x32xf32>
    %278 = arith.subf %261, %277 : vector<128x32xf32>
    %cst_113 = arith.constant 9.99999974E-6 : f32
    %279 = vector.broadcast %cst_113 : f32 to vector<128x1xf32>
    %280 = arith.addf %276, %279 : vector<128x1xf32>
    %281 = math.rsqrt %280 : vector<128x1xf32>
    %282 = vector.broadcast %281 : vector<128x1xf32> to vector<128x32xf32>
    %283 = arith.mulf %278, %282 : vector<128x32xf32>
    %284 = vector.broadcast %263 : vector<1x32xf32> to vector<128x32xf32>
    %285 = arith.mulf %283, %284 : vector<128x32xf32>
    %286 = vector.broadcast %265 : vector<1x32xf32> to vector<128x32xf32>
    %287 = arith.addf %285, %286 : vector<128x32xf32>
    %288 = arith.truncf %287 : vector<128x32xf32> to vector<128x32xbf16>
    %c1_114 = arith.constant 1 : index
    %c0_115 = arith.constant 0 : index
    %c0_116 = arith.constant 0 : index
    %289 = vector.load %arg14[%c1_114, %c0_115, %c0_116] : memref<2x32x64xbf16, #tpu.memory_space<vmem>>, vector<1x32x64xbf16>
    %290 = vector.shape_cast %289 : vector<1x32x64xbf16> to vector<32x64xbf16>
    %cst_117 = arith.constant dense<0.000000e+00> : vector<128x64xf32>
    %291 = tpu.matmul %288, %290, %cst_117 {dimension_numbers = #tpu.dot_dimension_numbers<[1], [0], [0], [1], [0, 0, 1, 1], [], []>} : vector<128x32xbf16>, vector<32x64xbf16>, vector<128x64xf32> -> vector<128x64xf32>
    %c1_118 = arith.constant 1 : index
    %c0_119 = arith.constant 0 : index
    %c0_120 = arith.constant 0 : index
    %292 = vector.load %arg15[%c1_118, %c0_119, %c0_120] : memref<2x1x64xf32, #tpu.memory_space<vmem>>, vector<1x1x64xf32>
    %293 = vector.shape_cast %292 : vector<1x1x64xf32> to vector<1x64xf32>
    %294 = vector.broadcast %293 : vector<1x64xf32> to vector<128x64xf32>
    %295 = arith.addf %291, %294 : vector<128x64xf32>
    %cst_121 = arith.constant 0.000000e+00 : f32
    %296 = vector.broadcast %cst_121 : f32 to vector<128x64xf32>
    %297 = arith.maximumf %295, %296 : vector<128x64xf32>
    %298 = arith.truncf %297 : vector<128x64xf32> to vector<128x64xbf16>
    %c1_122 = arith.constant 1 : index
    %c0_123 = arith.constant 0 : index
    %c0_124 = arith.constant 0 : index
    %299 = vector.load %arg16[%c1_122, %c0_123, %c0_124] : memref<2x64x32xbf16, #tpu.memory_space<vmem>>, vector<1x64x32xbf16>
    %300 = vector.shape_cast %299 : vector<1x64x32xbf16> to vector<64x32xbf16>
    %cst_125 = arith.constant dense<0.000000e+00> : vector<128x32xf32>
    %301 = tpu.matmul %298, %300, %cst_125 {dimension_numbers = #tpu.dot_dimension_numbers<[1], [0], [0], [1], [0, 0, 1, 1], [], []>} : vector<128x64xbf16>, vector<64x32xbf16>, vector<128x32xf32> -> vector<128x32xf32>
    %c1_126 = arith.constant 1 : index
    %c0_127 = arith.constant 0 : index
    %c0_128 = arith.constant 0 : index
    %302 = vector.load %arg17[%c1_126, %c0_127, %c0_128] : memref<2x1x32xf32, #tpu.memory_space<vmem>>, vector<1x1x32xf32>
    %303 = vector.shape_cast %302 : vector<1x1x32xf32> to vector<1x32xf32>
    %304 = vector.broadcast %303 : vector<1x32xf32> to vector<128x32xf32>
    %305 = arith.addf %301, %304 : vector<128x32xf32>
    %306 = arith.addf %287, %305 : vector<128x32xf32>
    %c1_129 = arith.constant 1 : index
    %c0_130 = arith.constant 0 : index
    %c0_131 = arith.constant 0 : index
    %307 = vector.load %arg12[%c1_129, %c0_130, %c0_131] : memref<2x1x32xf32, #tpu.memory_space<vmem>>, vector<1x1x32xf32>
    %308 = vector.shape_cast %307 : vector<1x1x32xf32> to vector<1x32xf32>
    %c1_132 = arith.constant 1 : index
    %c0_133 = arith.constant 0 : index
    %c0_134 = arith.constant 0 : index
    %309 = vector.load %arg13[%c1_132, %c0_133, %c0_134] : memref<2x1x32xf32, #tpu.memory_space<vmem>>, vector<1x1x32xf32>
    %310 = vector.shape_cast %309 : vector<1x1x32xf32> to vector<1x32xf32>
    %cst_135 = arith.constant dense<0.000000e+00> : vector<128xf32>
    %311 = vector.multi_reduction <add>, %306, %cst_135 [1] : vector<128x32xf32> to vector<128xf32>
    %312 = vector.shape_cast %311 : vector<128xf32> to vector<128x1xf32>
    %cst_136 = arith.constant 3.200000e+01 : f32
    %313 = vector.broadcast %cst_136 : f32 to vector<128x1xf32>
    %314 = arith.divf %312, %313 : vector<128x1xf32>
    %315 = vector.broadcast %314 : vector<128x1xf32> to vector<128x32xf32>
    %316 = arith.subf %306, %315 : vector<128x32xf32>
    %317 = arith.mulf %316, %316 : vector<128x32xf32>
    %cst_137 = arith.constant dense<0.000000e+00> : vector<128xf32>
    %318 = vector.multi_reduction <add>, %317, %cst_137 [1] : vector<128x32xf32> to vector<128xf32>
    %319 = vector.shape_cast %318 : vector<128xf32> to vector<128x1xf32>
    %cst_138 = arith.constant 3.200000e+01 : f32
    %320 = vector.broadcast %cst_138 : f32 to vector<128x1xf32>
    %321 = arith.divf %319, %320 : vector<128x1xf32>
    %322 = vector.broadcast %314 : vector<128x1xf32> to vector<128x32xf32>
    %323 = arith.subf %306, %322 : vector<128x32xf32>
    %cst_139 = arith.constant 9.99999974E-6 : f32
    %324 = vector.broadcast %cst_139 : f32 to vector<128x1xf32>
    %325 = arith.addf %321, %324 : vector<128x1xf32>
    %326 = math.rsqrt %325 : vector<128x1xf32>
    %327 = vector.broadcast %326 : vector<128x1xf32> to vector<128x32xf32>
    %328 = arith.mulf %323, %327 : vector<128x32xf32>
    %329 = vector.broadcast %308 : vector<1x32xf32> to vector<128x32xf32>
    %330 = arith.mulf %328, %329 : vector<128x32xf32>
    %331 = vector.broadcast %310 : vector<1x32xf32> to vector<128x32xf32>
    %332 = arith.addf %330, %331 : vector<128x32xf32>
    %c0_140 = arith.constant 0 : index
    %c0_141 = arith.constant 0 : index
    %333 = vector.load %arg18[%c0_140, %c0_141] : memref<128x32xf32, #tpu.memory_space<vmem>>, vector<128x32xf32>
    tpu.vector_store %arg18[%c0_140, %c0_141], %332 {strides = array<i32>} : memref<128x32xf32, #tpu.memory_space<vmem>>, vector<128x32xf32>,
    %c0_142 = arith.constant 0 : index
    %c0_143 = arith.constant 0 : index
    %334 = vector.load %arg4[%c0_142, %c0_143] : memref<16x128xbf16, #tpu.memory_space<vmem>>, vector<16x128xbf16>
    %335 = arith.truncf %332 : vector<128x32xf32> to vector<128x32xbf16>
    %cst_144 = arith.constant dense<0.000000e+00> : vector<16x32xf32>
    %336 = tpu.matmul %334, %335, %cst_144 {dimension_numbers = #tpu.dot_dimension_numbers<[1], [0], [0], [1], [0, 0, 1, 1], [], []>} : vector<16x128xbf16>, vector<128x32xbf16>, vector<16x32xf32> -> vector<16x32xf32>
    %c0_145 = arith.constant 0 : index
    %c0_146 = arith.constant 0 : index
    %337 = vector.load %arg19[%c0_145, %c0_146] : memref<16x32xf32, #tpu.memory_space<vmem>>, vector<16x32xf32>
    tpu.vector_store %arg19[%c0_145, %c0_146], %336 {strides = array<i32>} : memref<16x32xf32, #tpu.memory_space<vmem>>, vector<16x32xf32>,
    return
  }
  func.func @transform_0(%arg0: i32) -> (i32, i32) {
    %c0_i32 = arith.constant 0 : i32
    %c0_i32_0 = arith.constant 0 : i32
    return %arg0, %c0_i32 : i32, i32
  }
  func.func @transform_1(%arg0: i32) -> (i32, i32) {
    %c0_i32 = arith.constant 0 : i32
    %c0_i32_0 = arith.constant 0 : i32
    %c0_i32_1 = arith.constant 0 : i32
    return %c0_i32, %c0_i32_0 : i32, i32
  }
  func.func @transform_2(%arg0: i32) -> (i32, i32) {
    %c0_i32 = arith.constant 0 : i32
    %c0_i32_0 = arith.constant 0 : i32
    return %arg0, %c0_i32 : i32, i32
  }
  func.func @transform_3(%arg0: i32) -> (i32, i32) {
    %c0_i32 = arith.constant 0 : i32
    %c0_i32_0 = arith.constant 0 : i32
    %c0_i32_1 = arith.constant 0 : i32
    return %c0_i32, %c0_i32_0 : i32, i32
  }
  func.func @transform_4(%arg0: i32) -> (i32, i32) {
    %c0_i32 = arith.constant 0 : i32
    %c0_i32_0 = arith.constant 0 : i32
    %c0_i32_1 = arith.constant 0 : i32
    return %c0_i32, %c0_i32_0 : i32, i32
  }
  func.func @transform_5(%arg0: i32) -> (i32, i32, i32) {
    %c0_i32 = arith.constant 0 : i32
    %c0_i32_0 = arith.constant 0 : i32
    %c0_i32_1 = arith.constant 0 : i32
    %c0_i32_2 = arith.constant 0 : i32
    return %c0_i32, %c0_i32_0, %c0_i32_1 : i32, i32, i32
  }
  func.func @transform_6(%arg0: i32) -> (i32, i32, i32) {
    %c0_i32 = arith.constant 0 : i32
    %c0_i32_0 = arith.constant 0 : i32
    %c0_i32_1 = arith.constant 0 : i32
    %c0_i32_2 = arith.constant 0 : i32
    return %c0_i32, %c0_i32_0, %c0_i32_1 : i32, i32, i32
  }
  func.func @transform_7(%arg0: i32) -> (i32, i32, i32) {
    %c0_i32 = arith.constant 0 : i32
    %c0_i32_0 = arith.constant 0 : i32
    %c0_i32_1 = arith.constant 0 : i32
    %c0_i32_2 = arith.constant 0 : i32
    return %c0_i32, %c0_i32_0, %c0_i32_1 : i32, i32, i32
  }
  func.func @transform_8(%arg0: i32) -> (i32, i32, i32) {
    %c0_i32 = arith.constant 0 : i32
    %c0_i32_0 = arith.constant 0 : i32
    %c0_i32_1 = arith.constant 0 : i32
    %c0_i32_2 = arith.constant 0 : i32
    return %c0_i32, %c0_i32_0, %c0_i32_1 : i32, i32, i32
  }
  func.func @transform_9(%arg0: i32) -> (i32, i32, i32) {
    %c0_i32 = arith.constant 0 : i32
    %c0_i32_0 = arith.constant 0 : i32
    %c0_i32_1 = arith.constant 0 : i32
    %c0_i32_2 = arith.constant 0 : i32
    return %c0_i32, %c0_i32_0, %c0_i32_1 : i32, i32, i32
  }
  func.func @transform_10(%arg0: i32) -> (i32, i32, i32) {
    %c0_i32 = arith.constant 0 : i32
    %c0_i32_0 = arith.constant 0 : i32
    %c0_i32_1 = arith.constant 0 : i32
    %c0_i32_2 = arith.constant 0 : i32
    return %c0_i32, %c0_i32_0, %c0_i32_1 : i32, i32, i32
  }
  func.func @transform_11(%arg0: i32) -> (i32, i32, i32) {
    %c0_i32 = arith.constant 0 : i32
    %c0_i32_0 = arith.constant 0 : i32
    %c0_i32_1 = arith.constant 0 : i32
    %c0_i32_2 = arith.constant 0 : i32
    return %c0_i32, %c0_i32_0, %c0_i32_1 : i32, i32, i32
  }
  func.func @transform_12(%arg0: i32) -> (i32, i32, i32) {
    %c0_i32 = arith.constant 0 : i32
    %c0_i32_0 = arith.constant 0 : i32
    %c0_i32_1 = arith.constant 0 : i32
    %c0_i32_2 = arith.constant 0 : i32
    return %c0_i32, %c0_i32_0, %c0_i32_1 : i32, i32, i32
  }
  func.func @transform_13(%arg0: i32) -> (i32, i32, i32) {
    %c0_i32 = arith.constant 0 : i32
    %c0_i32_0 = arith.constant 0 : i32
    %c0_i32_1 = arith.constant 0 : i32
    %c0_i32_2 = arith.constant 0 : i32
    return %c0_i32, %c0_i32_0, %c0_i32_1 : i32, i32, i32
  }
  func.func @transform_14(%arg0: i32) -> (i32, i32, i32) {
    %c0_i32 = arith.constant 0 : i32
    %c0_i32_0 = arith.constant 0 : i32
    %c0_i32_1 = arith.constant 0 : i32
    %c0_i32_2 = arith.constant 0 : i32
    return %c0_i32, %c0_i32_0, %c0_i32_1 : i32, i32, i32
  }
  func.func @transform_15(%arg0: i32) -> (i32, i32, i32) {
    %c0_i32 = arith.constant 0 : i32
    %c0_i32_0 = arith.constant 0 : i32
    %c0_i32_1 = arith.constant 0 : i32
    %c0_i32_2 = arith.constant 0 : i32
    return %c0_i32, %c0_i32_0, %c0_i32_1 : i32, i32, i32
  }
  func.func @transform_16(%arg0: i32) -> (i32, i32, i32) {
    %c0_i32 = arith.constant 0 : i32
    %c0_i32_0 = arith.constant 0 : i32
    %c0_i32_1 = arith.constant 0 : i32
    %c0_i32_2 = arith.constant 0 : i32
    return %c0_i32, %c0_i32_0, %c0_i32_1 : i32, i32, i32
  }
  func.func @transform_17(%arg0: i32) -> (i32, i32) {
    %c0_i32 = arith.constant 0 : i32
    %c0_i32_0 = arith.constant 0 : i32
    return %arg0, %c0_i32 : i32, i32
  }
  func.func @transform_18(%arg0: i32) -> (i32, i32) {
    %c0_i32 = arith.constant 0 : i32
    %c0_i32_0 = arith.constant 0 : i32
    return %arg0, %c0_i32 : i32, i32
  }
}

</mosaic_0001>

<llo_original>
// kernel: tpu_custom_call.1
$region0: #{tpu_custom_call.1}
  #allocation0 [shape = 'u32[]', space=smem, size = 0x4, offset = 0x4, fixed_abs, tag = 'smem constant byte address 0x4 - core index']
  #allocation1 [shape = 'u32[144,128]{1,0:T(1,128)}', space=vmem, size = 0x12000, scoped, tag = 'internal scratch']
  %s0 = inlined_call_operand.vmem [shape: f32[256,4], index: 0, kind: input, shape index: {}]
  %s1 = inlined_call_operand.vmem [shape: f32[128,32], index: 1, kind: input, shape index: {}]
  %s2 = inlined_call_operand.vmem [shape: f32[256,128], index: 2, kind: input, shape index: {}]
  %s3 = inlined_call_operand.vmem [shape: bf16[16,128], index: 3, kind: input, shape index: {}]
  %s4 = inlined_call_operand.vmem [shape: bf16[4,32], index: 4, kind: input, shape index: {}]
  %s5 = inlined_call_operand.vmem [shape: bf16[2,32,96], index: 5, kind: input, shape index: {}]
  %s6 = inlined_call_operand.vmem [shape: f32[2,1,96], index: 6, kind: input, shape index: {}]
  %s7 = inlined_call_operand.vmem [shape: bf16[2,32,32], index: 7, kind: input, shape index: {}]
  %s8 = inlined_call_operand.vmem [shape: f32[2,1,32], index: 8, kind: input, shape index: {}]
  %s9 = inlined_call_operand.vmem [shape: f32[2,1,32], index: 9, kind: input, shape index: {}]
  %s10 = inlined_call_operand.vmem [shape: f32[2,1,32], index: 10, kind: input, shape index: {}]
  %s11 = inlined_call_operand.vmem [shape: f32[2,1,32], index: 11, kind: input, shape index: {}]
  %s12 = inlined_call_operand.vmem [shape: f32[2,1,32], index: 12, kind: input, shape index: {}]
  %s13 = inlined_call_operand.vmem [shape: bf16[2,32,64], index: 13, kind: input, shape index: {}]
  %s14 = inlined_call_operand.vmem [shape: f32[2,1,64], index: 14, kind: input, shape index: {}]
  %s15 = inlined_call_operand.vmem [shape: bf16[2,64,32], index: 15, kind: input, shape index: {}]
  %s16 = inlined_call_operand.vmem [shape: f32[2,1,32], index: 16, kind: input, shape index: {}]
  %s17 = inlined_call_operand.vmem [shape: f32[256,32], index: 17, kind: output, shape index: {0}]
  %s18 = inlined_call_operand.hbm [shape: f32[32,32], index: 18, kind: output, shape index: {1}]
  %19 = xla_tuple %s17, %s18
  %s20 = sld [smem:[#allocation0]]
  $region109: #{tpu_custom_call.1} parent=0
    _
  %s22 = ssub.s32 1, %s20
  %s23 = scalar_select 0, %s22, %s20
  $region1: #{tpu_custom_call.1} parent=0
    #allocation2 [shape = 'u8[16384]{0}', space=vmem, size = 0x4000, scoped, tag = 'output window, operand 1']
    #allocation3 [shape = 's32[2]{0}', space=sflag, size = 0x8, scoped, tag = 'scoped memory for tpu_custom_call.1']
    %24 = vsyncpa [#allocation3], 0
    %s25 = scalar_lea.sflag [#allocation3], 1
    %26 = vsyncpa %s25, 0
    loop: start=0, step=1, limit=4
    $region2: #{tpu_custom_call.1} parent=1 // loop_pre_header
      _
    $region3: #{tpu_custom_call.1} parent=1 // loop_header
      %s28 = sphi 0, %s32
      %p29 = scmp.ge.s32.totalorder %s28, 4
      %s38 = sphi 0, %s40
      %s41 = sphi 0, %s38
      %s42 = sphi 0, %s41
      %s58 = sphi 0, %s42
      %s62 = sphi 0, %s62
      %s64 = sphi 0, %s62
      %s65 = sphi 0, %s64
      %s79 = sphi 0, %s65
      %s85 = sphi 0, %s87
      %s88 = sphi 0, %s85
      %s89 = sphi 0, %s88
      %s105 = sphi 0, %s89
      %s109 = sphi 0, %s109
      %s111 = sphi 0, %s109
      %s112 = sphi 0, %s111
      %s126 = sphi 0, %s112
      %s130 = sphi 0, %s130
      %s132 = sphi 0, %s130
      %s133 = sphi 0, %s132
      %s147 = sphi 0, %s133
      %s151 = sphi 0, %s151
      %s153 = sphi 0, %s151
      %s154 = sphi 0, %s153
      %s168 = sphi 0, %s154
      %s172 = sphi 0, %s172
      %s174 = sphi 0, %s172
      %s175 = sphi 0, %s174
      %s189 = sphi 0, %s175
      %s193 = sphi 0, %s193
      %s195 = sphi 0, %s193
      %s196 = sphi 0, %s195
      %s210 = sphi 0, %s196
      %s214 = sphi 0, %s214
      %s216 = sphi 0, %s214
      %s217 = sphi 0, %s216
      %s231 = sphi 0, %s217
      %s235 = sphi 0, %s235
      %s237 = sphi 0, %s235
      %s238 = sphi 0, %s237
      %s252 = sphi 0, %s238
      %s256 = sphi 0, %s256
      %s258 = sphi 0, %s256
      %s259 = sphi 0, %s258
      %s273 = sphi 0, %s259
      %s277 = sphi 0, %s277
      %s279 = sphi 0, %s277
      %s280 = sphi 0, %s279
      %s294 = sphi 0, %s280
      %s298 = sphi 0, %s298
      %s300 = sphi 0, %s298
      %s301 = sphi 0, %s300
      %s315 = sphi 0, %s301
      %s319 = sphi 0, %s319
      %s321 = sphi 0, %s319
      %s322 = sphi 0, %s321
      %s336 = sphi 0, %s322
      %s340 = sphi 0, %s340
      %s342 = sphi 0, %s340
      %s343 = sphi 0, %s342
      %s357 = sphi 0, %s343
      %s361 = sphi 0, %s361
      %s363 = sphi 0, %s361
      %s364 = sphi 0, %s363
      %s378 = sphi 0, %s364
      %s382 = sphi 0, %s382
      %s384 = sphi 0, %s382
      %s385 = sphi 0, %s384
      %s399 = sphi 0, %s385
      %s405 = sphi 0, %s407
      %s408 = sphi 0, %s405
      %s409 = sphi 0, %s408
      %s425 = sphi 0, %s409
      %s431 = sphi 0, %s433
      %s434 = sphi 0, %s431
      %s435 = sphi 0, %s434
      %s451 = sphi 0, %s435
    $region4: #{tpu_custom_call.1} parent=1 // loop_header_branch
      %31 = sbr.rel (%p29) target = $region8
    $region5: #{tpu_custom_call.1} parent=1 // loop_body
      %s33 = ssub.s32 %s28, 1
      %s34 = ssub.s32 %s28, 2
      %s35 = sadd.s32 %s28, 1
      %s36 = ssub.s32 %s28, %s35
      %p37 = scmp.eq.s32.totalorder %s36, 0
      %s39 = sadd.s32 %s38, 1
      %s40 = scalar_select %p37, %s38, %s39
      %p43 = pneg %p37
      %p44 = scmp.eq.s32.totalorder %s28, 1
      %p45 = por %p43, %p44
      %p46 = scmp.ne.s32.totalorder %s38, %s41
      %p47 = scmp.eq.s32.totalorder %s28, 0
      %p48 = por %p46, %p47
      %p49 = scmp.ne.s32.totalorder %s38, %s41
      %p50 = scmp.eq.s32.totalorder %s33, 1
      %p51 = por %p49, %p50
      %p52 = scmp.ne.s32.totalorder %s41, %s42
      %p53 = scmp.eq.s32.totalorder %s33, 0
      %p54 = por %p52, %p53
      %p55 = scmp.ne.s32.totalorder %s41, %s42
      %p56 = scmp.eq.s32.totalorder %s34, 1
      %p57 = por %p55, %p56
      %p59 = scmp.ne.s32.totalorder %s42, %s58
      %p60 = scmp.eq.s32.totalorder %s34, 0
      %p61 = por %p59, %p60
      %s63 = sadd.s32 %s62, 1
      %p66 = scmp.eq.s32.totalorder %s28, 1
      %p67 = scmp.ne.s32.totalorder %s62, %s64
      %p68 = scmp.eq.s32.totalorder %s28, 0
      %p69 = por %p67, %p68
      %p70 = scmp.ne.s32.totalorder %s62, %s64
      %p71 = scmp.eq.s32.totalorder %s33, 1
      %p72 = por %p70, %p71
      %p73 = scmp.ne.s32.totalorder %s64, %s65
      %p74 = scmp.eq.s32.totalorder %s33, 0
      %p75 = por %p73, %p74
      %p76 = scmp.ne.s32.totalorder %s64, %s65
      %p77 = scmp.eq.s32.totalorder %s34, 1
      %p78 = por %p76, %p77
      %p80 = scmp.ne.s32.totalorder %s65, %s79
      %p81 = scmp.eq.s32.totalorder %s34, 0
      %p82 = por %p80, %p81
      %s83 = ssub.s32 %s28, %s35
      %p84 = scmp.eq.s32.totalorder %s83, 0
      %s86 = sadd.s32 %s85, 1
      %s87 = scalar_select %p84, %s85, %s86
      %p90 = pneg %p84
      %p91 = scmp.eq.s32.totalorder %s28, 1
      %p92 = por %p90, %p91
      %p93 = scmp.ne.s32.totalorder %s85, %s88
      %p94 = scmp.eq.s32.totalorder %s28, 0
      %p95 = por %p93, %p94
      %p96 = scmp.ne.s32.totalorder %s85, %s88
      %p97 = scmp.eq.s32.totalorder %s33, 1
      %p98 = por %p96, %p97
      %p99 = scmp.ne.s32.totalorder %s88, %s89
      %p100 = scmp.eq.s32.totalorder %s33, 0
      %p101 = por %p99, %p100
      %p102 = scmp.ne.s32.totalorder %s88, %s89
      %p103 = scmp.eq.s32.totalorder %s34, 1
      %p104 = por %p102, %p103
      %p106 = scmp.ne.s32.totalorder %s89, %s105
      %p107 = scmp.eq.s32.totalorder %s34, 0
      %p108 = por %p106, %p107
      %s110 = sadd.s32 %s109, 1
      %p113 = scmp.eq.s32.totalorder %s28, 1
      %p114 = scmp.ne.s32.totalorder %s109, %s111
      %p115 = scmp.eq.s32.totalorder %s28, 0
      %p116 = por %p114, %p115
      %p117 = scmp.ne.s32.totalorder %s109, %s111
      %p118 = scmp.eq.s32.totalorder %s33, 1
      %p119 = por %p117, %p118
      %p120 = scmp.ne.s32.totalorder %s111, %s112
      %p121 = scmp.eq.s32.totalorder %s33, 0
      %p122 = por %p120, %p121
      %p123 = scmp.ne.s32.totalorder %s111, %s112
      %p124 = scmp.eq.s32.totalorder %s34, 1
      %p125 = por %p123, %p124
      %p127 = scmp.ne.s32.totalorder %s112, %s126
      %p128 = scmp.eq.s32.totalorder %s34, 0
      %p129 = por %p127, %p128
      %s131 = sadd.s32 %s130, 1
      %p134 = scmp.eq.s32.totalorder %s28, 1
      %p135 = scmp.ne.s32.totalorder %s130, %s132
      %p136 = scmp.eq.s32.totalorder %s28, 0
      %p137 = por %p135, %p136
      %p138 = scmp.ne.s32.totalorder %s130, %s132
      %p139 = scmp.eq.s32.totalorder %s33, 1
      %p140 = por %p138, %p139
      %p141 = scmp.ne.s32.totalorder %s132, %s133
      %p142 = scmp.eq.s32.totalorder %s33, 0
      %p143 = por %p141, %p142
      %p144 = scmp.ne.s32.totalorder %s132, %s133
      %p145 = scmp.eq.s32.totalorder %s34, 1
      %p146 = por %p144, %p145
      %p148 = scmp.ne.s32.totalorder %s133, %s147
      %p149 = scmp.eq.s32.totalorder %s34, 0
      %p150 = por %p148, %p149
      %s152 = sadd.s32 %s151, 1
      %p155 = scmp.eq.s32.totalorder %s28, 1
      %p156 = scmp.ne.s32.totalorder %s151, %s153
      %p157 = scmp.eq.s32.totalorder %s28, 0
      %p158 = por %p156, %p157
      %p159 = scmp.ne.s32.totalorder %s151, %s153
      %p160 = scmp.eq.s32.totalorder %s33, 1
      %p161 = por %p159, %p160
      %p162 = scmp.ne.s32.totalorder %s153, %s154
      %p163 = scmp.eq.s32.totalorder %s33, 0
      %p164 = por %p162, %p163
      %p165 = scmp.ne.s32.totalorder %s153, %s154
      %p166 = scmp.eq.s32.totalorder %s34, 1
      %p167 = por %p165, %p166
      %p169 = scmp.ne.s32.totalorder %s154, %s168
      %p170 = scmp.eq.s32.totalorder %s34, 0
      %p171 = por %p169, %p170
      %s173 = sadd.s32 %s172, 1
      %p176 = scmp.eq.s32.totalorder %s28, 1
      %p177 = scmp.ne.s32.totalorder %s172, %s174
      %p178 = scmp.eq.s32.totalorder %s28, 0
      %p179 = por %p177, %p178
      %p180 = scmp.ne.s32.totalorder %s172, %s174
      %p181 = scmp.eq.s32.totalorder %s33, 1
      %p182 = por %p180, %p181
      %p183 = scmp.ne.s32.totalorder %s174, %s175
      %p184 = scmp.eq.s32.totalorder %s33, 0
      %p185 = por %p183, %p184
      %p186 = scmp.ne.s32.totalorder %s174, %s175
      %p187 = scmp.eq.s32.totalorder %s34, 1
      %p188 = por %p186, %p187
      %p190 = scmp.ne.s32.totalorder %s175, %s189
      %p191 = scmp.eq.s32.totalorder %s34, 0
      %p192 = por %p190, %p191
      %s194 = sadd.s32 %s193, 1
      %p197 = scmp.eq.s32.totalorder %s28, 1
      %p198 = scmp.ne.s32.totalorder %s193, %s195
      %p199 = scmp.eq.s32.totalorder %s28, 0
      %p200 = por %p198, %p199
      %p201 = scmp.ne.s32.totalorder %s193, %s195
      %p202 = scmp.eq.s32.totalorder %s33, 1
      %p203 = por %p201, %p202
      %p204 = scmp.ne.s32.totalorder %s195, %s196
      %p205 = scmp.eq.s32.totalorder %s33, 0
      %p206 = por %p204, %p205
      %p207 = scmp.ne.s32.totalorder %s195, %s196
      %p208 = scmp.eq.s32.totalorder %s34, 1
      %p209 = por %p207, %p208
      %p211 = scmp.ne.s32.totalorder %s196, %s210
      %p212 = scmp.eq.s32.totalorder %s34, 0
      %p213 = por %p211, %p212
      %s215 = sadd.s32 %s214, 1
      %p218 = scmp.eq.s32.totalorder %s28, 1
      %p219 = scmp.ne.s32.totalorder %s214, %s216
      %p220 = scmp.eq.s32.totalorder %s28, 0
      %p221 = por %p219, %p220
      %p222 = scmp.ne.s32.totalorder %s214, %s216
      %p223 = scmp.eq.s32.totalorder %s33, 1
      %p224 = por %p222, %p223
      %p225 = scmp.ne.s32.totalorder %s216, %s217
      %p226 = scmp.eq.s32.totalorder %s33, 0
      %p227 = por %p225, %p226
      %p228 = scmp.ne.s32.totalorder %s216, %s217
      %p229 = scmp.eq.s32.totalorder %s34, 1
      %p230 = por %p228, %p229
      %p232 = scmp.ne.s32.totalorder %s217, %s231
      %p233 = scmp.eq.s32.totalorder %s34, 0
      %p234 = por %p232, %p233
      %s236 = sadd.s32 %s235, 1
      %p239 = scmp.eq.s32.totalorder %s28, 1
      %p240 = scmp.ne.s32.totalorder %s235, %s237
      %p241 = scmp.eq.s32.totalorder %s28, 0
      %p242 = por %p240, %p241
      %p243 = scmp.ne.s32.totalorder %s235, %s237
      %p244 = scmp.eq.s32.totalorder %s33, 1
      %p245 = por %p243, %p244
      %p246 = scmp.ne.s32.totalorder %s237, %s238
      %p247 = scmp.eq.s32.totalorder %s33, 0
      %p248 = por %p246, %p247
      %p249 = scmp.ne.s32.totalorder %s237, %s238
      %p250 = scmp.eq.s32.totalorder %s34, 1
      %p251 = por %p249, %p250
      %p253 = scmp.ne.s32.totalorder %s238, %s252
      %p254 = scmp.eq.s32.totalorder %s34, 0
      %p255 = por %p253, %p254
      %s257 = sadd.s32 %s256, 1
      %p260 = scmp.eq.s32.totalorder %s28, 1
      %p261 = scmp.ne.s32.totalorder %s256, %s258
      %p262 = scmp.eq.s32.totalorder %s28, 0
      %p263 = por %p261, %p262
      %p264 = scmp.ne.s32.totalorder %s256, %s258
      %p265 = scmp.eq.s32.totalorder %s33, 1
      %p266 = por %p264, %p265
      %p267 = scmp.ne.s32.totalorder %s258, %s259
      %p268 = scmp.eq.s32.totalorder %s33, 0
      %p269 = por %p267, %p268
      %p270 = scmp.ne.s32.totalorder %s258, %s259
      %p271 = scmp.eq.s32.totalorder %s34, 1
      %p272 = por %p270, %p271
      %p274 = scmp.ne.s32.totalorder %s259, %s273
      %p275 = scmp.eq.s32.totalorder %s34, 0
      %p276 = por %p274, %p275
      %s278 = sadd.s32 %s277, 1
      %p281 = scmp.eq.s32.totalorder %s28, 1
      %p282 = scmp.ne.s32.totalorder %s277, %s279
      %p283 = scmp.eq.s32.totalorder %s28, 0
      %p284 = por %p282, %p283
      %p285 = scmp.ne.s32.totalorder %s277, %s279
      %p286 = scmp.eq.s32.totalorder %s33, 1
      %p287 = por %p285, %p286
      %p288 = scmp.ne.s32.totalorder %s279, %s280
      %p289 = scmp.eq.s32.totalorder %s33, 0
      %p290 = por %p288, %p289
      %p291 = scmp.ne.s32.totalorder %s279, %s280
      %p292 = scmp.eq.s32.totalorder %s34, 1
      %p293 = por %p291, %p292
      %p295 = scmp.ne.s32.totalorder %s280, %s294
      %p296 = scmp.eq.s32.totalorder %s34, 0
      %p297 = por %p295, %p296
      %s299 = sadd.s32 %s298, 1
      %p302 = scmp.eq.s32.totalorder %s28, 1
      %p303 = scmp.ne.s32.totalorder %s298, %s300
      %p304 = scmp.eq.s32.totalorder %s28, 0
      %p305 = por %p303, %p304
      %p306 = scmp.ne.s32.totalorder %s298, %s300
      %p307 = scmp.eq.s32.totalorder %s33, 1
      %p308 = por %p306, %p307
      %p309 = scmp.ne.s32.totalorder %s300, %s301
      %p310 = scmp.eq.s32.totalorder %s33, 0
      %p311 = por %p309, %p310
      %p312 = scmp.ne.s32.totalorder %s300, %s301
      %p313 = scmp.eq.s32.totalorder %s34, 1
      %p314 = por %p312, %p313
      %p316 = scmp.ne.s32.totalorder %s301, %s315
      %p317 = scmp.eq.s32.totalorder %s34, 0
      %p318 = por %p316, %p317
      %s320 = sadd.s32 %s319, 1
      %p323 = scmp.eq.s32.totalorder %s28, 1
      %p324 = scmp.ne.s32.totalorder %s319, %s321
      %p325 = scmp.eq.s32.totalorder %s28, 0
      %p326 = por %p324, %p325
      %p327 = scmp.ne.s32.totalorder %s319, %s321
      %p328 = scmp.eq.s32.totalorder %s33, 1
      %p329 = por %p327, %p328
      %p330 = scmp.ne.s32.totalorder %s321, %s322
      %p331 = scmp.eq.s32.totalorder %s33, 0
      %p332 = por %p330, %p331
      %p333 = scmp.ne.s32.totalorder %s321, %s322
      %p334 = scmp.eq.s32.totalorder %s34, 1
      %p335 = por %p333, %p334
      %p337 = scmp.ne.s32.totalorder %s322, %s336
      %p338 = scmp.eq.s32.totalorder %s34, 0
      %p339 = por %p337, %p338
      %s341 = sadd.s32 %s340, 1
      %p344 = scmp.eq.s32.totalorder %s28, 1
      %p345 = scmp.ne.s32.totalorder %s340, %s342
      %p346 = scmp.eq.s32.totalorder %s28, 0
      %p347 = por %p345, %p346
      %p348 = scmp.ne.s32.totalorder %s340, %s342
      %p349 = scmp.eq.s32.totalorder %s33, 1
      %p350 = por %p348, %p349
      %p351 = scmp.ne.s32.totalorder %s342, %s343
      %p352 = scmp.eq.s32.totalorder %s33, 0
      %p353 = por %p351, %p352
      %p354 = scmp.ne.s32.totalorder %s342, %s343
      %p355 = scmp.eq.s32.totalorder %s34, 1
      %p356 = por %p354, %p355
      %p358 = scmp.ne.s32.totalorder %s343, %s357
      %p359 = scmp.eq.s32.totalorder %s34, 0
      %p360 = por %p358, %p359
      %s362 = sadd.s32 %s361, 1
      %p365 = scmp.eq.s32.totalorder %s28, 1
      %p366 = scmp.ne.s32.totalorder %s361, %s363
      %p367 = scmp.eq.s32.totalorder %s28, 0
      %p368 = por %p366, %p367
      %p369 = scmp.ne.s32.totalorder %s361, %s363
      %p370 = scmp.eq.s32.totalorder %s33, 1
      %p371 = por %p369, %p370
      %p372 = scmp.ne.s32.totalorder %s363, %s364
      %p373 = scmp.eq.s32.totalorder %s33, 0
      %p374 = por %p372, %p373
      %p375 = scmp.ne.s32.totalorder %s363, %s364
      %p376 = scmp.eq.s32.totalorder %s34, 1
      %p377 = por %p375, %p376
      %p379 = scmp.ne.s32.totalorder %s364, %s378
      %p380 = scmp.eq.s32.totalorder %s34, 0
      %p381 = por %p379, %p380
      %s383 = sadd.s32 %s382, 1
      %p386 = scmp.eq.s32.totalorder %s28, 1
      %p387 = scmp.ne.s32.totalorder %s382, %s384
      %p388 = scmp.eq.s32.totalorder %s28, 0
      %p389 = por %p387, %p388
      %p390 = scmp.ne.s32.totalorder %s382, %s384
      %p391 = scmp.eq.s32.totalorder %s33, 1
      %p392 = por %p390, %p391
      %p393 = scmp.ne.s32.totalorder %s384, %s385
      %p394 = scmp.eq.s32.totalorder %s33, 0
      %p395 = por %p393, %p394
      %p396 = scmp.ne.s32.totalorder %s384, %s385
      %p397 = scmp.eq.s32.totalorder %s34, 1
      %p398 = por %p396, %p397
      %p400 = scmp.ne.s32.totalorder %s385, %s399
      %p401 = scmp.eq.s32.totalorder %s34, 0
      %p402 = por %p400, %p401
      %s403 = ssub.s32 %s28, %s35
      %p404 = scmp.eq.s32.totalorder %s403, 0
      %s406 = sadd.s32 %s405, 1
      %s407 = scalar_select %p404, %s405, %s406
      %p410 = pneg %p404
      %p411 = scmp.eq.s32.totalorder %s28, 1
      %p412 = por %p410, %p411
      %p413 = scmp.ne.s32.totalorder %s405, %s408
      %p414 = scmp.eq.s32.totalorder %s28, 0
      %p415 = por %p413, %p414
      %p416 = scmp.ne.s32.totalorder %s405, %s408
      %p417 = scmp.eq.s32.totalorder %s33, 1
      %p418 = por %p416, %p417
      %p419 = scmp.ne.s32.totalorder %s408, %s409
      %p420 = scmp.eq.s32.totalorder %s33, 0
      %p421 = por %p419, %p420
      %p422 = scmp.ne.s32.totalorder %s408, %s409
      %p423 = scmp.eq.s32.totalorder %s34, 1
      %p424 = por %p422, %p423
      %p426 = scmp.ne.s32.totalorder %s409, %s425
      %p427 = scmp.eq.s32.totalorder %s34, 0
      %p428 = por %p426, %p427
      %s429 = ssub.s32 %s28, %s35
      %p430 = scmp.eq.s32.totalorder %s429, 0
      %s432 = sadd.s32 %s431, 1
      %s433 = scalar_select %p430, %s431, %s432
      %p436 = pneg %p430
      %p437 = scmp.eq.s32.totalorder %s28, 1
      %p438 = por %p436, %p437
      %p439 = scmp.ne.s32.totalorder %s431, %s434
      %p440 = scmp.eq.s32.totalorder %s28, 0
      %p441 = por %p439, %p440
      %p442 = scmp.ne.s32.totalorder %s431, %s434
      %p443 = scmp.eq.s32.totalorder %s33, 1
      %p444 = por %p442, %p443
      %p445 = scmp.ne.s32.totalorder %s434, %s435
      %p446 = scmp.eq.s32.totalorder %s33, 0
      %p447 = por %p445, %p446
      %p448 = scmp.ne.s32.totalorder %s434, %s435
      %p449 = scmp.eq.s32.totalorder %s34, 1
      %p450 = por %p448, %p449
      %p452 = scmp.ne.s32.totalorder %s435, %s451
      %p453 = scmp.eq.s32.totalorder %s34, 0
      %p454 = por %p452, %p453
      %p455 = scmp.le.s32.totalorder 1, %s28
      %p456 = scmp.lt.s32.totalorder %s28, 3
      %p457 = pnand %p455, %p456
      %p458 = pneg %p457
      // Predicated region
      $region9: #{tpu_custom_call.1} parent=5 // pred_check
        _
      $region10: #{tpu_custom_call.1} parent=5 // pred_check_branch
        %460 = sbr.rel (%p457) target = $region12
      $region11: #{tpu_custom_call.1} parent=5 // pred_region
        %s461 = ssub.s32 %s28, 1
        // Predicated region
        $region13: #{tpu_custom_call.1} parent=11 // pred_check
          %p462 = pneg %p75
        $region14: #{tpu_custom_call.1} parent=11 // pred_check_branch
          %464 = sbr.rel (%p462) target = $region16
        $region15: #{tpu_custom_call.1} parent=11 // pred_region
          _
        $region16: #{tpu_custom_call.1} parent=11 // pred_fallthru
          _
        // Predicated region
        $region17: #{tpu_custom_call.1} parent=11 // pred_check
          %p465 = pneg %p122
        $region18: #{tpu_custom_call.1} parent=11 // pred_check_branch
          %467 = sbr.rel (%p465) target = $region20
        $region19: #{tpu_custom_call.1} parent=11 // pred_region
          _
        $region20: #{tpu_custom_call.1} parent=11 // pred_fallthru
          _
        // Predicated region
        $region21: #{tpu_custom_call.1} parent=11 // pred_check
          %p468 = pneg %p143
        $region22: #{tpu_custom_call.1} parent=11 // pred_check_branch
          %470 = sbr.rel (%p468) target = $region24
        $region23: #{tpu_custom_call.1} parent=11 // pred_region
          _
        $region24: #{tpu_custom_call.1} parent=11 // pred_fallthru
          _
        // Predicated region
        $region25: #{tpu_custom_call.1} parent=11 // pred_check
          %p471 = pneg %p164
        $region26: #{tpu_custom_call.1} parent=11 // pred_check_branch
          %473 = sbr.rel (%p471) target = $region28
        $region27: #{tpu_custom_call.1} parent=11 // pred_region
          _
        $region28: #{tpu_custom_call.1} parent=11 // pred_fallthru
          _
        // Predicated region
        $region29: #{tpu_custom_call.1} parent=11 // pred_check
          %p474 = pneg %p185
        $region30: #{tpu_custom_call.1} parent=11 // pred_check_branch
          %476 = sbr.rel (%p474) target = $region32
        $region31: #{tpu_custom_call.1} parent=11 // pred_region
          _
        $region32: #{tpu_custom_call.1} parent=11 // pred_fallthru
          _
        // Predicated region
        $region33: #{tpu_custom_call.1} parent=11 // pred_check
          %p477 = pneg %p206
        $region34: #{tpu_custom_call.1} parent=11 // pred_check_branch
          %479 = sbr.rel (%p477) target = $region36
        $region35: #{tpu_custom_call.1} parent=11 // pred_region
          _
        $region36: #{tpu_custom_call.1} parent=11 // pred_fallthru
          _
        // Predicated region
        $region37: #{tpu_custom_call.1} parent=11 // pred_check
          %p480 = pneg %p227
        $region38: #{tpu_custom_call.1} parent=11 // pred_check_branch
          %482 = sbr.rel (%p480) target = $region40
        $region39: #{tpu_custom_call.1} parent=11 // pred_region
          _
        $region40: #{tpu_custom_call.1} parent=11 // pred_fallthru
          _
        // Predicated region
        $region41: #{tpu_custom_call.1} parent=11 // pred_check
          %p483 = pneg %p248
        $region42: #{tpu_custom_call.1} parent=11 // pred_check_branch
          %485 = sbr.rel (%p483) target = $region44
        $region43: #{tpu_custom_call.1} parent=11 // pred_region
          _
        $region44: #{tpu_custom_call.1} parent=11 // pred_fallthru
          _
        // Predicated region
        $region45: #{tpu_custom_call.1} parent=11 // pred_check
          %p486 = pneg %p269
        $region46: #{tpu_custom_call.1} parent=11 // pred_check_branch
          %488 = sbr.rel (%p486) target = $region48
        $region47: #{tpu_custom_call.1} parent=11 // pred_region
          _
        $region48: #{tpu_custom_call.1} parent=11 // pred_fallthru
          _
        // Predicated region
        $region49: #{tpu_custom_call.1} parent=11 // pred_check
          %p489 = pneg %p290
        $region50: #{tpu_custom_call.1} parent=11 // pred_check_branch
          %491 = sbr.rel (%p489) target = $region52
        $region51: #{tpu_custom_call.1} parent=11 // pred_region
          _
        $region52: #{tpu_custom_call.1} parent=11 // pred_fallthru
          _
        // Predicated region
        $region53: #{tpu_custom_call.1} parent=11 // pred_check
          %p492 = pneg %p311
        $region54: #{tpu_custom_call.1} parent=11 // pred_check_branch
          %494 = sbr.rel (%p492) target = $region56
        $region55: #{tpu_custom_call.1} parent=11 // pred_region
          _
        $region56: #{tpu_custom_call.1} parent=11 // pred_fallthru
          _
        // Predicated region
        $region57: #{tpu_custom_call.1} parent=11 // pred_check
          %p495 = pneg %p332
        $region58: #{tpu_custom_call.1} parent=11 // pred_check_branch
          %497 = sbr.rel (%p495) target = $region60
        $region59: #{tpu_custom_call.1} parent=11 // pred_region
          _
        $region60: #{tpu_custom_call.1} parent=11 // pred_fallthru
          _
        // Predicated region
        $region61: #{tpu_custom_call.1} parent=11 // pred_check
          %p498 = pneg %p353
        $region62: #{tpu_custom_call.1} parent=11 // pred_check_branch
          %500 = sbr.rel (%p498) target = $region64
        $region63: #{tpu_custom_call.1} parent=11 // pred_region
          _
        $region64: #{tpu_custom_call.1} parent=11 // pred_fallthru
          _
        // Predicated region
        $region65: #{tpu_custom_call.1} parent=11 // pred_check
          %p501 = pneg %p374
        $region66: #{tpu_custom_call.1} parent=11 // pred_check_branch
          %503 = sbr.rel (%p501) target = $region68
        $region67: #{tpu_custom_call.1} parent=11 // pred_region
          _
        $region68: #{tpu_custom_call.1} parent=11 // pred_fallthru
          _
        // Predicated region
        $region69: #{tpu_custom_call.1} parent=11 // pred_check
          %p504 = pneg %p395
        $region70: #{tpu_custom_call.1} parent=11 // pred_check_branch
          %506 = sbr.rel (%p504) target = $region72
        $region71: #{tpu_custom_call.1} parent=11 // pred_region
          _
        $region72: #{tpu_custom_call.1} parent=11 // pred_fallthru
          _
      $region12: #{tpu_custom_call.1} parent=5 // pred_fallthru
        _
      %p507 = scmp.lt.s32.totalorder %s28, 2
      // Predicated region
      $region73: #{tpu_custom_call.1} parent=5 // pred_check
        %p508 = pneg %p507
      $region74: #{tpu_custom_call.1} parent=5 // pred_check_branch
        %510 = sbr.rel (%p508) target = $region76
      $region75: #{tpu_custom_call.1} parent=5 // pred_region
        // Predicated region
        $region77: #{tpu_custom_call.1} parent=75 // pred_check
          %p511 = pneg %p48
        $region78: #{tpu_custom_call.1} parent=75 // pred_check_branch
          %513 = sbr.rel (%p511) target = $region80
        $region79: #{tpu_custom_call.1} parent=75 // pred_region
          %s514 = smul.u32 16, %s28
          %p515 = scmp.lt.s32.totalorder %s514, 31
          %s516 = scalar_select %p515, %s514, 31
          %s517 = smul.addr %s516, 8
          %s518 = scalar_lea.vmem %s0, %s517
          %s519 = smul.u32 16, %s28
        $region80: #{tpu_custom_call.1} parent=75 // pred_fallthru
          _
        // Predicated region
        $region81: #{tpu_custom_call.1} parent=75 // pred_check
          %p520 = pneg %p95
        $region82: #{tpu_custom_call.1} parent=75 // pred_check_branch
          %522 = sbr.rel (%p520) target = $region84
        $region83: #{tpu_custom_call.1} parent=75 // pred_region
          %s523 = smul.u32 16, %s28
          %p524 = scmp.lt.s32.totalorder %s523, 31
          %s525 = scalar_select %p524, %s523, 31
          %s526 = smul.addr %s525, 8
          %s527 = scalar_lea.vmem %s2, %s526
          %s528 = smul.u32 16, %s28
        $region84: #{tpu_custom_call.1} parent=75 // pred_fallthru
          _
      $region76: #{tpu_custom_call.1} parent=5 // pred_fallthru
        _
      %p529 = scmp.le.s32.totalorder 1, %s28
      %p530 = scmp.lt.s32.totalorder %s28, 3
      %p531 = pnand %p529, %p530
      %p532 = pneg %p531
      // Predicated region
      $region85: #{tpu_custom_call.1} parent=5 // pred_check
        _
      $region86: #{tpu_custom_call.1} parent=5 // pred_check_branch
        %534 = sbr.rel (%p531) target = $region88
      $region87: #{tpu_custom_call.1} parent=5 // pred_region
        %s535 = ssub.s32 %s28, 1
        %s536 = smul.u32 16, %s33
        %p537 = scmp.lt.s32.totalorder %s536, 31
        %s538 = scalar_select %p537, %s536, 31
        %s539 = smul.addr %s538, 8
        %s540 = scalar_lea.vmem %s0, %s539
        %p541 = pneg %p54
        %p542 = pneg %p51
        %p543 = pneg %p75
        %p544 = pneg %p72
        %s545 = smul.u32 16, %s33
        %p546 = scmp.lt.s32.totalorder %s545, 31
        %s547 = scalar_select %p546, %s545, 31
        %s548 = smul.addr %s547, 8
        %s549 = scalar_lea.vmem %s2, %s548
        %p550 = pneg %p101
        %p551 = pneg %p98
        %p552 = pneg %p122
        %p553 = pneg %p119
        %p554 = pneg %p143
        %p555 = pneg %p140
        %p556 = pneg %p164
        %p557 = pneg %p161
        %p558 = pneg %p185
        %p559 = pneg %p182
        %p560 = pneg %p206
        %p561 = pneg %p203
        %p562 = pneg %p227
        %p563 = pneg %p224
        %p564 = pneg %p248
        %p565 = pneg %p245
        %p566 = pneg %p269
        %p567 = pneg %p266
        %p568 = pneg %p290
        %p569 = pneg %p287
        %p570 = pneg %p311
        %p571 = pneg %p308
        %p572 = pneg %p332
        %p573 = pneg %p329
        %p574 = pneg %p353
        %p575 = pneg %p350
        %p576 = pneg %p374
        %p577 = pneg %p371
        %p578 = pneg %p395
        %p579 = pneg %p392
        %p580 = pneg %p421
        %p581 = pneg %p418
        %s582 = smul.u32 16, %s33
        %p583 = scmp.lt.s32.totalorder %s582, 31
        %s584 = scalar_select %p583, %s582, 31
        %s585 = smul.addr %s584, 8
        %s586 = scalar_lea.vmem %s17, %s585
        %p587 = pneg %p447
        %p588 = pneg %p444
        %s589 = sand.u32 %s434, 1
        %s590 = scalar_lea.sflag [#allocation3], %s589
        %s591 = sand.u32 %s434, 1
        %s592 = smul.addr %s591, 16
        %s593 = scalar_lea.vmem [#allocation2], %s592
        %s594 = smul.u32 16, %s33
        %p595 = scmp.lt.s32.totalorder %s594, 31
        %s596 = scalar_select %p595, %s594, 31
        %s597 = smul.addr %s596, 8
        %s598 = scalar_lea.vmem %s0, %s597
        %s599 = smul.u32 16, %s33
        %s600 = smul.u32 16, %s33
        %p601 = scmp.lt.s32.totalorder %s600, 31
        %s602 = scalar_select %p601, %s600, 31
        %s603 = smul.addr %s602, 8
        %s604 = scalar_lea.vmem %s2, %s603
        %s605 = smul.u32 16, %s33
        %s606 = smul.u32 16, %s33
        %p607 = scmp.lt.s32.totalorder %s606, 31
        %s608 = scalar_select %p607, %s606, 31
        %s609 = smul.addr %s608, 8
        %s610 = scalar_lea.vmem %s17, %s609
        %s611 = smul.u32 16, %s33
        %s612 = smul.u32 2, %s33
        %v614 = vld [vmem:[%s604] sm:$0xff]
        %v615 = vld [vmem:[%s604 + $0x8] sm:$0xff]
        %v616 = vld [vmem:[%s604 + $0x10] sm:$0xff]
        %v617 = vld [vmem:[%s604 + $0x18] sm:$0xff]
        %v618 = vld [vmem:[%s604 + $0x20] sm:$0xff]
        %v619 = vld [vmem:[%s604 + $0x28] sm:$0xff]
        %v620 = vld [vmem:[%s604 + $0x30] sm:$0xff]
        %v621 = vld [vmem:[%s604 + $0x38] sm:$0xff]
        %v622 = vld [vmem:[%s604 + $0x40] sm:$0xff]
        %v623 = vld [vmem:[%s604 + $0x48] sm:$0xff]
        %v624 = vld [vmem:[%s604 + $0x50] sm:$0xff]
        %v625 = vld [vmem:[%s604 + $0x58] sm:$0xff]
        %v626 = vld [vmem:[%s604 + $0x60] sm:$0xff]
        %v627 = vld [vmem:[%s604 + $0x68] sm:$0xff]
        %v628 = vld [vmem:[%s604 + $0x70] sm:$0xff]
        %v629 = vld [vmem:[%s604 + $0x78] sm:$0xff]
        %v630 = vld [vmem:[%s598] sm:$0xff]
        %v631 = vld [vmem:[%s598 + $0x8] sm:$0xff]
        %v632 = vld [vmem:[%s598 + $0x10] sm:$0xff]
        %v633 = vld [vmem:[%s598 + $0x18] sm:$0xff]
        %v634 = vld [vmem:[%s598 + $0x20] sm:$0xff]
        %v635 = vld [vmem:[%s598 + $0x28] sm:$0xff]
        %v636 = vld [vmem:[%s598 + $0x30] sm:$0xff]
        %v637 = vld [vmem:[%s598 + $0x38] sm:$0xff]
        %v638 = vld [vmem:[%s598 + $0x40] sm:$0xff]
        %v639 = vld [vmem:[%s598 + $0x48] sm:$0xff]
        %v640 = vld [vmem:[%s598 + $0x50] sm:$0xff]
        %v641 = vld [vmem:[%s598 + $0x58] sm:$0xff]
        %v642 = vld [vmem:[%s598 + $0x60] sm:$0xff]
        %v643 = vld [vmem:[%s598 + $0x68] sm:$0xff]
        %v644 = vld [vmem:[%s598 + $0x70] sm:$0xff]
        %v645 = vld [vmem:[%s598 + $0x78] sm:$0xff]
        %v646 = vpack.c.bf16 %v631, %v630
        %v647 = vpack.c.bf16 %v633, %v632
        %v648 = vpack.c.bf16 %v635, %v634
        %v649 = vpack.c.bf16 %v637, %v636
        %v650 = vpack.c.bf16 %v639, %v638
        %v651 = vpack.c.bf16 %v641, %v640
        %v652 = vpack.c.bf16 %v643, %v642
        %v653 = vpack.c.bf16 %v645, %v644
        %v654 = vld [vmem:[%s4] sm:$0x3]
        %v655 = vld [vmem:[%s1] sm:$0xff]
        %v656 = vld [vmem:[%s1 + $0x8] sm:$0xff]
        %v657 = vld [vmem:[%s1 + $0x10] sm:$0xff]
        %v658 = vld [vmem:[%s1 + $0x18] sm:$0xff]
        %v659 = vld [vmem:[%s1 + $0x20] sm:$0xff]
        %v660 = vld [vmem:[%s1 + $0x28] sm:$0xff]
        %v661 = vld [vmem:[%s1 + $0x30] sm:$0xff]
        %v662 = vld [vmem:[%s1 + $0x38] sm:$0xff]
        %v663 = vld [vmem:[%s1 + $0x40] sm:$0xff]
        %v664 = vld [vmem:[%s1 + $0x48] sm:$0xff]
        %v665 = vld [vmem:[%s1 + $0x50] sm:$0xff]
        %v666 = vld [vmem:[%s1 + $0x58] sm:$0xff]
        %v667 = vld [vmem:[%s1 + $0x60] sm:$0xff]
        %v668 = vld [vmem:[%s1 + $0x68] sm:$0xff]
        %v669 = vld [vmem:[%s1 + $0x70] sm:$0xff]
        %v670 = vld [vmem:[%s1 + $0x78] sm:$0xff]
        %vm671 = vcmask 31744
        %v673 = vsel %vm671, %v646, 0
        %v676 = vsel %vm671, %v647, 0
        %v679 = vsel %vm671, %v648, 0
        %v682 = vsel %vm671, %v649, 0
        %v685 = vsel %vm671, %v650, 0
        %v688 = vsel %vm671, %v651, 0
        %v691 = vsel %vm671, %v652, 0
        %v694 = vsel %vm671, %v653, 0
        %vm696 = vcmask 1041408
        %v698 = vsel %vm696, %v654, 0
        %700 = vmatprep.subr.bf16.mxu0 0
        %701 = vmatpush1.bf16.msra.mxu0 0
        %702 = vmatprep.subr.bf16.mxu0 0
        %703 = vmatpush1.bf16.msra.mxu0 0
        %704 = vmatprep.subr.bf16.mxu0 0
        %705 = vmatpush1.bf16.msra.mxu0 0
        %706 = vmatprep.subr.bf16.mxu0 0
        %707 = vmatpush1.bf16.msra.mxu0 0
        %708 = vmatprep.subr.bf16.mxu0 0
        %709 = vmatpush1.bf16.msra.mxu0 0
        %710 = vmatprep.subr.bf16.mxu0 0
        %711 = vmatpush1.bf16.msra.mxu0 0
        %712 = vmatprep.subr.bf16.mxu0 0
        %713 = vmatpush1.bf16.msra.mxu0 0
        %714 = vmatprep.subr.bf16.mxu0 0
        %715 = vmatpush1.bf16.msra.mxu0 %v698
        %716 = vmatprep.subr.bf16.mxu0 0
        %717 = vmatpush2.bf16.msra.mxu0 0
        %718 = vmatprep.subr.bf16.mxu0 0
        %719 = vmatpush2.bf16.msra.mxu0 0
        %720 = vmatprep.subr.bf16.mxu0 0
        %721 = vmatpush2.bf16.msra.mxu0 0
        %722 = vmatprep.subr.bf16.mxu0 0
        %723 = vmatpush2.bf16.msra.mxu0 0
        %724 = vmatprep.subr.bf16.mxu0 0
        %725 = vmatpush2.bf16.msra.mxu0 0
        %726 = vmatprep.subr.bf16.mxu0 0
        %727 = vmatpush2.bf16.msra.mxu0 0
        %728 = vmatprep.subr.bf16.mxu0 0
        %729 = vmatpush2.bf16.msra.mxu0 0
        %730 = vmatprep.subr.bf16.mxu0 0
        %731 = vmatpush2.bf16.msra.mxu0 0
        %732 = vmatprep.mubr.bf16.mxu0 0
        %733 = vmatmul.mubr.bf16.gmra.mxu0 %v673
        %v734 = vpop.f32.mrf.mxu0
        %v735 = vadd.f32 %v655, %v734
        %v736 = vpop.f32.mrf.mxu0
        %v737 = vpop.f32.mrf.mxu0
        %v738 = vadd.f32 %v656, %v737
        %v739 = vpop.f32.mrf.mxu0
        %740 = vmatprep.mubr.bf16.mxu0 0
        %741 = vmatmul.mubr.bf16.gmra.mxu0 %v676
        %v742 = vpop.f32.mrf.mxu0
        %v743 = vadd.f32 %v657, %v742
        %v744 = vpop.f32.mrf.mxu0
        %v745 = vpop.f32.mrf.mxu0
        %v746 = vadd.f32 %v658, %v745
        %v747 = vpop.f32.mrf.mxu0
        %748 = vmatprep.mubr.bf16.mxu0 0
        %749 = vmatmul.mubr.bf16.gmra.mxu0 %v679
        %v750 = vpop.f32.mrf.mxu0
        %v751 = vadd.f32 %v659, %v750
        %v752 = vpop.f32.mrf.mxu0
        %v753 = vpop.f32.mrf.mxu0
        %v754 = vadd.f32 %v660, %v753
        %v755 = vpop.f32.mrf.mxu0
        %756 = vmatprep.mubr.bf16.mxu0 0
        %757 = vmatmul.mubr.bf16.gmra.mxu0 %v682
        %v758 = vpop.f32.mrf.mxu0
        %v759 = vadd.f32 %v661, %v758
        %v760 = vpop.f32.mrf.mxu0
        %v761 = vpop.f32.mrf.mxu0
        %v762 = vadd.f32 %v662, %v761
        %v763 = vpop.f32.mrf.mxu0
        %764 = vmatprep.mubr.bf16.mxu0 0
        %765 = vmatmul.mubr.bf16.gmra.mxu0 %v685
        %v766 = vpop.f32.mrf.mxu0
        %v767 = vadd.f32 %v663, %v766
        %v768 = vpop.f32.mrf.mxu0
        %v769 = vpop.f32.mrf.mxu0
        %v770 = vadd.f32 %v664, %v769
        %v771 = vpop.f32.mrf.mxu0
        %772 = vmatprep.mubr.bf16.mxu0 0
        %773 = vmatmul.mubr.bf16.gmra.mxu0 %v688
        %v774 = vpop.f32.mrf.mxu0
        %v775 = vadd.f32 %v665, %v774
        %v776 = vpop.f32.mrf.mxu0
        %v777 = vpop.f32.mrf.mxu0
        %v778 = vadd.f32 %v666, %v777
        %v779 = vpop.f32.mrf.mxu0
        %780 = vmatprep.mubr.bf16.mxu0 0
        %781 = vmatmul.mubr.bf16.gmra.mxu0 %v691
        %v782 = vpop.f32.mrf.mxu0
        %v783 = vadd.f32 %v667, %v782
        %v784 = vpop.f32.mrf.mxu0
        %v785 = vpop.f32.mrf.mxu0
        %v786 = vadd.f32 %v668, %v785
        %v787 = vpop.f32.mrf.mxu0
        %788 = vmatprep.mubr.bf16.mxu0 0
        %789 = vmatmul.mubr.bf16.gmra.mxu0 %v694
        %v790 = vpop.f32.mrf.mxu0
        %v791 = vadd.f32 %v669, %v790
        %v792 = vpop.f32.mrf.mxu0
        %v793 = vpop.f32.mrf.mxu0
        %v794 = vadd.f32 %v670, %v793
        %v795 = vpop.f32.mrf.mxu0
        %796 = vdwg.mxu0
        %v797 = vpack.c.bf16 %v738, %v735
        %v798 = vpack.c.bf16 %v746, %v743
        %v799 = vpack.c.bf16 %v754, %v751
        %v800 = vpack.c.bf16 %v762, %v759
        %v801 = vpack.c.bf16 %v770, %v767
        %v802 = vpack.c.bf16 %v778, %v775
        %v803 = vpack.c.bf16 %v786, %v783
        %v804 = vpack.c.bf16 %v794, %v791
        %v805 = vld [vmem:[%s5] sm:$0xf]
        %v806 = vld [vmem:[%s5 + $0x4] sm:$0xf]
        %v807 = vld [vmem:[%s5 + $0x8] sm:$0xf]
        %v808 = vld [vmem:[%s5 + $0xc] sm:$0xf]
        %v809 = vld [vmem:[%s6] sm:$0x1]
        %v811 = vlaneseq
        %v812 = vshrl.u32 %v811, 7
        %v813 = vsub.s32 0, %v812
        %v814 = vrot.slane %v809, %v813
        %v820 = vunpack.c.l.b16 %v805
        %v821 = vunpack.c.l.b16 %v806
        %v822 = vunpack.c.l.b16 %v807
        %v823 = vunpack.c.l.b16 %v808
        %v824 = vpack.c.b16 %v821, %v820
        %v825 = vpack.c.b16 %v823, %v822
        %vm828 = vcmask 261120
        %v830 = vsel %vm828, %v797, 0
        %v833 = vsel %vm828, %v798, 0
        %v836 = vsel %vm828, %v799, 0
        %v839 = vsel %vm828, %v800, 0
        %v842 = vsel %vm828, %v801, 0
        %v845 = vsel %vm828, %v802, 0
        %v848 = vsel %vm828, %v803, 0
        %v851 = vsel %vm828, %v804, 0
        %853 = vmatprep.subr.bf16.mxu0 0
        %854 = vmatpush1.bf16.msra.mxu0 0
        %855 = vmatprep.subr.bf16.mxu0 0
        %856 = vmatpush1.bf16.msra.mxu0 0
        %857 = vmatprep.subr.bf16.mxu0 0
        %858 = vmatpush1.bf16.msra.mxu0 0
        %859 = vmatprep.subr.bf16.mxu0 0
        %860 = vmatpush1.bf16.msra.mxu0 0
        %861 = vmatprep.subr.bf16.mxu0 0
        %862 = vmatpush1.bf16.msra.mxu0 0
        %863 = vmatprep.subr.bf16.mxu0 0
        %864 = vmatpush1.bf16.msra.mxu0 0
        %865 = vmatprep.subr.bf16.mxu0 0
        %866 = vmatpush1.bf16.msra.mxu0 %v825
        %867 = vmatprep.subr.bf16.mxu0 0
        %868 = vmatpush1.bf16.msra.mxu0 %v824
        %869 = vmatprep.subr.bf16.mxu0 0
        %870 = vmatpush2.bf16.msra.mxu0 0
        %871 = vmatprep.subr.bf16.mxu0 0
        %872 = vmatpush2.bf16.msra.mxu0 0
        %873 = vmatprep.subr.bf16.mxu0 0
        %874 = vmatpush2.bf16.msra.mxu0 0
        %875 = vmatprep.subr.bf16.mxu0 0
        %876 = vmatpush2.bf16.msra.mxu0 0
        %877 = vmatprep.subr.bf16.mxu0 0
        %878 = vmatpush2.bf16.msra.mxu0 0
        %879 = vmatprep.subr.bf16.mxu0 0
        %880 = vmatpush2.bf16.msra.mxu0 0
        %881 = vmatprep.subr.bf16.mxu0 0
        %882 = vmatpush2.bf16.msra.mxu0 0
        %883 = vmatprep.subr.bf16.mxu0 0
        %884 = vmatpush2.bf16.msra.mxu0 0
        %885 = vmatprep.mubr.bf16.mxu0 0
        %886 = vmatmul.mubr.bf16.gmra.mxu0 %v830
        %v887 = vpop.f32.mrf.mxu0
        %v888 = vadd.f32 %v814, %v887
        %v889 = vpop.f32.mrf.mxu0
        %v890 = vpop.f32.mrf.mxu0
        %v891 = vadd.f32 %v814, %v890
        %v892 = vpop.f32.mrf.mxu0
        %893 = vmatprep.mubr.bf16.mxu0 0
        %894 = vmatmul.mubr.bf16.gmra.mxu0 %v833
        %v895 = vpop.f32.mrf.mxu0
        %v896 = vadd.f32 %v814, %v895
        %v897 = vpop.f32.mrf.mxu0
        %v898 = vpop.f32.mrf.mxu0
        %v899 = vadd.f32 %v814, %v898
        %v900 = vpop.f32.mrf.mxu0
        %901 = vmatprep.mubr.bf16.mxu0 0
        %902 = vmatmul.mubr.bf16.gmra.mxu0 %v836
        %v903 = vpop.f32.mrf.mxu0
        %v904 = vadd.f32 %v814, %v903
        %v905 = vpop.f32.mrf.mxu0
        %v906 = vpop.f32.mrf.mxu0
        %v907 = vadd.f32 %v814, %v906
        %v908 = vpop.f32.mrf.mxu0
        %909 = vmatprep.mubr.bf16.mxu0 0
        %910 = vmatmul.mubr.bf16.gmra.mxu0 %v839
        %v911 = vpop.f32.mrf.mxu0
        %v912 = vadd.f32 %v814, %v911
        %v913 = vpop.f32.mrf.mxu0
        %v914 = vpop.f32.mrf.mxu0
        %v915 = vadd.f32 %v814, %v914
        %v916 = vpop.f32.mrf.mxu0
        %917 = vmatprep.mubr.bf16.mxu0 0
        %918 = vmatmul.mubr.bf16.gmra.mxu0 %v842
        %v919 = vpop.f32.mrf.mxu0
        %v920 = vadd.f32 %v814, %v919
        %v921 = vpop.f32.mrf.mxu0
        %v922 = vpop.f32.mrf.mxu0
        %v923 = vadd.f32 %v814, %v922
        %v924 = vpop.f32.mrf.mxu0
        %925 = vmatprep.mubr.bf16.mxu0 0
        %926 = vmatmul.mubr.bf16.gmra.mxu0 %v845
        %v927 = vpop.f32.mrf.mxu0
        %v928 = vadd.f32 %v814, %v927
        %v929 = vpop.f32.mrf.mxu0
        %v930 = vpop.f32.mrf.mxu0
        %v931 = vadd.f32 %v814, %v930
        %v932 = vpop.f32.mrf.mxu0
        %933 = vmatprep.mubr.bf16.mxu0 0
        %934 = vmatmul.mubr.bf16.gmra.mxu0 %v848
        %v935 = vpop.f32.mrf.mxu0
        %v936 = vadd.f32 %v814, %v935
        %v937 = vpop.f32.mrf.mxu0
        %v938 = vpop.f32.mrf.mxu0
        %v939 = vadd.f32 %v814, %v938
        %v940 = vpop.f32.mrf.mxu0
        %941 = vmatprep.mubr.bf16.mxu0 0
        %942 = vmatmul.mubr.bf16.gmra.mxu0 %v851
        %v943 = vpop.f32.mrf.mxu0
        %v944 = vadd.f32 %v814, %v943
        %v945 = vpop.f32.mrf.mxu0
        %v946 = vpop.f32.mrf.mxu0
        %v947 = vadd.f32 %v814, %v946
        %v948 = vpop.f32.mrf.mxu0
        %949 = vdwg.mxu0
        %v950 = vpack.c.bf16 %v891, %v888
        %v951 = vpack.c.bf16 %v899, %v896
        %v952 = vpack.c.bf16 %v907, %v904
        %v953 = vpack.c.bf16 %v915, %v912
        %v954 = vpack.c.bf16 %v923, %v920
        %v955 = vpack.c.bf16 %v931, %v928
        %v956 = vpack.c.bf16 %v939, %v936
        %v957 = vpack.c.bf16 %v947, %v944
        %966 = vrot.lane.b32.xlu0 %v950, 96
        %v967 = vpop.permute.xlu0 %966
        %968 = vrot.lane.b32.xlu0 %v951, 96
        %v969 = vpop.permute.xlu0 %968
        %970 = vrot.lane.b32.xlu0 %v952, 96
        %v971 = vpop.permute.xlu0 %970
        %972 = vrot.lane.b32.xlu0 %v953, 96
        %v973 = vpop.permute.xlu0 %972
        %974 = vrot.lane.b32.xlu0 %v954, 96
        %v975 = vpop.permute.xlu0 %974
        %976 = vrot.lane.b32.xlu0 %v955, 96
        %v977 = vpop.permute.xlu0 %976
        %978 = vrot.lane.b32.xlu0 %v956, 96
        %v979 = vpop.permute.xlu0 %978
        %980 = vrot.lane.b32.xlu0 %v957, 96
        %v981 = vpop.permute.xlu0 %980
        %vm982 = vcmask 64512
        %v984 = vsel %vm982, %v950, 0
        %v987 = vsel %vm982, %v951, 0
        %v990 = vsel %vm982, %v952, 0
        %v993 = vsel %vm982, %v953, 0
        %v996 = vsel %vm982, %v954, 0
        %v999 = vsel %vm982, %v955, 0
        %v1002 = vsel %vm982, %v956, 0
        %v1005 = vsel %vm982, %v957, 0
        %v1008 = vsel %vm982, %v967, 0
        %v1011 = vsel %vm982, %v969, 0
        %v1014 = vsel %vm982, %v971, 0
        %v1017 = vsel %vm982, %v973, 0
        %v1020 = vsel %vm982, %v975, 0
        %v1023 = vsel %vm982, %v977, 0
        %v1026 = vsel %vm982, %v979, 0
        %v1029 = vsel %vm982, %v981, 0
        %1031 = vmatprep.subr.bf16.mxu0 0
        %1032 = vmatpush1.bf16.xpose.msra.mxu0 %v1029
        %1033 = vmatprep.subr.bf16.mxu0 0
        %1034 = vmatpush1.bf16.xpose.msra.mxu0 %v1026
        %1035 = vmatprep.subr.bf16.mxu0 0
        %1036 = vmatpush1.bf16.xpose.msra.mxu0 %v1023
        %1037 = vmatprep.subr.bf16.mxu0 0
        %1038 = vmatpush1.bf16.xpose.msra.mxu0 %v1020
        %1039 = vmatprep.subr.bf16.mxu0 0
        %1040 = vmatpush1.bf16.xpose.msra.mxu0 %v1017
        %1041 = vmatprep.subr.bf16.mxu0 0
        %1042 = vmatpush1.bf16.xpose.msra.mxu0 %v1014
        %1043 = vmatprep.subr.bf16.mxu0 0
        %1044 = vmatpush1.bf16.xpose.msra.mxu0 %v1011
        %1045 = vmatprep.subr.bf16.mxu0 0
        %1046 = vmatpush1.bf16.xpose.msra.mxu0 %v1008
        %1047 = vmatprep.subr.bf16.mxu0 0
        %1048 = vmatpush2.bf16.xpose.msra.mxu0 0
        %1049 = vmatprep.subr.bf16.mxu0 0
        %1050 = vmatpush2.bf16.xpose.msra.mxu0 0
        %1051 = vmatprep.subr.bf16.mxu0 0
        %1052 = vmatpush2.bf16.xpose.msra.mxu0 0
        %1053 = vmatprep.subr.bf16.mxu0 0
        %1054 = vmatpush2.bf16.xpose.msra.mxu0 0
        %1055 = vmatprep.subr.bf16.mxu0 0
        %1056 = vmatpush2.bf16.xpose.msra.mxu0 0
        %1057 = vmatprep.subr.bf16.mxu0 0
        %1058 = vmatpush2.bf16.xpose.msra.mxu0 0
        %1059 = vmatprep.subr.bf16.mxu0 0
        %1060 = vmatpush2.bf16.xpose.msra.mxu0 0
        %1061 = vmatprep.subr.bf16.mxu0 0
        %1062 = vmatpush2.bf16.xpose.msra.mxu0 0
        %1063 = vmatprep.mubr.bf16.mxu0 0
        %1064 = vmatmul.mubr.bf16.gmra.mxu0 %v984
        %v1065 = vpop.f32.mrf.mxu0
        %v1066 = vadd.f32 %v614, %v1065
        %v1067 = vpop.f32.mrf.mxu0
        %v1068 = vpop.f32.mrf.mxu0
        %v1069 = vadd.f32 %v615, %v1068
        %v1070 = vpop.f32.mrf.mxu0
        %1071 = vmatprep.mubr.bf16.mxu0 0
        %1072 = vmatmul.mubr.bf16.gmra.mxu0 %v987
        %v1073 = vpop.f32.mrf.mxu0
        %v1074 = vadd.f32 %v616, %v1073
        %v1075 = vpop.f32.mrf.mxu0
        %v1076 = vpop.f32.mrf.mxu0
        %v1077 = vadd.f32 %v617, %v1076
        %v1078 = vpop.f32.mrf.mxu0
        %1079 = vmatprep.mubr.bf16.mxu0 0
        %1080 = vmatmul.mubr.bf16.gmra.mxu0 %v990
        %v1081 = vpop.f32.mrf.mxu0
        %v1082 = vadd.f32 %v618, %v1081
        %v1083 = vpop.f32.mrf.mxu0
        %v1084 = vpop.f32.mrf.mxu0
        %v1085 = vadd.f32 %v619, %v1084
        %v1086 = vpop.f32.mrf.mxu0
        %1087 = vmatprep.mubr.bf16.mxu0 0
        %1088 = vmatmul.mubr.bf16.gmra.mxu0 %v993
        %v1089 = vpop.f32.mrf.mxu0
        %v1090 = vadd.f32 %v620, %v1089
        %v1091 = vpop.f32.mrf.mxu0
        %v1092 = vpop.f32.mrf.mxu0
        %v1093 = vadd.f32 %v621, %v1092
        %v1094 = vpop.f32.mrf.mxu0
        %1095 = vmatprep.mubr.bf16.mxu0 0
        %1096 = vmatmul.mubr.bf16.gmra.mxu0 %v996
        %v1097 = vpop.f32.mrf.mxu0
        %v1098 = vadd.f32 %v622, %v1097
        %v1099 = vpop.f32.mrf.mxu0
        %v1100 = vpop.f32.mrf.mxu0
        %v1101 = vadd.f32 %v623, %v1100
        %v1102 = vpop.f32.mrf.mxu0
        %1103 = vmatprep.mubr.bf16.mxu0 0
        %1104 = vmatmul.mubr.bf16.gmra.mxu0 %v999
        %v1105 = vpop.f32.mrf.mxu0
        %v1106 = vadd.f32 %v624, %v1105
        %v1107 = vpop.f32.mrf.mxu0
        %v1108 = vpop.f32.mrf.mxu0
        %v1109 = vadd.f32 %v625, %v1108
        %v1110 = vpop.f32.mrf.mxu0
        %1111 = vmatprep.mubr.bf16.mxu0 0
        %1112 = vmatmul.mubr.bf16.gmra.mxu0 %v1002
        %v1113 = vpop.f32.mrf.mxu0
        %v1114 = vadd.f32 %v626, %v1113
        %v1115 = vpop.f32.mrf.mxu0
        %v1116 = vpop.f32.mrf.mxu0
        %v1117 = vadd.f32 %v627, %v1116
        %v1118 = vpop.f32.mrf.mxu0
        %1119 = vmatprep.mubr.bf16.mxu0 0
        %1120 = vmatmul.mubr.bf16.gmra.mxu0 %v1005
        %v1121 = vpop.f32.mrf.mxu0
        %v1122 = vadd.f32 %v628, %v1121
        %v1123 = vpop.f32.mrf.mxu0
        %v1124 = vpop.f32.mrf.mxu0
        %v1125 = vadd.f32 %v629, %v1124
        %v1126 = vpop.f32.mrf.mxu0
        %1127 = vdwg.mxu0
        %1128 = vmax.xlane.f32.xlu0 %v1066
        %v1129 = vpop.xlane.xlu0 %1128
        %1130 = vmax.xlane.f32.xlu0 %v1069
        %v1131 = vpop.xlane.xlu0 %1130
        %1132 = vmax.xlane.f32.xlu0 %v1074
        %v1133 = vpop.xlane.xlu0 %1132
        %1134 = vmax.xlane.f32.xlu0 %v1077
        %v1135 = vpop.xlane.xlu0 %1134
        %1136 = vmax.xlane.f32.xlu0 %v1082
        %v1137 = vpop.xlane.xlu0 %1136
        %1138 = vmax.xlane.f32.xlu0 %v1085
        %v1139 = vpop.xlane.xlu0 %1138
        %1140 = vmax.xlane.f32.xlu0 %v1090
        %v1141 = vpop.xlane.xlu0 %1140
        %1142 = vmax.xlane.f32.xlu0 %v1093
        %v1143 = vpop.xlane.xlu0 %1142
        %1144 = vmax.xlane.f32.xlu0 %v1098
        %v1145 = vpop.xlane.xlu0 %1144
        %1146 = vmax.xlane.f32.xlu0 %v1101
        %v1147 = vpop.xlane.xlu0 %1146
        %1148 = vmax.xlane.f32.xlu0 %v1106
        %v1149 = vpop.xlane.xlu0 %1148
        %1150 = vmax.xlane.f32.xlu0 %v1109
        %v1151 = vpop.xlane.xlu0 %1150
        %1152 = vmax.xlane.f32.xlu0 %v1114
        %v1153 = vpop.xlane.xlu0 %1152
        %1154 = vmax.xlane.f32.xlu0 %v1117
        %v1155 = vpop.xlane.xlu0 %1154
        %1156 = vmax.xlane.f32.xlu0 %v1122
        %v1157 = vpop.xlane.xlu0 %1156
        %1158 = vmax.xlane.f32.xlu0 %v1125
        %v1159 = vpop.xlane.xlu0 %1158
        %v1160 = vsub.f32 %v1066, %v1129
        %v1161 = vsub.f32 %v1069, %v1131
        %v1162 = vsub.f32 %v1074, %v1133
        %v1163 = vsub.f32 %v1077, %v1135
        %v1164 = vsub.f32 %v1082, %v1137
        %v1165 = vsub.f32 %v1085, %v1139
        %v1166 = vsub.f32 %v1090, %v1141
        %v1167 = vsub.f32 %v1093, %v1143
        %v1168 = vsub.f32 %v1098, %v1145
        %v1169 = vsub.f32 %v1101, %v1147
        %v1170 = vsub.f32 %v1106, %v1149
        %v1171 = vsub.f32 %v1109, %v1151
        %v1172 = vsub.f32 %v1114, %v1153
        %v1173 = vsub.f32 %v1117, %v1155
        %v1174 = vsub.f32 %v1122, %v1157
        %v1175 = vsub.f32 %v1125, %v1159
        %v1176 = vmul.f32 %v1160, 1.442695
        %v1177 = vpow.pop %v1176
        %v1178 = vmul.f32 %v1161, 1.442695
        %v1179 = vpow.pop %v1178
        %v1180 = vmul.f32 %v1162, 1.442695
        %v1181 = vpow.pop %v1180
        %v1182 = vmul.f32 %v1163, 1.442695
        %v1183 = vpow.pop %v1182
        %v1184 = vmul.f32 %v1164, 1.442695
        %v1185 = vpow.pop %v1184
        %v1186 = vmul.f32 %v1165, 1.442695
        %v1187 = vpow.pop %v1186
        %v1188 = vmul.f32 %v1166, 1.442695
        %v1189 = vpow.pop %v1188
        %v1190 = vmul.f32 %v1167, 1.442695
        %v1191 = vpow.pop %v1190
        %v1192 = vmul.f32 %v1168, 1.442695
        %v1193 = vpow.pop %v1192
        %v1194 = vmul.f32 %v1169, 1.442695
        %v1195 = vpow.pop %v1194
        %v1196 = vmul.f32 %v1170, 1.442695
        %v1197 = vpow.pop %v1196
        %v1198 = vmul.f32 %v1171, 1.442695
        %v1199 = vpow.pop %v1198
        %v1200 = vmul.f32 %v1172, 1.442695
        %v1201 = vpow.pop %v1200
        %v1202 = vmul.f32 %v1173, 1.442695
        %v1203 = vpow.pop %v1202
        %v1204 = vmul.f32 %v1174, 1.442695
        %v1205 = vpow.pop %v1204
        %v1206 = vmul.f32 %v1175, 1.442695
        %v1207 = vpow.pop %v1206
        %1208 = vadd.xlane.f32.xlu0 %v1177
        %v1209 = vpop.xlane.xlu0 %1208
        %1210 = vadd.xlane.f32.xlu0 %v1179
        %v1211 = vpop.xlane.xlu0 %1210
        %1212 = vadd.xlane.f32.xlu0 %v1181
        %v1213 = vpop.xlane.xlu0 %1212
        %1214 = vadd.xlane.f32.xlu0 %v1183
        %v1215 = vpop.xlane.xlu0 %1214
        %1216 = vadd.xlane.f32.xlu0 %v1185
        %v1217 = vpop.xlane.xlu0 %1216
        %1218 = vadd.xlane.f32.xlu0 %v1187
        %v1219 = vpop.xlane.xlu0 %1218
        %1220 = vadd.xlane.f32.xlu0 %v1189
        %v1221 = vpop.xlane.xlu0 %1220
        %1222 = vadd.xlane.f32.xlu0 %v1191
        %v1223 = vpop.xlane.xlu0 %1222
        %1224 = vadd.xlane.f32.xlu0 %v1193
        %v1225 = vpop.xlane.xlu0 %1224
        %1226 = vadd.xlane.f32.xlu0 %v1195
        %v1227 = vpop.xlane.xlu0 %1226
        %1228 = vadd.xlane.f32.xlu0 %v1197
        %v1229 = vpop.xlane.xlu0 %1228
        %1230 = vadd.xlane.f32.xlu0 %v1199
        %v1231 = vpop.xlane.xlu0 %1230
        %1232 = vadd.xlane.f32.xlu0 %v1201
        %v1233 = vpop.xlane.xlu0 %1232
        %1234 = vadd.xlane.f32.xlu0 %v1203
        %v1235 = vpop.xlane.xlu0 %1234
        %1236 = vadd.xlane.f32.xlu0 %v1205
        %v1237 = vpop.xlane.xlu0 %1236
        %1238 = vadd.xlane.f32.xlu0 %v1207
        %v1239 = vpop.xlane.xlu0 %1238
        %v1240 = vrcp.pop %v1209
        %v1241 = vrcp.pop %v1211
        %v1242 = vrcp.pop %v1213
        %v1243 = vrcp.pop %v1215
        %v1244 = vrcp.pop %v1217
        %v1245 = vrcp.pop %v1219
        %v1246 = vrcp.pop %v1221
        %v1247 = vrcp.pop %v1223
        %v1248 = vrcp.pop %v1225
        %v1249 = vrcp.pop %v1227
        %v1250 = vrcp.pop %v1229
        %v1251 = vrcp.pop %v1231
        %v1252 = vrcp.pop %v1233
        %v1253 = vrcp.pop %v1235
        %v1254 = vrcp.pop %v1237
        %v1255 = vrcp.pop %v1239
        %v1256 = vmul.f32 %v1177, %v1240
        %v1257 = vmul.f32 %v1179, %v1241
        %v1258 = vmul.f32 %v1181, %v1242
        %v1259 = vmul.f32 %v1183, %v1243
        %v1260 = vmul.f32 %v1185, %v1244
        %v1261 = vmul.f32 %v1187, %v1245
        %v1262 = vmul.f32 %v1189, %v1246
        %v1263 = vmul.f32 %v1191, %v1247
        %v1264 = vmul.f32 %v1193, %v1248
        %v1265 = vmul.f32 %v1195, %v1249
        %v1266 = vmul.f32 %v1197, %v1250
        %v1267 = vmul.f32 %v1199, %v1251
        %v1268 = vmul.f32 %v1201, %v1252
        %v1269 = vmul.f32 %v1203, %v1253
        %v1270 = vmul.f32 %v1205, %v1254
        %v1271 = vmul.f32 %v1207, %v1255
        %v1272 = vpack.c.bf16 %v1257, %v1256
        %v1273 = vpack.c.bf16 %v1259, %v1258
        %v1274 = vpack.c.bf16 %v1261, %v1260
        %v1275 = vpack.c.bf16 %v1263, %v1262
        %v1276 = vpack.c.bf16 %v1265, %v1264
        %v1277 = vpack.c.bf16 %v1267, %v1266
        %v1278 = vpack.c.bf16 %v1269, %v1268
        %v1279 = vpack.c.bf16 %v1271, %v1270
        %1280 = vrot.lane.b32.xlu0 %v950, 64
        %v1281 = vpop.permute.xlu0 %1280
        %1282 = vrot.lane.b32.xlu0 %v951, 64
        %v1283 = vpop.permute.xlu0 %1282
        %1284 = vrot.lane.b32.xlu0 %v952, 64
        %v1285 = vpop.permute.xlu0 %1284
        %1286 = vrot.lane.b32.xlu0 %v953, 64
        %v1287 = vpop.permute.xlu0 %1286
        %1288 = vrot.lane.b32.xlu0 %v954, 64
        %v1289 = vpop.permute.xlu0 %1288
        %1290 = vrot.lane.b32.xlu0 %v955, 64
        %v1291 = vpop.permute.xlu0 %1290
        %1292 = vrot.lane.b32.xlu0 %v956, 64
        %v1293 = vpop.permute.xlu0 %1292
        %1294 = vrot.lane.b32.xlu0 %v957, 64
        %v1295 = vpop.permute.xlu0 %1294
        %1304 = vmatprep.subr.bf16.mxu0 0
        %1305 = vmatpush1.bf16.msra.mxu0 %v1295
        %1306 = vmatprep.subr.bf16.mxu0 0
        %1307 = vmatpush1.bf16.msra.mxu0 %v1293
        %1308 = vmatprep.subr.bf16.mxu0 0
        %1309 = vmatpush1.bf16.msra.mxu0 %v1291
        %1310 = vmatprep.subr.bf16.mxu0 0
        %1311 = vmatpush1.bf16.msra.mxu0 %v1289
        %1312 = vmatprep.subr.bf16.mxu0 0
        %1313 = vmatpush1.bf16.msra.mxu0 %v1287
        %1314 = vmatprep.subr.bf16.mxu0 0
        %1315 = vmatpush1.bf16.msra.mxu0 %v1285
        %1316 = vmatprep.subr.bf16.mxu0 0
        %1317 = vmatpush1.bf16.msra.mxu0 %v1283
        %1318 = vmatprep.subr.bf16.mxu0 0
        %1319 = vmatpush1.bf16.msra.mxu0 %v1281
        %1320 = vmatprep.subr.bf16.mxu0 0
        %1321 = vmatpush2.bf16.msra.mxu0 0
        %1322 = vmatprep.subr.bf16.mxu0 0
        %1323 = vmatpush2.bf16.msra.mxu0 0
        %1324 = vmatprep.subr.bf16.mxu0 0
        %1325 = vmatpush2.bf16.msra.mxu0 0
        %1326 = vmatprep.subr.bf16.mxu0 0
        %1327 = vmatpush2.bf16.msra.mxu0 0
        %1328 = vmatprep.subr.bf16.mxu0 0
        %1329 = vmatpush2.bf16.msra.mxu0 0
        %1330 = vmatprep.subr.bf16.mxu0 0
        %1331 = vmatpush2.bf16.msra.mxu0 0
        %1332 = vmatprep.subr.bf16.mxu0 0
        %1333 = vmatpush2.bf16.msra.mxu0 0
        %1334 = vmatprep.subr.bf16.mxu0 0
        %1335 = vmatpush2.bf16.msra.mxu0 0
        %1336 = vmatprep.mubr.bf16.mxu0 0
        %1337 = vmatmul.mubr.bf16.gmra.mxu0 %v1272
        %v1338 = vpop.f32.mrf.mxu0
        %v1339 = vadd.f32 0.0, %v1338
        %v1340 = vpop.f32.mrf.mxu0
        %v1341 = vpop.f32.mrf.mxu0
        %v1342 = vadd.f32 0.0, %v1341
        %v1343 = vpop.f32.mrf.mxu0
        %1344 = vmatprep.mubr.bf16.mxu0 0
        %1345 = vmatmul.mubr.bf16.gmra.mxu0 %v1273
        %v1346 = vpop.f32.mrf.mxu0
        %v1347 = vadd.f32 0.0, %v1346
        %v1348 = vpop.f32.mrf.mxu0
        %v1349 = vpop.f32.mrf.mxu0
        %v1350 = vadd.f32 0.0, %v1349
        %v1351 = vpop.f32.mrf.mxu0
        %1352 = vmatprep.mubr.bf16.mxu0 0
        %1353 = vmatmul.mubr.bf16.gmra.mxu0 %v1274
        %v1354 = vpop.f32.mrf.mxu0
        %v1355 = vadd.f32 0.0, %v1354
        %v1356 = vpop.f32.mrf.mxu0
        %v1357 = vpop.f32.mrf.mxu0
        %v1358 = vadd.f32 0.0, %v1357
        %v1359 = vpop.f32.mrf.mxu0
        %1360 = vmatprep.mubr.bf16.mxu0 0
        %1361 = vmatmul.mubr.bf16.gmra.mxu0 %v1275
        %v1362 = vpop.f32.mrf.mxu0
        %v1363 = vadd.f32 0.0, %v1362
        %v1364 = vpop.f32.mrf.mxu0
        %v1365 = vpop.f32.mrf.mxu0
        %v1366 = vadd.f32 0.0, %v1365
        %v1367 = vpop.f32.mrf.mxu0
        %1368 = vmatprep.mubr.bf16.mxu0 0
        %1369 = vmatmul.mubr.bf16.gmra.mxu0 %v1276
        %v1370 = vpop.f32.mrf.mxu0
        %v1371 = vadd.f32 0.0, %v1370
        %v1372 = vpop.f32.mrf.mxu0
        %v1373 = vpop.f32.mrf.mxu0
        %v1374 = vadd.f32 0.0, %v1373
        %v1375 = vpop.f32.mrf.mxu0
        %1376 = vmatprep.mubr.bf16.mxu0 0
        %1377 = vmatmul.mubr.bf16.gmra.mxu0 %v1277
        %v1378 = vpop.f32.mrf.mxu0
        %v1379 = vadd.f32 0.0, %v1378
        %v1380 = vpop.f32.mrf.mxu0
        %v1381 = vpop.f32.mrf.mxu0
        %v1382 = vadd.f32 0.0, %v1381
        %v1383 = vpop.f32.mrf.mxu0
        %1384 = vmatprep.mubr.bf16.mxu0 0
        %1385 = vmatmul.mubr.bf16.gmra.mxu0 %v1278
        %v1386 = vpop.f32.mrf.mxu0
        %v1387 = vadd.f32 0.0, %v1386
        %v1388 = vpop.f32.mrf.mxu0
        %v1389 = vpop.f32.mrf.mxu0
        %v1390 = vadd.f32 0.0, %v1389
        %v1391 = vpop.f32.mrf.mxu0
        %1392 = vmatprep.mubr.bf16.mxu0 0
        %1393 = vmatmul.mubr.bf16.gmra.mxu0 %v1279
        %v1394 = vpop.f32.mrf.mxu0
        %v1395 = vadd.f32 0.0, %v1394
        %v1396 = vpop.f32.mrf.mxu0
        %v1397 = vpop.f32.mrf.mxu0
        %v1398 = vadd.f32 0.0, %v1397
        %v1399 = vpop.f32.mrf.mxu0
        %1400 = vdwg.mxu0
        %1401 = vrot.lane.b32.xlu0 %v950, 120
        %v1402 = vpop.permute.xlu0 %1401
        %1403 = vrot.lane.b32.xlu0 %v951, 120
        %v1404 = vpop.permute.xlu0 %1403
        %1405 = vrot.lane.b32.xlu0 %v952, 120
        %v1406 = vpop.permute.xlu0 %1405
        %1407 = vrot.lane.b32.xlu0 %v953, 120
        %v1408 = vpop.permute.xlu0 %1407
        %1409 = vrot.lane.b32.xlu0 %v954, 120
        %v1410 = vpop.permute.xlu0 %1409
        %1411 = vrot.lane.b32.xlu0 %v955, 120
        %v1412 = vpop.permute.xlu0 %1411
        %1413 = vrot.lane.b32.xlu0 %v956, 120
        %v1414 = vpop.permute.xlu0 %1413
        %1415 = vrot.lane.b32.xlu0 %v957, 120
        %v1416 = vpop.permute.xlu0 %1415
        %1417 = vrot.lane.b32.xlu0 %v950, 88
        %v1418 = vpop.permute.xlu0 %1417
        %1419 = vrot.lane.b32.xlu0 %v951, 88
        %v1420 = vpop.permute.xlu0 %1419
        %1421 = vrot.lane.b32.xlu0 %v952, 88
        %v1422 = vpop.permute.xlu0 %1421
        %1423 = vrot.lane.b32.xlu0 %v953, 88
        %v1424 = vpop.permute.xlu0 %1423
        %1425 = vrot.lane.b32.xlu0 %v954, 88
        %v1426 = vpop.permute.xlu0 %1425
        %1427 = vrot.lane.b32.xlu0 %v955, 88
        %v1428 = vpop.permute.xlu0 %1427
        %1429 = vrot.lane.b32.xlu0 %v956, 88
        %v1430 = vpop.permute.xlu0 %1429
        %1431 = vrot.lane.b32.xlu0 %v957, 88
        %v1432 = vpop.permute.xlu0 %1431
        %v1434 = vsel %vm982, %v1402, 0
        %v1437 = vsel %vm982, %v1404, 0
        %v1440 = vsel %vm982, %v1406, 0
        %v1443 = vsel %vm982, %v1408, 0
        %v1446 = vsel %vm982, %v1410, 0
        %v1449 = vsel %vm982, %v1412, 0
        %v1452 = vsel %vm982, %v1414, 0
        %v1455 = vsel %vm982, %v1416, 0
        %v1458 = vsel %vm982, %v1418, 0
        %v1461 = vsel %vm982, %v1420, 0
        %v1464 = vsel %vm982, %v1422, 0
        %v1467 = vsel %vm982, %v1424, 0
        %v1470 = vsel %vm982, %v1426, 0
        %v1473 = vsel %vm982, %v1428, 0
        %v1476 = vsel %vm982, %v1430, 0
        %v1479 = vsel %vm982, %v1432, 0
        %1481 = vmatprep.subr.bf16.mxu0 0
        %1482 = vmatpush1.bf16.xpose.msra.mxu0 %v1479
        %1483 = vmatprep.subr.bf16.mxu0 0
        %1484 = vmatpush1.bf16.xpose.msra.mxu0 %v1476
        %1485 = vmatprep.subr.bf16.mxu0 0
        %1486 = vmatpush1.bf16.xpose.msra.mxu0 %v1473
        %1487 = vmatprep.subr.bf16.mxu0 0
        %1488 = vmatpush1.bf16.xpose.msra.mxu0 %v1470
        %1489 = vmatprep.subr.bf16.mxu0 0
        %1490 = vmatpush1.bf16.xpose.msra.mxu0 %v1467
        %1491 = vmatprep.subr.bf16.mxu0 0
        %1492 = vmatpush1.bf16.xpose.msra.mxu0 %v1464
        %1493 = vmatprep.subr.bf16.mxu0 0
        %1494 = vmatpush1.bf16.xpose.msra.mxu0 %v1461
        %1495 = vmatprep.subr.bf16.mxu0 0
        %1496 = vmatpush1.bf16.xpose.msra.mxu0 %v1458
        %1497 = vmatprep.subr.bf16.mxu0 0
        %1498 = vmatpush2.bf16.xpose.msra.mxu0 0
        %1499 = vmatprep.subr.bf16.mxu0 0
        %1500 = vmatpush2.bf16.xpose.msra.mxu0 0
        %1501 = vmatprep.subr.bf16.mxu0 0
        %1502 = vmatpush2.bf16.xpose.msra.mxu0 0
        %1503 = vmatprep.subr.bf16.mxu0 0
        %1504 = vmatpush2.bf16.xpose.msra.mxu0 0
        %1505 = vmatprep.subr.bf16.mxu0 0
        %1506 = vmatpush2.bf16.xpose.msra.mxu0 0
        %1507 = vmatprep.subr.bf16.mxu0 0
        %1508 = vmatpush2.bf16.xpose.msra.mxu0 0
        %1509 = vmatprep.subr.bf16.mxu0 0
        %1510 = vmatpush2.bf16.xpose.msra.mxu0 0
        %1511 = vmatprep.subr.bf16.mxu0 0
        %1512 = vmatpush2.bf16.xpose.msra.mxu0 0
        %1513 = vmatprep.mubr.bf16.mxu0 0
        %1514 = vmatmul.mubr.bf16.gmra.mxu0 %v1434
        %v1515 = vpop.f32.mrf.mxu0
        %v1516 = vadd.f32 %v614, %v1515
        %v1517 = vpop.f32.mrf.mxu0
        %v1518 = vpop.f32.mrf.mxu0
        %v1519 = vadd.f32 %v615, %v1518
        %v1520 = vpop.f32.mrf.mxu0
        %1521 = vmatprep.mubr.bf16.mxu0 0
        %1522 = vmatmul.mubr.bf16.gmra.mxu0 %v1437
        %v1523 = vpop.f32.mrf.mxu0
        %v1524 = vadd.f32 %v616, %v1523
        %v1525 = vpop.f32.mrf.mxu0
        %v1526 = vpop.f32.mrf.mxu0
        %v1527 = vadd.f32 %v617, %v1526
        %v1528 = vpop.f32.mrf.mxu0
        %1529 = vmatprep.mubr.bf16.mxu0 0
        %1530 = vmatmul.mubr.bf16.gmra.mxu0 %v1440
        %v1531 = vpop.f32.mrf.mxu0
        %v1532 = vadd.f32 %v618, %v1531
        %v1533 = vpop.f32.mrf.mxu0
        %v1534 = vpop.f32.mrf.mxu0
        %v1535 = vadd.f32 %v619, %v1534
        %v1536 = vpop.f32.mrf.mxu0
        %1537 = vmatprep.mubr.bf16.mxu0 0
        %1538 = vmatmul.mubr.bf16.gmra.mxu0 %v1443
        %v1539 = vpop.f32.mrf.mxu0
        %v1540 = vadd.f32 %v620, %v1539
        %v1541 = vpop.f32.mrf.mxu0
        %v1542 = vpop.f32.mrf.mxu0
        %v1543 = vadd.f32 %v621, %v1542
        %v1544 = vpop.f32.mrf.mxu0
        %1545 = vmatprep.mubr.bf16.mxu0 0
        %1546 = vmatmul.mubr.bf16.gmra.mxu0 %v1446
        %v1547 = vpop.f32.mrf.mxu0
        %v1548 = vadd.f32 %v622, %v1547
        %v1549 = vpop.f32.mrf.mxu0
        %v1550 = vpop.f32.mrf.mxu0
        %v1551 = vadd.f32 %v623, %v1550
        %v1552 = vpop.f32.mrf.mxu0
        %1553 = vmatprep.mubr.bf16.mxu0 0
        %1554 = vmatmul.mubr.bf16.gmra.mxu0 %v1449
        %v1555 = vpop.f32.mrf.mxu0
        %v1556 = vadd.f32 %v624, %v1555
        %v1557 = vpop.f32.mrf.mxu0
        %v1558 = vpop.f32.mrf.mxu0
        %v1559 = vadd.f32 %v625, %v1558
        %v1560 = vpop.f32.mrf.mxu0
        %1561 = vmatprep.mubr.bf16.mxu0 0
        %1562 = vmatmul.mubr.bf16.gmra.mxu0 %v1452
        %v1563 = vpop.f32.mrf.mxu0
        %v1564 = vadd.f32 %v626, %v1563
        %v1565 = vpop.f32.mrf.mxu0
        %v1566 = vpop.f32.mrf.mxu0
        %v1567 = vadd.f32 %v627, %v1566
        %v1568 = vpop.f32.mrf.mxu0
        %1569 = vmatprep.mubr.bf16.mxu0 0
        %1570 = vmatmul.mubr.bf16.gmra.mxu0 %v1455
        %v1571 = vpop.f32.mrf.mxu0
        %v1572 = vadd.f32 %v628, %v1571
        %v1573 = vpop.f32.mrf.mxu0
        %v1574 = vpop.f32.mrf.mxu0
        %v1575 = vadd.f32 %v629, %v1574
        %v1576 = vpop.f32.mrf.mxu0
        %1577 = vdwg.mxu0
        %1578 = vmax.xlane.f32.xlu0 %v1516
        %v1579 = vpop.xlane.xlu0 %1578
        %1580 = vmax.xlane.f32.xlu0 %v1519
        %v1581 = vpop.xlane.xlu0 %1580
        %1582 = vmax.xlane.f32.xlu0 %v1524
        %v1583 = vpop.xlane.xlu0 %1582
        %1584 = vmax.xlane.f32.xlu0 %v1527
        %v1585 = vpop.xlane.xlu0 %1584
        %1586 = vmax.xlane.f32.xlu0 %v1532
        %v1587 = vpop.xlane.xlu0 %1586
        %1588 = vmax.xlane.f32.xlu0 %v1535
        %v1589 = vpop.xlane.xlu0 %1588
        %1590 = vmax.xlane.f32.xlu0 %v1540
        %v1591 = vpop.xlane.xlu0 %1590
        %1592 = vmax.xlane.f32.xlu0 %v1543
        %v1593 = vpop.xlane.xlu0 %1592
        %1594 = vmax.xlane.f32.xlu0 %v1548
        %v1595 = vpop.xlane.xlu0 %1594
        %1596 = vmax.xlane.f32.xlu0 %v1551
        %v1597 = vpop.xlane.xlu0 %1596
        %1598 = vmax.xlane.f32.xlu0 %v1556
        %v1599 = vpop.xlane.xlu0 %1598
        %1600 = vmax.xlane.f32.xlu0 %v1559
        %v1601 = vpop.xlane.xlu0 %1600
        %1602 = vmax.xlane.f32.xlu0 %v1564
        %v1603 = vpop.xlane.xlu0 %1602
        %1604 = vmax.xlane.f32.xlu0 %v1567
        %v1605 = vpop.xlane.xlu0 %1604
        %1606 = vmax.xlane.f32.xlu0 %v1572
        %v1607 = vpop.xlane.xlu0 %1606
        %1608 = vmax.xlane.f32.xlu0 %v1575
        %v1609 = vpop.xlane.xlu0 %1608
        %v1610 = vsub.f32 %v1516, %v1579
        %v1611 = vsub.f32 %v1519, %v1581
        %v1612 = vsub.f32 %v1524, %v1583
        %v1613 = vsub.f32 %v1527, %v1585
        %v1614 = vsub.f32 %v1532, %v1587
        %v1615 = vsub.f32 %v1535, %v1589
        %v1616 = vsub.f32 %v1540, %v1591
        %v1617 = vsub.f32 %v1543, %v1593
        %v1618 = vsub.f32 %v1548, %v1595
        %v1619 = vsub.f32 %v1551, %v1597
        %v1620 = vsub.f32 %v1556, %v1599
        %v1621 = vsub.f32 %v1559, %v1601
        %v1622 = vsub.f32 %v1564, %v1603
        %v1623 = vsub.f32 %v1567, %v1605
        %v1624 = vsub.f32 %v1572, %v1607
        %v1625 = vsub.f32 %v1575, %v1609
        %v1626 = vmul.f32 %v1610, 1.442695
        %v1627 = vpow.pop %v1626
        %v1628 = vmul.f32 %v1611, 1.442695
        %v1629 = vpow.pop %v1628
        %v1630 = vmul.f32 %v1612, 1.442695
        %v1631 = vpow.pop %v1630
        %v1632 = vmul.f32 %v1613, 1.442695
        %v1633 = vpow.pop %v1632
        %v1634 = vmul.f32 %v1614, 1.442695
        %v1635 = vpow.pop %v1634
        %v1636 = vmul.f32 %v1615, 1.442695
        %v1637 = vpow.pop %v1636
        %v1638 = vmul.f32 %v1616, 1.442695
        %v1639 = vpow.pop %v1638
        %v1640 = vmul.f32 %v1617, 1.442695
        %v1641 = vpow.pop %v1640
        %v1642 = vmul.f32 %v1618, 1.442695
        %v1643 = vpow.pop %v1642
        %v1644 = vmul.f32 %v1619, 1.442695
        %v1645 = vpow.pop %v1644
        %v1646 = vmul.f32 %v1620, 1.442695
        %v1647 = vpow.pop %v1646
        %v1648 = vmul.f32 %v1621, 1.442695
        %v1649 = vpow.pop %v1648
        %v1650 = vmul.f32 %v1622, 1.442695
        %v1651 = vpow.pop %v1650
        %v1652 = vmul.f32 %v1623, 1.442695
        %v1653 = vpow.pop %v1652
        %v1654 = vmul.f32 %v1624, 1.442695
        %v1655 = vpow.pop %v1654
        %v1656 = vmul.f32 %v1625, 1.442695
        %v1657 = vpow.pop %v1656
        %1658 = vadd.xlane.f32.xlu0 %v1627
        %v1659 = vpop.xlane.xlu0 %1658
        %1660 = vadd.xlane.f32.xlu0 %v1629
        %v1661 = vpop.xlane.xlu0 %1660
        %1662 = vadd.xlane.f32.xlu0 %v1631
        %v1663 = vpop.xlane.xlu0 %1662
        %1664 = vadd.xlane.f32.xlu0 %v1633
        %v1665 = vpop.xlane.xlu0 %1664
        %1666 = vadd.xlane.f32.xlu0 %v1635
        %v1667 = vpop.xlane.xlu0 %1666
        %1668 = vadd.xlane.f32.xlu0 %v1637
        %v1669 = vpop.xlane.xlu0 %1668
        %1670 = vadd.xlane.f32.xlu0 %v1639
        %v1671 = vpop.xlane.xlu0 %1670
        %1672 = vadd.xlane.f32.xlu0 %v1641
        %v1673 = vpop.xlane.xlu0 %1672
        %1674 = vadd.xlane.f32.xlu0 %v1643
        %v1675 = vpop.xlane.xlu0 %1674
        %1676 = vadd.xlane.f32.xlu0 %v1645
        %v1677 = vpop.xlane.xlu0 %1676
        %1678 = vadd.xlane.f32.xlu0 %v1647
        %v1679 = vpop.xlane.xlu0 %1678
        %1680 = vadd.xlane.f32.xlu0 %v1649
        %v1681 = vpop.xlane.xlu0 %1680
        %1682 = vadd.xlane.f32.xlu0 %v1651
        %v1683 = vpop.xlane.xlu0 %1682
        %1684 = vadd.xlane.f32.xlu0 %v1653
        %v1685 = vpop.xlane.xlu0 %1684
        %1686 = vadd.xlane.f32.xlu0 %v1655
        %v1687 = vpop.xlane.xlu0 %1686
        %1688 = vadd.xlane.f32.xlu0 %v1657
        %v1689 = vpop.xlane.xlu0 %1688
        %v1690 = vrcp.pop %v1659
        %v1691 = vrcp.pop %v1661
        %v1692 = vrcp.pop %v1663
        %v1693 = vrcp.pop %v1665
        %v1694 = vrcp.pop %v1667
        %v1695 = vrcp.pop %v1669
        %v1696 = vrcp.pop %v1671
        %v1697 = vrcp.pop %v1673
        %v1698 = vrcp.pop %v1675
        %v1699 = vrcp.pop %v1677
        %v1700 = vrcp.pop %v1679
        %v1701 = vrcp.pop %v1681
        %v1702 = vrcp.pop %v1683
        %v1703 = vrcp.pop %v1685
        %v1704 = vrcp.pop %v1687
        %v1705 = vrcp.pop %v1689
        %v1706 = vmul.f32 %v1627, %v1690
        %v1707 = vmul.f32 %v1629, %v1691
        %v1708 = vmul.f32 %v1631, %v1692
        %v1709 = vmul.f32 %v1633, %v1693
        %v1710 = vmul.f32 %v1635, %v1694
        %v1711 = vmul.f32 %v1637, %v1695
        %v1712 = vmul.f32 %v1639, %v1696
        %v1713 = vmul.f32 %v1641, %v1697
        %v1714 = vmul.f32 %v1643, %v1698
        %v1715 = vmul.f32 %v1645, %v1699
        %v1716 = vmul.f32 %v1647, %v1700
        %v1717 = vmul.f32 %v1649, %v1701
        %v1718 = vmul.f32 %v1651, %v1702
        %v1719 = vmul.f32 %v1653, %v1703
        %v1720 = vmul.f32 %v1655, %v1704
        %v1721 = vmul.f32 %v1657, %v1705
        %v1722 = vpack.c.bf16 %v1707, %v1706
        %v1723 = vpack.c.bf16 %v1709, %v1708
        %v1724 = vpack.c.bf16 %v1711, %v1710
        %v1725 = vpack.c.bf16 %v1713, %v1712
        %v1726 = vpack.c.bf16 %v1715, %v1714
        %v1727 = vpack.c.bf16 %v1717, %v1716
        %v1728 = vpack.c.bf16 %v1719, %v1718
        %v1729 = vpack.c.bf16 %v1721, %v1720
        %1730 = vrot.lane.b32.xlu0 %v950, 56
        %v1731 = vpop.permute.xlu0 %1730
        %1732 = vrot.lane.b32.xlu0 %v951, 56
        %v1733 = vpop.permute.xlu0 %1732
        %1734 = vrot.lane.b32.xlu0 %v952, 56
        %v1735 = vpop.permute.xlu0 %1734
        %1736 = vrot.lane.b32.xlu0 %v953, 56
        %v1737 = vpop.permute.xlu0 %1736
        %1738 = vrot.lane.b32.xlu0 %v954, 56
        %v1739 = vpop.permute.xlu0 %1738
        %1740 = vrot.lane.b32.xlu0 %v955, 56
        %v1741 = vpop.permute.xlu0 %1740
        %1742 = vrot.lane.b32.xlu0 %v956, 56
        %v1743 = vpop.permute.xlu0 %1742
        %1744 = vrot.lane.b32.xlu0 %v957, 56
        %v1745 = vpop.permute.xlu0 %1744
        %1754 = vmatprep.subr.bf16.mxu0 0
        %1755 = vmatpush1.bf16.msra.mxu0 %v1745
        %1756 = vmatprep.subr.bf16.mxu0 0
        %1757 = vmatpush1.bf16.msra.mxu0 %v1743
        %1758 = vmatprep.subr.bf16.mxu0 0
        %1759 = vmatpush1.bf16.msra.mxu0 %v1741
        %1760 = vmatprep.subr.bf16.mxu0 0
        %1761 = vmatpush1.bf16.msra.mxu0 %v1739
        %1762 = vmatprep.subr.bf16.mxu0 0
        %1763 = vmatpush1.bf16.msra.mxu0 %v1737
        %1764 = vmatprep.subr.bf16.mxu0 0
        %1765 = vmatpush1.bf16.msra.mxu0 %v1735
        %1766 = vmatprep.subr.bf16.mxu0 0
        %1767 = vmatpush1.bf16.msra.mxu0 %v1733
        %1768 = vmatprep.subr.bf16.mxu0 0
        %1769 = vmatpush1.bf16.msra.mxu0 %v1731
        %1770 = vmatprep.subr.bf16.mxu0 0
        %1771 = vmatpush2.bf16.msra.mxu0 0
        %1772 = vmatprep.subr.bf16.mxu0 0
        %1773 = vmatpush2.bf16.msra.mxu0 0
        %1774 = vmatprep.subr.bf16.mxu0 0
        %1775 = vmatpush2.bf16.msra.mxu0 0
        %1776 = vmatprep.subr.bf16.mxu0 0
        %1777 = vmatpush2.bf16.msra.mxu0 0
        %1778 = vmatprep.subr.bf16.mxu0 0
        %1779 = vmatpush2.bf16.msra.mxu0 0
        %1780 = vmatprep.subr.bf16.mxu0 0
        %1781 = vmatpush2.bf16.msra.mxu0 0
        %1782 = vmatprep.subr.bf16.mxu0 0
        %1783 = vmatpush2.bf16.msra.mxu0 0
        %1784 = vmatprep.subr.bf16.mxu0 0
        %1785 = vmatpush2.bf16.msra.mxu0 0
        %1786 = vmatprep.mubr.bf16.mxu0 0
        %1787 = vmatmul.mubr.bf16.gmra.mxu0 %v1722
        %v1788 = vpop.f32.mrf.mxu0
        %v1789 = vadd.f32 0.0, %v1788
        %v1790 = vpop.f32.mrf.mxu0
        %v1791 = vpop.f32.mrf.mxu0
        %v1792 = vadd.f32 0.0, %v1791
        %v1793 = vpop.f32.mrf.mxu0
        %1794 = vmatprep.mubr.bf16.mxu0 0
        %1795 = vmatmul.mubr.bf16.gmra.mxu0 %v1723
        %v1796 = vpop.f32.mrf.mxu0
        %v1797 = vadd.f32 0.0, %v1796
        %v1798 = vpop.f32.mrf.mxu0
        %v1799 = vpop.f32.mrf.mxu0
        %v1800 = vadd.f32 0.0, %v1799
        %v1801 = vpop.f32.mrf.mxu0
        %1802 = vmatprep.mubr.bf16.mxu0 0
        %1803 = vmatmul.mubr.bf16.gmra.mxu0 %v1724
        %v1804 = vpop.f32.mrf.mxu0
        %v1805 = vadd.f32 0.0, %v1804
        %v1806 = vpop.f32.mrf.mxu0
        %v1807 = vpop.f32.mrf.mxu0
        %v1808 = vadd.f32 0.0, %v1807
        %v1809 = vpop.f32.mrf.mxu0
        %1810 = vmatprep.mubr.bf16.mxu0 0
        %1811 = vmatmul.mubr.bf16.gmra.mxu0 %v1725
        %v1812 = vpop.f32.mrf.mxu0
        %v1813 = vadd.f32 0.0, %v1812
        %v1814 = vpop.f32.mrf.mxu0
        %v1815 = vpop.f32.mrf.mxu0
        %v1816 = vadd.f32 0.0, %v1815
        %v1817 = vpop.f32.mrf.mxu0
        %1818 = vmatprep.mubr.bf16.mxu0 0
        %1819 = vmatmul.mubr.bf16.gmra.mxu0 %v1726
        %v1820 = vpop.f32.mrf.mxu0
        %v1821 = vadd.f32 0.0, %v1820
        %v1822 = vpop.f32.mrf.mxu0
        %v1823 = vpop.f32.mrf.mxu0
        %v1824 = vadd.f32 0.0, %v1823
        %v1825 = vpop.f32.mrf.mxu0
        %1826 = vmatprep.mubr.bf16.mxu0 0
        %1827 = vmatmul.mubr.bf16.gmra.mxu0 %v1727
        %v1828 = vpop.f32.mrf.mxu0
        %v1829 = vadd.f32 0.0, %v1828
        %v1830 = vpop.f32.mrf.mxu0
        %v1831 = vpop.f32.mrf.mxu0
        %v1832 = vadd.f32 0.0, %v1831
        %v1833 = vpop.f32.mrf.mxu0
        %1834 = vmatprep.mubr.bf16.mxu0 0
        %1835 = vmatmul.mubr.bf16.gmra.mxu0 %v1728
        %v1836 = vpop.f32.mrf.mxu0
        %v1837 = vadd.f32 0.0, %v1836
        %v1838 = vpop.f32.mrf.mxu0
        %v1839 = vpop.f32.mrf.mxu0
        %v1840 = vadd.f32 0.0, %v1839
        %v1841 = vpop.f32.mrf.mxu0
        %1842 = vmatprep.mubr.bf16.mxu0 0
        %1843 = vmatmul.mubr.bf16.gmra.mxu0 %v1729
        %v1844 = vpop.f32.mrf.mxu0
        %v1845 = vadd.f32 0.0, %v1844
        %v1846 = vpop.f32.mrf.mxu0
        %v1847 = vpop.f32.mrf.mxu0
        %v1848 = vadd.f32 0.0, %v1847
        %v1849 = vpop.f32.mrf.mxu0
        %1850 = vdwg.mxu0
        %1851 = vrot.lane.b32.xlu0 %v950, 112
        %v1852 = vpop.permute.xlu0 %1851
        %1853 = vrot.lane.b32.xlu0 %v951, 112
        %v1854 = vpop.permute.xlu0 %1853
        %1855 = vrot.lane.b32.xlu0 %v952, 112
        %v1856 = vpop.permute.xlu0 %1855
        %1857 = vrot.lane.b32.xlu0 %v953, 112
        %v1858 = vpop.permute.xlu0 %1857
        %1859 = vrot.lane.b32.xlu0 %v954, 112
        %v1860 = vpop.permute.xlu0 %1859
        %1861 = vrot.lane.b32.xlu0 %v955, 112
        %v1862 = vpop.permute.xlu0 %1861
        %1863 = vrot.lane.b32.xlu0 %v956, 112
        %v1864 = vpop.permute.xlu0 %1863
        %1865 = vrot.lane.b32.xlu0 %v957, 112
        %v1866 = vpop.permute.xlu0 %1865
        %1867 = vrot.lane.b32.xlu0 %v950, 80
        %v1868 = vpop.permute.xlu0 %1867
        %1869 = vrot.lane.b32.xlu0 %v951, 80
        %v1870 = vpop.permute.xlu0 %1869
        %1871 = vrot.lane.b32.xlu0 %v952, 80
        %v1872 = vpop.permute.xlu0 %1871
        %1873 = vrot.lane.b32.xlu0 %v953, 80
        %v1874 = vpop.permute.xlu0 %1873
        %1875 = vrot.lane.b32.xlu0 %v954, 80
        %v1876 = vpop.permute.xlu0 %1875
        %1877 = vrot.lane.b32.xlu0 %v955, 80
        %v1878 = vpop.permute.xlu0 %1877
        %1879 = vrot.lane.b32.xlu0 %v956, 80
        %v1880 = vpop.permute.xlu0 %1879
        %1881 = vrot.lane.b32.xlu0 %v957, 80
        %v1882 = vpop.permute.xlu0 %1881
        %v1884 = vsel %vm982, %v1852, 0
        %v1887 = vsel %vm982, %v1854, 0
        %v1890 = vsel %vm982, %v1856, 0
        %v1893 = vsel %vm982, %v1858, 0
        %v1896 = vsel %vm982, %v1860, 0
        %v1899 = vsel %vm982, %v1862, 0
        %v1902 = vsel %vm982, %v1864, 0
        %v1905 = vsel %vm982, %v1866, 0
        %v1908 = vsel %vm982, %v1868, 0
        %v1911 = vsel %vm982, %v1870, 0
        %v1914 = vsel %vm982, %v1872, 0
        %v1917 = vsel %vm982, %v1874, 0
        %v1920 = vsel %vm982, %v1876, 0
        %v1923 = vsel %vm982, %v1878, 0
        %v1926 = vsel %vm982, %v1880, 0
        %v1929 = vsel %vm982, %v1882, 0
        %1931 = vmatprep.subr.bf16.mxu0 0
        %1932 = vmatpush1.bf16.xpose.msra.mxu0 %v1929
        %1933 = vmatprep.subr.bf16.mxu0 0
        %1934 = vmatpush1.bf16.xpose.msra.mxu0 %v1926
        %1935 = vmatprep.subr.bf16.mxu0 0
        %1936 = vmatpush1.bf16.xpose.msra.mxu0 %v1923
        %1937 = vmatprep.subr.bf16.mxu0 0
        %1938 = vmatpush1.bf16.xpose.msra.mxu0 %v1920
        %1939 = vmatprep.subr.bf16.mxu0 0
        %1940 = vmatpush1.bf16.xpose.msra.mxu0 %v1917
        %1941 = vmatprep.subr.bf16.mxu0 0
        %1942 = vmatpush1.bf16.xpose.msra.mxu0 %v1914
        %1943 = vmatprep.subr.bf16.mxu0 0
        %1944 = vmatpush1.bf16.xpose.msra.mxu0 %v1911
        %1945 = vmatprep.subr.bf16.mxu0 0
        %1946 = vmatpush1.bf16.xpose.msra.mxu0 %v1908
        %1947 = vmatprep.subr.bf16.mxu0 0
        %1948 = vmatpush2.bf16.xpose.msra.mxu0 0
        %1949 = vmatprep.subr.bf16.mxu0 0
        %1950 = vmatpush2.bf16.xpose.msra.mxu0 0
        %1951 = vmatprep.subr.bf16.mxu0 0
        %1952 = vmatpush2.bf16.xpose.msra.mxu0 0
        %1953 = vmatprep.subr.bf16.mxu0 0
        %1954 = vmatpush2.bf16.xpose.msra.mxu0 0
        %1955 = vmatprep.subr.bf16.mxu0 0
        %1956 = vmatpush2.bf16.xpose.msra.mxu0 0
        %1957 = vmatprep.subr.bf16.mxu0 0
        %1958 = vmatpush2.bf16.xpose.msra.mxu0 0
        %1959 = vmatprep.subr.bf16.mxu0 0
        %1960 = vmatpush2.bf16.xpose.msra.mxu0 0
        %1961 = vmatprep.subr.bf16.mxu0 0
        %1962 = vmatpush2.bf16.xpose.msra.mxu0 0
        %1963 = vmatprep.mubr.bf16.mxu0 0
        %1964 = vmatmul.mubr.bf16.gmra.mxu0 %v1884
        %v1965 = vpop.f32.mrf.mxu0
        %v1966 = vadd.f32 %v614, %v1965
        %v1967 = vpop.f32.mrf.mxu0
        %v1968 = vpop.f32.mrf.mxu0
        %v1969 = vadd.f32 %v615, %v1968
        %v1970 = vpop.f32.mrf.mxu0
        %1971 = vmatprep.mubr.bf16.mxu0 0
        %1972 = vmatmul.mubr.bf16.gmra.mxu0 %v1887
        %v1973 = vpop.f32.mrf.mxu0
        %v1974 = vadd.f32 %v616, %v1973
        %v1975 = vpop.f32.mrf.mxu0
        %v1976 = vpop.f32.mrf.mxu0
        %v1977 = vadd.f32 %v617, %v1976
        %v1978 = vpop.f32.mrf.mxu0
        %1979 = vmatprep.mubr.bf16.mxu0 0
        %1980 = vmatmul.mubr.bf16.gmra.mxu0 %v1890
        %v1981 = vpop.f32.mrf.mxu0
        %v1982 = vadd.f32 %v618, %v1981
        %v1983 = vpop.f32.mrf.mxu0
        %v1984 = vpop.f32.mrf.mxu0
        %v1985 = vadd.f32 %v619, %v1984
        %v1986 = vpop.f32.mrf.mxu0
        %1987 = vmatprep.mubr.bf16.mxu0 0
        %1988 = vmatmul.mubr.bf16.gmra.mxu0 %v1893
        %v1989 = vpop.f32.mrf.mxu0
        %v1990 = vadd.f32 %v620, %v1989
        %v1991 = vpop.f32.mrf.mxu0
        %v1992 = vpop.f32.mrf.mxu0
        %v1993 = vadd.f32 %v621, %v1992
        %v1994 = vpop.f32.mrf.mxu0
        %1995 = vmatprep.mubr.bf16.mxu0 0
        %1996 = vmatmul.mubr.bf16.gmra.mxu0 %v1896
        %v1997 = vpop.f32.mrf.mxu0
        %v1998 = vadd.f32 %v622, %v1997
        %v1999 = vpop.f32.mrf.mxu0
        %v2000 = vpop.f32.mrf.mxu0
        %v2001 = vadd.f32 %v623, %v2000
        %v2002 = vpop.f32.mrf.mxu0
        %2003 = vmatprep.mubr.bf16.mxu0 0
        %2004 = vmatmul.mubr.bf16.gmra.mxu0 %v1899
        %v2005 = vpop.f32.mrf.mxu0
        %v2006 = vadd.f32 %v624, %v2005
        %v2007 = vpop.f32.mrf.mxu0
        %v2008 = vpop.f32.mrf.mxu0
        %v2009 = vadd.f32 %v625, %v2008
        %v2010 = vpop.f32.mrf.mxu0
        %2011 = vmatprep.mubr.bf16.mxu0 0
        %2012 = vmatmul.mubr.bf16.gmra.mxu0 %v1902
        %v2013 = vpop.f32.mrf.mxu0
        %v2014 = vadd.f32 %v626, %v2013
        %v2015 = vpop.f32.mrf.mxu0
        %v2016 = vpop.f32.mrf.mxu0
        %v2017 = vadd.f32 %v627, %v2016
        %v2018 = vpop.f32.mrf.mxu0
        %2019 = vmatprep.mubr.bf16.mxu0 0
        %2020 = vmatmul.mubr.bf16.gmra.mxu0 %v1905
        %v2021 = vpop.f32.mrf.mxu0
        %v2022 = vadd.f32 %v628, %v2021
        %v2023 = vpop.f32.mrf.mxu0
        %v2024 = vpop.f32.mrf.mxu0
        %v2025 = vadd.f32 %v629, %v2024
        %v2026 = vpop.f32.mrf.mxu0
        %2027 = vdwg.mxu0
        %2028 = vmax.xlane.f32.xlu0 %v1966
        %v2029 = vpop.xlane.xlu0 %2028
        %2030 = vmax.xlane.f32.xlu0 %v1969
        %v2031 = vpop.xlane.xlu0 %2030
        %2032 = vmax.xlane.f32.xlu0 %v1974
        %v2033 = vpop.xlane.xlu0 %2032
        %2034 = vmax.xlane.f32.xlu0 %v1977
        %v2035 = vpop.xlane.xlu0 %2034
        %2036 = vmax.xlane.f32.xlu0 %v1982
        %v2037 = vpop.xlane.xlu0 %2036
        %2038 = vmax.xlane.f32.xlu0 %v1985
        %v2039 = vpop.xlane.xlu0 %2038
        %2040 = vmax.xlane.f32.xlu0 %v1990
        %v2041 = vpop.xlane.xlu0 %2040
        %2042 = vmax.xlane.f32.xlu0 %v1993
        %v2043 = vpop.xlane.xlu0 %2042
        %2044 = vmax.xlane.f32.xlu0 %v1998
        %v2045 = vpop.xlane.xlu0 %2044
        %2046 = vmax.xlane.f32.xlu0 %v2001
        %v2047 = vpop.xlane.xlu0 %2046
        %2048 = vmax.xlane.f32.xlu0 %v2006
        %v2049 = vpop.xlane.xlu0 %2048
        %2050 = vmax.xlane.f32.xlu0 %v2009
        %v2051 = vpop.xlane.xlu0 %2050
        %2052 = vmax.xlane.f32.xlu0 %v2014
        %v2053 = vpop.xlane.xlu0 %2052
        %2054 = vmax.xlane.f32.xlu0 %v2017
        %v2055 = vpop.xlane.xlu0 %2054
        %2056 = vmax.xlane.f32.xlu0 %v2022
        %v2057 = vpop.xlane.xlu0 %2056
        %2058 = vmax.xlane.f32.xlu0 %v2025
        %v2059 = vpop.xlane.xlu0 %2058
        %v2060 = vsub.f32 %v1966, %v2029
        %v2061 = vsub.f32 %v1969, %v2031
        %v2062 = vsub.f32 %v1974, %v2033
        %v2063 = vsub.f32 %v1977, %v2035
        %v2064 = vsub.f32 %v1982, %v2037
        %v2065 = vsub.f32 %v1985, %v2039
        %v2066 = vsub.f32 %v1990, %v2041
        %v2067 = vsub.f32 %v1993, %v2043
        %v2068 = vsub.f32 %v1998, %v2045
        %v2069 = vsub.f32 %v2001, %v2047
        %v2070 = vsub.f32 %v2006, %v2049
        %v2071 = vsub.f32 %v2009, %v2051
        %v2072 = vsub.f32 %v2014, %v2053
        %v2073 = vsub.f32 %v2017, %v2055
        %v2074 = vsub.f32 %v2022, %v2057
        %v2075 = vsub.f32 %v2025, %v2059
        %v2076 = vmul.f32 %v2060, 1.442695
        %v2077 = vpow.pop %v2076
        %v2078 = vmul.f32 %v2061, 1.442695
        %v2079 = vpow.pop %v2078
        %v2080 = vmul.f32 %v2062, 1.442695
        %v2081 = vpow.pop %v2080
        %v2082 = vmul.f32 %v2063, 1.442695
        %v2083 = vpow.pop %v2082
        %v2084 = vmul.f32 %v2064, 1.442695
        %v2085 = vpow.pop %v2084
        %v2086 = vmul.f32 %v2065, 1.442695
        %v2087 = vpow.pop %v2086
        %v2088 = vmul.f32 %v2066, 1.442695
        %v2089 = vpow.pop %v2088
        %v2090 = vmul.f32 %v2067, 1.442695
        %v2091 = vpow.pop %v2090
        %v2092 = vmul.f32 %v2068, 1.442695
        %v2093 = vpow.pop %v2092
        %v2094 = vmul.f32 %v2069, 1.442695
        %v2095 = vpow.pop %v2094
        %v2096 = vmul.f32 %v2070, 1.442695
        %v2097 = vpow.pop %v2096
        %v2098 = vmul.f32 %v2071, 1.442695
        %v2099 = vpow.pop %v2098
        %v2100 = vmul.f32 %v2072, 1.442695
        %v2101 = vpow.pop %v2100
        %v2102 = vmul.f32 %v2073, 1.442695
        %v2103 = vpow.pop %v2102
        %v2104 = vmul.f32 %v2074, 1.442695
        %v2105 = vpow.pop %v2104
        %v2106 = vmul.f32 %v2075, 1.442695
        %v2107 = vpow.pop %v2106
        %2108 = vadd.xlane.f32.xlu0 %v2077
        %v2109 = vpop.xlane.xlu0 %2108
        %2110 = vadd.xlane.f32.xlu0 %v2079
        %v2111 = vpop.xlane.xlu0 %2110
        %2112 = vadd.xlane.f32.xlu0 %v2081
        %v2113 = vpop.xlane.xlu0 %2112
        %2114 = vadd.xlane.f32.xlu0 %v2083
        %v2115 = vpop.xlane.xlu0 %2114
        %2116 = vadd.xlane.f32.xlu0 %v2085
        %v2117 = vpop.xlane.xlu0 %2116
        %2118 = vadd.xlane.f32.xlu0 %v2087
        %v2119 = vpop.xlane.xlu0 %2118
        %2120 = vadd.xlane.f32.xlu0 %v2089
        %v2121 = vpop.xlane.xlu0 %2120
        %2122 = vadd.xlane.f32.xlu0 %v2091
        %v2123 = vpop.xlane.xlu0 %2122
        %2124 = vadd.xlane.f32.xlu0 %v2093
        %v2125 = vpop.xlane.xlu0 %2124
        %2126 = vadd.xlane.f32.xlu0 %v2095
        %v2127 = vpop.xlane.xlu0 %2126
        %2128 = vadd.xlane.f32.xlu0 %v2097
        %v2129 = vpop.xlane.xlu0 %2128
        %2130 = vadd.xlane.f32.xlu0 %v2099
        %v2131 = vpop.xlane.xlu0 %2130
        %2132 = vadd.xlane.f32.xlu0 %v2101
        %v2133 = vpop.xlane.xlu0 %2132
        %2134 = vadd.xlane.f32.xlu0 %v2103
        %v2135 = vpop.xlane.xlu0 %2134
        %2136 = vadd.xlane.f32.xlu0 %v2105
        %v2137 = vpop.xlane.xlu0 %2136
        %2138 = vadd.xlane.f32.xlu0 %v2107
        %v2139 = vpop.xlane.xlu0 %2138
        %v2140 = vrcp.pop %v2109
        %v2141 = vrcp.pop %v2111
        %v2142 = vrcp.pop %v2113
        %v2143 = vrcp.pop %v2115
        %v2144 = vrcp.pop %v2117
        %v2145 = vrcp.pop %v2119
        %v2146 = vrcp.pop %v2121
        %v2147 = vrcp.pop %v2123
        %v2148 = vrcp.pop %v2125
        %v2149 = vrcp.pop %v2127
        %v2150 = vrcp.pop %v2129
        %v2151 = vrcp.pop %v2131
        %v2152 = vrcp.pop %v2133
        %v2153 = vrcp.pop %v2135
        %v2154 = vrcp.pop %v2137
        %v2155 = vrcp.pop %v2139
        %v2156 = vmul.f32 %v2077, %v2140
        %v2157 = vmul.f32 %v2079, %v2141
        %v2158 = vmul.f32 %v2081, %v2142
        %v2159 = vmul.f32 %v2083, %v2143
        %v2160 = vmul.f32 %v2085, %v2144
        %v2161 = vmul.f32 %v2087, %v2145
        %v2162 = vmul.f32 %v2089, %v2146
        %v2163 = vmul.f32 %v2091, %v2147
        %v2164 = vmul.f32 %v2093, %v2148
        %v2165 = vmul.f32 %v2095, %v2149
        %v2166 = vmul.f32 %v2097, %v2150
        %v2167 = vmul.f32 %v2099, %v2151
        %v2168 = vmul.f32 %v2101, %v2152
        %v2169 = vmul.f32 %v2103, %v2153
        %v2170 = vmul.f32 %v2105, %v2154
        %v2171 = vmul.f32 %v2107, %v2155
        %v2172 = vpack.c.bf16 %v2157, %v2156
        %v2173 = vpack.c.bf16 %v2159, %v2158
        %v2174 = vpack.c.bf16 %v2161, %v2160
        %v2175 = vpack.c.bf16 %v2163, %v2162
        %v2176 = vpack.c.bf16 %v2165, %v2164
        %v2177 = vpack.c.bf16 %v2167, %v2166
        %v2178 = vpack.c.bf16 %v2169, %v2168
        %v2179 = vpack.c.bf16 %v2171, %v2170
        %2180 = vrot.lane.b32.xlu0 %v950, 48
        %v2181 = vpop.permute.xlu0 %2180
        %2182 = vrot.lane.b32.xlu0 %v951, 48
        %v2183 = vpop.permute.xlu0 %2182
        %2184 = vrot.lane.b32.xlu0 %v952, 48
        %v2185 = vpop.permute.xlu0 %2184
        %2186 = vrot.lane.b32.xlu0 %v953, 48
        %v2187 = vpop.permute.xlu0 %2186
        %2188 = vrot.lane.b32.xlu0 %v954, 48
        %v2189 = vpop.permute.xlu0 %2188
        %2190 = vrot.lane.b32.xlu0 %v955, 48
        %v2191 = vpop.permute.xlu0 %2190
        %2192 = vrot.lane.b32.xlu0 %v956, 48
        %v2193 = vpop.permute.xlu0 %2192
        %2194 = vrot.lane.b32.xlu0 %v957, 48
        %v2195 = vpop.permute.xlu0 %2194
        %2204 = vmatprep.subr.bf16.mxu0 0
        %2205 = vmatpush1.bf16.msra.mxu0 %v2195
        %2206 = vmatprep.subr.bf16.mxu0 0
        %2207 = vmatpush1.bf16.msra.mxu0 %v2193
        %2208 = vmatprep.subr.bf16.mxu0 0
        %2209 = vmatpush1.bf16.msra.mxu0 %v2191
        %2210 = vmatprep.subr.bf16.mxu0 0
        %2211 = vmatpush1.bf16.msra.mxu0 %v2189
        %2212 = vmatprep.subr.bf16.mxu0 0
        %2213 = vmatpush1.bf16.msra.mxu0 %v2187
        %2214 = vmatprep.subr.bf16.mxu0 0
        %2215 = vmatpush1.bf16.msra.mxu0 %v2185
        %2216 = vmatprep.subr.bf16.mxu0 0
        %2217 = vmatpush1.bf16.msra.mxu0 %v2183
        %2218 = vmatprep.subr.bf16.mxu0 0
        %2219 = vmatpush1.bf16.msra.mxu0 %v2181
        %2220 = vmatprep.subr.bf16.mxu0 0
        %2221 = vmatpush2.bf16.msra.mxu0 0
        %2222 = vmatprep.subr.bf16.mxu0 0
        %2223 = vmatpush2.bf16.msra.mxu0 0
        %2224 = vmatprep.subr.bf16.mxu0 0
        %2225 = vmatpush2.bf16.msra.mxu0 0
        %2226 = vmatprep.subr.bf16.mxu0 0
        %2227 = vmatpush2.bf16.msra.mxu0 0
        %2228 = vmatprep.subr.bf16.mxu0 0
        %2229 = vmatpush2.bf16.msra.mxu0 0
        %2230 = vmatprep.subr.bf16.mxu0 0
        %2231 = vmatpush2.bf16.msra.mxu0 0
        %2232 = vmatprep.subr.bf16.mxu0 0
        %2233 = vmatpush2.bf16.msra.mxu0 0
        %2234 = vmatprep.subr.bf16.mxu0 0
        %2235 = vmatpush2.bf16.msra.mxu0 0
        %2236 = vmatprep.mubr.bf16.mxu0 0
        %2237 = vmatmul.mubr.bf16.gmra.mxu0 %v2172
        %v2238 = vpop.f32.mrf.mxu0
        %v2239 = vadd.f32 0.0, %v2238
        %v2240 = vpop.f32.mrf.mxu0
        %v2241 = vpop.f32.mrf.mxu0
        %v2242 = vadd.f32 0.0, %v2241
        %v2243 = vpop.f32.mrf.mxu0
        %2244 = vmatprep.mubr.bf16.mxu0 0
        %2245 = vmatmul.mubr.bf16.gmra.mxu0 %v2173
        %v2246 = vpop.f32.mrf.mxu0
        %v2247 = vadd.f32 0.0, %v2246
        %v2248 = vpop.f32.mrf.mxu0
        %v2249 = vpop.f32.mrf.mxu0
        %v2250 = vadd.f32 0.0, %v2249
        %v2251 = vpop.f32.mrf.mxu0
        %2252 = vmatprep.mubr.bf16.mxu0 0
        %2253 = vmatmul.mubr.bf16.gmra.mxu0 %v2174
        %v2254 = vpop.f32.mrf.mxu0
        %v2255 = vadd.f32 0.0, %v2254
        %v2256 = vpop.f32.mrf.mxu0
        %v2257 = vpop.f32.mrf.mxu0
        %v2258 = vadd.f32 0.0, %v2257
        %v2259 = vpop.f32.mrf.mxu0
        %2260 = vmatprep.mubr.bf16.mxu0 0
        %2261 = vmatmul.mubr.bf16.gmra.mxu0 %v2175
        %v2262 = vpop.f32.mrf.mxu0
        %v2263 = vadd.f32 0.0, %v2262
        %v2264 = vpop.f32.mrf.mxu0
        %v2265 = vpop.f32.mrf.mxu0
        %v2266 = vadd.f32 0.0, %v2265
        %v2267 = vpop.f32.mrf.mxu0
        %2268 = vmatprep.mubr.bf16.mxu0 0
        %2269 = vmatmul.mubr.bf16.gmra.mxu0 %v2176
        %v2270 = vpop.f32.mrf.mxu0
        %v2271 = vadd.f32 0.0, %v2270
        %v2272 = vpop.f32.mrf.mxu0
        %v2273 = vpop.f32.mrf.mxu0
        %v2274 = vadd.f32 0.0, %v2273
        %v2275 = vpop.f32.mrf.mxu0
        %2276 = vmatprep.mubr.bf16.mxu0 0
        %2277 = vmatmul.mubr.bf16.gmra.mxu0 %v2177
        %v2278 = vpop.f32.mrf.mxu0
        %v2279 = vadd.f32 0.0, %v2278
        %v2280 = vpop.f32.mrf.mxu0
        %v2281 = vpop.f32.mrf.mxu0
        %v2282 = vadd.f32 0.0, %v2281
        %v2283 = vpop.f32.mrf.mxu0
        %2284 = vmatprep.mubr.bf16.mxu0 0
        %2285 = vmatmul.mubr.bf16.gmra.mxu0 %v2178
        %v2286 = vpop.f32.mrf.mxu0
        %v2287 = vadd.f32 0.0, %v2286
        %v2288 = vpop.f32.mrf.mxu0
        %v2289 = vpop.f32.mrf.mxu0
        %v2290 = vadd.f32 0.0, %v2289
        %v2291 = vpop.f32.mrf.mxu0
        %2292 = vmatprep.mubr.bf16.mxu0 0
        %2293 = vmatmul.mubr.bf16.gmra.mxu0 %v2179
        %v2294 = vpop.f32.mrf.mxu0
        %v2295 = vadd.f32 0.0, %v2294
        %v2296 = vpop.f32.mrf.mxu0
        %v2297 = vpop.f32.mrf.mxu0
        %v2298 = vadd.f32 0.0, %v2297
        %v2299 = vpop.f32.mrf.mxu0
        %2300 = vdwg.mxu0
        %2301 = vrot.lane.b32.xlu0 %v950, 104
        %v2302 = vpop.permute.xlu0 %2301
        %2303 = vrot.lane.b32.xlu0 %v951, 104
        %v2304 = vpop.permute.xlu0 %2303
        %2305 = vrot.lane.b32.xlu0 %v952, 104
        %v2306 = vpop.permute.xlu0 %2305
        %2307 = vrot.lane.b32.xlu0 %v953, 104
        %v2308 = vpop.permute.xlu0 %2307
        %2309 = vrot.lane.b32.xlu0 %v954, 104
        %v2310 = vpop.permute.xlu0 %2309
        %2311 = vrot.lane.b32.xlu0 %v955, 104
        %v2312 = vpop.permute.xlu0 %2311
        %2313 = vrot.lane.b32.xlu0 %v956, 104
        %v2314 = vpop.permute.xlu0 %2313
        %2315 = vrot.lane.b32.xlu0 %v957, 104
        %v2316 = vpop.permute.xlu0 %2315
        %2317 = vrot.lane.b32.xlu0 %v950, 72
        %v2318 = vpop.permute.xlu0 %2317
        %2319 = vrot.lane.b32.xlu0 %v951, 72
        %v2320 = vpop.permute.xlu0 %2319
        %2321 = vrot.lane.b32.xlu0 %v952, 72
        %v2322 = vpop.permute.xlu0 %2321
        %2323 = vrot.lane.b32.xlu0 %v953, 72
        %v2324 = vpop.permute.xlu0 %2323
        %2325 = vrot.lane.b32.xlu0 %v954, 72
        %v2326 = vpop.permute.xlu0 %2325
        %2327 = vrot.lane.b32.xlu0 %v955, 72
        %v2328 = vpop.permute.xlu0 %2327
        %2329 = vrot.lane.b32.xlu0 %v956, 72
        %v2330 = vpop.permute.xlu0 %2329
        %2331 = vrot.lane.b32.xlu0 %v957, 72
        %v2332 = vpop.permute.xlu0 %2331
        %v2334 = vsel %vm982, %v2302, 0
        %v2337 = vsel %vm982, %v2304, 0
        %v2340 = vsel %vm982, %v2306, 0
        %v2343 = vsel %vm982, %v2308, 0
        %v2346 = vsel %vm982, %v2310, 0
        %v2349 = vsel %vm982, %v2312, 0
        %v2352 = vsel %vm982, %v2314, 0
        %v2355 = vsel %vm982, %v2316, 0
        %v2358 = vsel %vm982, %v2318, 0
        %v2361 = vsel %vm982, %v2320, 0
        %v2364 = vsel %vm982, %v2322, 0
        %v2367 = vsel %vm982, %v2324, 0
        %v2370 = vsel %vm982, %v2326, 0
        %v2373 = vsel %vm982, %v2328, 0
        %v2376 = vsel %vm982, %v2330, 0
        %v2379 = vsel %vm982, %v2332, 0
        %2381 = vmatprep.subr.bf16.mxu0 0
        %2382 = vmatpush1.bf16.xpose.msra.mxu0 %v2379
        %2383 = vmatprep.subr.bf16.mxu0 0
        %2384 = vmatpush1.bf16.xpose.msra.mxu0 %v2376
        %2385 = vmatprep.subr.bf16.mxu0 0
        %2386 = vmatpush1.bf16.xpose.msra.mxu0 %v2373
        %2387 = vmatprep.subr.bf16.mxu0 0
        %2388 = vmatpush1.bf16.xpose.msra.mxu0 %v2370
        %2389 = vmatprep.subr.bf16.mxu0 0
        %2390 = vmatpush1.bf16.xpose.msra.mxu0 %v2367
        %2391 = vmatprep.subr.bf16.mxu0 0
        %2392 = vmatpush1.bf16.xpose.msra.mxu0 %v2364
        %2393 = vmatprep.subr.bf16.mxu0 0
        %2394 = vmatpush1.bf16.xpose.msra.mxu0 %v2361
        %2395 = vmatprep.subr.bf16.mxu0 0
        %2396 = vmatpush1.bf16.xpose.msra.mxu0 %v2358
        %2397 = vmatprep.subr.bf16.mxu0 0
        %2398 = vmatpush2.bf16.xpose.msra.mxu0 0
        %2399 = vmatprep.subr.bf16.mxu0 0
        %2400 = vmatpush2.bf16.xpose.msra.mxu0 0
        %2401 = vmatprep.subr.bf16.mxu0 0
        %2402 = vmatpush2.bf16.xpose.msra.mxu0 0
        %2403 = vmatprep.subr.bf16.mxu0 0
        %2404 = vmatpush2.bf16.xpose.msra.mxu0 0
        %2405 = vmatprep.subr.bf16.mxu0 0
        %2406 = vmatpush2.bf16.xpose.msra.mxu0 0
        %2407 = vmatprep.subr.bf16.mxu0 0
        %2408 = vmatpush2.bf16.xpose.msra.mxu0 0
        %2409 = vmatprep.subr.bf16.mxu0 0
        %2410 = vmatpush2.bf16.xpose.msra.mxu0 0
        %2411 = vmatprep.subr.bf16.mxu0 0
        %2412 = vmatpush2.bf16.xpose.msra.mxu0 0
        %2413 = vmatprep.mubr.bf16.mxu0 0
        %2414 = vmatmul.mubr.bf16.gmra.mxu0 %v2334
        %v2415 = vpop.f32.mrf.mxu0
        %v2416 = vadd.f32 %v614, %v2415
        %v2417 = vpop.f32.mrf.mxu0
        %v2418 = vpop.f32.mrf.mxu0
        %v2419 = vadd.f32 %v615, %v2418
        %v2420 = vpop.f32.mrf.mxu0
        %2421 = vmatprep.mubr.bf16.mxu0 0
        %2422 = vmatmul.mubr.bf16.gmra.mxu0 %v2337
        %v2423 = vpop.f32.mrf.mxu0
        %v2424 = vadd.f32 %v616, %v2423
        %v2425 = vpop.f32.mrf.mxu0
        %v2426 = vpop.f32.mrf.mxu0
        %v2427 = vadd.f32 %v617, %v2426
        %v2428 = vpop.f32.mrf.mxu0
        %2429 = vmatprep.mubr.bf16.mxu0 0
        %2430 = vmatmul.mubr.bf16.gmra.mxu0 %v2340
        %v2431 = vpop.f32.mrf.mxu0
        %v2432 = vadd.f32 %v618, %v2431
        %v2433 = vpop.f32.mrf.mxu0
        %v2434 = vpop.f32.mrf.mxu0
        %v2435 = vadd.f32 %v619, %v2434
        %v2436 = vpop.f32.mrf.mxu0
        %2437 = vmatprep.mubr.bf16.mxu0 0
        %2438 = vmatmul.mubr.bf16.gmra.mxu0 %v2343
        %v2439 = vpop.f32.mrf.mxu0
        %v2440 = vadd.f32 %v620, %v2439
        %v2441 = vpop.f32.mrf.mxu0
        %v2442 = vpop.f32.mrf.mxu0
        %v2443 = vadd.f32 %v621, %v2442
        %v2444 = vpop.f32.mrf.mxu0
        %2445 = vmatprep.mubr.bf16.mxu0 0
        %2446 = vmatmul.mubr.bf16.gmra.mxu0 %v2346
        %v2447 = vpop.f32.mrf.mxu0
        %v2448 = vadd.f32 %v622, %v2447
        %v2449 = vpop.f32.mrf.mxu0
        %v2450 = vpop.f32.mrf.mxu0
        %v2451 = vadd.f32 %v623, %v2450
        %v2452 = vpop.f32.mrf.mxu0
        %2453 = vmatprep.mubr.bf16.mxu0 0
        %2454 = vmatmul.mubr.bf16.gmra.mxu0 %v2349
        %v2455 = vpop.f32.mrf.mxu0
        %v2456 = vadd.f32 %v624, %v2455
        %v2457 = vpop.f32.mrf.mxu0
        %v2458 = vpop.f32.mrf.mxu0
        %v2459 = vadd.f32 %v625, %v2458
        %v2460 = vpop.f32.mrf.mxu0
        %2461 = vmatprep.mubr.bf16.mxu0 0
        %2462 = vmatmul.mubr.bf16.gmra.mxu0 %v2352
        %v2463 = vpop.f32.mrf.mxu0
        %v2464 = vadd.f32 %v626, %v2463
        %v2465 = vpop.f32.mrf.mxu0
        %v2466 = vpop.f32.mrf.mxu0
        %v2467 = vadd.f32 %v627, %v2466
        %v2468 = vpop.f32.mrf.mxu0
        %2469 = vmatprep.mubr.bf16.mxu0 0
        %2470 = vmatmul.mubr.bf16.gmra.mxu0 %v2355
        %v2471 = vpop.f32.mrf.mxu0
        %v2472 = vadd.f32 %v628, %v2471
        %v2473 = vpop.f32.mrf.mxu0
        %v2474 = vpop.f32.mrf.mxu0
        %v2475 = vadd.f32 %v629, %v2474
        %v2476 = vpop.f32.mrf.mxu0
        %2477 = vdwg.mxu0
        %2478 = vmax.xlane.f32.xlu0 %v2416
        %v2479 = vpop.xlane.xlu0 %2478
        %2480 = vmax.xlane.f32.xlu0 %v2419
        %v2481 = vpop.xlane.xlu0 %2480
        %2482 = vmax.xlane.f32.xlu0 %v2424
        %v2483 = vpop.xlane.xlu0 %2482
        %2484 = vmax.xlane.f32.xlu0 %v2427
        %v2485 = vpop.xlane.xlu0 %2484
        %2486 = vmax.xlane.f32.xlu0 %v2432
        %v2487 = vpop.xlane.xlu0 %2486
        %2488 = vmax.xlane.f32.xlu0 %v2435
        %v2489 = vpop.xlane.xlu0 %2488
        %2490 = vmax.xlane.f32.xlu0 %v2440
        %v2491 = vpop.xlane.xlu0 %2490
        %2492 = vmax.xlane.f32.xlu0 %v2443
        %v2493 = vpop.xlane.xlu0 %2492
        %2494 = vmax.xlane.f32.xlu0 %v2448
        %v2495 = vpop.xlane.xlu0 %2494
        %2496 = vmax.xlane.f32.xlu0 %v2451
        %v2497 = vpop.xlane.xlu0 %2496
        %2498 = vmax.xlane.f32.xlu0 %v2456
        %v2499 = vpop.xlane.xlu0 %2498
        %2500 = vmax.xlane.f32.xlu0 %v2459
        %v2501 = vpop.xlane.xlu0 %2500
        %2502 = vmax.xlane.f32.xlu0 %v2464
        %v2503 = vpop.xlane.xlu0 %2502
        %2504 = vmax.xlane.f32.xlu0 %v2467
        %v2505 = vpop.xlane.xlu0 %2504
        %2506 = vmax.xlane.f32.xlu0 %v2472
        %v2507 = vpop.xlane.xlu0 %2506
        %2508 = vmax.xlane.f32.xlu0 %v2475
        %v2509 = vpop.xlane.xlu0 %2508
        %v2510 = vsub.f32 %v2416, %v2479
        %v2511 = vsub.f32 %v2419, %v2481
        %v2512 = vsub.f32 %v2424, %v2483
        %v2513 = vsub.f32 %v2427, %v2485
        %v2514 = vsub.f32 %v2432, %v2487
        %v2515 = vsub.f32 %v2435, %v2489
        %v2516 = vsub.f32 %v2440, %v2491
        %v2517 = vsub.f32 %v2443, %v2493
        %v2518 = vsub.f32 %v2448, %v2495
        %v2519 = vsub.f32 %v2451, %v2497
        %v2520 = vsub.f32 %v2456, %v2499
        %v2521 = vsub.f32 %v2459, %v2501
        %v2522 = vsub.f32 %v2464, %v2503
        %v2523 = vsub.f32 %v2467, %v2505
        %v2524 = vsub.f32 %v2472, %v2507
        %v2525 = vsub.f32 %v2475, %v2509
        %v2526 = vmul.f32 %v2510, 1.442695
        %v2527 = vpow.pop %v2526
        %v2528 = vmul.f32 %v2511, 1.442695
        %v2529 = vpow.pop %v2528
        %v2530 = vmul.f32 %v2512, 1.442695
        %v2531 = vpow.pop %v2530
        %v2532 = vmul.f32 %v2513, 1.442695
        %v2533 = vpow.pop %v2532
        %v2534 = vmul.f32 %v2514, 1.442695
        %v2535 = vpow.pop %v2534
        %v2536 = vmul.f32 %v2515, 1.442695
        %v2537 = vpow.pop %v2536
        %v2538 = vmul.f32 %v2516, 1.442695
        %v2539 = vpow.pop %v2538
        %v2540 = vmul.f32 %v2517, 1.442695
        %v2541 = vpow.pop %v2540
        %v2542 = vmul.f32 %v2518, 1.442695
        %v2543 = vpow.pop %v2542
        %v2544 = vmul.f32 %v2519, 1.442695
        %v2545 = vpow.pop %v2544
        %v2546 = vmul.f32 %v2520, 1.442695
        %v2547 = vpow.pop %v2546
        %v2548 = vmul.f32 %v2521, 1.442695
        %v2549 = vpow.pop %v2548
        %v2550 = vmul.f32 %v2522, 1.442695
        %v2551 = vpow.pop %v2550
        %v2552 = vmul.f32 %v2523, 1.442695
        %v2553 = vpow.pop %v2552
        %v2554 = vmul.f32 %v2524, 1.442695
        %v2555 = vpow.pop %v2554
        %v2556 = vmul.f32 %v2525, 1.442695
        %v2557 = vpow.pop %v2556
        %2558 = vadd.xlane.f32.xlu0 %v2527
        %v2559 = vpop.xlane.xlu0 %2558
        %2560 = vadd.xlane.f32.xlu0 %v2529
        %v2561 = vpop.xlane.xlu0 %2560
        %2562 = vadd.xlane.f32.xlu0 %v2531
        %v2563 = vpop.xlane.xlu0 %2562
        %2564 = vadd.xlane.f32.xlu0 %v2533
        %v2565 = vpop.xlane.xlu0 %2564
        %2566 = vadd.xlane.f32.xlu0 %v2535
        %v2567 = vpop.xlane.xlu0 %2566
        %2568 = vadd.xlane.f32.xlu0 %v2537
        %v2569 = vpop.xlane.xlu0 %2568
        %2570 = vadd.xlane.f32.xlu0 %v2539
        %v2571 = vpop.xlane.xlu0 %2570
        %2572 = vadd.xlane.f32.xlu0 %v2541
        %v2573 = vpop.xlane.xlu0 %2572
        %2574 = vadd.xlane.f32.xlu0 %v2543
        %v2575 = vpop.xlane.xlu0 %2574
        %2576 = vadd.xlane.f32.xlu0 %v2545
        %v2577 = vpop.xlane.xlu0 %2576
        %2578 = vadd.xlane.f32.xlu0 %v2547
        %v2579 = vpop.xlane.xlu0 %2578
        %2580 = vadd.xlane.f32.xlu0 %v2549
        %v2581 = vpop.xlane.xlu0 %2580
        %2582 = vadd.xlane.f32.xlu0 %v2551
        %v2583 = vpop.xlane.xlu0 %2582
        %2584 = vadd.xlane.f32.xlu0 %v2553
        %v2585 = vpop.xlane.xlu0 %2584
        %2586 = vadd.xlane.f32.xlu0 %v2555
        %v2587 = vpop.xlane.xlu0 %2586
        %2588 = vadd.xlane.f32.xlu0 %v2557
        %v2589 = vpop.xlane.xlu0 %2588
        %v2590 = vrcp.pop %v2559
        %v2591 = vrcp.pop %v2561
        %v2592 = vrcp.pop %v2563
        %v2593 = vrcp.pop %v2565
        %v2594 = vrcp.pop %v2567
        %v2595 = vrcp.pop %v2569
        %v2596 = vrcp.pop %v2571
        %v2597 = vrcp.pop %v2573
        %v2598 = vrcp.pop %v2575
        %v2599 = vrcp.pop %v2577
        %v2600 = vrcp.pop %v2579
        %v2601 = vrcp.pop %v2581
        %v2602 = vrcp.pop %v2583
        %v2603 = vrcp.pop %v2585
        %v2604 = vrcp.pop %v2587
        %v2605 = vrcp.pop %v2589
        %v2606 = vmul.f32 %v2527, %v2590
        %v2607 = vmul.f32 %v2529, %v2591
        %v2608 = vmul.f32 %v2531, %v2592
        %v2609 = vmul.f32 %v2533, %v2593
        %v2610 = vmul.f32 %v2535, %v2594
        %v2611 = vmul.f32 %v2537, %v2595
        %v2612 = vmul.f32 %v2539, %v2596
        %v2613 = vmul.f32 %v2541, %v2597
        %v2614 = vmul.f32 %v2543, %v2598
        %v2615 = vmul.f32 %v2545, %v2599
        %v2616 = vmul.f32 %v2547, %v2600
        %v2617 = vmul.f32 %v2549, %v2601
        %v2618 = vmul.f32 %v2551, %v2602
        %v2619 = vmul.f32 %v2553, %v2603
        %v2620 = vmul.f32 %v2555, %v2604
        %v2621 = vmul.f32 %v2557, %v2605
        %v2622 = vpack.c.bf16 %v2607, %v2606
        %v2623 = vpack.c.bf16 %v2609, %v2608
        %v2624 = vpack.c.bf16 %v2611, %v2610
        %v2625 = vpack.c.bf16 %v2613, %v2612
        %v2626 = vpack.c.bf16 %v2615, %v2614
        %v2627 = vpack.c.bf16 %v2617, %v2616
        %v2628 = vpack.c.bf16 %v2619, %v2618
        %v2629 = vpack.c.bf16 %v2621, %v2620
        %2630 = vrot.lane.b32.xlu0 %v950, 40
        %v2631 = vpop.permute.xlu0 %2630
        %2632 = vrot.lane.b32.xlu0 %v951, 40
        %v2633 = vpop.permute.xlu0 %2632
        %2634 = vrot.lane.b32.xlu0 %v952, 40
        %v2635 = vpop.permute.xlu0 %2634
        %2636 = vrot.lane.b32.xlu0 %v953, 40
        %v2637 = vpop.permute.xlu0 %2636
        %2638 = vrot.lane.b32.xlu0 %v954, 40
        %v2639 = vpop.permute.xlu0 %2638
        %2640 = vrot.lane.b32.xlu0 %v955, 40
        %v2641 = vpop.permute.xlu0 %2640
        %2642 = vrot.lane.b32.xlu0 %v956, 40
        %v2643 = vpop.permute.xlu0 %2642
        %2644 = vrot.lane.b32.xlu0 %v957, 40
        %v2645 = vpop.permute.xlu0 %2644
        %2654 = vmatprep.subr.bf16.mxu0 0
        %2655 = vmatpush1.bf16.msra.mxu0 %v2645
        %2656 = vmatprep.subr.bf16.mxu0 0
        %2657 = vmatpush1.bf16.msra.mxu0 %v2643
        %2658 = vmatprep.subr.bf16.mxu0 0
        %2659 = vmatpush1.bf16.msra.mxu0 %v2641
        %2660 = vmatprep.subr.bf16.mxu0 0
        %2661 = vmatpush1.bf16.msra.mxu0 %v2639
        %2662 = vmatprep.subr.bf16.mxu0 0
        %2663 = vmatpush1.bf16.msra.mxu0 %v2637
        %2664 = vmatprep.subr.bf16.mxu0 0
        %2665 = vmatpush1.bf16.msra.mxu0 %v2635
        %2666 = vmatprep.subr.bf16.mxu0 0
        %2667 = vmatpush1.bf16.msra.mxu0 %v2633
        %2668 = vmatprep.subr.bf16.mxu0 0
        %2669 = vmatpush1.bf16.msra.mxu0 %v2631
        %2670 = vmatprep.subr.bf16.mxu0 0
        %2671 = vmatpush2.bf16.msra.mxu0 0
        %2672 = vmatprep.subr.bf16.mxu0 0
        %2673 = vmatpush2.bf16.msra.mxu0 0
        %2674 = vmatprep.subr.bf16.mxu0 0
        %2675 = vmatpush2.bf16.msra.mxu0 0
        %2676 = vmatprep.subr.bf16.mxu0 0
        %2677 = vmatpush2.bf16.msra.mxu0 0
        %2678 = vmatprep.subr.bf16.mxu0 0
        %2679 = vmatpush2.bf16.msra.mxu0 0
        %2680 = vmatprep.subr.bf16.mxu0 0
        %2681 = vmatpush2.bf16.msra.mxu0 0
        %2682 = vmatprep.subr.bf16.mxu0 0
        %2683 = vmatpush2.bf16.msra.mxu0 0
        %2684 = vmatprep.subr.bf16.mxu0 0
        %2685 = vmatpush2.bf16.msra.mxu0 0
        %2686 = vmatprep.mubr.bf16.mxu0 0
        %2687 = vmatmul.mubr.bf16.gmra.mxu0 %v2622
        %v2688 = vpop.f32.mrf.mxu0
        %v2689 = vadd.f32 0.0, %v2688
        %v2690 = vpop.f32.mrf.mxu0
        %v2691 = vpop.f32.mrf.mxu0
        %v2692 = vadd.f32 0.0, %v2691
        %v2693 = vpop.f32.mrf.mxu0
        %2694 = vmatprep.mubr.bf16.mxu0 0
        %2695 = vmatmul.mubr.bf16.gmra.mxu0 %v2623
        %v2696 = vpop.f32.mrf.mxu0
        %v2697 = vadd.f32 0.0, %v2696
        %v2698 = vpop.f32.mrf.mxu0
        %v2699 = vpop.f32.mrf.mxu0
        %v2700 = vadd.f32 0.0, %v2699
        %v2701 = vpop.f32.mrf.mxu0
        %2702 = vmatprep.mubr.bf16.mxu0 0
        %2703 = vmatmul.mubr.bf16.gmra.mxu0 %v2624
        %v2704 = vpop.f32.mrf.mxu0
        %v2705 = vadd.f32 0.0, %v2704
        %v2706 = vpop.f32.mrf.mxu0
        %v2707 = vpop.f32.mrf.mxu0
        %v2708 = vadd.f32 0.0, %v2707
        %v2709 = vpop.f32.mrf.mxu0
        %2710 = vmatprep.mubr.bf16.mxu0 0
        %2711 = vmatmul.mubr.bf16.gmra.mxu0 %v2625
        %v2712 = vpop.f32.mrf.mxu0
        %v2713 = vadd.f32 0.0, %v2712
        %v2714 = vpop.f32.mrf.mxu0
        %v2715 = vpop.f32.mrf.mxu0
        %v2716 = vadd.f32 0.0, %v2715
        %v2717 = vpop.f32.mrf.mxu0
        %2718 = vmatprep.mubr.bf16.mxu0 0
        %2719 = vmatmul.mubr.bf16.gmra.mxu0 %v2626
        %v2720 = vpop.f32.mrf.mxu0
        %v2721 = vadd.f32 0.0, %v2720
        %v2722 = vpop.f32.mrf.mxu0
        %v2723 = vpop.f32.mrf.mxu0
        %v2724 = vadd.f32 0.0, %v2723
        %v2725 = vpop.f32.mrf.mxu0
        %2726 = vmatprep.mubr.bf16.mxu0 0
        %2727 = vmatmul.mubr.bf16.gmra.mxu0 %v2627
        %v2728 = vpop.f32.mrf.mxu0
        %v2729 = vadd.f32 0.0, %v2728
        %v2730 = vpop.f32.mrf.mxu0
        %v2731 = vpop.f32.mrf.mxu0
        %v2732 = vadd.f32 0.0, %v2731
        %v2733 = vpop.f32.mrf.mxu0
        %2734 = vmatprep.mubr.bf16.mxu0 0
        %2735 = vmatmul.mubr.bf16.gmra.mxu0 %v2628
        %v2736 = vpop.f32.mrf.mxu0
        %v2737 = vadd.f32 0.0, %v2736
        %v2738 = vpop.f32.mrf.mxu0
        %v2739 = vpop.f32.mrf.mxu0
        %v2740 = vadd.f32 0.0, %v2739
        %v2741 = vpop.f32.mrf.mxu0
        %2742 = vmatprep.mubr.bf16.mxu0 0
        %2743 = vmatmul.mubr.bf16.gmra.mxu0 %v2629
        %v2744 = vpop.f32.mrf.mxu0
        %v2745 = vadd.f32 0.0, %v2744
        %v2746 = vpop.f32.mrf.mxu0
        %v2747 = vpop.f32.mrf.mxu0
        %v2748 = vadd.f32 0.0, %v2747
        %v2749 = vpop.f32.mrf.mxu0
        %2750 = vdwg.mxu0
        %2767 = vrot.lane.b32.xlu0 %v1789, 8
        %v2768 = vpop.permute.xlu0 %2767
        %2769 = vrot.lane.b32.xlu0 %v1792, 8
        %v2770 = vpop.permute.xlu0 %2769
        %2771 = vrot.lane.b32.xlu0 %v1797, 8
        %v2772 = vpop.permute.xlu0 %2771
        %2773 = vrot.lane.b32.xlu0 %v1800, 8
        %v2774 = vpop.permute.xlu0 %2773
        %2775 = vrot.lane.b32.xlu0 %v1805, 8
        %v2776 = vpop.permute.xlu0 %2775
        %2777 = vrot.lane.b32.xlu0 %v1808, 8
        %v2778 = vpop.permute.xlu0 %2777
        %2779 = vrot.lane.b32.xlu0 %v1813, 8
        %v2780 = vpop.permute.xlu0 %2779
        %2781 = vrot.lane.b32.xlu0 %v1816, 8
        %v2782 = vpop.permute.xlu0 %2781
        %2783 = vrot.lane.b32.xlu0 %v1821, 8
        %v2784 = vpop.permute.xlu0 %2783
        %2785 = vrot.lane.b32.xlu0 %v1824, 8
        %v2786 = vpop.permute.xlu0 %2785
        %2787 = vrot.lane.b32.xlu0 %v1829, 8
        %v2788 = vpop.permute.xlu0 %2787
        %2789 = vrot.lane.b32.xlu0 %v1832, 8
        %v2790 = vpop.permute.xlu0 %2789
        %2791 = vrot.lane.b32.xlu0 %v1837, 8
        %v2792 = vpop.permute.xlu0 %2791
        %2793 = vrot.lane.b32.xlu0 %v1840, 8
        %v2794 = vpop.permute.xlu0 %2793
        %2795 = vrot.lane.b32.xlu0 %v1845, 8
        %v2796 = vpop.permute.xlu0 %2795
        %2797 = vrot.lane.b32.xlu0 %v1848, 8
        %v2798 = vpop.permute.xlu0 %2797
        %2831 = vrot.lane.b32.xlu0 %v2239, 16
        %v2832 = vpop.permute.xlu0 %2831
        %2833 = vrot.lane.b32.xlu0 %v2242, 16
        %v2834 = vpop.permute.xlu0 %2833
        %2835 = vrot.lane.b32.xlu0 %v2247, 16
        %v2836 = vpop.permute.xlu0 %2835
        %2837 = vrot.lane.b32.xlu0 %v2250, 16
        %v2838 = vpop.permute.xlu0 %2837
        %2839 = vrot.lane.b32.xlu0 %v2255, 16
        %v2840 = vpop.permute.xlu0 %2839
        %2841 = vrot.lane.b32.xlu0 %v2258, 16
        %v2842 = vpop.permute.xlu0 %2841
        %2843 = vrot.lane.b32.xlu0 %v2263, 16
        %v2844 = vpop.permute.xlu0 %2843
        %2845 = vrot.lane.b32.xlu0 %v2266, 16
        %v2846 = vpop.permute.xlu0 %2845
        %2847 = vrot.lane.b32.xlu0 %v2271, 16
        %v2848 = vpop.permute.xlu0 %2847
        %2849 = vrot.lane.b32.xlu0 %v2274, 16
        %v2850 = vpop.permute.xlu0 %2849
        %2851 = vrot.lane.b32.xlu0 %v2279, 16
        %v2852 = vpop.permute.xlu0 %2851
        %2853 = vrot.lane.b32.xlu0 %v2282, 16
        %v2854 = vpop.permute.xlu0 %2853
        %2855 = vrot.lane.b32.xlu0 %v2287, 16
        %v2856 = vpop.permute.xlu0 %2855
        %2857 = vrot.lane.b32.xlu0 %v2290, 16
        %v2858 = vpop.permute.xlu0 %2857
        %2859 = vrot.lane.b32.xlu0 %v2295, 16
        %v2860 = vpop.permute.xlu0 %2859
        %2861 = vrot.lane.b32.xlu0 %v2298, 16
        %v2862 = vpop.permute.xlu0 %2861
        %2895 = vrot.lane.b32.xlu0 %v2689, 24
        %v2896 = vpop.permute.xlu0 %2895
        %2897 = vrot.lane.b32.xlu0 %v2692, 24
        %v2898 = vpop.permute.xlu0 %2897
        %2899 = vrot.lane.b32.xlu0 %v2697, 24
        %v2900 = vpop.permute.xlu0 %2899
        %2901 = vrot.lane.b32.xlu0 %v2700, 24
        %v2902 = vpop.permute.xlu0 %2901
        %2903 = vrot.lane.b32.xlu0 %v2705, 24
        %v2904 = vpop.permute.xlu0 %2903
        %2905 = vrot.lane.b32.xlu0 %v2708, 24
        %v2906 = vpop.permute.xlu0 %2905
        %2907 = vrot.lane.b32.xlu0 %v2713, 24
        %v2908 = vpop.permute.xlu0 %2907
        %2909 = vrot.lane.b32.xlu0 %v2716, 24
        %v2910 = vpop.permute.xlu0 %2909
        %2911 = vrot.lane.b32.xlu0 %v2721, 24
        %v2912 = vpop.permute.xlu0 %2911
        %2913 = vrot.lane.b32.xlu0 %v2724, 24
        %v2914 = vpop.permute.xlu0 %2913
        %2915 = vrot.lane.b32.xlu0 %v2729, 24
        %v2916 = vpop.permute.xlu0 %2915
        %2917 = vrot.lane.b32.xlu0 %v2732, 24
        %v2918 = vpop.permute.xlu0 %2917
        %2919 = vrot.lane.b32.xlu0 %v2737, 24
        %v2920 = vpop.permute.xlu0 %2919
        %2921 = vrot.lane.b32.xlu0 %v2740, 24
        %v2922 = vpop.permute.xlu0 %2921
        %2923 = vrot.lane.b32.xlu0 %v2745, 24
        %v2924 = vpop.permute.xlu0 %2923
        %2925 = vrot.lane.b32.xlu0 %v2748, 24
        %v2926 = vpop.permute.xlu0 %2925
        %v2943 = vsel %vm982, %v1339, %v2768
        %v2944 = vsel %vm982, %v1342, %v2770
        %v2945 = vsel %vm982, %v1347, %v2772
        %v2946 = vsel %vm982, %v1350, %v2774
        %v2947 = vsel %vm982, %v1355, %v2776
        %v2948 = vsel %vm982, %v1358, %v2778
        %v2949 = vsel %vm982, %v1363, %v2780
        %v2950 = vsel %vm982, %v1366, %v2782
        %v2951 = vsel %vm982, %v1371, %v2784
        %v2952 = vsel %vm982, %v1374, %v2786
        %v2953 = vsel %vm982, %v1379, %v2788
        %v2954 = vsel %vm982, %v1382, %v2790
        %v2955 = vsel %vm982, %v1387, %v2792
        %v2956 = vsel %vm982, %v1390, %v2794
        %v2957 = vsel %vm982, %v1395, %v2796
        %v2958 = vsel %vm982, %v1398, %v2798
        %vm2959 = vcmask 130048
        %v2960 = vsel %vm2959, %v2943, %v2832
        %v2961 = vsel %vm2959, %v2944, %v2834
        %v2962 = vsel %vm2959, %v2945, %v2836
        %v2963 = vsel %vm2959, %v2946, %v2838
        %v2964 = vsel %vm2959, %v2947, %v2840
        %v2965 = vsel %vm2959, %v2948, %v2842
        %v2966 = vsel %vm2959, %v2949, %v2844
        %v2967 = vsel %vm2959, %v2950, %v2846
        %v2968 = vsel %vm2959, %v2951, %v2848
        %v2969 = vsel %vm2959, %v2952, %v2850
        %v2970 = vsel %vm2959, %v2953, %v2852
        %v2971 = vsel %vm2959, %v2954, %v2854
        %v2972 = vsel %vm2959, %v2955, %v2856
        %v2973 = vsel %vm2959, %v2956, %v2858
        %v2974 = vsel %vm2959, %v2957, %v2860
        %v2975 = vsel %vm2959, %v2958, %v2862
        %vm2976 = vcmask 195584
        %v2977 = vsel %vm2976, %v2960, %v2896
        %v2978 = vsel %vm2976, %v2961, %v2898
        %v2979 = vsel %vm2976, %v2962, %v2900
        %v2980 = vsel %vm2976, %v2963, %v2902
        %v2981 = vsel %vm2976, %v2964, %v2904
        %v2982 = vsel %vm2976, %v2965, %v2906
        %v2983 = vsel %vm2976, %v2966, %v2908
        %v2984 = vsel %vm2976, %v2967, %v2910
        %v2985 = vsel %vm2976, %v2968, %v2912
        %v2986 = vsel %vm2976, %v2969, %v2914
        %v2987 = vsel %vm2976, %v2970, %v2916
        %v2988 = vsel %vm2976, %v2971, %v2918
        %v2989 = vsel %vm2976, %v2972, %v2920
        %v2990 = vsel %vm2976, %v2973, %v2922
        %v2991 = vsel %vm2976, %v2974, %v2924
        %v2992 = vsel %vm2976, %v2975, %v2926
        %v2993 = vpack.c.bf16 %v2978, %v2977
        %v2994 = vpack.c.bf16 %v2980, %v2979
        %v2995 = vpack.c.bf16 %v2982, %v2981
        %v2996 = vpack.c.bf16 %v2984, %v2983
        %v2997 = vpack.c.bf16 %v2986, %v2985
        %v2998 = vpack.c.bf16 %v2988, %v2987
        %v2999 = vpack.c.bf16 %v2990, %v2989
        %v3000 = vpack.c.bf16 %v2992, %v2991
        %v3001 = vld [vmem:[%s7] sm:$0xf]
        %v3002 = vld [vmem:[%s7 + $0x4] sm:$0xf]
        %v3003 = vld [vmem:[%s7 + $0x8] sm:$0xf]
        %v3004 = vld [vmem:[%s7 + $0xc] sm:$0xf]
        %v3005 = vld [vmem:[%s8] sm:$0x1]
        %v3007 = vlaneseq
        %v3008 = vshrl.u32 %v3007, 7
        %v3009 = vsub.s32 0, %v3008
        %v3010 = vrot.slane %v3005, %v3009
        %v3016 = vunpack.c.l.b16 %v3001
        %v3017 = vunpack.c.l.b16 %v3002
        %v3018 = vunpack.c.l.b16 %v3003
        %v3019 = vunpack.c.l.b16 %v3004
        %v3020 = vpack.c.b16 %v3017, %v3016
        %v3021 = vpack.c.b16 %v3019, %v3018
        %v3025 = vsel %vm828, %v2993, 0
        %v3028 = vsel %vm828, %v2994, 0
        %v3031 = vsel %vm828, %v2995, 0
        %v3034 = vsel %vm828, %v2996, 0
        %v3037 = vsel %vm828, %v2997, 0
        %v3040 = vsel %vm828, %v2998, 0
        %v3043 = vsel %vm828, %v2999, 0
        %v3046 = vsel %vm828, %v3000, 0
        %3048 = vmatprep.subr.bf16.mxu0 0
        %3049 = vmatpush1.bf16.msra.mxu0 0
        %3050 = vmatprep.subr.bf16.mxu0 0
        %3051 = vmatpush1.bf16.msra.mxu0 0
        %3052 = vmatprep.subr.bf16.mxu0 0
        %3053 = vmatpush1.bf16.msra.mxu0 0
        %3054 = vmatprep.subr.bf16.mxu0 0
        %3055 = vmatpush1.bf16.msra.mxu0 0
        %3056 = vmatprep.subr.bf16.mxu0 0
        %3057 = vmatpush1.bf16.msra.mxu0 0
        %3058 = vmatprep.subr.bf16.mxu0 0
        %3059 = vmatpush1.bf16.msra.mxu0 0
        %3060 = vmatprep.subr.bf16.mxu0 0
        %3061 = vmatpush1.bf16.msra.mxu0 %v3021
        %3062 = vmatprep.subr.bf16.mxu0 0
        %3063 = vmatpush1.bf16.msra.mxu0 %v3020
        %3064 = vmatprep.subr.bf16.mxu0 0
        %3065 = vmatpush2.bf16.msra.mxu0 0
        %3066 = vmatprep.subr.bf16.mxu0 0
        %3067 = vmatpush2.bf16.msra.mxu0 0
        %3068 = vmatprep.subr.bf16.mxu0 0
        %3069 = vmatpush2.bf16.msra.mxu0 0
        %3070 = vmatprep.subr.bf16.mxu0 0
        %3071 = vmatpush2.bf16.msra.mxu0 0
        %3072 = vmatprep.subr.bf16.mxu0 0
        %3073 = vmatpush2.bf16.msra.mxu0 0
        %3074 = vmatprep.subr.bf16.mxu0 0
        %3075 = vmatpush2.bf16.msra.mxu0 0
        %3076 = vmatprep.subr.bf16.mxu0 0
        %3077 = vmatpush2.bf16.msra.mxu0 0
        %3078 = vmatprep.subr.bf16.mxu0 0
        %3079 = vmatpush2.bf16.msra.mxu0 0
        %3080 = vmatprep.mubr.bf16.mxu0 0
        %3081 = vmatmul.mubr.bf16.gmra.mxu0 %v3025
        %v3082 = vpop.f32.mrf.mxu0
        %v3083 = vadd.f32 %v3010, %v3082
        %v3084 = vpop.f32.mrf.mxu0
        %v3085 = vpop.f32.mrf.mxu0
        %v3086 = vadd.f32 %v3010, %v3085
        %v3087 = vpop.f32.mrf.mxu0
        %3088 = vmatprep.mubr.bf16.mxu0 0
        %3089 = vmatmul.mubr.bf16.gmra.mxu0 %v3028
        %v3090 = vpop.f32.mrf.mxu0
        %v3091 = vadd.f32 %v3010, %v3090
        %v3092 = vpop.f32.mrf.mxu0
        %v3093 = vpop.f32.mrf.mxu0
        %v3094 = vadd.f32 %v3010, %v3093
        %v3095 = vpop.f32.mrf.mxu0
        %3096 = vmatprep.mubr.bf16.mxu0 0
        %3097 = vmatmul.mubr.bf16.gmra.mxu0 %v3031
        %v3098 = vpop.f32.mrf.mxu0
        %v3099 = vadd.f32 %v3010, %v3098
        %v3100 = vpop.f32.mrf.mxu0
        %v3101 = vpop.f32.mrf.mxu0
        %v3102 = vadd.f32 %v3010, %v3101
        %v3103 = vpop.f32.mrf.mxu0
        %3104 = vmatprep.mubr.bf16.mxu0 0
        %3105 = vmatmul.mubr.bf16.gmra.mxu0 %v3034
        %v3106 = vpop.f32.mrf.mxu0
        %v3107 = vadd.f32 %v3010, %v3106
        %v3108 = vpop.f32.mrf.mxu0
        %v3109 = vpop.f32.mrf.mxu0
        %v3110 = vadd.f32 %v3010, %v3109
        %v3111 = vpop.f32.mrf.mxu0
        %3112 = vmatprep.mubr.bf16.mxu0 0
        %3113 = vmatmul.mubr.bf16.gmra.mxu0 %v3037
        %v3114 = vpop.f32.mrf.mxu0
        %v3115 = vadd.f32 %v3010, %v3114
        %v3116 = vpop.f32.mrf.mxu0
        %v3117 = vpop.f32.mrf.mxu0
        %v3118 = vadd.f32 %v3010, %v3117
        %v3119 = vpop.f32.mrf.mxu0
        %3120 = vmatprep.mubr.bf16.mxu0 0
        %3121 = vmatmul.mubr.bf16.gmra.mxu0 %v3040
        %v3122 = vpop.f32.mrf.mxu0
        %v3123 = vadd.f32 %v3010, %v3122
        %v3124 = vpop.f32.mrf.mxu0
        %v3125 = vpop.f32.mrf.mxu0
        %v3126 = vadd.f32 %v3010, %v3125
        %v3127 = vpop.f32.mrf.mxu0
        %3128 = vmatprep.mubr.bf16.mxu0 0
        %3129 = vmatmul.mubr.bf16.gmra.mxu0 %v3043
        %v3130 = vpop.f32.mrf.mxu0
        %v3131 = vadd.f32 %v3010, %v3130
        %v3132 = vpop.f32.mrf.mxu0
        %v3133 = vpop.f32.mrf.mxu0
        %v3134 = vadd.f32 %v3010, %v3133
        %v3135 = vpop.f32.mrf.mxu0
        %3136 = vmatprep.mubr.bf16.mxu0 0
        %3137 = vmatmul.mubr.bf16.gmra.mxu0 %v3046
        %v3138 = vpop.f32.mrf.mxu0
        %v3139 = vadd.f32 %v3010, %v3138
        %v3140 = vpop.f32.mrf.mxu0
        %v3141 = vpop.f32.mrf.mxu0
        %v3142 = vadd.f32 %v3010, %v3141
        %v3143 = vpop.f32.mrf.mxu0
        %3144 = vdwg.mxu0
        %v3145 = vadd.f32 %v735, %v3083
        %v3146 = vadd.f32 %v738, %v3086
        %v3147 = vadd.f32 %v743, %v3091
        %v3148 = vadd.f32 %v746, %v3094
        %v3149 = vadd.f32 %v751, %v3099
        %v3150 = vadd.f32 %v754, %v3102
        %v3151 = vadd.f32 %v759, %v3107
        %v3152 = vadd.f32 %v762, %v3110
        %v3153 = vadd.f32 %v767, %v3115
        %v3154 = vadd.f32 %v770, %v3118
        %v3155 = vadd.f32 %v775, %v3123
        %v3156 = vadd.f32 %v778, %v3126
        %v3157 = vadd.f32 %v783, %v3131
        %v3158 = vadd.f32 %v786, %v3134
        %v3159 = vadd.f32 %v791, %v3139
        %v3160 = vadd.f32 %v794, %v3142
        %v3161 = vld [vmem:[%s9] sm:$0x1]
        %v3162 = vld [vmem:[%s10] sm:$0x1]
        %v3163 = vsel %vm828, %v3145, 0.0
        %3164 = vadd.xlane.f32.xlu0 %v3163
        %v3165 = vpop.xlane.xlu0 %3164
        %v3166 = vsel %vm828, %v3146, 0.0
        %3167 = vadd.xlane.f32.xlu0 %v3166
        %v3168 = vpop.xlane.xlu0 %3167
        %v3169 = vsel %vm828, %v3147, 0.0
        %3170 = vadd.xlane.f32.xlu0 %v3169
        %v3171 = vpop.xlane.xlu0 %3170
        %v3172 = vsel %vm828, %v3148, 0.0
        %3173 = vadd.xlane.f32.xlu0 %v3172
        %v3174 = vpop.xlane.xlu0 %3173
        %v3175 = vsel %vm828, %v3149, 0.0
        %3176 = vadd.xlane.f32.xlu0 %v3175
        %v3177 = vpop.xlane.xlu0 %3176
        %v3178 = vsel %vm828, %v3150, 0.0
        %3179 = vadd.xlane.f32.xlu0 %v3178
        %v3180 = vpop.xlane.xlu0 %3179
        %v3181 = vsel %vm828, %v3151, 0.0
        %3182 = vadd.xlane.f32.xlu0 %v3181
        %v3183 = vpop.xlane.xlu0 %3182
        %v3184 = vsel %vm828, %v3152, 0.0
        %3185 = vadd.xlane.f32.xlu0 %v3184
        %v3186 = vpop.xlane.xlu0 %3185
        %v3187 = vsel %vm828, %v3153, 0.0
        %3188 = vadd.xlane.f32.xlu0 %v3187
        %v3189 = vpop.xlane.xlu0 %3188
        %v3190 = vsel %vm828, %v3154, 0.0
        %3191 = vadd.xlane.f32.xlu0 %v3190
        %v3192 = vpop.xlane.xlu0 %3191
        %v3193 = vsel %vm828, %v3155, 0.0
        %3194 = vadd.xlane.f32.xlu0 %v3193
        %v3195 = vpop.xlane.xlu0 %3194
        %v3196 = vsel %vm828, %v3156, 0.0
        %3197 = vadd.xlane.f32.xlu0 %v3196
        %v3198 = vpop.xlane.xlu0 %3197
        %v3199 = vsel %vm828, %v3157, 0.0
        %3200 = vadd.xlane.f32.xlu0 %v3199
        %v3201 = vpop.xlane.xlu0 %3200
        %v3202 = vsel %vm828, %v3158, 0.0
        %3203 = vadd.xlane.f32.xlu0 %v3202
        %v3204 = vpop.xlane.xlu0 %3203
        %v3205 = vsel %vm828, %v3159, 0.0
        %3206 = vadd.xlane.f32.xlu0 %v3205
        %v3207 = vpop.xlane.xlu0 %3206
        %v3208 = vsel %vm828, %v3160, 0.0
        %3209 = vadd.xlane.f32.xlu0 %v3208
        %v3210 = vpop.xlane.xlu0 %3209
        %v3211 = vrcp.pop 32.0
        %v3212 = vmul.f32 %v3165, %v3211
        %v3213 = vmul.f32 %v3168, %v3211
        %v3214 = vmul.f32 %v3171, %v3211
        %v3215 = vmul.f32 %v3174, %v3211
        %v3216 = vmul.f32 %v3177, %v3211
        %v3217 = vmul.f32 %v3180, %v3211
        %v3218 = vmul.f32 %v3183, %v3211
        %v3219 = vmul.f32 %v3186, %v3211
        %v3220 = vmul.f32 %v3189, %v3211
        %v3221 = vmul.f32 %v3192, %v3211
        %v3222 = vmul.f32 %v3195, %v3211
        %v3223 = vmul.f32 %v3198, %v3211
        %v3224 = vmul.f32 %v3201, %v3211
        %v3225 = vmul.f32 %v3204, %v3211
        %v3226 = vmul.f32 %v3207, %v3211
        %v3227 = vmul.f32 %v3210, %v3211
        %v3228 = vsub.f32 %v3145, %v3212
        %v3229 = vsub.f32 %v3146, %v3213
        %v3230 = vsub.f32 %v3147, %v3214
        %v3231 = vsub.f32 %v3148, %v3215
        %v3232 = vsub.f32 %v3149, %v3216
        %v3233 = vsub.f32 %v3150, %v3217
        %v3234 = vsub.f32 %v3151, %v3218
        %v3235 = vsub.f32 %v3152, %v3219
        %v3236 = vsub.f32 %v3153, %v3220
        %v3237 = vsub.f32 %v3154, %v3221
        %v3238 = vsub.f32 %v3155, %v3222
        %v3239 = vsub.f32 %v3156, %v3223
        %v3240 = vsub.f32 %v3157, %v3224
        %v3241 = vsub.f32 %v3158, %v3225
        %v3242 = vsub.f32 %v3159, %v3226
        %v3243 = vsub.f32 %v3160, %v3227
        %v3244 = vmul.f32 %v3228, %v3228
        %v3245 = vmul.f32 %v3229, %v3229
        %v3246 = vmul.f32 %v3230, %v3230
        %v3247 = vmul.f32 %v3231, %v3231
        %v3248 = vmul.f32 %v3232, %v3232
        %v3249 = vmul.f32 %v3233, %v3233
        %v3250 = vmul.f32 %v3234, %v3234
        %v3251 = vmul.f32 %v3235, %v3235
        %v3252 = vmul.f32 %v3236, %v3236
        %v3253 = vmul.f32 %v3237, %v3237
        %v3254 = vmul.f32 %v3238, %v3238
        %v3255 = vmul.f32 %v3239, %v3239
        %v3256 = vmul.f32 %v3240, %v3240
        %v3257 = vmul.f32 %v3241, %v3241
        %v3258 = vmul.f32 %v3242, %v3242
        %v3259 = vmul.f32 %v3243, %v3243
        %v3260 = vsel %vm828, %v3244, 0.0
        %3261 = vadd.xlane.f32.xlu0 %v3260
        %v3262 = vpop.xlane.xlu0 %3261
        %v3263 = vsel %vm828, %v3245, 0.0
        %3264 = vadd.xlane.f32.xlu0 %v3263
        %v3265 = vpop.xlane.xlu0 %3264
        %v3266 = vsel %vm828, %v3246, 0.0
        %3267 = vadd.xlane.f32.xlu0 %v3266
        %v3268 = vpop.xlane.xlu0 %3267
        %v3269 = vsel %vm828, %v3247, 0.0
        %3270 = vadd.xlane.f32.xlu0 %v3269
        %v3271 = vpop.xlane.xlu0 %3270
        %v3272 = vsel %vm828, %v3248, 0.0
        %3273 = vadd.xlane.f32.xlu0 %v3272
        %v3274 = vpop.xlane.xlu0 %3273
        %v3275 = vsel %vm828, %v3249, 0.0
        %3276 = vadd.xlane.f32.xlu0 %v3275
        %v3277 = vpop.xlane.xlu0 %3276
        %v3278 = vsel %vm828, %v3250, 0.0
        %3279 = vadd.xlane.f32.xlu0 %v3278
        %v3280 = vpop.xlane.xlu0 %3279
        %v3281 = vsel %vm828, %v3251, 0.0
        %3282 = vadd.xlane.f32.xlu0 %v3281
        %v3283 = vpop.xlane.xlu0 %3282
        %v3284 = vsel %vm828, %v3252, 0.0
        %3285 = vadd.xlane.f32.xlu0 %v3284
        %v3286 = vpop.xlane.xlu0 %3285
        %v3287 = vsel %vm828, %v3253, 0.0
        %3288 = vadd.xlane.f32.xlu0 %v3287
        %v3289 = vpop.xlane.xlu0 %3288
        %v3290 = vsel %vm828, %v3254, 0.0
        %3291 = vadd.xlane.f32.xlu0 %v3290
        %v3292 = vpop.xlane.xlu0 %3291
        %v3293 = vsel %vm828, %v3255, 0.0
        %3294 = vadd.xlane.f32.xlu0 %v3293
        %v3295 = vpop.xlane.xlu0 %3294
        %v3296 = vsel %vm828, %v3256, 0.0
        %3297 = vadd.xlane.f32.xlu0 %v3296
        %v3298 = vpop.xlane.xlu0 %3297
        %v3299 = vsel %vm828, %v3257, 0.0
        %3300 = vadd.xlane.f32.xlu0 %v3299
        %v3301 = vpop.xlane.xlu0 %3300
        %v3302 = vsel %vm828, %v3258, 0.0
        %3303 = vadd.xlane.f32.xlu0 %v3302
        %v3304 = vpop.xlane.xlu0 %3303
        %v3305 = vsel %vm828, %v3259, 0.0
        %3306 = vadd.xlane.f32.xlu0 %v3305
        %v3307 = vpop.xlane.xlu0 %3306
        %v3308 = vmul.f32 %v3262, %v3211
        %v3309 = vmul.f32 %v3265, %v3211
        %v3310 = vmul.f32 %v3268, %v3211
        %v3311 = vmul.f32 %v3271, %v3211
        %v3312 = vmul.f32 %v3274, %v3211
        %v3313 = vmul.f32 %v3277, %v3211
        %v3314 = vmul.f32 %v3280, %v3211
        %v3315 = vmul.f32 %v3283, %v3211
        %v3316 = vmul.f32 %v3286, %v3211
        %v3317 = vmul.f32 %v3289, %v3211
        %v3318 = vmul.f32 %v3292, %v3211
        %v3319 = vmul.f32 %v3295, %v3211
        %v3320 = vmul.f32 %v3298, %v3211
        %v3321 = vmul.f32 %v3301, %v3211
        %v3322 = vmul.f32 %v3304, %v3211
        %v3323 = vmul.f32 %v3307, %v3211
        %v3324 = vadd.f32 %v3308, 1e-05
        %v3325 = vadd.f32 %v3309, 1e-05
        %v3326 = vadd.f32 %v3310, 1e-05
        %v3327 = vadd.f32 %v3311, 1e-05
        %v3328 = vadd.f32 %v3312, 1e-05
        %v3329 = vadd.f32 %v3313, 1e-05
        %v3330 = vadd.f32 %v3314, 1e-05
        %v3331 = vadd.f32 %v3315, 1e-05
        %v3332 = vadd.f32 %v3316, 1e-05
        %v3333 = vadd.f32 %v3317, 1e-05
        %v3334 = vadd.f32 %v3318, 1e-05
        %v3335 = vadd.f32 %v3319, 1e-05
        %v3336 = vadd.f32 %v3320, 1e-05
        %v3337 = vadd.f32 %v3321, 1e-05
        %v3338 = vadd.f32 %v3322, 1e-05
        %v3339 = vadd.f32 %v3323, 1e-05
        %v3340 = vrsqrt.pop %v3324
        %v3341 = vrsqrt.pop %v3325
        %v3342 = vrsqrt.pop %v3326
        %v3343 = vrsqrt.pop %v3327
        %v3344 = vrsqrt.pop %v3328
        %v3345 = vrsqrt.pop %v3329
        %v3346 = vrsqrt.pop %v3330
        %v3347 = vrsqrt.pop %v3331
        %v3348 = vrsqrt.pop %v3332
        %v3349 = vrsqrt.pop %v3333
        %v3350 = vrsqrt.pop %v3334
        %v3351 = vrsqrt.pop %v3335
        %v3352 = vrsqrt.pop %v3336
        %v3353 = vrsqrt.pop %v3337
        %v3354 = vrsqrt.pop %v3338
        %v3355 = vrsqrt.pop %v3339
        %v3356 = vmul.f32 %v3228, %v3340
        %v3357 = vmul.f32 %v3229, %v3341
        %v3358 = vmul.f32 %v3230, %v3342
        %v3359 = vmul.f32 %v3231, %v3343
        %v3360 = vmul.f32 %v3232, %v3344
        %v3361 = vmul.f32 %v3233, %v3345
        %v3362 = vmul.f32 %v3234, %v3346
        %v3363 = vmul.f32 %v3235, %v3347
        %v3364 = vmul.f32 %v3236, %v3348
        %v3365 = vmul.f32 %v3237, %v3349
        %v3366 = vmul.f32 %v3238, %v3350
        %v3367 = vmul.f32 %v3239, %v3351
        %v3368 = vmul.f32 %v3240, %v3352
        %v3369 = vmul.f32 %v3241, %v3353
        %v3370 = vmul.f32 %v3242, %v3354
        %v3371 = vmul.f32 %v3243, %v3355
        %v3373 = vlaneseq
        %v3374 = vshrl.u32 %v3373, 7
        %v3375 = vsub.s32 0, %v3374
        %v3376 = vrot.slane %v3161, %v3375
        %v3378 = vmul.f32 %v3356, %v3376
        %v3379 = vmul.f32 %v3357, %v3376
        %v3380 = vmul.f32 %v3358, %v3376
        %v3381 = vmul.f32 %v3359, %v3376
        %v3382 = vmul.f32 %v3360, %v3376
        %v3383 = vmul.f32 %v3361, %v3376
        %v3384 = vmul.f32 %v3362, %v3376
        %v3385 = vmul.f32 %v3363, %v3376
        %v3386 = vmul.f32 %v3364, %v3376
        %v3387 = vmul.f32 %v3365, %v3376
        %v3388 = vmul.f32 %v3366, %v3376
        %v3389 = vmul.f32 %v3367, %v3376
        %v3390 = vmul.f32 %v3368, %v3376
        %v3391 = vmul.f32 %v3369, %v3376
        %v3392 = vmul.f32 %v3370, %v3376
        %v3393 = vmul.f32 %v3371, %v3376
        %v3395 = vlaneseq
        %v3396 = vshrl.u32 %v3395, 7
        %v3397 = vsub.s32 0, %v3396
        %v3398 = vrot.slane %v3162, %v3397
        %v3400 = vadd.f32 %v3378, %v3398
        %v3401 = vadd.f32 %v3379, %v3398
        %v3402 = vadd.f32 %v3380, %v3398
        %v3403 = vadd.f32 %v3381, %v3398
        %v3404 = vadd.f32 %v3382, %v3398
        %v3405 = vadd.f32 %v3383, %v3398
        %v3406 = vadd.f32 %v3384, %v3398
        %v3407 = vadd.f32 %v3385, %v3398
        %v3408 = vadd.f32 %v3386, %v3398
        %v3409 = vadd.f32 %v3387, %v3398
        %v3410 = vadd.f32 %v3388, %v3398
        %v3411 = vadd.f32 %v3389, %v3398
        %v3412 = vadd.f32 %v3390, %v3398
        %v3413 = vadd.f32 %v3391, %v3398
        %v3414 = vadd.f32 %v3392, %v3398
        %v3415 = vadd.f32 %v3393, %v3398
        %v3416 = vpack.c.bf16 %v3401, %v3400
        %v3417 = vpack.c.bf16 %v3403, %v3402
        %v3418 = vpack.c.bf16 %v3405, %v3404
        %v3419 = vpack.c.bf16 %v3407, %v3406
        %v3420 = vpack.c.bf16 %v3409, %v3408
        %v3421 = vpack.c.bf16 %v3411, %v3410
        %v3422 = vpack.c.bf16 %v3413, %v3412
        %v3423 = vpack.c.bf16 %v3415, %v3414
        %v3424 = vld [vmem:[%s13] sm:$0xf]
        %v3425 = vld [vmem:[%s13 + $0x4] sm:$0xf]
        %v3426 = vld [vmem:[%s13 + $0x8] sm:$0xf]
        %v3427 = vld [vmem:[%s13 + $0xc] sm:$0xf]
        %v3428 = vld [vmem:[%s14] sm:$0x1]
        %v3430 = vlaneseq
        %v3431 = vshrl.u32 %v3430, 7
        %v3432 = vsub.s32 0, %v3431
        %v3433 = vrot.slane %v3428, %v3432
        %v3439 = vunpack.c.l.b16 %v3424
        %v3440 = vunpack.c.l.b16 %v3425
        %v3441 = vunpack.c.l.b16 %v3426
        %v3442 = vunpack.c.l.b16 %v3427
        %v3443 = vpack.c.b16 %v3440, %v3439
        %v3444 = vpack.c.b16 %v3442, %v3441
        %v3448 = vsel %vm828, %v3416, 0
        %v3451 = vsel %vm828, %v3417, 0
        %v3454 = vsel %vm828, %v3418, 0
        %v3457 = vsel %vm828, %v3419, 0
        %v3460 = vsel %vm828, %v3420, 0
        %v3463 = vsel %vm828, %v3421, 0
        %v3466 = vsel %vm828, %v3422, 0
        %v3469 = vsel %vm828, %v3423, 0
        %3471 = vmatprep.subr.bf16.mxu0 0
        %3472 = vmatpush1.bf16.msra.mxu0 0
        %3473 = vmatprep.subr.bf16.mxu0 0
        %3474 = vmatpush1.bf16.msra.mxu0 0
        %3475 = vmatprep.subr.bf16.mxu0 0
        %3476 = vmatpush1.bf16.msra.mxu0 0
        %3477 = vmatprep.subr.bf16.mxu0 0
        %3478 = vmatpush1.bf16.msra.mxu0 0
        %3479 = vmatprep.subr.bf16.mxu0 0
        %3480 = vmatpush1.bf16.msra.mxu0 0
        %3481 = vmatprep.subr.bf16.mxu0 0
        %3482 = vmatpush1.bf16.msra.mxu0 0
        %3483 = vmatprep.subr.bf16.mxu0 0
        %3484 = vmatpush1.bf16.msra.mxu0 %v3444
        %3485 = vmatprep.subr.bf16.mxu0 0
        %3486 = vmatpush1.bf16.msra.mxu0 %v3443
        %3487 = vmatprep.subr.bf16.mxu0 0
        %3488 = vmatpush2.bf16.msra.mxu0 0
        %3489 = vmatprep.subr.bf16.mxu0 0
        %3490 = vmatpush2.bf16.msra.mxu0 0
        %3491 = vmatprep.subr.bf16.mxu0 0
        %3492 = vmatpush2.bf16.msra.mxu0 0
        %3493 = vmatprep.subr.bf16.mxu0 0
        %3494 = vmatpush2.bf16.msra.mxu0 0
        %3495 = vmatprep.subr.bf16.mxu0 0
        %3496 = vmatpush2.bf16.msra.mxu0 0
        %3497 = vmatprep.subr.bf16.mxu0 0
        %3498 = vmatpush2.bf16.msra.mxu0 0
        %3499 = vmatprep.subr.bf16.mxu0 0
        %3500 = vmatpush2.bf16.msra.mxu0 0
        %3501 = vmatprep.subr.bf16.mxu0 0
        %3502 = vmatpush2.bf16.msra.mxu0 0
        %3503 = vmatprep.mubr.bf16.mxu0 0
        %3504 = vmatmul.mubr.bf16.gmra.mxu0 %v3448
        %v3505 = vpop.f32.mrf.mxu0
        %v3506 = vadd.f32 %v3433, %v3505
        %v3507 = vpop.f32.mrf.mxu0
        %v3508 = vpop.f32.mrf.mxu0
        %v3509 = vadd.f32 %v3433, %v3508
        %v3510 = vpop.f32.mrf.mxu0
        %3511 = vmatprep.mubr.bf16.mxu0 0
        %3512 = vmatmul.mubr.bf16.gmra.mxu0 %v3451
        %v3513 = vpop.f32.mrf.mxu0
        %v3514 = vadd.f32 %v3433, %v3513
        %v3515 = vpop.f32.mrf.mxu0
        %v3516 = vpop.f32.mrf.mxu0
        %v3517 = vadd.f32 %v3433, %v3516
        %v3518 = vpop.f32.mrf.mxu0
        %3519 = vmatprep.mubr.bf16.mxu0 0
        %3520 = vmatmul.mubr.bf16.gmra.mxu0 %v3454
        %v3521 = vpop.f32.mrf.mxu0
        %v3522 = vadd.f32 %v3433, %v3521
        %v3523 = vpop.f32.mrf.mxu0
        %v3524 = vpop.f32.mrf.mxu0
        %v3525 = vadd.f32 %v3433, %v3524
        %v3526 = vpop.f32.mrf.mxu0
        %3527 = vmatprep.mubr.bf16.mxu0 0
        %3528 = vmatmul.mubr.bf16.gmra.mxu0 %v3457
        %v3529 = vpop.f32.mrf.mxu0
        %v3530 = vadd.f32 %v3433, %v3529
        %v3531 = vpop.f32.mrf.mxu0
        %v3532 = vpop.f32.mrf.mxu0
        %v3533 = vadd.f32 %v3433, %v3532
        %v3534 = vpop.f32.mrf.mxu0
        %3535 = vmatprep.mubr.bf16.mxu0 0
        %3536 = vmatmul.mubr.bf16.gmra.mxu0 %v3460
        %v3537 = vpop.f32.mrf.mxu0
        %v3538 = vadd.f32 %v3433, %v3537
        %v3539 = vpop.f32.mrf.mxu0
        %v3540 = vpop.f32.mrf.mxu0
        %v3541 = vadd.f32 %v3433, %v3540
        %v3542 = vpop.f32.mrf.mxu0
        %3543 = vmatprep.mubr.bf16.mxu0 0
        %3544 = vmatmul.mubr.bf16.gmra.mxu0 %v3463
        %v3545 = vpop.f32.mrf.mxu0
        %v3546 = vadd.f32 %v3433, %v3545
        %v3547 = vpop.f32.mrf.mxu0
        %v3548 = vpop.f32.mrf.mxu0
        %v3549 = vadd.f32 %v3433, %v3548
        %v3550 = vpop.f32.mrf.mxu0
        %3551 = vmatprep.mubr.bf16.mxu0 0
        %3552 = vmatmul.mubr.bf16.gmra.mxu0 %v3466
        %v3553 = vpop.f32.mrf.mxu0
        %v3554 = vadd.f32 %v3433, %v3553
        %v3555 = vpop.f32.mrf.mxu0
        %v3556 = vpop.f32.mrf.mxu0
        %v3557 = vadd.f32 %v3433, %v3556
        %v3558 = vpop.f32.mrf.mxu0
        %3559 = vmatprep.mubr.bf16.mxu0 0
        %3560 = vmatmul.mubr.bf16.gmra.mxu0 %v3469
        %v3561 = vpop.f32.mrf.mxu0
        %v3562 = vadd.f32 %v3433, %v3561
        %v3563 = vpop.f32.mrf.mxu0
        %v3564 = vpop.f32.mrf.mxu0
        %v3565 = vadd.f32 %v3433, %v3564
        %v3566 = vpop.f32.mrf.mxu0
        %3567 = vdwg.mxu0
        %v3568 = vmax.f32 %v3506, 0.0
        %v3569 = vmax.f32 %v3509, 0.0
        %v3570 = vmax.f32 %v3514, 0.0
        %v3571 = vmax.f32 %v3517, 0.0
        %v3572 = vmax.f32 %v3522, 0.0
        %v3573 = vmax.f32 %v3525, 0.0
        %v3574 = vmax.f32 %v3530, 0.0
        %v3575 = vmax.f32 %v3533, 0.0
        %v3576 = vmax.f32 %v3538, 0.0
        %v3577 = vmax.f32 %v3541, 0.0
        %v3578 = vmax.f32 %v3546, 0.0
        %v3579 = vmax.f32 %v3549, 0.0
        %v3580 = vmax.f32 %v3554, 0.0
        %v3581 = vmax.f32 %v3557, 0.0
        %v3582 = vmax.f32 %v3562, 0.0
        %v3583 = vmax.f32 %v3565, 0.0
        %v3584 = vpack.c.bf16 %v3569, %v3568
        %v3585 = vpack.c.bf16 %v3571, %v3570
        %v3586 = vpack.c.bf16 %v3573, %v3572
        %v3587 = vpack.c.bf16 %v3575, %v3574
        %v3588 = vpack.c.bf16 %v3577, %v3576
        %v3589 = vpack.c.bf16 %v3579, %v3578
        %v3590 = vpack.c.bf16 %v3581, %v3580
        %v3591 = vpack.c.bf16 %v3583, %v3582
        %v3592 = vld [vmem:[%s15] sm:$0xf]
        %v3593 = vld [vmem:[%s15 + $0x4] sm:$0xf]
        %v3594 = vld [vmem:[%s15 + $0x8] sm:$0xf]
        %v3595 = vld [vmem:[%s15 + $0xc] sm:$0xf]
        %v3596 = vld [vmem:[%s15 + $0x10] sm:$0xf]
        %v3597 = vld [vmem:[%s15 + $0x14] sm:$0xf]
        %v3598 = vld [vmem:[%s15 + $0x18] sm:$0xf]
        %v3599 = vld [vmem:[%s15 + $0x1c] sm:$0xf]
        %v3600 = vld [vmem:[%s16] sm:$0x1]
        %v3602 = vlaneseq
        %v3603 = vshrl.u32 %v3602, 7
        %v3604 = vsub.s32 0, %v3603
        %v3605 = vrot.slane %v3600, %v3604
        %v3615 = vunpack.c.l.b16 %v3592
        %v3616 = vunpack.c.l.b16 %v3593
        %v3617 = vunpack.c.l.b16 %v3594
        %v3618 = vunpack.c.l.b16 %v3595
        %v3619 = vunpack.c.l.b16 %v3596
        %v3620 = vunpack.c.l.b16 %v3597
        %v3621 = vunpack.c.l.b16 %v3598
        %v3622 = vunpack.c.l.b16 %v3599
        %v3623 = vpack.c.b16 %v3616, %v3615
        %v3624 = vpack.c.b16 %v3618, %v3617
        %v3625 = vpack.c.b16 %v3620, %v3619
        %v3626 = vpack.c.b16 %v3622, %v3621
        %vm3631 = vcmask 523264
        %v3633 = vsel %vm3631, %v3584, 0
        %v3636 = vsel %vm3631, %v3585, 0
        %v3639 = vsel %vm3631, %v3586, 0
        %v3642 = vsel %vm3631, %v3587, 0
        %v3645 = vsel %vm3631, %v3588, 0
        %v3648 = vsel %vm3631, %v3589, 0
        %v3651 = vsel %vm3631, %v3590, 0
        %v3654 = vsel %vm3631, %v3591, 0
        %3656 = vmatprep.subr.bf16.mxu0 0
        %3657 = vmatpush1.bf16.msra.mxu0 0
        %3658 = vmatprep.subr.bf16.mxu0 0
        %3659 = vmatpush1.bf16.msra.mxu0 0
        %3660 = vmatprep.subr.bf16.mxu0 0
        %3661 = vmatpush1.bf16.msra.mxu0 0
        %3662 = vmatprep.subr.bf16.mxu0 0
        %3663 = vmatpush1.bf16.msra.mxu0 0
        %3664 = vmatprep.subr.bf16.mxu0 0
        %3665 = vmatpush1.bf16.msra.mxu0 %v3626
        %3666 = vmatprep.subr.bf16.mxu0 0
        %3667 = vmatpush1.bf16.msra.mxu0 %v3625
        %3668 = vmatprep.subr.bf16.mxu0 0
        %3669 = vmatpush1.bf16.msra.mxu0 %v3624
        %3670 = vmatprep.subr.bf16.mxu0 0
        %3671 = vmatpush1.bf16.msra.mxu0 %v3623
        %3672 = vmatprep.subr.bf16.mxu0 0
        %3673 = vmatpush2.bf16.msra.mxu0 0
        %3674 = vmatprep.subr.bf16.mxu0 0
        %3675 = vmatpush2.bf16.msra.mxu0 0
        %3676 = vmatprep.subr.bf16.mxu0 0
        %3677 = vmatpush2.bf16.msra.mxu0 0
        %3678 = vmatprep.subr.bf16.mxu0 0
        %3679 = vmatpush2.bf16.msra.mxu0 0
        %3680 = vmatprep.subr.bf16.mxu0 0
        %3681 = vmatpush2.bf16.msra.mxu0 0
        %3682 = vmatprep.subr.bf16.mxu0 0
        %3683 = vmatpush2.bf16.msra.mxu0 0
        %3684 = vmatprep.subr.bf16.mxu0 0
        %3685 = vmatpush2.bf16.msra.mxu0 0
        %3686 = vmatprep.subr.bf16.mxu0 0
        %3687 = vmatpush2.bf16.msra.mxu0 0
        %3688 = vmatprep.mubr.bf16.mxu0 0
        %3689 = vmatmul.mubr.bf16.gmra.mxu0 %v3633
        %v3690 = vpop.f32.mrf.mxu0
        %v3691 = vadd.f32 %v3605, %v3690
        %v3692 = vpop.f32.mrf.mxu0
        %v3693 = vpop.f32.mrf.mxu0
        %v3694 = vadd.f32 %v3605, %v3693
        %v3695 = vpop.f32.mrf.mxu0
        %3696 = vmatprep.mubr.bf16.mxu0 0
        %3697 = vmatmul.mubr.bf16.gmra.mxu0 %v3636
        %v3698 = vpop.f32.mrf.mxu0
        %v3699 = vadd.f32 %v3605, %v3698
        %v3700 = vpop.f32.mrf.mxu0
        %v3701 = vpop.f32.mrf.mxu0
        %v3702 = vadd.f32 %v3605, %v3701
        %v3703 = vpop.f32.mrf.mxu0
        %3704 = vmatprep.mubr.bf16.mxu0 0
        %3705 = vmatmul.mubr.bf16.gmra.mxu0 %v3639
        %v3706 = vpop.f32.mrf.mxu0
        %v3707 = vadd.f32 %v3605, %v3706
        %v3708 = vpop.f32.mrf.mxu0
        %v3709 = vpop.f32.mrf.mxu0
        %v3710 = vadd.f32 %v3605, %v3709
        %v3711 = vpop.f32.mrf.mxu0
        %3712 = vmatprep.mubr.bf16.mxu0 0
        %3713 = vmatmul.mubr.bf16.gmra.mxu0 %v3642
        %v3714 = vpop.f32.mrf.mxu0
        %v3715 = vadd.f32 %v3605, %v3714
        %v3716 = vpop.f32.mrf.mxu0
        %v3717 = vpop.f32.mrf.mxu0
        %v3718 = vadd.f32 %v3605, %v3717
        %v3719 = vpop.f32.mrf.mxu0
        %3720 = vmatprep.mubr.bf16.mxu0 0
        %3721 = vmatmul.mubr.bf16.gmra.mxu0 %v3645
        %v3722 = vpop.f32.mrf.mxu0
        %v3723 = vadd.f32 %v3605, %v3722
        %v3724 = vpop.f32.mrf.mxu0
        %v3725 = vpop.f32.mrf.mxu0
        %v3726 = vadd.f32 %v3605, %v3725
        %v3727 = vpop.f32.mrf.mxu0
        %3728 = vmatprep.mubr.bf16.mxu0 0
        %3729 = vmatmul.mubr.bf16.gmra.mxu0 %v3648
        %v3730 = vpop.f32.mrf.mxu0
        %v3731 = vadd.f32 %v3605, %v3730
        %v3732 = vpop.f32.mrf.mxu0
        %v3733 = vpop.f32.mrf.mxu0
        %v3734 = vadd.f32 %v3605, %v3733
        %v3735 = vpop.f32.mrf.mxu0
        %3736 = vmatprep.mubr.bf16.mxu0 0
        %3737 = vmatmul.mubr.bf16.gmra.mxu0 %v3651
        %v3738 = vpop.f32.mrf.mxu0
        %v3739 = vadd.f32 %v3605, %v3738
        %v3740 = vpop.f32.mrf.mxu0
        %v3741 = vpop.f32.mrf.mxu0
        %v3742 = vadd.f32 %v3605, %v3741
        %v3743 = vpop.f32.mrf.mxu0
        %3744 = vmatprep.mubr.bf16.mxu0 0
        %3745 = vmatmul.mubr.bf16.gmra.mxu0 %v3654
        %v3746 = vpop.f32.mrf.mxu0
        %v3747 = vadd.f32 %v3605, %v3746
        %v3748 = vpop.f32.mrf.mxu0
        %v3749 = vpop.f32.mrf.mxu0
        %v3750 = vadd.f32 %v3605, %v3749
        %v3751 = vpop.f32.mrf.mxu0
        %3752 = vdwg.mxu0
        %v3753 = vadd.f32 %v3400, %v3691
        %v3754 = vadd.f32 %v3401, %v3694
        %v3755 = vadd.f32 %v3402, %v3699
        %v3756 = vadd.f32 %v3403, %v3702
        %v3757 = vadd.f32 %v3404, %v3707
        %v3758 = vadd.f32 %v3405, %v3710
        %v3759 = vadd.f32 %v3406, %v3715
        %v3760 = vadd.f32 %v3407, %v3718
        %v3761 = vadd.f32 %v3408, %v3723
        %v3762 = vadd.f32 %v3409, %v3726
        %v3763 = vadd.f32 %v3410, %v3731
        %v3764 = vadd.f32 %v3411, %v3734
        %v3765 = vadd.f32 %v3412, %v3739
        %v3766 = vadd.f32 %v3413, %v3742
        %v3767 = vadd.f32 %v3414, %v3747
        %v3768 = vadd.f32 %v3415, %v3750
        %v3769 = vld [vmem:[%s11] sm:$0x1]
        %v3770 = vld [vmem:[%s12] sm:$0x1]
        %v3771 = vsel %vm828, %v3753, 0.0
        %3772 = vadd.xlane.f32.xlu0 %v3771
        %v3773 = vpop.xlane.xlu0 %3772
        %v3774 = vsel %vm828, %v3754, 0.0
        %3775 = vadd.xlane.f32.xlu0 %v3774
        %v3776 = vpop.xlane.xlu0 %3775
        %v3777 = vsel %vm828, %v3755, 0.0
        %3778 = vadd.xlane.f32.xlu0 %v3777
        %v3779 = vpop.xlane.xlu0 %3778
        %v3780 = vsel %vm828, %v3756, 0.0
        %3781 = vadd.xlane.f32.xlu0 %v3780
        %v3782 = vpop.xlane.xlu0 %3781
        %v3783 = vsel %vm828, %v3757, 0.0
        %3784 = vadd.xlane.f32.xlu0 %v3783
        %v3785 = vpop.xlane.xlu0 %3784
        %v3786 = vsel %vm828, %v3758, 0.0
        %3787 = vadd.xlane.f32.xlu0 %v3786
        %v3788 = vpop.xlane.xlu0 %3787
        %v3789 = vsel %vm828, %v3759, 0.0
        %3790 = vadd.xlane.f32.xlu0 %v3789
        %v3791 = vpop.xlane.xlu0 %3790
        %v3792 = vsel %vm828, %v3760, 0.0
        %3793 = vadd.xlane.f32.xlu0 %v3792
        %v3794 = vpop.xlane.xlu0 %3793
        %v3795 = vsel %vm828, %v3761, 0.0
        %3796 = vadd.xlane.f32.xlu0 %v3795
        %v3797 = vpop.xlane.xlu0 %3796
        %v3798 = vsel %vm828, %v3762, 0.0
        %3799 = vadd.xlane.f32.xlu0 %v3798
        %v3800 = vpop.xlane.xlu0 %3799
        %v3801 = vsel %vm828, %v3763, 0.0
        %3802 = vadd.xlane.f32.xlu0 %v3801
        %v3803 = vpop.xlane.xlu0 %3802
        %v3804 = vsel %vm828, %v3764, 0.0
        %3805 = vadd.xlane.f32.xlu0 %v3804
        %v3806 = vpop.xlane.xlu0 %3805
        %v3807 = vsel %vm828, %v3765, 0.0
        %3808 = vadd.xlane.f32.xlu0 %v3807
        %v3809 = vpop.xlane.xlu0 %3808
        %v3810 = vsel %vm828, %v3766, 0.0
        %3811 = vadd.xlane.f32.xlu0 %v3810
        %v3812 = vpop.xlane.xlu0 %3811
        %v3813 = vsel %vm828, %v3767, 0.0
        %3814 = vadd.xlane.f32.xlu0 %v3813
        %v3815 = vpop.xlane.xlu0 %3814
        %v3816 = vsel %vm828, %v3768, 0.0
        %3817 = vadd.xlane.f32.xlu0 %v3816
        %v3818 = vpop.xlane.xlu0 %3817
        %v3819 = vmul.f32 %v3773, %v3211
        %v3820 = vmul.f32 %v3776, %v3211
        %v3821 = vmul.f32 %v3779, %v3211
        %v3822 = vmul.f32 %v3782, %v3211
        %v3823 = vmul.f32 %v3785, %v3211
        %v3824 = vmul.f32 %v3788, %v3211
        %v3825 = vmul.f32 %v3791, %v3211
        %v3826 = vmul.f32 %v3794, %v3211
        %v3827 = vmul.f32 %v3797, %v3211
        %v3828 = vmul.f32 %v3800, %v3211
        %v3829 = vmul.f32 %v3803, %v3211
        %v3830 = vmul.f32 %v3806, %v3211
        %v3831 = vmul.f32 %v3809, %v3211
        %v3832 = vmul.f32 %v3812, %v3211
        %v3833 = vmul.f32 %v3815, %v3211
        %v3834 = vmul.f32 %v3818, %v3211
        %v3835 = vsub.f32 %v3753, %v3819
        %v3836 = vsub.f32 %v3754, %v3820
        %v3837 = vsub.f32 %v3755, %v3821
        %v3838 = vsub.f32 %v3756, %v3822
        %v3839 = vsub.f32 %v3757, %v3823
        %v3840 = vsub.f32 %v3758, %v3824
        %v3841 = vsub.f32 %v3759, %v3825
        %v3842 = vsub.f32 %v3760, %v3826
        %v3843 = vsub.f32 %v3761, %v3827
        %v3844 = vsub.f32 %v3762, %v3828
        %v3845 = vsub.f32 %v3763, %v3829
        %v3846 = vsub.f32 %v3764, %v3830
        %v3847 = vsub.f32 %v3765, %v3831
        %v3848 = vsub.f32 %v3766, %v3832
        %v3849 = vsub.f32 %v3767, %v3833
        %v3850 = vsub.f32 %v3768, %v3834
        %v3851 = vmul.f32 %v3835, %v3835
        %v3852 = vmul.f32 %v3836, %v3836
        %v3853 = vmul.f32 %v3837, %v3837
        %v3854 = vmul.f32 %v3838, %v3838
        %v3855 = vmul.f32 %v3839, %v3839
        %v3856 = vmul.f32 %v3840, %v3840
        %v3857 = vmul.f32 %v3841, %v3841
        %v3858 = vmul.f32 %v3842, %v3842
        %v3859 = vmul.f32 %v3843, %v3843
        %v3860 = vmul.f32 %v3844, %v3844
        %v3861 = vmul.f32 %v3845, %v3845
        %v3862 = vmul.f32 %v3846, %v3846
        %v3863 = vmul.f32 %v3847, %v3847
        %v3864 = vmul.f32 %v3848, %v3848
        %v3865 = vmul.f32 %v3849, %v3849
        %v3866 = vmul.f32 %v3850, %v3850
        %v3867 = vsel %vm828, %v3851, 0.0
        %3868 = vadd.xlane.f32.xlu0 %v3867
        %v3869 = vpop.xlane.xlu0 %3868
        %v3870 = vsel %vm828, %v3852, 0.0
        %3871 = vadd.xlane.f32.xlu0 %v3870
        %v3872 = vpop.xlane.xlu0 %3871
        %v3873 = vsel %vm828, %v3853, 0.0
        %3874 = vadd.xlane.f32.xlu0 %v3873
        %v3875 = vpop.xlane.xlu0 %3874
        %v3876 = vsel %vm828, %v3854, 0.0
        %3877 = vadd.xlane.f32.xlu0 %v3876
        %v3878 = vpop.xlane.xlu0 %3877
        %v3879 = vsel %vm828, %v3855, 0.0
        %3880 = vadd.xlane.f32.xlu0 %v3879
        %v3881 = vpop.xlane.xlu0 %3880
        %v3882 = vsel %vm828, %v3856, 0.0
        %3883 = vadd.xlane.f32.xlu0 %v3882
        %v3884 = vpop.xlane.xlu0 %3883
        %v3885 = vsel %vm828, %v3857, 0.0
        %3886 = vadd.xlane.f32.xlu0 %v3885
        %v3887 = vpop.xlane.xlu0 %3886
        %v3888 = vsel %vm828, %v3858, 0.0
        %3889 = vadd.xlane.f32.xlu0 %v3888
        %v3890 = vpop.xlane.xlu0 %3889
        %v3891 = vsel %vm828, %v3859, 0.0
        %3892 = vadd.xlane.f32.xlu0 %v3891
        %v3893 = vpop.xlane.xlu0 %3892
        %v3894 = vsel %vm828, %v3860, 0.0
        %3895 = vadd.xlane.f32.xlu0 %v3894
        %v3896 = vpop.xlane.xlu0 %3895
        %v3897 = vsel %vm828, %v3861, 0.0
        %3898 = vadd.xlane.f32.xlu0 %v3897
        %v3899 = vpop.xlane.xlu0 %3898
        %v3900 = vsel %vm828, %v3862, 0.0
        %3901 = vadd.xlane.f32.xlu0 %v3900
        %v3902 = vpop.xlane.xlu0 %3901
        %v3903 = vsel %vm828, %v3863, 0.0
        %3904 = vadd.xlane.f32.xlu0 %v3903
        %v3905 = vpop.xlane.xlu0 %3904
        %v3906 = vsel %vm828, %v3864, 0.0
        %3907 = vadd.xlane.f32.xlu0 %v3906
        %v3908 = vpop.xlane.xlu0 %3907
        %v3909 = vsel %vm828, %v3865, 0.0
        %3910 = vadd.xlane.f32.xlu0 %v3909
        %v3911 = vpop.xlane.xlu0 %3910
        %v3912 = vsel %vm828, %v3866, 0.0
        %3913 = vadd.xlane.f32.xlu0 %v3912
        %v3914 = vpop.xlane.xlu0 %3913
        %v3915 = vmul.f32 %v3869, %v3211
        %v3916 = vmul.f32 %v3872, %v3211
        %v3917 = vmul.f32 %v3875, %v3211
        %v3918 = vmul.f32 %v3878, %v3211
        %v3919 = vmul.f32 %v3881, %v3211
        %v3920 = vmul.f32 %v3884, %v3211
        %v3921 = vmul.f32 %v3887, %v3211
        %v3922 = vmul.f32 %v3890, %v3211
        %v3923 = vmul.f32 %v3893, %v3211
        %v3924 = vmul.f32 %v3896, %v3211
        %v3925 = vmul.f32 %v3899, %v3211
        %v3926 = vmul.f32 %v3902, %v3211
        %v3927 = vmul.f32 %v3905, %v3211
        %v3928 = vmul.f32 %v3908, %v3211
        %v3929 = vmul.f32 %v3911, %v3211
        %v3930 = vmul.f32 %v3914, %v3211
        %v3931 = vadd.f32 %v3915, 1e-05
        %v3932 = vadd.f32 %v3916, 1e-05
        %v3933 = vadd.f32 %v3917, 1e-05
        %v3934 = vadd.f32 %v3918, 1e-05
        %v3935 = vadd.f32 %v3919, 1e-05
        %v3936 = vadd.f32 %v3920, 1e-05
        %v3937 = vadd.f32 %v3921, 1e-05
        %v3938 = vadd.f32 %v3922, 1e-05
        %v3939 = vadd.f32 %v3923, 1e-05
        %v3940 = vadd.f32 %v3924, 1e-05
        %v3941 = vadd.f32 %v3925, 1e-05
        %v3942 = vadd.f32 %v3926, 1e-05
        %v3943 = vadd.f32 %v3927, 1e-05
        %v3944 = vadd.f32 %v3928, 1e-05
        %v3945 = vadd.f32 %v3929, 1e-05
        %v3946 = vadd.f32 %v3930, 1e-05
        %v3947 = vrsqrt.pop %v3931
        %v3948 = vrsqrt.pop %v3932
        %v3949 = vrsqrt.pop %v3933
        %v3950 = vrsqrt.pop %v3934
        %v3951 = vrsqrt.pop %v3935
        %v3952 = vrsqrt.pop %v3936
        %v3953 = vrsqrt.pop %v3937
        %v3954 = vrsqrt.pop %v3938
        %v3955 = vrsqrt.pop %v3939
        %v3956 = vrsqrt.pop %v3940
        %v3957 = vrsqrt.pop %v3941
        %v3958 = vrsqrt.pop %v3942
        %v3959 = vrsqrt.pop %v3943
        %v3960 = vrsqrt.pop %v3944
        %v3961 = vrsqrt.pop %v3945
        %v3962 = vrsqrt.pop %v3946
        %v3963 = vmul.f32 %v3835, %v3947
        %v3964 = vmul.f32 %v3836, %v3948
        %v3965 = vmul.f32 %v3837, %v3949
        %v3966 = vmul.f32 %v3838, %v3950
        %v3967 = vmul.f32 %v3839, %v3951
        %v3968 = vmul.f32 %v3840, %v3952
        %v3969 = vmul.f32 %v3841, %v3953
        %v3970 = vmul.f32 %v3842, %v3954
        %v3971 = vmul.f32 %v3843, %v3955
        %v3972 = vmul.f32 %v3844, %v3956
        %v3973 = vmul.f32 %v3845, %v3957
        %v3974 = vmul.f32 %v3846, %v3958
        %v3975 = vmul.f32 %v3847, %v3959
        %v3976 = vmul.f32 %v3848, %v3960
        %v3977 = vmul.f32 %v3849, %v3961
        %v3978 = vmul.f32 %v3850, %v3962
        %v3980 = vlaneseq
        %v3981 = vshrl.u32 %v3980, 7
        %v3982 = vsub.s32 0, %v3981
        %v3983 = vrot.slane %v3769, %v3982
        %v3985 = vmul.f32 %v3963, %v3983
        %v3986 = vmul.f32 %v3964, %v3983
        %v3987 = vmul.f32 %v3965, %v3983
        %v3988 = vmul.f32 %v3966, %v3983
        %v3989 = vmul.f32 %v3967, %v3983
        %v3990 = vmul.f32 %v3968, %v3983
        %v3991 = vmul.f32 %v3969, %v3983
        %v3992 = vmul.f32 %v3970, %v3983
        %v3993 = vmul.f32 %v3971, %v3983
        %v3994 = vmul.f32 %v3972, %v3983
        %v3995 = vmul.f32 %v3973, %v3983
        %v3996 = vmul.f32 %v3974, %v3983
        %v3997 = vmul.f32 %v3975, %v3983
        %v3998 = vmul.f32 %v3976, %v3983
        %v3999 = vmul.f32 %v3977, %v3983
        %v4000 = vmul.f32 %v3978, %v3983
        %v4002 = vlaneseq
        %v4003 = vshrl.u32 %v4002, 7
        %v4004 = vsub.s32 0, %v4003
        %v4005 = vrot.slane %v3770, %v4004
        %v4007 = vadd.f32 %v3985, %v4005
        %v4008 = vadd.f32 %v3986, %v4005
        %v4009 = vadd.f32 %v3987, %v4005
        %v4010 = vadd.f32 %v3988, %v4005
        %v4011 = vadd.f32 %v3989, %v4005
        %v4012 = vadd.f32 %v3990, %v4005
        %v4013 = vadd.f32 %v3991, %v4005
        %v4014 = vadd.f32 %v3992, %v4005
        %v4015 = vadd.f32 %v3993, %v4005
        %v4016 = vadd.f32 %v3994, %v4005
        %v4017 = vadd.f32 %v3995, %v4005
        %v4018 = vadd.f32 %v3996, %v4005
        %v4019 = vadd.f32 %v3997, %v4005
        %v4020 = vadd.f32 %v3998, %v4005
        %v4021 = vadd.f32 %v3999, %v4005
        %v4022 = vadd.f32 %v4000, %v4005
        %v4023 = vpack.c.bf16 %v4008, %v4007
        %v4024 = vpack.c.bf16 %v4010, %v4009
        %v4025 = vpack.c.bf16 %v4012, %v4011
        %v4026 = vpack.c.bf16 %v4014, %v4013
        %v4027 = vpack.c.bf16 %v4016, %v4015
        %v4028 = vpack.c.bf16 %v4018, %v4017
        %v4029 = vpack.c.bf16 %v4020, %v4019
        %v4030 = vpack.c.bf16 %v4022, %v4021
        %s4031 = scalar_lea.vmem %s5, 16
        %v4032 = vld [vmem:[%s4031] sm:$0xf]
        %v4033 = vld [vmem:[%s4031 + $0x4] sm:$0xf]
        %v4034 = vld [vmem:[%s4031 + $0x8] sm:$0xf]
        %v4035 = vld [vmem:[%s4031 + $0xc] sm:$0xf]
        %s4036 = scalar_lea.vmem %s6, 1
        %v4037 = vld [vmem:[%s4036] sm:$0x1]
        %v4039 = vlaneseq
        %v4040 = vshrl.u32 %v4039, 7
        %v4041 = vsub.s32 0, %v4040
        %v4042 = vrot.slane %v4037, %v4041
        %v4048 = vunpack.c.l.b16 %v4032
        %v4049 = vunpack.c.l.b16 %v4033
        %v4050 = vunpack.c.l.b16 %v4034
        %v4051 = vunpack.c.l.b16 %v4035
        %v4052 = vpack.c.b16 %v4049, %v4048
        %v4053 = vpack.c.b16 %v4051, %v4050
        %v4057 = vsel %vm828, %v4023, 0
        %v4060 = vsel %vm828, %v4024, 0
        %v4063 = vsel %vm828, %v4025, 0
        %v4066 = vsel %vm828, %v4026, 0
        %v4069 = vsel %vm828, %v4027, 0
        %v4072 = vsel %vm828, %v4028, 0
        %v4075 = vsel %vm828, %v4029, 0
        %v4078 = vsel %vm828, %v4030, 0
        %4080 = vmatprep.subr.bf16.mxu0 0
        %4081 = vmatpush1.bf16.msra.mxu0 0
        %4082 = vmatprep.subr.bf16.mxu0 0
        %4083 = vmatpush1.bf16.msra.mxu0 0
        %4084 = vmatprep.subr.bf16.mxu0 0
        %4085 = vmatpush1.bf16.msra.mxu0 0
        %4086 = vmatprep.subr.bf16.mxu0 0
        %4087 = vmatpush1.bf16.msra.mxu0 0
        %4088 = vmatprep.subr.bf16.mxu0 0
        %4089 = vmatpush1.bf16.msra.mxu0 0
        %4090 = vmatprep.subr.bf16.mxu0 0
        %4091 = vmatpush1.bf16.msra.mxu0 0
        %4092 = vmatprep.subr.bf16.mxu0 0
        %4093 = vmatpush1.bf16.msra.mxu0 %v4053
        %4094 = vmatprep.subr.bf16.mxu0 0
        %4095 = vmatpush1.bf16.msra.mxu0 %v4052
        %4096 = vmatprep.subr.bf16.mxu0 0
        %4097 = vmatpush2.bf16.msra.mxu0 0
        %4098 = vmatprep.subr.bf16.mxu0 0
        %4099 = vmatpush2.bf16.msra.mxu0 0
        %4100 = vmatprep.subr.bf16.mxu0 0
        %4101 = vmatpush2.bf16.msra.mxu0 0
        %4102 = vmatprep.subr.bf16.mxu0 0
        %4103 = vmatpush2.bf16.msra.mxu0 0
        %4104 = vmatprep.subr.bf16.mxu0 0
        %4105 = vmatpush2.bf16.msra.mxu0 0
        %4106 = vmatprep.subr.bf16.mxu0 0
        %4107 = vmatpush2.bf16.msra.mxu0 0
        %4108 = vmatprep.subr.bf16.mxu0 0
        %4109 = vmatpush2.bf16.msra.mxu0 0
        %4110 = vmatprep.subr.bf16.mxu0 0
        %4111 = vmatpush2.bf16.msra.mxu0 0
        %4112 = vmatprep.mubr.bf16.mxu0 0
        %4113 = vmatmul.mubr.bf16.gmra.mxu0 %v4057
        %v4114 = vpop.f32.mrf.mxu0
        %v4115 = vadd.f32 %v4042, %v4114
        %v4116 = vpop.f32.mrf.mxu0
        %v4117 = vpop.f32.mrf.mxu0
        %v4118 = vadd.f32 %v4042, %v4117
        %v4119 = vpop.f32.mrf.mxu0
        %4120 = vmatprep.mubr.bf16.mxu0 0
        %4121 = vmatmul.mubr.bf16.gmra.mxu0 %v4060
        %v4122 = vpop.f32.mrf.mxu0
        %v4123 = vadd.f32 %v4042, %v4122
        %v4124 = vpop.f32.mrf.mxu0
        %v4125 = vpop.f32.mrf.mxu0
        %v4126 = vadd.f32 %v4042, %v4125
        %v4127 = vpop.f32.mrf.mxu0
        %4128 = vmatprep.mubr.bf16.mxu0 0
        %4129 = vmatmul.mubr.bf16.gmra.mxu0 %v4063
        %v4130 = vpop.f32.mrf.mxu0
        %v4131 = vadd.f32 %v4042, %v4130
        %v4132 = vpop.f32.mrf.mxu0
        %v4133 = vpop.f32.mrf.mxu0
        %v4134 = vadd.f32 %v4042, %v4133
        %v4135 = vpop.f32.mrf.mxu0
        %4136 = vmatprep.mubr.bf16.mxu0 0
        %4137 = vmatmul.mubr.bf16.gmra.mxu0 %v4066
        %v4138 = vpop.f32.mrf.mxu0
        %v4139 = vadd.f32 %v4042, %v4138
        %v4140 = vpop.f32.mrf.mxu0
        %v4141 = vpop.f32.mrf.mxu0
        %v4142 = vadd.f32 %v4042, %v4141
        %v4143 = vpop.f32.mrf.mxu0
        %4144 = vmatprep.mubr.bf16.mxu0 0
        %4145 = vmatmul.mubr.bf16.gmra.mxu0 %v4069
        %v4146 = vpop.f32.mrf.mxu0
        %v4147 = vadd.f32 %v4042, %v4146
        %v4148 = vpop.f32.mrf.mxu0
        %v4149 = vpop.f32.mrf.mxu0
        %v4150 = vadd.f32 %v4042, %v4149
        %v4151 = vpop.f32.mrf.mxu0
        %4152 = vmatprep.mubr.bf16.mxu0 0
        %4153 = vmatmul.mubr.bf16.gmra.mxu0 %v4072
        %v4154 = vpop.f32.mrf.mxu0
        %v4155 = vadd.f32 %v4042, %v4154
        %v4156 = vpop.f32.mrf.mxu0
        %v4157 = vpop.f32.mrf.mxu0
        %v4158 = vadd.f32 %v4042, %v4157
        %v4159 = vpop.f32.mrf.mxu0
        %4160 = vmatprep.mubr.bf16.mxu0 0
        %4161 = vmatmul.mubr.bf16.gmra.mxu0 %v4075
        %v4162 = vpop.f32.mrf.mxu0
        %v4163 = vadd.f32 %v4042, %v4162
        %v4164 = vpop.f32.mrf.mxu0
        %v4165 = vpop.f32.mrf.mxu0
        %v4166 = vadd.f32 %v4042, %v4165
        %v4167 = vpop.f32.mrf.mxu0
        %4168 = vmatprep.mubr.bf16.mxu0 0
        %4169 = vmatmul.mubr.bf16.gmra.mxu0 %v4078
        %v4170 = vpop.f32.mrf.mxu0
        %v4171 = vadd.f32 %v4042, %v4170
        %v4172 = vpop.f32.mrf.mxu0
        %v4173 = vpop.f32.mrf.mxu0
        %v4174 = vadd.f32 %v4042, %v4173
        %v4175 = vpop.f32.mrf.mxu0
        %4176 = vdwg.mxu0
        %v4177 = vpack.c.bf16 %v4118, %v4115
        %v4178 = vpack.c.bf16 %v4126, %v4123
        %v4179 = vpack.c.bf16 %v4134, %v4131
        %v4180 = vpack.c.bf16 %v4142, %v4139
        %v4181 = vpack.c.bf16 %v4150, %v4147
        %v4182 = vpack.c.bf16 %v4158, %v4155
        %v4183 = vpack.c.bf16 %v4166, %v4163
        %v4184 = vpack.c.bf16 %v4174, %v4171
        %4193 = vrot.lane.b32.xlu0 %v4177, 96
        %v4194 = vpop.permute.xlu0 %4193
        %4195 = vrot.lane.b32.xlu0 %v4178, 96
        %v4196 = vpop.permute.xlu0 %4195
        %4197 = vrot.lane.b32.xlu0 %v4179, 96
        %v4198 = vpop.permute.xlu0 %4197
        %4199 = vrot.lane.b32.xlu0 %v4180, 96
        %v4200 = vpop.permute.xlu0 %4199
        %4201 = vrot.lane.b32.xlu0 %v4181, 96
        %v4202 = vpop.permute.xlu0 %4201
        %4203 = vrot.lane.b32.xlu0 %v4182, 96
        %v4204 = vpop.permute.xlu0 %4203
        %4205 = vrot.lane.b32.xlu0 %v4183, 96
        %v4206 = vpop.permute.xlu0 %4205
        %4207 = vrot.lane.b32.xlu0 %v4184, 96
        %v4208 = vpop.permute.xlu0 %4207
        %v4210 = vsel %vm982, %v4177, 0
        %v4213 = vsel %vm982, %v4178, 0
        %v4216 = vsel %vm982, %v4179, 0
        %v4219 = vsel %vm982, %v4180, 0
        %v4222 = vsel %vm982, %v4181, 0
        %v4225 = vsel %vm982, %v4182, 0
        %v4228 = vsel %vm982, %v4183, 0
        %v4231 = vsel %vm982, %v4184, 0
        %v4234 = vsel %vm982, %v4194, 0
        %v4237 = vsel %vm982, %v4196, 0
        %v4240 = vsel %vm982, %v4198, 0
        %v4243 = vsel %vm982, %v4200, 0
        %v4246 = vsel %vm982, %v4202, 0
        %v4249 = vsel %vm982, %v4204, 0
        %v4252 = vsel %vm982, %v4206, 0
        %v4255 = vsel %vm982, %v4208, 0
        %4257 = vmatprep.subr.bf16.mxu0 0
        %4258 = vmatpush1.bf16.xpose.msra.mxu0 %v4255
        %4259 = vmatprep.subr.bf16.mxu0 0
        %4260 = vmatpush1.bf16.xpose.msra.mxu0 %v4252
        %4261 = vmatprep.subr.bf16.mxu0 0
        %4262 = vmatpush1.bf16.xpose.msra.mxu0 %v4249
        %4263 = vmatprep.subr.bf16.mxu0 0
        %4264 = vmatpush1.bf16.xpose.msra.mxu0 %v4246
        %4265 = vmatprep.subr.bf16.mxu0 0
        %4266 = vmatpush1.bf16.xpose.msra.mxu0 %v4243
        %4267 = vmatprep.subr.bf16.mxu0 0
        %4268 = vmatpush1.bf16.xpose.msra.mxu0 %v4240
        %4269 = vmatprep.subr.bf16.mxu0 0
        %4270 = vmatpush1.bf16.xpose.msra.mxu0 %v4237
        %4271 = vmatprep.subr.bf16.mxu0 0
        %4272 = vmatpush1.bf16.xpose.msra.mxu0 %v4234
        %4273 = vmatprep.subr.bf16.mxu0 0
        %4274 = vmatpush2.bf16.xpose.msra.mxu0 0
        %4275 = vmatprep.subr.bf16.mxu0 0
        %4276 = vmatpush2.bf16.xpose.msra.mxu0 0
        %4277 = vmatprep.subr.bf16.mxu0 0
        %4278 = vmatpush2.bf16.xpose.msra.mxu0 0
        %4279 = vmatprep.subr.bf16.mxu0 0
        %4280 = vmatpush2.bf16.xpose.msra.mxu0 0
        %4281 = vmatprep.subr.bf16.mxu0 0
        %4282 = vmatpush2.bf16.xpose.msra.mxu0 0
        %4283 = vmatprep.subr.bf16.mxu0 0
        %4284 = vmatpush2.bf16.xpose.msra.mxu0 0
        %4285 = vmatprep.subr.bf16.mxu0 0
        %4286 = vmatpush2.bf16.xpose.msra.mxu0 0
        %4287 = vmatprep.subr.bf16.mxu0 0
        %4288 = vmatpush2.bf16.xpose.msra.mxu0 0
        %4289 = vmatprep.mubr.bf16.mxu0 0
        %4290 = vmatmul.mubr.bf16.gmra.mxu0 %v4210
        %v4291 = vpop.f32.mrf.mxu0
        %v4292 = vadd.f32 %v614, %v4291
        %v4293 = vpop.f32.mrf.mxu0
        %v4294 = vpop.f32.mrf.mxu0
        %v4295 = vadd.f32 %v615, %v4294
        %v4296 = vpop.f32.mrf.mxu0
        %4297 = vmatprep.mubr.bf16.mxu0 0
        %4298 = vmatmul.mubr.bf16.gmra.mxu0 %v4213
        %v4299 = vpop.f32.mrf.mxu0
        %v4300 = vadd.f32 %v616, %v4299
        %v4301 = vpop.f32.mrf.mxu0
        %v4302 = vpop.f32.mrf.mxu0
        %v4303 = vadd.f32 %v617, %v4302
        %v4304 = vpop.f32.mrf.mxu0
        %4305 = vmatprep.mubr.bf16.mxu0 0
        %4306 = vmatmul.mubr.bf16.gmra.mxu0 %v4216
        %v4307 = vpop.f32.mrf.mxu0
        %v4308 = vadd.f32 %v618, %v4307
        %v4309 = vpop.f32.mrf.mxu0
        %v4310 = vpop.f32.mrf.mxu0
        %v4311 = vadd.f32 %v619, %v4310
        %v4312 = vpop.f32.mrf.mxu0
        %4313 = vmatprep.mubr.bf16.mxu0 0
        %4314 = vmatmul.mubr.bf16.gmra.mxu0 %v4219
        %v4315 = vpop.f32.mrf.mxu0
        %v4316 = vadd.f32 %v620, %v4315
        %v4317 = vpop.f32.mrf.mxu0
        %v4318 = vpop.f32.mrf.mxu0
        %v4319 = vadd.f32 %v621, %v4318
        %v4320 = vpop.f32.mrf.mxu0
        %4321 = vmatprep.mubr.bf16.mxu0 0
        %4322 = vmatmul.mubr.bf16.gmra.mxu0 %v4222
        %v4323 = vpop.f32.mrf.mxu0
        %v4324 = vadd.f32 %v622, %v4323
        %v4325 = vpop.f32.mrf.mxu0
        %v4326 = vpop.f32.mrf.mxu0
        %v4327 = vadd.f32 %v623, %v4326
        %v4328 = vpop.f32.mrf.mxu0
        %4329 = vmatprep.mubr.bf16.mxu0 0
        %4330 = vmatmul.mubr.bf16.gmra.mxu0 %v4225
        %v4331 = vpop.f32.mrf.mxu0
        %v4332 = vadd.f32 %v624, %v4331
        %v4333 = vpop.f32.mrf.mxu0
        %v4334 = vpop.f32.mrf.mxu0
        %v4335 = vadd.f32 %v625, %v4334
        %v4336 = vpop.f32.mrf.mxu0
        %4337 = vmatprep.mubr.bf16.mxu0 0
        %4338 = vmatmul.mubr.bf16.gmra.mxu0 %v4228
        %v4339 = vpop.f32.mrf.mxu0
        %v4340 = vadd.f32 %v626, %v4339
        %v4341 = vpop.f32.mrf.mxu0
        %v4342 = vpop.f32.mrf.mxu0
        %v4343 = vadd.f32 %v627, %v4342
        %v4344 = vpop.f32.mrf.mxu0
        %4345 = vmatprep.mubr.bf16.mxu0 0
        %4346 = vmatmul.mubr.bf16.gmra.mxu0 %v4231
        %v4347 = vpop.f32.mrf.mxu0
        %v4348 = vadd.f32 %v628, %v4347
        %v4349 = vpop.f32.mrf.mxu0
        %v4350 = vpop.f32.mrf.mxu0
        %v4351 = vadd.f32 %v629, %v4350
        %v4352 = vpop.f32.mrf.mxu0
        %4353 = vdwg.mxu0
        %4354 = vmax.xlane.f32.xlu0 %v4292
        %v4355 = vpop.xlane.xlu0 %4354
        %4356 = vmax.xlane.f32.xlu0 %v4295
        %v4357 = vpop.xlane.xlu0 %4356
        %4358 = vmax.xlane.f32.xlu0 %v4300
        %v4359 = vpop.xlane.xlu0 %4358
        %4360 = vmax.xlane.f32.xlu0 %v4303
        %v4361 = vpop.xlane.xlu0 %4360
        %4362 = vmax.xlane.f32.xlu0 %v4308
        %v4363 = vpop.xlane.xlu0 %4362
        %4364 = vmax.xlane.f32.xlu0 %v4311
        %v4365 = vpop.xlane.xlu0 %4364
        %4366 = vmax.xlane.f32.xlu0 %v4316
        %v4367 = vpop.xlane.xlu0 %4366
        %4368 = vmax.xlane.f32.xlu0 %v4319
        %v4369 = vpop.xlane.xlu0 %4368
        %4370 = vmax.xlane.f32.xlu0 %v4324
        %v4371 = vpop.xlane.xlu0 %4370
        %4372 = vmax.xlane.f32.xlu0 %v4327
        %v4373 = vpop.xlane.xlu0 %4372
        %4374 = vmax.xlane.f32.xlu0 %v4332
        %v4375 = vpop.xlane.xlu0 %4374
        %4376 = vmax.xlane.f32.xlu0 %v4335
        %v4377 = vpop.xlane.xlu0 %4376
        %4378 = vmax.xlane.f32.xlu0 %v4340
        %v4379 = vpop.xlane.xlu0 %4378
        %4380 = vmax.xlane.f32.xlu0 %v4343
        %v4381 = vpop.xlane.xlu0 %4380
        %4382 = vmax.xlane.f32.xlu0 %v4348
        %v4383 = vpop.xlane.xlu0 %4382
        %4384 = vmax.xlane.f32.xlu0 %v4351
        %v4385 = vpop.xlane.xlu0 %4384
        %v4386 = vsub.f32 %v4292, %v4355
        %v4387 = vsub.f32 %v4295, %v4357
        %v4388 = vsub.f32 %v4300, %v4359
        %v4389 = vsub.f32 %v4303, %v4361
        %v4390 = vsub.f32 %v4308, %v4363
        %v4391 = vsub.f32 %v4311, %v4365
        %v4392 = vsub.f32 %v4316, %v4367
        %v4393 = vsub.f32 %v4319, %v4369
        %v4394 = vsub.f32 %v4324, %v4371
        %v4395 = vsub.f32 %v4327, %v4373
        %v4396 = vsub.f32 %v4332, %v4375
        %v4397 = vsub.f32 %v4335, %v4377
        %v4398 = vsub.f32 %v4340, %v4379
        %v4399 = vsub.f32 %v4343, %v4381
        %v4400 = vsub.f32 %v4348, %v4383
        %v4401 = vsub.f32 %v4351, %v4385
        %v4402 = vmul.f32 %v4386, 1.442695
        %v4403 = vpow.pop %v4402
        %v4404 = vmul.f32 %v4387, 1.442695
        %v4405 = vpow.pop %v4404
        %v4406 = vmul.f32 %v4388, 1.442695
        %v4407 = vpow.pop %v4406
        %v4408 = vmul.f32 %v4389, 1.442695
        %v4409 = vpow.pop %v4408
        %v4410 = vmul.f32 %v4390, 1.442695
        %v4411 = vpow.pop %v4410
        %v4412 = vmul.f32 %v4391, 1.442695
        %v4413 = vpow.pop %v4412
        %v4414 = vmul.f32 %v4392, 1.442695
        %v4415 = vpow.pop %v4414
        %v4416 = vmul.f32 %v4393, 1.442695
        %v4417 = vpow.pop %v4416
        %v4418 = vmul.f32 %v4394, 1.442695
        %v4419 = vpow.pop %v4418
        %v4420 = vmul.f32 %v4395, 1.442695
        %v4421 = vpow.pop %v4420
        %v4422 = vmul.f32 %v4396, 1.442695
        %v4423 = vpow.pop %v4422
        %v4424 = vmul.f32 %v4397, 1.442695
        %v4425 = vpow.pop %v4424
        %v4426 = vmul.f32 %v4398, 1.442695
        %v4427 = vpow.pop %v4426
        %v4428 = vmul.f32 %v4399, 1.442695
        %v4429 = vpow.pop %v4428
        %v4430 = vmul.f32 %v4400, 1.442695
        %v4431 = vpow.pop %v4430
        %v4432 = vmul.f32 %v4401, 1.442695
        %v4433 = vpow.pop %v4432
        %4434 = vadd.xlane.f32.xlu0 %v4403
        %v4435 = vpop.xlane.xlu0 %4434
        %4436 = vadd.xlane.f32.xlu0 %v4405
        %v4437 = vpop.xlane.xlu0 %4436
        %4438 = vadd.xlane.f32.xlu0 %v4407
        %v4439 = vpop.xlane.xlu0 %4438
        %4440 = vadd.xlane.f32.xlu0 %v4409
        %v4441 = vpop.xlane.xlu0 %4440
        %4442 = vadd.xlane.f32.xlu0 %v4411
        %v4443 = vpop.xlane.xlu0 %4442
        %4444 = vadd.xlane.f32.xlu0 %v4413
        %v4445 = vpop.xlane.xlu0 %4444
        %4446 = vadd.xlane.f32.xlu0 %v4415
        %v4447 = vpop.xlane.xlu0 %4446
        %4448 = vadd.xlane.f32.xlu0 %v4417
        %v4449 = vpop.xlane.xlu0 %4448
        %4450 = vadd.xlane.f32.xlu0 %v4419
        %v4451 = vpop.xlane.xlu0 %4450
        %4452 = vadd.xlane.f32.xlu0 %v4421
        %v4453 = vpop.xlane.xlu0 %4452
        %4454 = vadd.xlane.f32.xlu0 %v4423
        %v4455 = vpop.xlane.xlu0 %4454
        %4456 = vadd.xlane.f32.xlu0 %v4425
        %v4457 = vpop.xlane.xlu0 %4456
        %4458 = vadd.xlane.f32.xlu0 %v4427
        %v4459 = vpop.xlane.xlu0 %4458
        %4460 = vadd.xlane.f32.xlu0 %v4429
        %v4461 = vpop.xlane.xlu0 %4460
        %4462 = vadd.xlane.f32.xlu0 %v4431
        %v4463 = vpop.xlane.xlu0 %4462
        %4464 = vadd.xlane.f32.xlu0 %v4433
        %v4465 = vpop.xlane.xlu0 %4464
        %v4466 = vrcp.pop %v4435
        %v4467 = vrcp.pop %v4437
        %v4468 = vrcp.pop %v4439
        %v4469 = vrcp.pop %v4441
        %v4470 = vrcp.pop %v4443
        %v4471 = vrcp.pop %v4445
        %v4472 = vrcp.pop %v4447
        %v4473 = vrcp.pop %v4449
        %v4474 = vrcp.pop %v4451
        %v4475 = vrcp.pop %v4453
        %v4476 = vrcp.pop %v4455
        %v4477 = vrcp.pop %v4457
        %v4478 = vrcp.pop %v4459
        %v4479 = vrcp.pop %v4461
        %v4480 = vrcp.pop %v4463
        %v4481 = vrcp.pop %v4465
        %v4482 = vmul.f32 %v4403, %v4466
        %v4483 = vmul.f32 %v4405, %v4467
        %v4484 = vmul.f32 %v4407, %v4468
        %v4485 = vmul.f32 %v4409, %v4469
        %v4486 = vmul.f32 %v4411, %v4470
        %v4487 = vmul.f32 %v4413, %v4471
        %v4488 = vmul.f32 %v4415, %v4472
        %v4489 = vmul.f32 %v4417, %v4473
        %v4490 = vmul.f32 %v4419, %v4474
        %v4491 = vmul.f32 %v4421, %v4475
        %v4492 = vmul.f32 %v4423, %v4476
        %v4493 = vmul.f32 %v4425, %v4477
        %v4494 = vmul.f32 %v4427, %v4478
        %v4495 = vmul.f32 %v4429, %v4479
        %v4496 = vmul.f32 %v4431, %v4480
        %v4497 = vmul.f32 %v4433, %v4481
        %v4498 = vpack.c.bf16 %v4483, %v4482
        %v4499 = vpack.c.bf16 %v4485, %v4484
        %v4500 = vpack.c.bf16 %v4487, %v4486
        %v4501 = vpack.c.bf16 %v4489, %v4488
        %v4502 = vpack.c.bf16 %v4491, %v4490
        %v4503 = vpack.c.bf16 %v4493, %v4492
        %v4504 = vpack.c.bf16 %v4495, %v4494
        %v4505 = vpack.c.bf16 %v4497, %v4496
        %4506 = vrot.lane.b32.xlu0 %v4177, 64
        %v4507 = vpop.permute.xlu0 %4506
        %4508 = vrot.lane.b32.xlu0 %v4178, 64
        %v4509 = vpop.permute.xlu0 %4508
        %4510 = vrot.lane.b32.xlu0 %v4179, 64
        %v4511 = vpop.permute.xlu0 %4510
        %4512 = vrot.lane.b32.xlu0 %v4180, 64
        %v4513 = vpop.permute.xlu0 %4512
        %4514 = vrot.lane.b32.xlu0 %v4181, 64
        %v4515 = vpop.permute.xlu0 %4514
        %4516 = vrot.lane.b32.xlu0 %v4182, 64
        %v4517 = vpop.permute.xlu0 %4516
        %4518 = vrot.lane.b32.xlu0 %v4183, 64
        %v4519 = vpop.permute.xlu0 %4518
        %4520 = vrot.lane.b32.xlu0 %v4184, 64
        %v4521 = vpop.permute.xlu0 %4520
        %4530 = vmatprep.subr.bf16.mxu0 0
        %4531 = vmatpush1.bf16.msra.mxu0 %v4521
        %4532 = vmatprep.subr.bf16.mxu0 0
        %4533 = vmatpush1.bf16.msra.mxu0 %v4519
        %4534 = vmatprep.subr.bf16.mxu0 0
        %4535 = vmatpush1.bf16.msra.mxu0 %v4517
        %4536 = vmatprep.subr.bf16.mxu0 0
        %4537 = vmatpush1.bf16.msra.mxu0 %v4515
        %4538 = vmatprep.subr.bf16.mxu0 0
        %4539 = vmatpush1.bf16.msra.mxu0 %v4513
        %4540 = vmatprep.subr.bf16.mxu0 0
        %4541 = vmatpush1.bf16.msra.mxu0 %v4511
        %4542 = vmatprep.subr.bf16.mxu0 0
        %4543 = vmatpush1.bf16.msra.mxu0 %v4509
        %4544 = vmatprep.subr.bf16.mxu0 0
        %4545 = vmatpush1.bf16.msra.mxu0 %v4507
        %4546 = vmatprep.subr.bf16.mxu0 0
        %4547 = vmatpush2.bf16.msra.mxu0 0
        %4548 = vmatprep.subr.bf16.mxu0 0
        %4549 = vmatpush2.bf16.msra.mxu0 0
        %4550 = vmatprep.subr.bf16.mxu0 0
        %4551 = vmatpush2.bf16.msra.mxu0 0
        %4552 = vmatprep.subr.bf16.mxu0 0
        %4553 = vmatpush2.bf16.msra.mxu0 0
        %4554 = vmatprep.subr.bf16.mxu0 0
        %4555 = vmatpush2.bf16.msra.mxu0 0
        %4556 = vmatprep.subr.bf16.mxu0 0
        %4557 = vmatpush2.bf16.msra.mxu0 0
        %4558 = vmatprep.subr.bf16.mxu0 0
        %4559 = vmatpush2.bf16.msra.mxu0 0
        %4560 = vmatprep.subr.bf16.mxu0 0
        %4561 = vmatpush2.bf16.msra.mxu0 0
        %4562 = vmatprep.mubr.bf16.mxu0 0
        %4563 = vmatmul.mubr.bf16.gmra.mxu0 %v4498
        %v4564 = vpop.f32.mrf.mxu0
        %v4565 = vadd.f32 0.0, %v4564
        %v4566 = vpop.f32.mrf.mxu0
        %v4567 = vpop.f32.mrf.mxu0
        %v4568 = vadd.f32 0.0, %v4567
        %v4569 = vpop.f32.mrf.mxu0
        %4570 = vmatprep.mubr.bf16.mxu0 0
        %4571 = vmatmul.mubr.bf16.gmra.mxu0 %v4499
        %v4572 = vpop.f32.mrf.mxu0
        %v4573 = vadd.f32 0.0, %v4572
        %v4574 = vpop.f32.mrf.mxu0
        %v4575 = vpop.f32.mrf.mxu0
        %v4576 = vadd.f32 0.0, %v4575
        %v4577 = vpop.f32.mrf.mxu0
        %4578 = vmatprep.mubr.bf16.mxu0 0
        %4579 = vmatmul.mubr.bf16.gmra.mxu0 %v4500
        %v4580 = vpop.f32.mrf.mxu0
        %v4581 = vadd.f32 0.0, %v4580
        %v4582 = vpop.f32.mrf.mxu0
        %v4583 = vpop.f32.mrf.mxu0
        %v4584 = vadd.f32 0.0, %v4583
        %v4585 = vpop.f32.mrf.mxu0
        %4586 = vmatprep.mubr.bf16.mxu0 0
        %4587 = vmatmul.mubr.bf16.gmra.mxu0 %v4501
        %v4588 = vpop.f32.mrf.mxu0
        %v4589 = vadd.f32 0.0, %v4588
        %v4590 = vpop.f32.mrf.mxu0
        %v4591 = vpop.f32.mrf.mxu0
        %v4592 = vadd.f32 0.0, %v4591
        %v4593 = vpop.f32.mrf.mxu0
        %4594 = vmatprep.mubr.bf16.mxu0 0
        %4595 = vmatmul.mubr.bf16.gmra.mxu0 %v4502
        %v4596 = vpop.f32.mrf.mxu0
        %v4597 = vadd.f32 0.0, %v4596
        %v4598 = vpop.f32.mrf.mxu0
        %v4599 = vpop.f32.mrf.mxu0
        %v4600 = vadd.f32 0.0, %v4599
        %v4601 = vpop.f32.mrf.mxu0
        %4602 = vmatprep.mubr.bf16.mxu0 0
        %4603 = vmatmul.mubr.bf16.gmra.mxu0 %v4503
        %v4604 = vpop.f32.mrf.mxu0
        %v4605 = vadd.f32 0.0, %v4604
        %v4606 = vpop.f32.mrf.mxu0
        %v4607 = vpop.f32.mrf.mxu0
        %v4608 = vadd.f32 0.0, %v4607
        %v4609 = vpop.f32.mrf.mxu0
        %4610 = vmatprep.mubr.bf16.mxu0 0
        %4611 = vmatmul.mubr.bf16.gmra.mxu0 %v4504
        %v4612 = vpop.f32.mrf.mxu0
        %v4613 = vadd.f32 0.0, %v4612
        %v4614 = vpop.f32.mrf.mxu0
        %v4615 = vpop.f32.mrf.mxu0
        %v4616 = vadd.f32 0.0, %v4615
        %v4617 = vpop.f32.mrf.mxu0
        %4618 = vmatprep.mubr.bf16.mxu0 0
        %4619 = vmatmul.mubr.bf16.gmra.mxu0 %v4505
        %v4620 = vpop.f32.mrf.mxu0
        %v4621 = vadd.f32 0.0, %v4620
        %v4622 = vpop.f32.mrf.mxu0
        %v4623 = vpop.f32.mrf.mxu0
        %v4624 = vadd.f32 0.0, %v4623
        %v4625 = vpop.f32.mrf.mxu0
        %4626 = vdwg.mxu0
        %4627 = vrot.lane.b32.xlu0 %v4177, 120
        %v4628 = vpop.permute.xlu0 %4627
        %4629 = vrot.lane.b32.xlu0 %v4178, 120
        %v4630 = vpop.permute.xlu0 %4629
        %4631 = vrot.lane.b32.xlu0 %v4179, 120
        %v4632 = vpop.permute.xlu0 %4631
        %4633 = vrot.lane.b32.xlu0 %v4180, 120
        %v4634 = vpop.permute.xlu0 %4633
        %4635 = vrot.lane.b32.xlu0 %v4181, 120
        %v4636 = vpop.permute.xlu0 %4635
        %4637 = vrot.lane.b32.xlu0 %v4182, 120
        %v4638 = vpop.permute.xlu0 %4637
        %4639 = vrot.lane.b32.xlu0 %v4183, 120
        %v4640 = vpop.permute.xlu0 %4639
        %4641 = vrot.lane.b32.xlu0 %v4184, 120
        %v4642 = vpop.permute.xlu0 %4641
        %4643 = vrot.lane.b32.xlu0 %v4177, 88
        %v4644 = vpop.permute.xlu0 %4643
        %4645 = vrot.lane.b32.xlu0 %v4178, 88
        %v4646 = vpop.permute.xlu0 %4645
        %4647 = vrot.lane.b32.xlu0 %v4179, 88
        %v4648 = vpop.permute.xlu0 %4647
        %4649 = vrot.lane.b32.xlu0 %v4180, 88
        %v4650 = vpop.permute.xlu0 %4649
        %4651 = vrot.lane.b32.xlu0 %v4181, 88
        %v4652 = vpop.permute.xlu0 %4651
        %4653 = vrot.lane.b32.xlu0 %v4182, 88
        %v4654 = vpop.permute.xlu0 %4653
        %4655 = vrot.lane.b32.xlu0 %v4183, 88
        %v4656 = vpop.permute.xlu0 %4655
        %4657 = vrot.lane.b32.xlu0 %v4184, 88
        %v4658 = vpop.permute.xlu0 %4657
        %v4660 = vsel %vm982, %v4628, 0
        %v4663 = vsel %vm982, %v4630, 0
        %v4666 = vsel %vm982, %v4632, 0
        %v4669 = vsel %vm982, %v4634, 0
        %v4672 = vsel %vm982, %v4636, 0
        %v4675 = vsel %vm982, %v4638, 0
        %v4678 = vsel %vm982, %v4640, 0
        %v4681 = vsel %vm982, %v4642, 0
        %v4684 = vsel %vm982, %v4644, 0
        %v4687 = vsel %vm982, %v4646, 0
        %v4690 = vsel %vm982, %v4648, 0
        %v4693 = vsel %vm982, %v4650, 0
        %v4696 = vsel %vm982, %v4652, 0
        %v4699 = vsel %vm982, %v4654, 0
        %v4702 = vsel %vm982, %v4656, 0
        %v4705 = vsel %vm982, %v4658, 0
        %4707 = vmatprep.subr.bf16.mxu0 0
        %4708 = vmatpush1.bf16.xpose.msra.mxu0 %v4705
        %4709 = vmatprep.subr.bf16.mxu0 0
        %4710 = vmatpush1.bf16.xpose.msra.mxu0 %v4702
        %4711 = vmatprep.subr.bf16.mxu0 0
        %4712 = vmatpush1.bf16.xpose.msra.mxu0 %v4699
        %4713 = vmatprep.subr.bf16.mxu0 0
        %4714 = vmatpush1.bf16.xpose.msra.mxu0 %v4696
        %4715 = vmatprep.subr.bf16.mxu0 0
        %4716 = vmatpush1.bf16.xpose.msra.mxu0 %v4693
        %4717 = vmatprep.subr.bf16.mxu0 0
        %4718 = vmatpush1.bf16.xpose.msra.mxu0 %v4690
        %4719 = vmatprep.subr.bf16.mxu0 0
        %4720 = vmatpush1.bf16.xpose.msra.mxu0 %v4687
        %4721 = vmatprep.subr.bf16.mxu0 0
        %4722 = vmatpush1.bf16.xpose.msra.mxu0 %v4684
        %4723 = vmatprep.subr.bf16.mxu0 0
        %4724 = vmatpush2.bf16.xpose.msra.mxu0 0
        %4725 = vmatprep.subr.bf16.mxu0 0
        %4726 = vmatpush2.bf16.xpose.msra.mxu0 0
        %4727 = vmatprep.subr.bf16.mxu0 0
        %4728 = vmatpush2.bf16.xpose.msra.mxu0 0
        %4729 = vmatprep.subr.bf16.mxu0 0
        %4730 = vmatpush2.bf16.xpose.msra.mxu0 0
        %4731 = vmatprep.subr.bf16.mxu0 0
        %4732 = vmatpush2.bf16.xpose.msra.mxu0 0
        %4733 = vmatprep.subr.bf16.mxu0 0
        %4734 = vmatpush2.bf16.xpose.msra.mxu0 0
        %4735 = vmatprep.subr.bf16.mxu0 0
        %4736 = vmatpush2.bf16.xpose.msra.mxu0 0
        %4737 = vmatprep.subr.bf16.mxu0 0
        %4738 = vmatpush2.bf16.xpose.msra.mxu0 0
        %4739 = vmatprep.mubr.bf16.mxu0 0
        %4740 = vmatmul.mubr.bf16.gmra.mxu0 %v4660
        %v4741 = vpop.f32.mrf.mxu0
        %v4742 = vadd.f32 %v614, %v4741
        %v4743 = vpop.f32.mrf.mxu0
        %v4744 = vpop.f32.mrf.mxu0
        %v4745 = vadd.f32 %v615, %v4744
        %v4746 = vpop.f32.mrf.mxu0
        %4747 = vmatprep.mubr.bf16.mxu0 0
        %4748 = vmatmul.mubr.bf16.gmra.mxu0 %v4663
        %v4749 = vpop.f32.mrf.mxu0
        %v4750 = vadd.f32 %v616, %v4749
        %v4751 = vpop.f32.mrf.mxu0
        %v4752 = vpop.f32.mrf.mxu0
        %v4753 = vadd.f32 %v617, %v4752
        %v4754 = vpop.f32.mrf.mxu0
        %4755 = vmatprep.mubr.bf16.mxu0 0
        %4756 = vmatmul.mubr.bf16.gmra.mxu0 %v4666
        %v4757 = vpop.f32.mrf.mxu0
        %v4758 = vadd.f32 %v618, %v4757
        %v4759 = vpop.f32.mrf.mxu0
        %v4760 = vpop.f32.mrf.mxu0
        %v4761 = vadd.f32 %v619, %v4760
        %v4762 = vpop.f32.mrf.mxu0
        %4763 = vmatprep.mubr.bf16.mxu0 0
        %4764 = vmatmul.mubr.bf16.gmra.mxu0 %v4669
        %v4765 = vpop.f32.mrf.mxu0
        %v4766 = vadd.f32 %v620, %v4765
        %v4767 = vpop.f32.mrf.mxu0
        %v4768 = vpop.f32.mrf.mxu0
        %v4769 = vadd.f32 %v621, %v4768
        %v4770 = vpop.f32.mrf.mxu0
        %4771 = vmatprep.mubr.bf16.mxu0 0
        %4772 = vmatmul.mubr.bf16.gmra.mxu0 %v4672
        %v4773 = vpop.f32.mrf.mxu0
        %v4774 = vadd.f32 %v622, %v4773
        %v4775 = vpop.f32.mrf.mxu0
        %v4776 = vpop.f32.mrf.mxu0
        %v4777 = vadd.f32 %v623, %v4776
        %v4778 = vpop.f32.mrf.mxu0
        %4779 = vmatprep.mubr.bf16.mxu0 0
        %4780 = vmatmul.mubr.bf16.gmra.mxu0 %v4675
        %v4781 = vpop.f32.mrf.mxu0
        %v4782 = vadd.f32 %v624, %v4781
        %v4783 = vpop.f32.mrf.mxu0
        %v4784 = vpop.f32.mrf.mxu0
        %v4785 = vadd.f32 %v625, %v4784
        %v4786 = vpop.f32.mrf.mxu0
        %4787 = vmatprep.mubr.bf16.mxu0 0
        %4788 = vmatmul.mubr.bf16.gmra.mxu0 %v4678
        %v4789 = vpop.f32.mrf.mxu0
        %v4790 = vadd.f32 %v626, %v4789
        %v4791 = vpop.f32.mrf.mxu0
        %v4792 = vpop.f32.mrf.mxu0
        %v4793 = vadd.f32 %v627, %v4792
        %v4794 = vpop.f32.mrf.mxu0
        %4795 = vmatprep.mubr.bf16.mxu0 0
        %4796 = vmatmul.mubr.bf16.gmra.mxu0 %v4681
        %v4797 = vpop.f32.mrf.mxu0
        %v4798 = vadd.f32 %v628, %v4797
        %v4799 = vpop.f32.mrf.mxu0
        %v4800 = vpop.f32.mrf.mxu0
        %v4801 = vadd.f32 %v629, %v4800
        %v4802 = vpop.f32.mrf.mxu0
        %4803 = vdwg.mxu0
        %4804 = vmax.xlane.f32.xlu0 %v4742
        %v4805 = vpop.xlane.xlu0 %4804
        %4806 = vmax.xlane.f32.xlu0 %v4745
        %v4807 = vpop.xlane.xlu0 %4806
        %4808 = vmax.xlane.f32.xlu0 %v4750
        %v4809 = vpop.xlane.xlu0 %4808
        %4810 = vmax.xlane.f32.xlu0 %v4753
        %v4811 = vpop.xlane.xlu0 %4810
        %4812 = vmax.xlane.f32.xlu0 %v4758
        %v4813 = vpop.xlane.xlu0 %4812
        %4814 = vmax.xlane.f32.xlu0 %v4761
        %v4815 = vpop.xlane.xlu0 %4814
        %4816 = vmax.xlane.f32.xlu0 %v4766
        %v4817 = vpop.xlane.xlu0 %4816
        %4818 = vmax.xlane.f32.xlu0 %v4769
        %v4819 = vpop.xlane.xlu0 %4818
        %4820 = vmax.xlane.f32.xlu0 %v4774
        %v4821 = vpop.xlane.xlu0 %4820
        %4822 = vmax.xlane.f32.xlu0 %v4777
        %v4823 = vpop.xlane.xlu0 %4822
        %4824 = vmax.xlane.f32.xlu0 %v4782
        %v4825 = vpop.xlane.xlu0 %4824
        %4826 = vmax.xlane.f32.xlu0 %v4785
        %v4827 = vpop.xlane.xlu0 %4826
        %4828 = vmax.xlane.f32.xlu0 %v4790
        %v4829 = vpop.xlane.xlu0 %4828
        %4830 = vmax.xlane.f32.xlu0 %v4793
        %v4831 = vpop.xlane.xlu0 %4830
        %4832 = vmax.xlane.f32.xlu0 %v4798
        %v4833 = vpop.xlane.xlu0 %4832
        %4834 = vmax.xlane.f32.xlu0 %v4801
        %v4835 = vpop.xlane.xlu0 %4834
        %v4836 = vsub.f32 %v4742, %v4805
        %v4837 = vsub.f32 %v4745, %v4807
        %v4838 = vsub.f32 %v4750, %v4809
        %v4839 = vsub.f32 %v4753, %v4811
        %v4840 = vsub.f32 %v4758, %v4813
        %v4841 = vsub.f32 %v4761, %v4815
        %v4842 = vsub.f32 %v4766, %v4817
        %v4843 = vsub.f32 %v4769, %v4819
        %v4844 = vsub.f32 %v4774, %v4821
        %v4845 = vsub.f32 %v4777, %v4823
        %v4846 = vsub.f32 %v4782, %v4825
        %v4847 = vsub.f32 %v4785, %v4827
        %v4848 = vsub.f32 %v4790, %v4829
        %v4849 = vsub.f32 %v4793, %v4831
        %v4850 = vsub.f32 %v4798, %v4833
        %v4851 = vsub.f32 %v4801, %v4835
        %v4852 = vmul.f32 %v4836, 1.442695
        %v4853 = vpow.pop %v4852
        %v4854 = vmul.f32 %v4837, 1.442695
        %v4855 = vpow.pop %v4854
        %v4856 = vmul.f32 %v4838, 1.442695
        %v4857 = vpow.pop %v4856
        %v4858 = vmul.f32 %v4839, 1.442695
        %v4859 = vpow.pop %v4858
        %v4860 = vmul.f32 %v4840, 1.442695
        %v4861 = vpow.pop %v4860
        %v4862 = vmul.f32 %v4841, 1.442695
        %v4863 = vpow.pop %v4862
        %v4864 = vmul.f32 %v4842, 1.442695
        %v4865 = vpow.pop %v4864
        %v4866 = vmul.f32 %v4843, 1.442695
        %v4867 = vpow.pop %v4866
        %v4868 = vmul.f32 %v4844, 1.442695
        %v4869 = vpow.pop %v4868
        %v4870 = vmul.f32 %v4845, 1.442695
        %v4871 = vpow.pop %v4870
        %v4872 = vmul.f32 %v4846, 1.442695
        %v4873 = vpow.pop %v4872
        %v4874 = vmul.f32 %v4847, 1.442695
        %v4875 = vpow.pop %v4874
        %v4876 = vmul.f32 %v4848, 1.442695
        %v4877 = vpow.pop %v4876
        %v4878 = vmul.f32 %v4849, 1.442695
        %v4879 = vpow.pop %v4878
        %v4880 = vmul.f32 %v4850, 1.442695
        %v4881 = vpow.pop %v4880
        %v4882 = vmul.f32 %v4851, 1.442695
        %v4883 = vpow.pop %v4882
        %4884 = vadd.xlane.f32.xlu0 %v4853
        %v4885 = vpop.xlane.xlu0 %4884
        %4886 = vadd.xlane.f32.xlu0 %v4855
        %v4887 = vpop.xlane.xlu0 %4886
        %4888 = vadd.xlane.f32.xlu0 %v4857
        %v4889 = vpop.xlane.xlu0 %4888
        %4890 = vadd.xlane.f32.xlu0 %v4859
        %v4891 = vpop.xlane.xlu0 %4890
        %4892 = vadd.xlane.f32.xlu0 %v4861
        %v4893 = vpop.xlane.xlu0 %4892
        %4894 = vadd.xlane.f32.xlu0 %v4863
        %v4895 = vpop.xlane.xlu0 %4894
        %4896 = vadd.xlane.f32.xlu0 %v4865
        %v4897 = vpop.xlane.xlu0 %4896
        %4898 = vadd.xlane.f32.xlu0 %v4867
        %v4899 = vpop.xlane.xlu0 %4898
        %4900 = vadd.xlane.f32.xlu0 %v4869
        %v4901 = vpop.xlane.xlu0 %4900
        %4902 = vadd.xlane.f32.xlu0 %v4871
        %v4903 = vpop.xlane.xlu0 %4902
        %4904 = vadd.xlane.f32.xlu0 %v4873
        %v4905 = vpop.xlane.xlu0 %4904
        %4906 = vadd.xlane.f32.xlu0 %v4875
        %v4907 = vpop.xlane.xlu0 %4906
        %4908 = vadd.xlane.f32.xlu0 %v4877
        %v4909 = vpop.xlane.xlu0 %4908
        %4910 = vadd.xlane.f32.xlu0 %v4879
        %v4911 = vpop.xlane.xlu0 %4910
        %4912 = vadd.xlane.f32.xlu0 %v4881
        %v4913 = vpop.xlane.xlu0 %4912
        %4914 = vadd.xlane.f32.xlu0 %v4883
        %v4915 = vpop.xlane.xlu0 %4914
        %v4916 = vrcp.pop %v4885
        %v4917 = vrcp.pop %v4887
        %v4918 = vrcp.pop %v4889
        %v4919 = vrcp.pop %v4891
        %v4920 = vrcp.pop %v4893
        %v4921 = vrcp.pop %v4895
        %v4922 = vrcp.pop %v4897
        %v4923 = vrcp.pop %v4899
        %v4924 = vrcp.pop %v4901
        %v4925 = vrcp.pop %v4903
        %v4926 = vrcp.pop %v4905
        %v4927 = vrcp.pop %v4907
        %v4928 = vrcp.pop %v4909
        %v4929 = vrcp.pop %v4911
        %v4930 = vrcp.pop %v4913
        %v4931 = vrcp.pop %v4915
        %v4932 = vmul.f32 %v4853, %v4916
        %v4933 = vmul.f32 %v4855, %v4917
        %v4934 = vmul.f32 %v4857, %v4918
        %v4935 = vmul.f32 %v4859, %v4919
        %v4936 = vmul.f32 %v4861, %v4920
        %v4937 = vmul.f32 %v4863, %v4921
        %v4938 = vmul.f32 %v4865, %v4922
        %v4939 = vmul.f32 %v4867, %v4923
        %v4940 = vmul.f32 %v4869, %v4924
        %v4941 = vmul.f32 %v4871, %v4925
        %v4942 = vmul.f32 %v4873, %v4926
        %v4943 = vmul.f32 %v4875, %v4927
        %v4944 = vmul.f32 %v4877, %v4928
        %v4945 = vmul.f32 %v4879, %v4929
        %v4946 = vmul.f32 %v4881, %v4930
        %v4947 = vmul.f32 %v4883, %v4931
        %v4948 = vpack.c.bf16 %v4933, %v4932
        %v4949 = vpack.c.bf16 %v4935, %v4934
        %v4950 = vpack.c.bf16 %v4937, %v4936
        %v4951 = vpack.c.bf16 %v4939, %v4938
        %v4952 = vpack.c.bf16 %v4941, %v4940
        %v4953 = vpack.c.bf16 %v4943, %v4942
        %v4954 = vpack.c.bf16 %v4945, %v4944
        %v4955 = vpack.c.bf16 %v4947, %v4946
        %4956 = vrot.lane.b32.xlu0 %v4177, 56
        %v4957 = vpop.permute.xlu0 %4956
        %4958 = vrot.lane.b32.xlu0 %v4178, 56
        %v4959 = vpop.permute.xlu0 %4958
        %4960 = vrot.lane.b32.xlu0 %v4179, 56
        %v4961 = vpop.permute.xlu0 %4960
        %4962 = vrot.lane.b32.xlu0 %v4180, 56
        %v4963 = vpop.permute.xlu0 %4962
        %4964 = vrot.lane.b32.xlu0 %v4181, 56
        %v4965 = vpop.permute.xlu0 %4964
        %4966 = vrot.lane.b32.xlu0 %v4182, 56
        %v4967 = vpop.permute.xlu0 %4966
        %4968 = vrot.lane.b32.xlu0 %v4183, 56
        %v4969 = vpop.permute.xlu0 %4968
        %4970 = vrot.lane.b32.xlu0 %v4184, 56
        %v4971 = vpop.permute.xlu0 %4970
        %4980 = vmatprep.subr.bf16.mxu0 0
        %4981 = vmatpush1.bf16.msra.mxu0 %v4971
        %4982 = vmatprep.subr.bf16.mxu0 0
        %4983 = vmatpush1.bf16.msra.mxu0 %v4969
        %4984 = vmatprep.subr.bf16.mxu0 0
        %4985 = vmatpush1.bf16.msra.mxu0 %v4967
        %4986 = vmatprep.subr.bf16.mxu0 0
        %4987 = vmatpush1.bf16.msra.mxu0 %v4965
        %4988 = vmatprep.subr.bf16.mxu0 0
        %4989 = vmatpush1.bf16.msra.mxu0 %v4963
        %4990 = vmatprep.subr.bf16.mxu0 0
        %4991 = vmatpush1.bf16.msra.mxu0 %v4961
        %4992 = vmatprep.subr.bf16.mxu0 0
        %4993 = vmatpush1.bf16.msra.mxu0 %v4959
        %4994 = vmatprep.subr.bf16.mxu0 0
        %4995 = vmatpush1.bf16.msra.mxu0 %v4957
        %4996 = vmatprep.subr.bf16.mxu0 0
        %4997 = vmatpush2.bf16.msra.mxu0 0
        %4998 = vmatprep.subr.bf16.mxu0 0
        %4999 = vmatpush2.bf16.msra.mxu0 0
        %5000 = vmatprep.subr.bf16.mxu0 0
        %5001 = vmatpush2.bf16.msra.mxu0 0
        %5002 = vmatprep.subr.bf16.mxu0 0
        %5003 = vmatpush2.bf16.msra.mxu0 0
        %5004 = vmatprep.subr.bf16.mxu0 0
        %5005 = vmatpush2.bf16.msra.mxu0 0
        %5006 = vmatprep.subr.bf16.mxu0 0
        %5007 = vmatpush2.bf16.msra.mxu0 0
        %5008 = vmatprep.subr.bf16.mxu0 0
        %5009 = vmatpush2.bf16.msra.mxu0 0
        %5010 = vmatprep.subr.bf16.mxu0 0
        %5011 = vmatpush2.bf16.msra.mxu0 0
        %5012 = vmatprep.mubr.bf16.mxu0 0
        %5013 = vmatmul.mubr.bf16.gmra.mxu0 %v4948
        %v5014 = vpop.f32.mrf.mxu0
        %v5015 = vadd.f32 0.0, %v5014
        %v5016 = vpop.f32.mrf.mxu0
        %v5017 = vpop.f32.mrf.mxu0
        %v5018 = vadd.f32 0.0, %v5017
        %v5019 = vpop.f32.mrf.mxu0
        %5020 = vmatprep.mubr.bf16.mxu0 0
        %5021 = vmatmul.mubr.bf16.gmra.mxu0 %v4949
        %v5022 = vpop.f32.mrf.mxu0
        %v5023 = vadd.f32 0.0, %v5022
        %v5024 = vpop.f32.mrf.mxu0
        %v5025 = vpop.f32.mrf.mxu0
        %v5026 = vadd.f32 0.0, %v5025
        %v5027 = vpop.f32.mrf.mxu0
        %5028 = vmatprep.mubr.bf16.mxu0 0
        %5029 = vmatmul.mubr.bf16.gmra.mxu0 %v4950
        %v5030 = vpop.f32.mrf.mxu0
        %v5031 = vadd.f32 0.0, %v5030
        %v5032 = vpop.f32.mrf.mxu0
        %v5033 = vpop.f32.mrf.mxu0
        %v5034 = vadd.f32 0.0, %v5033
        %v5035 = vpop.f32.mrf.mxu0
        %5036 = vmatprep.mubr.bf16.mxu0 0
        %5037 = vmatmul.mubr.bf16.gmra.mxu0 %v4951
        %v5038 = vpop.f32.mrf.mxu0
        %v5039 = vadd.f32 0.0, %v5038
        %v5040 = vpop.f32.mrf.mxu0
        %v5041 = vpop.f32.mrf.mxu0
        %v5042 = vadd.f32 0.0, %v5041
        %v5043 = vpop.f32.mrf.mxu0
        %5044 = vmatprep.mubr.bf16.mxu0 0
        %5045 = vmatmul.mubr.bf16.gmra.mxu0 %v4952
        %v5046 = vpop.f32.mrf.mxu0
        %v5047 = vadd.f32 0.0, %v5046
        %v5048 = vpop.f32.mrf.mxu0
        %v5049 = vpop.f32.mrf.mxu0
        %v5050 = vadd.f32 0.0, %v5049
        %v5051 = vpop.f32.mrf.mxu0
        %5052 = vmatprep.mubr.bf16.mxu0 0
        %5053 = vmatmul.mubr.bf16.gmra.mxu0 %v4953
        %v5054 = vpop.f32.mrf.mxu0
        %v5055 = vadd.f32 0.0, %v5054
        %v5056 = vpop.f32.mrf.mxu0
        %v5057 = vpop.f32.mrf.mxu0
        %v5058 = vadd.f32 0.0, %v5057
        %v5059 = vpop.f32.mrf.mxu0
        %5060 = vmatprep.mubr.bf16.mxu0 0
        %5061 = vmatmul.mubr.bf16.gmra.mxu0 %v4954
        %v5062 = vpop.f32.mrf.mxu0
        %v5063 = vadd.f32 0.0, %v5062
        %v5064 = vpop.f32.mrf.mxu0
        %v5065 = vpop.f32.mrf.mxu0
        %v5066 = vadd.f32 0.0, %v5065
        %v5067 = vpop.f32.mrf.mxu0
        %5068 = vmatprep.mubr.bf16.mxu0 0
        %5069 = vmatmul.mubr.bf16.gmra.mxu0 %v4955
        %v5070 = vpop.f32.mrf.mxu0
        %v5071 = vadd.f32 0.0, %v5070
        %v5072 = vpop.f32.mrf.mxu0
        %v5073 = vpop.f32.mrf.mxu0
        %v5074 = vadd.f32 0.0, %v5073
        %v5075 = vpop.f32.mrf.mxu0
        %5076 = vdwg.mxu0
        %5077 = vrot.lane.b32.xlu0 %v4177, 112
        %v5078 = vpop.permute.xlu0 %5077
        %5079 = vrot.lane.b32.xlu0 %v4178, 112
        %v5080 = vpop.permute.xlu0 %5079
        %5081 = vrot.lane.b32.xlu0 %v4179, 112
        %v5082 = vpop.permute.xlu0 %5081
        %5083 = vrot.lane.b32.xlu0 %v4180, 112
        %v5084 = vpop.permute.xlu0 %5083
        %5085 = vrot.lane.b32.xlu0 %v4181, 112
        %v5086 = vpop.permute.xlu0 %5085
        %5087 = vrot.lane.b32.xlu0 %v4182, 112
        %v5088 = vpop.permute.xlu0 %5087
        %5089 = vrot.lane.b32.xlu0 %v4183, 112
        %v5090 = vpop.permute.xlu0 %5089
        %5091 = vrot.lane.b32.xlu0 %v4184, 112
        %v5092 = vpop.permute.xlu0 %5091
        %5093 = vrot.lane.b32.xlu0 %v4177, 80
        %v5094 = vpop.permute.xlu0 %5093
        %5095 = vrot.lane.b32.xlu0 %v4178, 80
        %v5096 = vpop.permute.xlu0 %5095
        %5097 = vrot.lane.b32.xlu0 %v4179, 80
        %v5098 = vpop.permute.xlu0 %5097
        %5099 = vrot.lane.b32.xlu0 %v4180, 80
        %v5100 = vpop.permute.xlu0 %5099
        %5101 = vrot.lane.b32.xlu0 %v4181, 80
        %v5102 = vpop.permute.xlu0 %5101
        %5103 = vrot.lane.b32.xlu0 %v4182, 80
        %v5104 = vpop.permute.xlu0 %5103
        %5105 = vrot.lane.b32.xlu0 %v4183, 80
        %v5106 = vpop.permute.xlu0 %5105
        %5107 = vrot.lane.b32.xlu0 %v4184, 80
        %v5108 = vpop.permute.xlu0 %5107
        %v5110 = vsel %vm982, %v5078, 0
        %v5113 = vsel %vm982, %v5080, 0
        %v5116 = vsel %vm982, %v5082, 0
        %v5119 = vsel %vm982, %v5084, 0
        %v5122 = vsel %vm982, %v5086, 0
        %v5125 = vsel %vm982, %v5088, 0
        %v5128 = vsel %vm982, %v5090, 0
        %v5131 = vsel %vm982, %v5092, 0
        %v5134 = vsel %vm982, %v5094, 0
        %v5137 = vsel %vm982, %v5096, 0
        %v5140 = vsel %vm982, %v5098, 0
        %v5143 = vsel %vm982, %v5100, 0
        %v5146 = vsel %vm982, %v5102, 0
        %v5149 = vsel %vm982, %v5104, 0
        %v5152 = vsel %vm982, %v5106, 0
        %v5155 = vsel %vm982, %v5108, 0
        %5157 = vmatprep.subr.bf16.mxu0 0
        %5158 = vmatpush1.bf16.xpose.msra.mxu0 %v5155
        %5159 = vmatprep.subr.bf16.mxu0 0
        %5160 = vmatpush1.bf16.xpose.msra.mxu0 %v5152
        %5161 = vmatprep.subr.bf16.mxu0 0
        %5162 = vmatpush1.bf16.xpose.msra.mxu0 %v5149
        %5163 = vmatprep.subr.bf16.mxu0 0
        %5164 = vmatpush1.bf16.xpose.msra.mxu0 %v5146
        %5165 = vmatprep.subr.bf16.mxu0 0
        %5166 = vmatpush1.bf16.xpose.msra.mxu0 %v5143
        %5167 = vmatprep.subr.bf16.mxu0 0
        %5168 = vmatpush1.bf16.xpose.msra.mxu0 %v5140
        %5169 = vmatprep.subr.bf16.mxu0 0
        %5170 = vmatpush1.bf16.xpose.msra.mxu0 %v5137
        %5171 = vmatprep.subr.bf16.mxu0 0
        %5172 = vmatpush1.bf16.xpose.msra.mxu0 %v5134
        %5173 = vmatprep.subr.bf16.mxu0 0
        %5174 = vmatpush2.bf16.xpose.msra.mxu0 0
        %5175 = vmatprep.subr.bf16.mxu0 0
        %5176 = vmatpush2.bf16.xpose.msra.mxu0 0
        %5177 = vmatprep.subr.bf16.mxu0 0
        %5178 = vmatpush2.bf16.xpose.msra.mxu0 0
        %5179 = vmatprep.subr.bf16.mxu0 0
        %5180 = vmatpush2.bf16.xpose.msra.mxu0 0
        %5181 = vmatprep.subr.bf16.mxu0 0
        %5182 = vmatpush2.bf16.xpose.msra.mxu0 0
        %5183 = vmatprep.subr.bf16.mxu0 0
        %5184 = vmatpush2.bf16.xpose.msra.mxu0 0
        %5185 = vmatprep.subr.bf16.mxu0 0
        %5186 = vmatpush2.bf16.xpose.msra.mxu0 0
        %5187 = vmatprep.subr.bf16.mxu0 0
        %5188 = vmatpush2.bf16.xpose.msra.mxu0 0
        %5189 = vmatprep.mubr.bf16.mxu0 0
        %5190 = vmatmul.mubr.bf16.gmra.mxu0 %v5110
        %v5191 = vpop.f32.mrf.mxu0
        %v5192 = vadd.f32 %v614, %v5191
        %v5193 = vpop.f32.mrf.mxu0
        %v5194 = vpop.f32.mrf.mxu0
        %v5195 = vadd.f32 %v615, %v5194
        %v5196 = vpop.f32.mrf.mxu0
        %5197 = vmatprep.mubr.bf16.mxu0 0
        %5198 = vmatmul.mubr.bf16.gmra.mxu0 %v5113
        %v5199 = vpop.f32.mrf.mxu0
        %v5200 = vadd.f32 %v616, %v5199
        %v5201 = vpop.f32.mrf.mxu0
        %v5202 = vpop.f32.mrf.mxu0
        %v5203 = vadd.f32 %v617, %v5202
        %v5204 = vpop.f32.mrf.mxu0
        %5205 = vmatprep.mubr.bf16.mxu0 0
        %5206 = vmatmul.mubr.bf16.gmra.mxu0 %v5116
        %v5207 = vpop.f32.mrf.mxu0
        %v5208 = vadd.f32 %v618, %v5207
        %v5209 = vpop.f32.mrf.mxu0
        %v5210 = vpop.f32.mrf.mxu0
        %v5211 = vadd.f32 %v619, %v5210
        %v5212 = vpop.f32.mrf.mxu0
        %5213 = vmatprep.mubr.bf16.mxu0 0
        %5214 = vmatmul.mubr.bf16.gmra.mxu0 %v5119
        %v5215 = vpop.f32.mrf.mxu0
        %v5216 = vadd.f32 %v620, %v5215
        %v5217 = vpop.f32.mrf.mxu0
        %v5218 = vpop.f32.mrf.mxu0
        %v5219 = vadd.f32 %v621, %v5218
        %v5220 = vpop.f32.mrf.mxu0
        %5221 = vmatprep.mubr.bf16.mxu0 0
        %5222 = vmatmul.mubr.bf16.gmra.mxu0 %v5122
        %v5223 = vpop.f32.mrf.mxu0
        %v5224 = vadd.f32 %v622, %v5223
        %v5225 = vpop.f32.mrf.mxu0
        %v5226 = vpop.f32.mrf.mxu0
        %v5227 = vadd.f32 %v623, %v5226
        %v5228 = vpop.f32.mrf.mxu0
        %5229 = vmatprep.mubr.bf16.mxu0 0
        %5230 = vmatmul.mubr.bf16.gmra.mxu0 %v5125
        %v5231 = vpop.f32.mrf.mxu0
        %v5232 = vadd.f32 %v624, %v5231
        %v5233 = vpop.f32.mrf.mxu0
        %v5234 = vpop.f32.mrf.mxu0
        %v5235 = vadd.f32 %v625, %v5234
        %v5236 = vpop.f32.mrf.mxu0
        %5237 = vmatprep.mubr.bf16.mxu0 0
        %5238 = vmatmul.mubr.bf16.gmra.mxu0 %v5128
        %v5239 = vpop.f32.mrf.mxu0
        %v5240 = vadd.f32 %v626, %v5239
        %v5241 = vpop.f32.mrf.mxu0
        %v5242 = vpop.f32.mrf.mxu0
        %v5243 = vadd.f32 %v627, %v5242
        %v5244 = vpop.f32.mrf.mxu0
        %5245 = vmatprep.mubr.bf16.mxu0 0
        %5246 = vmatmul.mubr.bf16.gmra.mxu0 %v5131
        %v5247 = vpop.f32.mrf.mxu0
        %v5248 = vadd.f32 %v628, %v5247
        %v5249 = vpop.f32.mrf.mxu0
        %v5250 = vpop.f32.mrf.mxu0
        %v5251 = vadd.f32 %v629, %v5250
        %v5252 = vpop.f32.mrf.mxu0
        %5253 = vdwg.mxu0
        %5254 = vmax.xlane.f32.xlu0 %v5192
        %v5255 = vpop.xlane.xlu0 %5254
        %5256 = vmax.xlane.f32.xlu0 %v5195
        %v5257 = vpop.xlane.xlu0 %5256
        %5258 = vmax.xlane.f32.xlu0 %v5200
        %v5259 = vpop.xlane.xlu0 %5258
        %5260 = vmax.xlane.f32.xlu0 %v5203
        %v5261 = vpop.xlane.xlu0 %5260
        %5262 = vmax.xlane.f32.xlu0 %v5208
        %v5263 = vpop.xlane.xlu0 %5262
        %5264 = vmax.xlane.f32.xlu0 %v5211
        %v5265 = vpop.xlane.xlu0 %5264
        %5266 = vmax.xlane.f32.xlu0 %v5216
        %v5267 = vpop.xlane.xlu0 %5266
        %5268 = vmax.xlane.f32.xlu0 %v5219
        %v5269 = vpop.xlane.xlu0 %5268
        %5270 = vmax.xlane.f32.xlu0 %v5224
        %v5271 = vpop.xlane.xlu0 %5270
        %5272 = vmax.xlane.f32.xlu0 %v5227
        %v5273 = vpop.xlane.xlu0 %5272
        %5274 = vmax.xlane.f32.xlu0 %v5232
        %v5275 = vpop.xlane.xlu0 %5274
        %5276 = vmax.xlane.f32.xlu0 %v5235
        %v5277 = vpop.xlane.xlu0 %5276
        %5278 = vmax.xlane.f32.xlu0 %v5240
        %v5279 = vpop.xlane.xlu0 %5278
        %5280 = vmax.xlane.f32.xlu0 %v5243
        %v5281 = vpop.xlane.xlu0 %5280
        %5282 = vmax.xlane.f32.xlu0 %v5248
        %v5283 = vpop.xlane.xlu0 %5282
        %5284 = vmax.xlane.f32.xlu0 %v5251
        %v5285 = vpop.xlane.xlu0 %5284
        %v5286 = vsub.f32 %v5192, %v5255
        %v5287 = vsub.f32 %v5195, %v5257
        %v5288 = vsub.f32 %v5200, %v5259
        %v5289 = vsub.f32 %v5203, %v5261
        %v5290 = vsub.f32 %v5208, %v5263
        %v5291 = vsub.f32 %v5211, %v5265
        %v5292 = vsub.f32 %v5216, %v5267
        %v5293 = vsub.f32 %v5219, %v5269
        %v5294 = vsub.f32 %v5224, %v5271
        %v5295 = vsub.f32 %v5227, %v5273
        %v5296 = vsub.f32 %v5232, %v5275
        %v5297 = vsub.f32 %v5235, %v5277
        %v5298 = vsub.f32 %v5240, %v5279
        %v5299 = vsub.f32 %v5243, %v5281
        %v5300 = vsub.f32 %v5248, %v5283
        %v5301 = vsub.f32 %v5251, %v5285
        %v5302 = vmul.f32 %v5286, 1.442695
        %v5303 = vpow.pop %v5302
        %v5304 = vmul.f32 %v5287, 1.442695
        %v5305 = vpow.pop %v5304
        %v5306 = vmul.f32 %v5288, 1.442695
        %v5307 = vpow.pop %v5306
        %v5308 = vmul.f32 %v5289, 1.442695
        %v5309 = vpow.pop %v5308
        %v5310 = vmul.f32 %v5290, 1.442695
        %v5311 = vpow.pop %v5310
        %v5312 = vmul.f32 %v5291, 1.442695
        %v5313 = vpow.pop %v5312
        %v5314 = vmul.f32 %v5292, 1.442695
        %v5315 = vpow.pop %v5314
        %v5316 = vmul.f32 %v5293, 1.442695
        %v5317 = vpow.pop %v5316
        %v5318 = vmul.f32 %v5294, 1.442695
        %v5319 = vpow.pop %v5318
        %v5320 = vmul.f32 %v5295, 1.442695
        %v5321 = vpow.pop %v5320
        %v5322 = vmul.f32 %v5296, 1.442695
        %v5323 = vpow.pop %v5322
        %v5324 = vmul.f32 %v5297, 1.442695
        %v5325 = vpow.pop %v5324
        %v5326 = vmul.f32 %v5298, 1.442695
        %v5327 = vpow.pop %v5326
        %v5328 = vmul.f32 %v5299, 1.442695
        %v5329 = vpow.pop %v5328
        %v5330 = vmul.f32 %v5300, 1.442695
        %v5331 = vpow.pop %v5330
        %v5332 = vmul.f32 %v5301, 1.442695
        %v5333 = vpow.pop %v5332
        %5334 = vadd.xlane.f32.xlu0 %v5303
        %v5335 = vpop.xlane.xlu0 %5334
        %5336 = vadd.xlane.f32.xlu0 %v5305
        %v5337 = vpop.xlane.xlu0 %5336
        %5338 = vadd.xlane.f32.xlu0 %v5307
        %v5339 = vpop.xlane.xlu0 %5338
        %5340 = vadd.xlane.f32.xlu0 %v5309
        %v5341 = vpop.xlane.xlu0 %5340
        %5342 = vadd.xlane.f32.xlu0 %v5311
        %v5343 = vpop.xlane.xlu0 %5342
        %5344 = vadd.xlane.f32.xlu0 %v5313
        %v5345 = vpop.xlane.xlu0 %5344
        %5346 = vadd.xlane.f32.xlu0 %v5315
        %v5347 = vpop.xlane.xlu0 %5346
        %5348 = vadd.xlane.f32.xlu0 %v5317
        %v5349 = vpop.xlane.xlu0 %5348
        %5350 = vadd.xlane.f32.xlu0 %v5319
        %v5351 = vpop.xlane.xlu0 %5350
        %5352 = vadd.xlane.f32.xlu0 %v5321
        %v5353 = vpop.xlane.xlu0 %5352
        %5354 = vadd.xlane.f32.xlu0 %v5323
        %v5355 = vpop.xlane.xlu0 %5354
        %5356 = vadd.xlane.f32.xlu0 %v5325
        %v5357 = vpop.xlane.xlu0 %5356
        %5358 = vadd.xlane.f32.xlu0 %v5327
        %v5359 = vpop.xlane.xlu0 %5358
        %5360 = vadd.xlane.f32.xlu0 %v5329
        %v5361 = vpop.xlane.xlu0 %5360
        %5362 = vadd.xlane.f32.xlu0 %v5331
        %v5363 = vpop.xlane.xlu0 %5362
        %5364 = vadd.xlane.f32.xlu0 %v5333
        %v5365 = vpop.xlane.xlu0 %5364
        %v5366 = vrcp.pop %v5335
        %v5367 = vrcp.pop %v5337
        %v5368 = vrcp.pop %v5339
        %v5369 = vrcp.pop %v5341
        %v5370 = vrcp.pop %v5343
        %v5371 = vrcp.pop %v5345
        %v5372 = vrcp.pop %v5347
        %v5373 = vrcp.pop %v5349
        %v5374 = vrcp.pop %v5351
        %v5375 = vrcp.pop %v5353
        %v5376 = vrcp.pop %v5355
        %v5377 = vrcp.pop %v5357
        %v5378 = vrcp.pop %v5359
        %v5379 = vrcp.pop %v5361
        %v5380 = vrcp.pop %v5363
        %v5381 = vrcp.pop %v5365
        %v5382 = vmul.f32 %v5303, %v5366
        %v5383 = vmul.f32 %v5305, %v5367
        %v5384 = vmul.f32 %v5307, %v5368
        %v5385 = vmul.f32 %v5309, %v5369
        %v5386 = vmul.f32 %v5311, %v5370
        %v5387 = vmul.f32 %v5313, %v5371
        %v5388 = vmul.f32 %v5315, %v5372
        %v5389 = vmul.f32 %v5317, %v5373
        %v5390 = vmul.f32 %v5319, %v5374
        %v5391 = vmul.f32 %v5321, %v5375
        %v5392 = vmul.f32 %v5323, %v5376
        %v5393 = vmul.f32 %v5325, %v5377
        %v5394 = vmul.f32 %v5327, %v5378
        %v5395 = vmul.f32 %v5329, %v5379
        %v5396 = vmul.f32 %v5331, %v5380
        %v5397 = vmul.f32 %v5333, %v5381
        %v5398 = vpack.c.bf16 %v5383, %v5382
        %v5399 = vpack.c.bf16 %v5385, %v5384
        %v5400 = vpack.c.bf16 %v5387, %v5386
        %v5401 = vpack.c.bf16 %v5389, %v5388
        %v5402 = vpack.c.bf16 %v5391, %v5390
        %v5403 = vpack.c.bf16 %v5393, %v5392
        %v5404 = vpack.c.bf16 %v5395, %v5394
        %v5405 = vpack.c.bf16 %v5397, %v5396
        %5406 = vrot.lane.b32.xlu0 %v4177, 48
        %v5407 = vpop.permute.xlu0 %5406
        %5408 = vrot.lane.b32.xlu0 %v4178, 48
        %v5409 = vpop.permute.xlu0 %5408
        %5410 = vrot.lane.b32.xlu0 %v4179, 48
        %v5411 = vpop.permute.xlu0 %5410
        %5412 = vrot.lane.b32.xlu0 %v4180, 48
        %v5413 = vpop.permute.xlu0 %5412
        %5414 = vrot.lane.b32.xlu0 %v4181, 48
        %v5415 = vpop.permute.xlu0 %5414
        %5416 = vrot.lane.b32.xlu0 %v4182, 48
        %v5417 = vpop.permute.xlu0 %5416
        %5418 = vrot.lane.b32.xlu0 %v4183, 48
        %v5419 = vpop.permute.xlu0 %5418
        %5420 = vrot.lane.b32.xlu0 %v4184, 48
        %v5421 = vpop.permute.xlu0 %5420
        %5430 = vmatprep.subr.bf16.mxu0 0
        %5431 = vmatpush1.bf16.msra.mxu0 %v5421
        %5432 = vmatprep.subr.bf16.mxu0 0
        %5433 = vmatpush1.bf16.msra.mxu0 %v5419
        %5434 = vmatprep.subr.bf16.mxu0 0
        %5435 = vmatpush1.bf16.msra.mxu0 %v5417
        %5436 = vmatprep.subr.bf16.mxu0 0
        %5437 = vmatpush1.bf16.msra.mxu0 %v5415
        %5438 = vmatprep.subr.bf16.mxu0 0
        %5439 = vmatpush1.bf16.msra.mxu0 %v5413
        %5440 = vmatprep.subr.bf16.mxu0 0
        %5441 = vmatpush1.bf16.msra.mxu0 %v5411
        %5442 = vmatprep.subr.bf16.mxu0 0
        %5443 = vmatpush1.bf16.msra.mxu0 %v5409
        %5444 = vmatprep.subr.bf16.mxu0 0
        %5445 = vmatpush1.bf16.msra.mxu0 %v5407
        %5446 = vmatprep.subr.bf16.mxu0 0
        %5447 = vmatpush2.bf16.msra.mxu0 0
        %5448 = vmatprep.subr.bf16.mxu0 0
        %5449 = vmatpush2.bf16.msra.mxu0 0
        %5450 = vmatprep.subr.bf16.mxu0 0
        %5451 = vmatpush2.bf16.msra.mxu0 0
        %5452 = vmatprep.subr.bf16.mxu0 0
        %5453 = vmatpush2.bf16.msra.mxu0 0
        %5454 = vmatprep.subr.bf16.mxu0 0
        %5455 = vmatpush2.bf16.msra.mxu0 0
        %5456 = vmatprep.subr.bf16.mxu0 0
        %5457 = vmatpush2.bf16.msra.mxu0 0
        %5458 = vmatprep.subr.bf16.mxu0 0
        %5459 = vmatpush2.bf16.msra.mxu0 0
        %5460 = vmatprep.subr.bf16.mxu0 0
        %5461 = vmatpush2.bf16.msra.mxu0 0
        %5462 = vmatprep.mubr.bf16.mxu0 0
        %5463 = vmatmul.mubr.bf16.gmra.mxu0 %v5398
        %v5464 = vpop.f32.mrf.mxu0
        %v5465 = vadd.f32 0.0, %v5464
        %v5466 = vpop.f32.mrf.mxu0
        %v5467 = vpop.f32.mrf.mxu0
        %v5468 = vadd.f32 0.0, %v5467
        %v5469 = vpop.f32.mrf.mxu0
        %5470 = vmatprep.mubr.bf16.mxu0 0
        %5471 = vmatmul.mubr.bf16.gmra.mxu0 %v5399
        %v5472 = vpop.f32.mrf.mxu0
        %v5473 = vadd.f32 0.0, %v5472
        %v5474 = vpop.f32.mrf.mxu0
        %v5475 = vpop.f32.mrf.mxu0
        %v5476 = vadd.f32 0.0, %v5475
        %v5477 = vpop.f32.mrf.mxu0
        %5478 = vmatprep.mubr.bf16.mxu0 0
        %5479 = vmatmul.mubr.bf16.gmra.mxu0 %v5400
        %v5480 = vpop.f32.mrf.mxu0
        %v5481 = vadd.f32 0.0, %v5480
        %v5482 = vpop.f32.mrf.mxu0
        %v5483 = vpop.f32.mrf.mxu0
        %v5484 = vadd.f32 0.0, %v5483
        %v5485 = vpop.f32.mrf.mxu0
        %5486 = vmatprep.mubr.bf16.mxu0 0
        %5487 = vmatmul.mubr.bf16.gmra.mxu0 %v5401
        %v5488 = vpop.f32.mrf.mxu0
        %v5489 = vadd.f32 0.0, %v5488
        %v5490 = vpop.f32.mrf.mxu0
        %v5491 = vpop.f32.mrf.mxu0
        %v5492 = vadd.f32 0.0, %v5491
        %v5493 = vpop.f32.mrf.mxu0
        %5494 = vmatprep.mubr.bf16.mxu0 0
        %5495 = vmatmul.mubr.bf16.gmra.mxu0 %v5402
        %v5496 = vpop.f32.mrf.mxu0
        %v5497 = vadd.f32 0.0, %v5496
        %v5498 = vpop.f32.mrf.mxu0
        %v5499 = vpop.f32.mrf.mxu0
        %v5500 = vadd.f32 0.0, %v5499
        %v5501 = vpop.f32.mrf.mxu0
        %5502 = vmatprep.mubr.bf16.mxu0 0
        %5503 = vmatmul.mubr.bf16.gmra.mxu0 %v5403
        %v5504 = vpop.f32.mrf.mxu0
        %v5505 = vadd.f32 0.0, %v5504
        %v5506 = vpop.f32.mrf.mxu0
        %v5507 = vpop.f32.mrf.mxu0
        %v5508 = vadd.f32 0.0, %v5507
        %v5509 = vpop.f32.mrf.mxu0
        %5510 = vmatprep.mubr.bf16.mxu0 0
        %5511 = vmatmul.mubr.bf16.gmra.mxu0 %v5404
        %v5512 = vpop.f32.mrf.mxu0
        %v5513 = vadd.f32 0.0, %v5512
        %v5514 = vpop.f32.mrf.mxu0
        %v5515 = vpop.f32.mrf.mxu0
        %v5516 = vadd.f32 0.0, %v5515
        %v5517 = vpop.f32.mrf.mxu0
        %5518 = vmatprep.mubr.bf16.mxu0 0
        %5519 = vmatmul.mubr.bf16.gmra.mxu0 %v5405
        %v5520 = vpop.f32.mrf.mxu0
        %v5521 = vadd.f32 0.0, %v5520
        %v5522 = vpop.f32.mrf.mxu0
        %v5523 = vpop.f32.mrf.mxu0
        %v5524 = vadd.f32 0.0, %v5523
        %v5525 = vpop.f32.mrf.mxu0
        %5526 = vdwg.mxu0
        %5527 = vrot.lane.b32.xlu0 %v4177, 104
        %v5528 = vpop.permute.xlu0 %5527
        %5529 = vrot.lane.b32.xlu0 %v4178, 104
        %v5530 = vpop.permute.xlu0 %5529
        %5531 = vrot.lane.b32.xlu0 %v4179, 104
        %v5532 = vpop.permute.xlu0 %5531
        %5533 = vrot.lane.b32.xlu0 %v4180, 104
        %v5534 = vpop.permute.xlu0 %5533
        %5535 = vrot.lane.b32.xlu0 %v4181, 104
        %v5536 = vpop.permute.xlu0 %5535
        %5537 = vrot.lane.b32.xlu0 %v4182, 104
        %v5538 = vpop.permute.xlu0 %5537
        %5539 = vrot.lane.b32.xlu0 %v4183, 104
        %v5540 = vpop.permute.xlu0 %5539
        %5541 = vrot.lane.b32.xlu0 %v4184, 104
        %v5542 = vpop.permute.xlu0 %5541
        %5543 = vrot.lane.b32.xlu0 %v4177, 72
        %v5544 = vpop.permute.xlu0 %5543
        %5545 = vrot.lane.b32.xlu0 %v4178, 72
        %v5546 = vpop.permute.xlu0 %5545
        %5547 = vrot.lane.b32.xlu0 %v4179, 72
        %v5548 = vpop.permute.xlu0 %5547
        %5549 = vrot.lane.b32.xlu0 %v4180, 72
        %v5550 = vpop.permute.xlu0 %5549
        %5551 = vrot.lane.b32.xlu0 %v4181, 72
        %v5552 = vpop.permute.xlu0 %5551
        %5553 = vrot.lane.b32.xlu0 %v4182, 72
        %v5554 = vpop.permute.xlu0 %5553
        %5555 = vrot.lane.b32.xlu0 %v4183, 72
        %v5556 = vpop.permute.xlu0 %5555
        %5557 = vrot.lane.b32.xlu0 %v4184, 72
        %v5558 = vpop.permute.xlu0 %5557
        %v5560 = vsel %vm982, %v5528, 0
        %v5563 = vsel %vm982, %v5530, 0
        %v5566 = vsel %vm982, %v5532, 0
        %v5569 = vsel %vm982, %v5534, 0
        %v5572 = vsel %vm982, %v5536, 0
        %v5575 = vsel %vm982, %v5538, 0
        %v5578 = vsel %vm982, %v5540, 0
        %v5581 = vsel %vm982, %v5542, 0
        %v5584 = vsel %vm982, %v5544, 0
        %v5587 = vsel %vm982, %v5546, 0
        %v5590 = vsel %vm982, %v5548, 0
        %v5593 = vsel %vm982, %v5550, 0
        %v5596 = vsel %vm982, %v5552, 0
        %v5599 = vsel %vm982, %v5554, 0
        %v5602 = vsel %vm982, %v5556, 0
        %v5605 = vsel %vm982, %v5558, 0
        %5607 = vmatprep.subr.bf16.mxu0 0
        %5608 = vmatpush1.bf16.xpose.msra.mxu0 %v5605
        %5609 = vmatprep.subr.bf16.mxu0 0
        %5610 = vmatpush1.bf16.xpose.msra.mxu0 %v5602
        %5611 = vmatprep.subr.bf16.mxu0 0
        %5612 = vmatpush1.bf16.xpose.msra.mxu0 %v5599
        %5613 = vmatprep.subr.bf16.mxu0 0
        %5614 = vmatpush1.bf16.xpose.msra.mxu0 %v5596
        %5615 = vmatprep.subr.bf16.mxu0 0
        %5616 = vmatpush1.bf16.xpose.msra.mxu0 %v5593
        %5617 = vmatprep.subr.bf16.mxu0 0
        %5618 = vmatpush1.bf16.xpose.msra.mxu0 %v5590
        %5619 = vmatprep.subr.bf16.mxu0 0
        %5620 = vmatpush1.bf16.xpose.msra.mxu0 %v5587
        %5621 = vmatprep.subr.bf16.mxu0 0
        %5622 = vmatpush1.bf16.xpose.msra.mxu0 %v5584
        %5623 = vmatprep.subr.bf16.mxu0 0
        %5624 = vmatpush2.bf16.xpose.msra.mxu0 0
        %5625 = vmatprep.subr.bf16.mxu0 0
        %5626 = vmatpush2.bf16.xpose.msra.mxu0 0
        %5627 = vmatprep.subr.bf16.mxu0 0
        %5628 = vmatpush2.bf16.xpose.msra.mxu0 0
        %5629 = vmatprep.subr.bf16.mxu0 0
        %5630 = vmatpush2.bf16.xpose.msra.mxu0 0
        %5631 = vmatprep.subr.bf16.mxu0 0
        %5632 = vmatpush2.bf16.xpose.msra.mxu0 0
        %5633 = vmatprep.subr.bf16.mxu0 0
        %5634 = vmatpush2.bf16.xpose.msra.mxu0 0
        %5635 = vmatprep.subr.bf16.mxu0 0
        %5636 = vmatpush2.bf16.xpose.msra.mxu0 0
        %5637 = vmatprep.subr.bf16.mxu0 0
        %5638 = vmatpush2.bf16.xpose.msra.mxu0 0
        %5639 = vmatprep.mubr.bf16.mxu0 0
        %5640 = vmatmul.mubr.bf16.gmra.mxu0 %v5560
        %v5641 = vpop.f32.mrf.mxu0
        %v5642 = vadd.f32 %v614, %v5641
        %v5643 = vpop.f32.mrf.mxu0
        %v5644 = vpop.f32.mrf.mxu0
        %v5645 = vadd.f32 %v615, %v5644
        %v5646 = vpop.f32.mrf.mxu0
        %5647 = vmatprep.mubr.bf16.mxu0 0
        %5648 = vmatmul.mubr.bf16.gmra.mxu0 %v5563
        %v5649 = vpop.f32.mrf.mxu0
        %v5650 = vadd.f32 %v616, %v5649
        %v5651 = vpop.f32.mrf.mxu0
        %v5652 = vpop.f32.mrf.mxu0
        %v5653 = vadd.f32 %v617, %v5652
        %v5654 = vpop.f32.mrf.mxu0
        %5655 = vmatprep.mubr.bf16.mxu0 0
        %5656 = vmatmul.mubr.bf16.gmra.mxu0 %v5566
        %v5657 = vpop.f32.mrf.mxu0
        %v5658 = vadd.f32 %v618, %v5657
        %v5659 = vpop.f32.mrf.mxu0
        %v5660 = vpop.f32.mrf.mxu0
        %v5661 = vadd.f32 %v619, %v5660
        %v5662 = vpop.f32.mrf.mxu0
        %5663 = vmatprep.mubr.bf16.mxu0 0
        %5664 = vmatmul.mubr.bf16.gmra.mxu0 %v5569
        %v5665 = vpop.f32.mrf.mxu0
        %v5666 = vadd.f32 %v620, %v5665
        %v5667 = vpop.f32.mrf.mxu0
        %v5668 = vpop.f32.mrf.mxu0
        %v5669 = vadd.f32 %v621, %v5668
        %v5670 = vpop.f32.mrf.mxu0
        %5671 = vmatprep.mubr.bf16.mxu0 0
        %5672 = vmatmul.mubr.bf16.gmra.mxu0 %v5572
        %v5673 = vpop.f32.mrf.mxu0
        %v5674 = vadd.f32 %v622, %v5673
        %v5675 = vpop.f32.mrf.mxu0
        %v5676 = vpop.f32.mrf.mxu0
        %v5677 = vadd.f32 %v623, %v5676
        %v5678 = vpop.f32.mrf.mxu0
        %5679 = vmatprep.mubr.bf16.mxu0 0
        %5680 = vmatmul.mubr.bf16.gmra.mxu0 %v5575
        %v5681 = vpop.f32.mrf.mxu0
        %v5682 = vadd.f32 %v624, %v5681
        %v5683 = vpop.f32.mrf.mxu0
        %v5684 = vpop.f32.mrf.mxu0
        %v5685 = vadd.f32 %v625, %v5684
        %v5686 = vpop.f32.mrf.mxu0
        %5687 = vmatprep.mubr.bf16.mxu0 0
        %5688 = vmatmul.mubr.bf16.gmra.mxu0 %v5578
        %v5689 = vpop.f32.mrf.mxu0
        %v5690 = vadd.f32 %v626, %v5689
        %v5691 = vpop.f32.mrf.mxu0
        %v5692 = vpop.f32.mrf.mxu0
        %v5693 = vadd.f32 %v627, %v5692
        %v5694 = vpop.f32.mrf.mxu0
        %5695 = vmatprep.mubr.bf16.mxu0 0
        %5696 = vmatmul.mubr.bf16.gmra.mxu0 %v5581
        %v5697 = vpop.f32.mrf.mxu0
        %v5698 = vadd.f32 %v628, %v5697
        %v5699 = vpop.f32.mrf.mxu0
        %v5700 = vpop.f32.mrf.mxu0
        %v5701 = vadd.f32 %v629, %v5700
        %v5702 = vpop.f32.mrf.mxu0
        %5703 = vdwg.mxu0
        %5704 = vmax.xlane.f32.xlu0 %v5642
        %v5705 = vpop.xlane.xlu0 %5704
        %5706 = vmax.xlane.f32.xlu0 %v5645
        %v5707 = vpop.xlane.xlu0 %5706
        %5708 = vmax.xlane.f32.xlu0 %v5650
        %v5709 = vpop.xlane.xlu0 %5708
        %5710 = vmax.xlane.f32.xlu0 %v5653
        %v5711 = vpop.xlane.xlu0 %5710
        %5712 = vmax.xlane.f32.xlu0 %v5658
        %v5713 = vpop.xlane.xlu0 %5712
        %5714 = vmax.xlane.f32.xlu0 %v5661
        %v5715 = vpop.xlane.xlu0 %5714
        %5716 = vmax.xlane.f32.xlu0 %v5666
        %v5717 = vpop.xlane.xlu0 %5716
        %5718 = vmax.xlane.f32.xlu0 %v5669
        %v5719 = vpop.xlane.xlu0 %5718
        %5720 = vmax.xlane.f32.xlu0 %v5674
        %v5721 = vpop.xlane.xlu0 %5720
        %5722 = vmax.xlane.f32.xlu0 %v5677
        %v5723 = vpop.xlane.xlu0 %5722
        %5724 = vmax.xlane.f32.xlu0 %v5682
        %v5725 = vpop.xlane.xlu0 %5724
        %5726 = vmax.xlane.f32.xlu0 %v5685
        %v5727 = vpop.xlane.xlu0 %5726
        %5728 = vmax.xlane.f32.xlu0 %v5690
        %v5729 = vpop.xlane.xlu0 %5728
        %5730 = vmax.xlane.f32.xlu0 %v5693
        %v5731 = vpop.xlane.xlu0 %5730
        %5732 = vmax.xlane.f32.xlu0 %v5698
        %v5733 = vpop.xlane.xlu0 %5732
        %5734 = vmax.xlane.f32.xlu0 %v5701
        %v5735 = vpop.xlane.xlu0 %5734
        %v5736 = vsub.f32 %v5642, %v5705
        %v5737 = vsub.f32 %v5645, %v5707
        %v5738 = vsub.f32 %v5650, %v5709
        %v5739 = vsub.f32 %v5653, %v5711
        %v5740 = vsub.f32 %v5658, %v5713
        %v5741 = vsub.f32 %v5661, %v5715
        %v5742 = vsub.f32 %v5666, %v5717
        %v5743 = vsub.f32 %v5669, %v5719
        %v5744 = vsub.f32 %v5674, %v5721
        %v5745 = vsub.f32 %v5677, %v5723
        %v5746 = vsub.f32 %v5682, %v5725
        %v5747 = vsub.f32 %v5685, %v5727
        %v5748 = vsub.f32 %v5690, %v5729
        %v5749 = vsub.f32 %v5693, %v5731
        %v5750 = vsub.f32 %v5698, %v5733
        %v5751 = vsub.f32 %v5701, %v5735
        %v5752 = vmul.f32 %v5736, 1.442695
        %v5753 = vpow.pop %v5752
        %v5754 = vmul.f32 %v5737, 1.442695
        %v5755 = vpow.pop %v5754
        %v5756 = vmul.f32 %v5738, 1.442695
        %v5757 = vpow.pop %v5756
        %v5758 = vmul.f32 %v5739, 1.442695
        %v5759 = vpow.pop %v5758
        %v5760 = vmul.f32 %v5740, 1.442695
        %v5761 = vpow.pop %v5760
        %v5762 = vmul.f32 %v5741, 1.442695
        %v5763 = vpow.pop %v5762
        %v5764 = vmul.f32 %v5742, 1.442695
        %v5765 = vpow.pop %v5764
        %v5766 = vmul.f32 %v5743, 1.442695
        %v5767 = vpow.pop %v5766
        %v5768 = vmul.f32 %v5744, 1.442695
        %v5769 = vpow.pop %v5768
        %v5770 = vmul.f32 %v5745, 1.442695
        %v5771 = vpow.pop %v5770
        %v5772 = vmul.f32 %v5746, 1.442695
        %v5773 = vpow.pop %v5772
        %v5774 = vmul.f32 %v5747, 1.442695
        %v5775 = vpow.pop %v5774
        %v5776 = vmul.f32 %v5748, 1.442695
        %v5777 = vpow.pop %v5776
        %v5778 = vmul.f32 %v5749, 1.442695
        %v5779 = vpow.pop %v5778
        %v5780 = vmul.f32 %v5750, 1.442695
        %v5781 = vpow.pop %v5780
        %v5782 = vmul.f32 %v5751, 1.442695
        %v5783 = vpow.pop %v5782
        %5784 = vadd.xlane.f32.xlu0 %v5753
        %v5785 = vpop.xlane.xlu0 %5784
        %5786 = vadd.xlane.f32.xlu0 %v5755
        %v5787 = vpop.xlane.xlu0 %5786
        %5788 = vadd.xlane.f32.xlu0 %v5757
        %v5789 = vpop.xlane.xlu0 %5788
        %5790 = vadd.xlane.f32.xlu0 %v5759
        %v5791 = vpop.xlane.xlu0 %5790
        %5792 = vadd.xlane.f32.xlu0 %v5761
        %v5793 = vpop.xlane.xlu0 %5792
        %5794 = vadd.xlane.f32.xlu0 %v5763
        %v5795 = vpop.xlane.xlu0 %5794
        %5796 = vadd.xlane.f32.xlu0 %v5765
        %v5797 = vpop.xlane.xlu0 %5796
        %5798 = vadd.xlane.f32.xlu0 %v5767
        %v5799 = vpop.xlane.xlu0 %5798
        %5800 = vadd.xlane.f32.xlu0 %v5769
        %v5801 = vpop.xlane.xlu0 %5800
        %5802 = vadd.xlane.f32.xlu0 %v5771
        %v5803 = vpop.xlane.xlu0 %5802
        %5804 = vadd.xlane.f32.xlu0 %v5773
        %v5805 = vpop.xlane.xlu0 %5804
        %5806 = vadd.xlane.f32.xlu0 %v5775
        %v5807 = vpop.xlane.xlu0 %5806
        %5808 = vadd.xlane.f32.xlu0 %v5777
        %v5809 = vpop.xlane.xlu0 %5808
        %5810 = vadd.xlane.f32.xlu0 %v5779
        %v5811 = vpop.xlane.xlu0 %5810
        %5812 = vadd.xlane.f32.xlu0 %v5781
        %v5813 = vpop.xlane.xlu0 %5812
        %5814 = vadd.xlane.f32.xlu0 %v5783
        %v5815 = vpop.xlane.xlu0 %5814
        %v5816 = vrcp.pop %v5785
        %v5817 = vrcp.pop %v5787
        %v5818 = vrcp.pop %v5789
        %v5819 = vrcp.pop %v5791
        %v5820 = vrcp.pop %v5793
        %v5821 = vrcp.pop %v5795
        %v5822 = vrcp.pop %v5797
        %v5823 = vrcp.pop %v5799
        %v5824 = vrcp.pop %v5801
        %v5825 = vrcp.pop %v5803
        %v5826 = vrcp.pop %v5805
        %v5827 = vrcp.pop %v5807
        %v5828 = vrcp.pop %v5809
        %v5829 = vrcp.pop %v5811
        %v5830 = vrcp.pop %v5813
        %v5831 = vrcp.pop %v5815
        %v5832 = vmul.f32 %v5753, %v5816
        %v5833 = vmul.f32 %v5755, %v5817
        %v5834 = vmul.f32 %v5757, %v5818
        %v5835 = vmul.f32 %v5759, %v5819
        %v5836 = vmul.f32 %v5761, %v5820
        %v5837 = vmul.f32 %v5763, %v5821
        %v5838 = vmul.f32 %v5765, %v5822
        %v5839 = vmul.f32 %v5767, %v5823
        %v5840 = vmul.f32 %v5769, %v5824
        %v5841 = vmul.f32 %v5771, %v5825
        %v5842 = vmul.f32 %v5773, %v5826
        %v5843 = vmul.f32 %v5775, %v5827
        %v5844 = vmul.f32 %v5777, %v5828
        %v5845 = vmul.f32 %v5779, %v5829
        %v5846 = vmul.f32 %v5781, %v5830
        %v5847 = vmul.f32 %v5783, %v5831
        %v5848 = vpack.c.bf16 %v5833, %v5832
        %v5849 = vpack.c.bf16 %v5835, %v5834
        %v5850 = vpack.c.bf16 %v5837, %v5836
        %v5851 = vpack.c.bf16 %v5839, %v5838
        %v5852 = vpack.c.bf16 %v5841, %v5840
        %v5853 = vpack.c.bf16 %v5843, %v5842
        %v5854 = vpack.c.bf16 %v5845, %v5844
        %v5855 = vpack.c.bf16 %v5847, %v5846
        %5856 = vrot.lane.b32.xlu0 %v4177, 40
        %v5857 = vpop.permute.xlu0 %5856
        %5858 = vrot.lane.b32.xlu0 %v4178, 40
        %v5859 = vpop.permute.xlu0 %5858
        %5860 = vrot.lane.b32.xlu0 %v4179, 40
        %v5861 = vpop.permute.xlu0 %5860
        %5862 = vrot.lane.b32.xlu0 %v4180, 40
        %v5863 = vpop.permute.xlu0 %5862
        %5864 = vrot.lane.b32.xlu0 %v4181, 40
        %v5865 = vpop.permute.xlu0 %5864
        %5866 = vrot.lane.b32.xlu0 %v4182, 40
        %v5867 = vpop.permute.xlu0 %5866
        %5868 = vrot.lane.b32.xlu0 %v4183, 40
        %v5869 = vpop.permute.xlu0 %5868
        %5870 = vrot.lane.b32.xlu0 %v4184, 40
        %v5871 = vpop.permute.xlu0 %5870
        %5880 = vmatprep.subr.bf16.mxu0 0
        %5881 = vmatpush1.bf16.msra.mxu0 %v5871
        %5882 = vmatprep.subr.bf16.mxu0 0
        %5883 = vmatpush1.bf16.msra.mxu0 %v5869
        %5884 = vmatprep.subr.bf16.mxu0 0
        %5885 = vmatpush1.bf16.msra.mxu0 %v5867
        %5886 = vmatprep.subr.bf16.mxu0 0
        %5887 = vmatpush1.bf16.msra.mxu0 %v5865
        %5888 = vmatprep.subr.bf16.mxu0 0
        %5889 = vmatpush1.bf16.msra.mxu0 %v5863
        %5890 = vmatprep.subr.bf16.mxu0 0
        %5891 = vmatpush1.bf16.msra.mxu0 %v5861
        %5892 = vmatprep.subr.bf16.mxu0 0
        %5893 = vmatpush1.bf16.msra.mxu0 %v5859
        %5894 = vmatprep.subr.bf16.mxu0 0
        %5895 = vmatpush1.bf16.msra.mxu0 %v5857
        %5896 = vmatprep.subr.bf16.mxu0 0
        %5897 = vmatpush2.bf16.msra.mxu0 0
        %5898 = vmatprep.subr.bf16.mxu0 0
        %5899 = vmatpush2.bf16.msra.mxu0 0
        %5900 = vmatprep.subr.bf16.mxu0 0
        %5901 = vmatpush2.bf16.msra.mxu0 0
        %5902 = vmatprep.subr.bf16.mxu0 0
        %5903 = vmatpush2.bf16.msra.mxu0 0
        %5904 = vmatprep.subr.bf16.mxu0 0
        %5905 = vmatpush2.bf16.msra.mxu0 0
        %5906 = vmatprep.subr.bf16.mxu0 0
        %5907 = vmatpush2.bf16.msra.mxu0 0
        %5908 = vmatprep.subr.bf16.mxu0 0
        %5909 = vmatpush2.bf16.msra.mxu0 0
        %5910 = vmatprep.subr.bf16.mxu0 0
        %5911 = vmatpush2.bf16.msra.mxu0 0
        %5912 = vmatprep.mubr.bf16.mxu0 0
        %5913 = vmatmul.mubr.bf16.gmra.mxu0 %v5848
        %v5914 = vpop.f32.mrf.mxu0
        %v5915 = vadd.f32 0.0, %v5914
        %v5916 = vpop.f32.mrf.mxu0
        %v5917 = vpop.f32.mrf.mxu0
        %v5918 = vadd.f32 0.0, %v5917
        %v5919 = vpop.f32.mrf.mxu0
        %5920 = vmatprep.mubr.bf16.mxu0 0
        %5921 = vmatmul.mubr.bf16.gmra.mxu0 %v5849
        %v5922 = vpop.f32.mrf.mxu0
        %v5923 = vadd.f32 0.0, %v5922
        %v5924 = vpop.f32.mrf.mxu0
        %v5925 = vpop.f32.mrf.mxu0
        %v5926 = vadd.f32 0.0, %v5925
        %v5927 = vpop.f32.mrf.mxu0
        %5928 = vmatprep.mubr.bf16.mxu0 0
        %5929 = vmatmul.mubr.bf16.gmra.mxu0 %v5850
        %v5930 = vpop.f32.mrf.mxu0
        %v5931 = vadd.f32 0.0, %v5930
        %v5932 = vpop.f32.mrf.mxu0
        %v5933 = vpop.f32.mrf.mxu0
        %v5934 = vadd.f32 0.0, %v5933
        %v5935 = vpop.f32.mrf.mxu0
        %5936 = vmatprep.mubr.bf16.mxu0 0
        %5937 = vmatmul.mubr.bf16.gmra.mxu0 %v5851
        %v5938 = vpop.f32.mrf.mxu0
        %v5939 = vadd.f32 0.0, %v5938
        %v5940 = vpop.f32.mrf.mxu0
        %v5941 = vpop.f32.mrf.mxu0
        %v5942 = vadd.f32 0.0, %v5941
        %v5943 = vpop.f32.mrf.mxu0
        %5944 = vmatprep.mubr.bf16.mxu0 0
        %5945 = vmatmul.mubr.bf16.gmra.mxu0 %v5852
        %v5946 = vpop.f32.mrf.mxu0
        %v5947 = vadd.f32 0.0, %v5946
        %v5948 = vpop.f32.mrf.mxu0
        %v5949 = vpop.f32.mrf.mxu0
        %v5950 = vadd.f32 0.0, %v5949
        %v5951 = vpop.f32.mrf.mxu0
        %5952 = vmatprep.mubr.bf16.mxu0 0
        %5953 = vmatmul.mubr.bf16.gmra.mxu0 %v5853
        %v5954 = vpop.f32.mrf.mxu0
        %v5955 = vadd.f32 0.0, %v5954
        %v5956 = vpop.f32.mrf.mxu0
        %v5957 = vpop.f32.mrf.mxu0
        %v5958 = vadd.f32 0.0, %v5957
        %v5959 = vpop.f32.mrf.mxu0
        %5960 = vmatprep.mubr.bf16.mxu0 0
        %5961 = vmatmul.mubr.bf16.gmra.mxu0 %v5854
        %v5962 = vpop.f32.mrf.mxu0
        %v5963 = vadd.f32 0.0, %v5962
        %v5964 = vpop.f32.mrf.mxu0
        %v5965 = vpop.f32.mrf.mxu0
        %v5966 = vadd.f32 0.0, %v5965
        %v5967 = vpop.f32.mrf.mxu0
        %5968 = vmatprep.mubr.bf16.mxu0 0
        %5969 = vmatmul.mubr.bf16.gmra.mxu0 %v5855
        %v5970 = vpop.f32.mrf.mxu0
        %v5971 = vadd.f32 0.0, %v5970
        %v5972 = vpop.f32.mrf.mxu0
        %v5973 = vpop.f32.mrf.mxu0
        %v5974 = vadd.f32 0.0, %v5973
        %v5975 = vpop.f32.mrf.mxu0
        %5976 = vdwg.mxu0
        %5993 = vrot.lane.b32.xlu0 %v5015, 8
        %v5994 = vpop.permute.xlu0 %5993
        %5995 = vrot.lane.b32.xlu0 %v5018, 8
        %v5996 = vpop.permute.xlu0 %5995
        %5997 = vrot.lane.b32.xlu0 %v5023, 8
        %v5998 = vpop.permute.xlu0 %5997
        %5999 = vrot.lane.b32.xlu0 %v5026, 8
        %v6000 = vpop.permute.xlu0 %5999
        %6001 = vrot.lane.b32.xlu0 %v5031, 8
        %v6002 = vpop.permute.xlu0 %6001
        %6003 = vrot.lane.b32.xlu0 %v5034, 8
        %v6004 = vpop.permute.xlu0 %6003
        %6005 = vrot.lane.b32.xlu0 %v5039, 8
        %v6006 = vpop.permute.xlu0 %6005
        %6007 = vrot.lane.b32.xlu0 %v5042, 8
        %v6008 = vpop.permute.xlu0 %6007
        %6009 = vrot.lane.b32.xlu0 %v5047, 8
        %v6010 = vpop.permute.xlu0 %6009
        %6011 = vrot.lane.b32.xlu0 %v5050, 8
        %v6012 = vpop.permute.xlu0 %6011
        %6013 = vrot.lane.b32.xlu0 %v5055, 8
        %v6014 = vpop.permute.xlu0 %6013
        %6015 = vrot.lane.b32.xlu0 %v5058, 8
        %v6016 = vpop.permute.xlu0 %6015
        %6017 = vrot.lane.b32.xlu0 %v5063, 8
        %v6018 = vpop.permute.xlu0 %6017
        %6019 = vrot.lane.b32.xlu0 %v5066, 8
        %v6020 = vpop.permute.xlu0 %6019
        %6021 = vrot.lane.b32.xlu0 %v5071, 8
        %v6022 = vpop.permute.xlu0 %6021
        %6023 = vrot.lane.b32.xlu0 %v5074, 8
        %v6024 = vpop.permute.xlu0 %6023
        %6057 = vrot.lane.b32.xlu0 %v5465, 16
        %v6058 = vpop.permute.xlu0 %6057
        %6059 = vrot.lane.b32.xlu0 %v5468, 16
        %v6060 = vpop.permute.xlu0 %6059
        %6061 = vrot.lane.b32.xlu0 %v5473, 16
        %v6062 = vpop.permute.xlu0 %6061
        %6063 = vrot.lane.b32.xlu0 %v5476, 16
        %v6064 = vpop.permute.xlu0 %6063
        %6065 = vrot.lane.b32.xlu0 %v5481, 16
        %v6066 = vpop.permute.xlu0 %6065
        %6067 = vrot.lane.b32.xlu0 %v5484, 16
        %v6068 = vpop.permute.xlu0 %6067
        %6069 = vrot.lane.b32.xlu0 %v5489, 16
        %v6070 = vpop.permute.xlu0 %6069
        %6071 = vrot.lane.b32.xlu0 %v5492, 16
        %v6072 = vpop.permute.xlu0 %6071
        %6073 = vrot.lane.b32.xlu0 %v5497, 16
        %v6074 = vpop.permute.xlu0 %6073
        %6075 = vrot.lane.b32.xlu0 %v5500, 16
        %v6076 = vpop.permute.xlu0 %6075
        %6077 = vrot.lane.b32.xlu0 %v5505, 16
        %v6078 = vpop.permute.xlu0 %6077
        %6079 = vrot.lane.b32.xlu0 %v5508, 16
        %v6080 = vpop.permute.xlu0 %6079
        %6081 = vrot.lane.b32.xlu0 %v5513, 16
        %v6082 = vpop.permute.xlu0 %6081
        %6083 = vrot.lane.b32.xlu0 %v5516, 16
        %v6084 = vpop.permute.xlu0 %6083
        %6085 = vrot.lane.b32.xlu0 %v5521, 16
        %v6086 = vpop.permute.xlu0 %6085
        %6087 = vrot.lane.b32.xlu0 %v5524, 16
        %v6088 = vpop.permute.xlu0 %6087
        %6121 = vrot.lane.b32.xlu0 %v5915, 24
        %v6122 = vpop.permute.xlu0 %6121
        %6123 = vrot.lane.b32.xlu0 %v5918, 24
        %v6124 = vpop.permute.xlu0 %6123
        %6125 = vrot.lane.b32.xlu0 %v5923, 24
        %v6126 = vpop.permute.xlu0 %6125
        %6127 = vrot.lane.b32.xlu0 %v5926, 24
        %v6128 = vpop.permute.xlu0 %6127
        %6129 = vrot.lane.b32.xlu0 %v5931, 24
        %v6130 = vpop.permute.xlu0 %6129
        %6131 = vrot.lane.b32.xlu0 %v5934, 24
        %v6132 = vpop.permute.xlu0 %6131
        %6133 = vrot.lane.b32.xlu0 %v5939, 24
        %v6134 = vpop.permute.xlu0 %6133
        %6135 = vrot.lane.b32.xlu0 %v5942, 24
        %v6136 = vpop.permute.xlu0 %6135
        %6137 = vrot.lane.b32.xlu0 %v5947, 24
        %v6138 = vpop.permute.xlu0 %6137
        %6139 = vrot.lane.b32.xlu0 %v5950, 24
        %v6140 = vpop.permute.xlu0 %6139
        %6141 = vrot.lane.b32.xlu0 %v5955, 24
        %v6142 = vpop.permute.xlu0 %6141
        %6143 = vrot.lane.b32.xlu0 %v5958, 24
        %v6144 = vpop.permute.xlu0 %6143
        %6145 = vrot.lane.b32.xlu0 %v5963, 24
        %v6146 = vpop.permute.xlu0 %6145
        %6147 = vrot.lane.b32.xlu0 %v5966, 24
        %v6148 = vpop.permute.xlu0 %6147
        %6149 = vrot.lane.b32.xlu0 %v5971, 24
        %v6150 = vpop.permute.xlu0 %6149
        %6151 = vrot.lane.b32.xlu0 %v5974, 24
        %v6152 = vpop.permute.xlu0 %6151
        %v6169 = vsel %vm982, %v4565, %v5994
        %v6170 = vsel %vm982, %v4568, %v5996
        %v6171 = vsel %vm982, %v4573, %v5998
        %v6172 = vsel %vm982, %v4576, %v6000
        %v6173 = vsel %vm982, %v4581, %v6002
        %v6174 = vsel %vm982, %v4584, %v6004
        %v6175 = vsel %vm982, %v4589, %v6006
        %v6176 = vsel %vm982, %v4592, %v6008
        %v6177 = vsel %vm982, %v4597, %v6010
        %v6178 = vsel %vm982, %v4600, %v6012
        %v6179 = vsel %vm982, %v4605, %v6014
        %v6180 = vsel %vm982, %v4608, %v6016
        %v6181 = vsel %vm982, %v4613, %v6018
        %v6182 = vsel %vm982, %v4616, %v6020
        %v6183 = vsel %vm982, %v4621, %v6022
        %v6184 = vsel %vm982, %v4624, %v6024
        %v6185 = vsel %vm2959, %v6169, %v6058
        %v6186 = vsel %vm2959, %v6170, %v6060
        %v6187 = vsel %vm2959, %v6171, %v6062
        %v6188 = vsel %vm2959, %v6172, %v6064
        %v6189 = vsel %vm2959, %v6173, %v6066
        %v6190 = vsel %vm2959, %v6174, %v6068
        %v6191 = vsel %vm2959, %v6175, %v6070
        %v6192 = vsel %vm2959, %v6176, %v6072
        %v6193 = vsel %vm2959, %v6177, %v6074
        %v6194 = vsel %vm2959, %v6178, %v6076
        %v6195 = vsel %vm2959, %v6179, %v6078
        %v6196 = vsel %vm2959, %v6180, %v6080
        %v6197 = vsel %vm2959, %v6181, %v6082
        %v6198 = vsel %vm2959, %v6182, %v6084
        %v6199 = vsel %vm2959, %v6183, %v6086
        %v6200 = vsel %vm2959, %v6184, %v6088
        %v6201 = vsel %vm2976, %v6185, %v6122
        %v6202 = vsel %vm2976, %v6186, %v6124
        %v6203 = vsel %vm2976, %v6187, %v6126
        %v6204 = vsel %vm2976, %v6188, %v6128
        %v6205 = vsel %vm2976, %v6189, %v6130
        %v6206 = vsel %vm2976, %v6190, %v6132
        %v6207 = vsel %vm2976, %v6191, %v6134
        %v6208 = vsel %vm2976, %v6192, %v6136
        %v6209 = vsel %vm2976, %v6193, %v6138
        %v6210 = vsel %vm2976, %v6194, %v6140
        %v6211 = vsel %vm2976, %v6195, %v6142
        %v6212 = vsel %vm2976, %v6196, %v6144
        %v6213 = vsel %vm2976, %v6197, %v6146
        %v6214 = vsel %vm2976, %v6198, %v6148
        %v6215 = vsel %vm2976, %v6199, %v6150
        %v6216 = vsel %vm2976, %v6200, %v6152
        %v6217 = vpack.c.bf16 %v6202, %v6201
        %v6218 = vpack.c.bf16 %v6204, %v6203
        %v6219 = vpack.c.bf16 %v6206, %v6205
        %v6220 = vpack.c.bf16 %v6208, %v6207
        %v6221 = vpack.c.bf16 %v6210, %v6209
        %v6222 = vpack.c.bf16 %v6212, %v6211
        %v6223 = vpack.c.bf16 %v6214, %v6213
        %v6224 = vpack.c.bf16 %v6216, %v6215
        %s6225 = scalar_lea.vmem %s7, 16
        %v6226 = vld [vmem:[%s6225] sm:$0xf]
        %v6227 = vld [vmem:[%s6225 + $0x4] sm:$0xf]
        %v6228 = vld [vmem:[%s6225 + $0x8] sm:$0xf]
        %v6229 = vld [vmem:[%s6225 + $0xc] sm:$0xf]
        %s6230 = scalar_lea.vmem %s8, 1
        %v6231 = vld [vmem:[%s6230] sm:$0x1]
        %v6233 = vlaneseq
        %v6234 = vshrl.u32 %v6233, 7
        %v6235 = vsub.s32 0, %v6234
        %v6236 = vrot.slane %v6231, %v6235
        %v6242 = vunpack.c.l.b16 %v6226
        %v6243 = vunpack.c.l.b16 %v6227
        %v6244 = vunpack.c.l.b16 %v6228
        %v6245 = vunpack.c.l.b16 %v6229
        %v6246 = vpack.c.b16 %v6243, %v6242
        %v6247 = vpack.c.b16 %v6245, %v6244
        %v6251 = vsel %vm828, %v6217, 0
        %v6254 = vsel %vm828, %v6218, 0
        %v6257 = vsel %vm828, %v6219, 0
        %v6260 = vsel %vm828, %v6220, 0
        %v6263 = vsel %vm828, %v6221, 0
        %v6266 = vsel %vm828, %v6222, 0
        %v6269 = vsel %vm828, %v6223, 0
        %v6272 = vsel %vm828, %v6224, 0
        %6274 = vmatprep.subr.bf16.mxu0 0
        %6275 = vmatpush1.bf16.msra.mxu0 0
        %6276 = vmatprep.subr.bf16.mxu0 0
        %6277 = vmatpush1.bf16.msra.mxu0 0
        %6278 = vmatprep.subr.bf16.mxu0 0
        %6279 = vmatpush1.bf16.msra.mxu0 0
        %6280 = vmatprep.subr.bf16.mxu0 0
        %6281 = vmatpush1.bf16.msra.mxu0 0
        %6282 = vmatprep.subr.bf16.mxu0 0
        %6283 = vmatpush1.bf16.msra.mxu0 0
        %6284 = vmatprep.subr.bf16.mxu0 0
        %6285 = vmatpush1.bf16.msra.mxu0 0
        %6286 = vmatprep.subr.bf16.mxu0 0
        %6287 = vmatpush1.bf16.msra.mxu0 %v6247
        %6288 = vmatprep.subr.bf16.mxu0 0
        %6289 = vmatpush1.bf16.msra.mxu0 %v6246
        %6290 = vmatprep.subr.bf16.mxu0 0
        %6291 = vmatpush2.bf16.msra.mxu0 0
        %6292 = vmatprep.subr.bf16.mxu0 0
        %6293 = vmatpush2.bf16.msra.mxu0 0
        %6294 = vmatprep.subr.bf16.mxu0 0
        %6295 = vmatpush2.bf16.msra.mxu0 0
        %6296 = vmatprep.subr.bf16.mxu0 0
        %6297 = vmatpush2.bf16.msra.mxu0 0
        %6298 = vmatprep.subr.bf16.mxu0 0
        %6299 = vmatpush2.bf16.msra.mxu0 0
        %6300 = vmatprep.subr.bf16.mxu0 0
        %6301 = vmatpush2.bf16.msra.mxu0 0
        %6302 = vmatprep.subr.bf16.mxu0 0
        %6303 = vmatpush2.bf16.msra.mxu0 0
        %6304 = vmatprep.subr.bf16.mxu0 0
        %6305 = vmatpush2.bf16.msra.mxu0 0
        %6306 = vmatprep.mubr.bf16.mxu0 0
        %6307 = vmatmul.mubr.bf16.gmra.mxu0 %v6251
        %v6308 = vpop.f32.mrf.mxu0
        %v6309 = vadd.f32 %v6236, %v6308
        %v6310 = vpop.f32.mrf.mxu0
        %v6311 = vpop.f32.mrf.mxu0
        %v6312 = vadd.f32 %v6236, %v6311
        %v6313 = vpop.f32.mrf.mxu0
        %6314 = vmatprep.mubr.bf16.mxu0 0
        %6315 = vmatmul.mubr.bf16.gmra.mxu0 %v6254
        %v6316 = vpop.f32.mrf.mxu0
        %v6317 = vadd.f32 %v6236, %v6316
        %v6318 = vpop.f32.mrf.mxu0
        %v6319 = vpop.f32.mrf.mxu0
        %v6320 = vadd.f32 %v6236, %v6319
        %v6321 = vpop.f32.mrf.mxu0
        %6322 = vmatprep.mubr.bf16.mxu0 0
        %6323 = vmatmul.mubr.bf16.gmra.mxu0 %v6257
        %v6324 = vpop.f32.mrf.mxu0
        %v6325 = vadd.f32 %v6236, %v6324
        %v6326 = vpop.f32.mrf.mxu0
        %v6327 = vpop.f32.mrf.mxu0
        %v6328 = vadd.f32 %v6236, %v6327
        %v6329 = vpop.f32.mrf.mxu0
        %6330 = vmatprep.mubr.bf16.mxu0 0
        %6331 = vmatmul.mubr.bf16.gmra.mxu0 %v6260
        %v6332 = vpop.f32.mrf.mxu0
        %v6333 = vadd.f32 %v6236, %v6332
        %v6334 = vpop.f32.mrf.mxu0
        %v6335 = vpop.f32.mrf.mxu0
        %v6336 = vadd.f32 %v6236, %v6335
        %v6337 = vpop.f32.mrf.mxu0
        %6338 = vmatprep.mubr.bf16.mxu0 0
        %6339 = vmatmul.mubr.bf16.gmra.mxu0 %v6263
        %v6340 = vpop.f32.mrf.mxu0
        %v6341 = vadd.f32 %v6236, %v6340
        %v6342 = vpop.f32.mrf.mxu0
        %v6343 = vpop.f32.mrf.mxu0
        %v6344 = vadd.f32 %v6236, %v6343
        %v6345 = vpop.f32.mrf.mxu0
        %6346 = vmatprep.mubr.bf16.mxu0 0
        %6347 = vmatmul.mubr.bf16.gmra.mxu0 %v6266
        %v6348 = vpop.f32.mrf.mxu0
        %v6349 = vadd.f32 %v6236, %v6348
        %v6350 = vpop.f32.mrf.mxu0
        %v6351 = vpop.f32.mrf.mxu0
        %v6352 = vadd.f32 %v6236, %v6351
        %v6353 = vpop.f32.mrf.mxu0
        %6354 = vmatprep.mubr.bf16.mxu0 0
        %6355 = vmatmul.mubr.bf16.gmra.mxu0 %v6269
        %v6356 = vpop.f32.mrf.mxu0
        %v6357 = vadd.f32 %v6236, %v6356
        %v6358 = vpop.f32.mrf.mxu0
        %v6359 = vpop.f32.mrf.mxu0
        %v6360 = vadd.f32 %v6236, %v6359
        %v6361 = vpop.f32.mrf.mxu0
        %6362 = vmatprep.mubr.bf16.mxu0 0
        %6363 = vmatmul.mubr.bf16.gmra.mxu0 %v6272
        %v6364 = vpop.f32.mrf.mxu0
        %v6365 = vadd.f32 %v6236, %v6364
        %v6366 = vpop.f32.mrf.mxu0
        %v6367 = vpop.f32.mrf.mxu0
        %v6368 = vadd.f32 %v6236, %v6367
        %v6369 = vpop.f32.mrf.mxu0
        %6370 = vdwg.mxu0
        %v6371 = vadd.f32 %v4007, %v6309
        %v6372 = vadd.f32 %v4008, %v6312
        %v6373 = vadd.f32 %v4009, %v6317
        %v6374 = vadd.f32 %v4010, %v6320
        %v6375 = vadd.f32 %v4011, %v6325
        %v6376 = vadd.f32 %v4012, %v6328
        %v6377 = vadd.f32 %v4013, %v6333
        %v6378 = vadd.f32 %v4014, %v6336
        %v6379 = vadd.f32 %v4015, %v6341
        %v6380 = vadd.f32 %v4016, %v6344
        %v6381 = vadd.f32 %v4017, %v6349
        %v6382 = vadd.f32 %v4018, %v6352
        %v6383 = vadd.f32 %v4019, %v6357
        %v6384 = vadd.f32 %v4020, %v6360
        %v6385 = vadd.f32 %v4021, %v6365
        %v6386 = vadd.f32 %v4022, %v6368
        %s6387 = scalar_lea.vmem %s9, 1
        %v6388 = vld [vmem:[%s6387] sm:$0x1]
        %s6389 = scalar_lea.vmem %s10, 1
        %v6390 = vld [vmem:[%s6389] sm:$0x1]
        %v6391 = vsel %vm828, %v6371, 0.0
        %6392 = vadd.xlane.f32.xlu0 %v6391
        %v6393 = vpop.xlane.xlu0 %6392
        %v6394 = vsel %vm828, %v6372, 0.0
        %6395 = vadd.xlane.f32.xlu0 %v6394
        %v6396 = vpop.xlane.xlu0 %6395
        %v6397 = vsel %vm828, %v6373, 0.0
        %6398 = vadd.xlane.f32.xlu0 %v6397
        %v6399 = vpop.xlane.xlu0 %6398
        %v6400 = vsel %vm828, %v6374, 0.0
        %6401 = vadd.xlane.f32.xlu0 %v6400
        %v6402 = vpop.xlane.xlu0 %6401
        %v6403 = vsel %vm828, %v6375, 0.0
        %6404 = vadd.xlane.f32.xlu0 %v6403
        %v6405 = vpop.xlane.xlu0 %6404
        %v6406 = vsel %vm828, %v6376, 0.0
        %6407 = vadd.xlane.f32.xlu0 %v6406
        %v6408 = vpop.xlane.xlu0 %6407
        %v6409 = vsel %vm828, %v6377, 0.0
        %6410 = vadd.xlane.f32.xlu0 %v6409
        %v6411 = vpop.xlane.xlu0 %6410
        %v6412 = vsel %vm828, %v6378, 0.0
        %6413 = vadd.xlane.f32.xlu0 %v6412
        %v6414 = vpop.xlane.xlu0 %6413
        %v6415 = vsel %vm828, %v6379, 0.0
        %6416 = vadd.xlane.f32.xlu0 %v6415
        %v6417 = vpop.xlane.xlu0 %6416
        %v6418 = vsel %vm828, %v6380, 0.0
        %6419 = vadd.xlane.f32.xlu0 %v6418
        %v6420 = vpop.xlane.xlu0 %6419
        %v6421 = vsel %vm828, %v6381, 0.0
        %6422 = vadd.xlane.f32.xlu0 %v6421
        %v6423 = vpop.xlane.xlu0 %6422
        %v6424 = vsel %vm828, %v6382, 0.0
        %6425 = vadd.xlane.f32.xlu0 %v6424
        %v6426 = vpop.xlane.xlu0 %6425
        %v6427 = vsel %vm828, %v6383, 0.0
        %6428 = vadd.xlane.f32.xlu0 %v6427
        %v6429 = vpop.xlane.xlu0 %6428
        %v6430 = vsel %vm828, %v6384, 0.0
        %6431 = vadd.xlane.f32.xlu0 %v6430
        %v6432 = vpop.xlane.xlu0 %6431
        %v6433 = vsel %vm828, %v6385, 0.0
        %6434 = vadd.xlane.f32.xlu0 %v6433
        %v6435 = vpop.xlane.xlu0 %6434
        %v6436 = vsel %vm828, %v6386, 0.0
        %6437 = vadd.xlane.f32.xlu0 %v6436
        %v6438 = vpop.xlane.xlu0 %6437
        %v6439 = vmul.f32 %v6393, %v3211
        %v6440 = vmul.f32 %v6396, %v3211
        %v6441 = vmul.f32 %v6399, %v3211
        %v6442 = vmul.f32 %v6402, %v3211
        %v6443 = vmul.f32 %v6405, %v3211
        %v6444 = vmul.f32 %v6408, %v3211
        %v6445 = vmul.f32 %v6411, %v3211
        %v6446 = vmul.f32 %v6414, %v3211
        %v6447 = vmul.f32 %v6417, %v3211
        %v6448 = vmul.f32 %v6420, %v3211
        %v6449 = vmul.f32 %v6423, %v3211
        %v6450 = vmul.f32 %v6426, %v3211
        %v6451 = vmul.f32 %v6429, %v3211
        %v6452 = vmul.f32 %v6432, %v3211
        %v6453 = vmul.f32 %v6435, %v3211
        %v6454 = vmul.f32 %v6438, %v3211
        %v6455 = vsub.f32 %v6371, %v6439
        %v6456 = vsub.f32 %v6372, %v6440
        %v6457 = vsub.f32 %v6373, %v6441
        %v6458 = vsub.f32 %v6374, %v6442
        %v6459 = vsub.f32 %v6375, %v6443
        %v6460 = vsub.f32 %v6376, %v6444
        %v6461 = vsub.f32 %v6377, %v6445
        %v6462 = vsub.f32 %v6378, %v6446
        %v6463 = vsub.f32 %v6379, %v6447
        %v6464 = vsub.f32 %v6380, %v6448
        %v6465 = vsub.f32 %v6381, %v6449
        %v6466 = vsub.f32 %v6382, %v6450
        %v6467 = vsub.f32 %v6383, %v6451
        %v6468 = vsub.f32 %v6384, %v6452
        %v6469 = vsub.f32 %v6385, %v6453
        %v6470 = vsub.f32 %v6386, %v6454
        %v6471 = vmul.f32 %v6455, %v6455
        %v6472 = vmul.f32 %v6456, %v6456
        %v6473 = vmul.f32 %v6457, %v6457
        %v6474 = vmul.f32 %v6458, %v6458
        %v6475 = vmul.f32 %v6459, %v6459
        %v6476 = vmul.f32 %v6460, %v6460
        %v6477 = vmul.f32 %v6461, %v6461
        %v6478 = vmul.f32 %v6462, %v6462
        %v6479 = vmul.f32 %v6463, %v6463
        %v6480 = vmul.f32 %v6464, %v6464
        %v6481 = vmul.f32 %v6465, %v6465
        %v6482 = vmul.f32 %v6466, %v6466
        %v6483 = vmul.f32 %v6467, %v6467
        %v6484 = vmul.f32 %v6468, %v6468
        %v6485 = vmul.f32 %v6469, %v6469
        %v6486 = vmul.f32 %v6470, %v6470
        %v6487 = vsel %vm828, %v6471, 0.0
        %6488 = vadd.xlane.f32.xlu0 %v6487
        %v6489 = vpop.xlane.xlu0 %6488
        %v6490 = vsel %vm828, %v6472, 0.0
        %6491 = vadd.xlane.f32.xlu0 %v6490
        %v6492 = vpop.xlane.xlu0 %6491
        %v6493 = vsel %vm828, %v6473, 0.0
        %6494 = vadd.xlane.f32.xlu0 %v6493
        %v6495 = vpop.xlane.xlu0 %6494
        %v6496 = vsel %vm828, %v6474, 0.0
        %6497 = vadd.xlane.f32.xlu0 %v6496
        %v6498 = vpop.xlane.xlu0 %6497
        %v6499 = vsel %vm828, %v6475, 0.0
        %6500 = vadd.xlane.f32.xlu0 %v6499
        %v6501 = vpop.xlane.xlu0 %6500
        %v6502 = vsel %vm828, %v6476, 0.0
        %6503 = vadd.xlane.f32.xlu0 %v6502
        %v6504 = vpop.xlane.xlu0 %6503
        %v6505 = vsel %vm828, %v6477, 0.0
        %6506 = vadd.xlane.f32.xlu0 %v6505
        %v6507 = vpop.xlane.xlu0 %6506
        %v6508 = vsel %vm828, %v6478, 0.0
        %6509 = vadd.xlane.f32.xlu0 %v6508
        %v6510 = vpop.xlane.xlu0 %6509
        %v6511 = vsel %vm828, %v6479, 0.0
        %6512 = vadd.xlane.f32.xlu0 %v6511
        %v6513 = vpop.xlane.xlu0 %6512
        %v6514 = vsel %vm828, %v6480, 0.0
        %6515 = vadd.xlane.f32.xlu0 %v6514
        %v6516 = vpop.xlane.xlu0 %6515
        %v6517 = vsel %vm828, %v6481, 0.0
        %6518 = vadd.xlane.f32.xlu0 %v6517
        %v6519 = vpop.xlane.xlu0 %6518
        %v6520 = vsel %vm828, %v6482, 0.0
        %6521 = vadd.xlane.f32.xlu0 %v6520
        %v6522 = vpop.xlane.xlu0 %6521
        %v6523 = vsel %vm828, %v6483, 0.0
        %6524 = vadd.xlane.f32.xlu0 %v6523
        %v6525 = vpop.xlane.xlu0 %6524
        %v6526 = vsel %vm828, %v6484, 0.0
        %6527 = vadd.xlane.f32.xlu0 %v6526
        %v6528 = vpop.xlane.xlu0 %6527
        %v6529 = vsel %vm828, %v6485, 0.0
        %6530 = vadd.xlane.f32.xlu0 %v6529
        %v6531 = vpop.xlane.xlu0 %6530
        %v6532 = vsel %vm828, %v6486, 0.0
        %6533 = vadd.xlane.f32.xlu0 %v6532
        %v6534 = vpop.xlane.xlu0 %6533
        %v6535 = vmul.f32 %v6489, %v3211
        %v6536 = vmul.f32 %v6492, %v3211
        %v6537 = vmul.f32 %v6495, %v3211
        %v6538 = vmul.f32 %v6498, %v3211
        %v6539 = vmul.f32 %v6501, %v3211
        %v6540 = vmul.f32 %v6504, %v3211
        %v6541 = vmul.f32 %v6507, %v3211
        %v6542 = vmul.f32 %v6510, %v3211
        %v6543 = vmul.f32 %v6513, %v3211
        %v6544 = vmul.f32 %v6516, %v3211
        %v6545 = vmul.f32 %v6519, %v3211
        %v6546 = vmul.f32 %v6522, %v3211
        %v6547 = vmul.f32 %v6525, %v3211
        %v6548 = vmul.f32 %v6528, %v3211
        %v6549 = vmul.f32 %v6531, %v3211
        %v6550 = vmul.f32 %v6534, %v3211
        %v6551 = vadd.f32 %v6535, 1e-05
        %v6552 = vadd.f32 %v6536, 1e-05
        %v6553 = vadd.f32 %v6537, 1e-05
        %v6554 = vadd.f32 %v6538, 1e-05
        %v6555 = vadd.f32 %v6539, 1e-05
        %v6556 = vadd.f32 %v6540, 1e-05
        %v6557 = vadd.f32 %v6541, 1e-05
        %v6558 = vadd.f32 %v6542, 1e-05
        %v6559 = vadd.f32 %v6543, 1e-05
        %v6560 = vadd.f32 %v6544, 1e-05
        %v6561 = vadd.f32 %v6545, 1e-05
        %v6562 = vadd.f32 %v6546, 1e-05
        %v6563 = vadd.f32 %v6547, 1e-05
        %v6564 = vadd.f32 %v6548, 1e-05
        %v6565 = vadd.f32 %v6549, 1e-05
        %v6566 = vadd.f32 %v6550, 1e-05
        %v6567 = vrsqrt.pop %v6551
        %v6568 = vrsqrt.pop %v6552
        %v6569 = vrsqrt.pop %v6553
        %v6570 = vrsqrt.pop %v6554
        %v6571 = vrsqrt.pop %v6555
        %v6572 = vrsqrt.pop %v6556
        %v6573 = vrsqrt.pop %v6557
        %v6574 = vrsqrt.pop %v6558
        %v6575 = vrsqrt.pop %v6559
        %v6576 = vrsqrt.pop %v6560
        %v6577 = vrsqrt.pop %v6561
        %v6578 = vrsqrt.pop %v6562
        %v6579 = vrsqrt.pop %v6563
        %v6580 = vrsqrt.pop %v6564
        %v6581 = vrsqrt.pop %v6565
        %v6582 = vrsqrt.pop %v6566
        %v6583 = vmul.f32 %v6455, %v6567
        %v6584 = vmul.f32 %v6456, %v6568
        %v6585 = vmul.f32 %v6457, %v6569
        %v6586 = vmul.f32 %v6458, %v6570
        %v6587 = vmul.f32 %v6459, %v6571
        %v6588 = vmul.f32 %v6460, %v6572
        %v6589 = vmul.f32 %v6461, %v6573
        %v6590 = vmul.f32 %v6462, %v6574
        %v6591 = vmul.f32 %v6463, %v6575
        %v6592 = vmul.f32 %v6464, %v6576
        %v6593 = vmul.f32 %v6465, %v6577
        %v6594 = vmul.f32 %v6466, %v6578
        %v6595 = vmul.f32 %v6467, %v6579
        %v6596 = vmul.f32 %v6468, %v6580
        %v6597 = vmul.f32 %v6469, %v6581
        %v6598 = vmul.f32 %v6470, %v6582
        %v6600 = vlaneseq
        %v6601 = vshrl.u32 %v6600, 7
        %v6602 = vsub.s32 0, %v6601
        %v6603 = vrot.slane %v6388, %v6602
        %v6605 = vmul.f32 %v6583, %v6603
        %v6606 = vmul.f32 %v6584, %v6603
        %v6607 = vmul.f32 %v6585, %v6603
        %v6608 = vmul.f32 %v6586, %v6603
        %v6609 = vmul.f32 %v6587, %v6603
        %v6610 = vmul.f32 %v6588, %v6603
        %v6611 = vmul.f32 %v6589, %v6603
        %v6612 = vmul.f32 %v6590, %v6603
        %v6613 = vmul.f32 %v6591, %v6603
        %v6614 = vmul.f32 %v6592, %v6603
        %v6615 = vmul.f32 %v6593, %v6603
        %v6616 = vmul.f32 %v6594, %v6603
        %v6617 = vmul.f32 %v6595, %v6603
        %v6618 = vmul.f32 %v6596, %v6603
        %v6619 = vmul.f32 %v6597, %v6603
        %v6620 = vmul.f32 %v6598, %v6603
        %v6622 = vlaneseq
        %v6623 = vshrl.u32 %v6622, 7
        %v6624 = vsub.s32 0, %v6623
        %v6625 = vrot.slane %v6390, %v6624
        %v6627 = vadd.f32 %v6605, %v6625
        %v6628 = vadd.f32 %v6606, %v6625
        %v6629 = vadd.f32 %v6607, %v6625
        %v6630 = vadd.f32 %v6608, %v6625
        %v6631 = vadd.f32 %v6609, %v6625
        %v6632 = vadd.f32 %v6610, %v6625
        %v6633 = vadd.f32 %v6611, %v6625
        %v6634 = vadd.f32 %v6612, %v6625
        %v6635 = vadd.f32 %v6613, %v6625
        %v6636 = vadd.f32 %v6614, %v6625
        %v6637 = vadd.f32 %v6615, %v6625
        %v6638 = vadd.f32 %v6616, %v6625
        %v6639 = vadd.f32 %v6617, %v6625
        %v6640 = vadd.f32 %v6618, %v6625
        %v6641 = vadd.f32 %v6619, %v6625
        %v6642 = vadd.f32 %v6620, %v6625
        %v6643 = vpack.c.bf16 %v6628, %v6627
        %v6644 = vpack.c.bf16 %v6630, %v6629
        %v6645 = vpack.c.bf16 %v6632, %v6631
        %v6646 = vpack.c.bf16 %v6634, %v6633
        %v6647 = vpack.c.bf16 %v6636, %v6635
        %v6648 = vpack.c.bf16 %v6638, %v6637
        %v6649 = vpack.c.bf16 %v6640, %v6639
        %v6650 = vpack.c.bf16 %v6642, %v6641
        %s6651 = scalar_lea.vmem %s13, 16
        %v6652 = vld [vmem:[%s6651] sm:$0xf]
        %v6653 = vld [vmem:[%s6651 + $0x4] sm:$0xf]
        %v6654 = vld [vmem:[%s6651 + $0x8] sm:$0xf]
        %v6655 = vld [vmem:[%s6651 + $0xc] sm:$0xf]
        %s6656 = scalar_lea.vmem %s14, 1
        %v6657 = vld [vmem:[%s6656] sm:$0x1]
        %v6659 = vlaneseq
        %v6660 = vshrl.u32 %v6659, 7
        %v6661 = vsub.s32 0, %v6660
        %v6662 = vrot.slane %v6657, %v6661
        %v6668 = vunpack.c.l.b16 %v6652
        %v6669 = vunpack.c.l.b16 %v6653
        %v6670 = vunpack.c.l.b16 %v6654
        %v6671 = vunpack.c.l.b16 %v6655
        %v6672 = vpack.c.b16 %v6669, %v6668
        %v6673 = vpack.c.b16 %v6671, %v6670
        %v6677 = vsel %vm828, %v6643, 0
        %v6680 = vsel %vm828, %v6644, 0
        %v6683 = vsel %vm828, %v6645, 0
        %v6686 = vsel %vm828, %v6646, 0
        %v6689 = vsel %vm828, %v6647, 0
        %v6692 = vsel %vm828, %v6648, 0
        %v6695 = vsel %vm828, %v6649, 0
        %v6698 = vsel %vm828, %v6650, 0
        %6700 = vmatprep.subr.bf16.mxu0 0
        %6701 = vmatpush1.bf16.msra.mxu0 0
        %6702 = vmatprep.subr.bf16.mxu0 0
        %6703 = vmatpush1.bf16.msra.mxu0 0
        %6704 = vmatprep.subr.bf16.mxu0 0
        %6705 = vmatpush1.bf16.msra.mxu0 0
        %6706 = vmatprep.subr.bf16.mxu0 0
        %6707 = vmatpush1.bf16.msra.mxu0 0
        %6708 = vmatprep.subr.bf16.mxu0 0
        %6709 = vmatpush1.bf16.msra.mxu0 0
        %6710 = vmatprep.subr.bf16.mxu0 0
        %6711 = vmatpush1.bf16.msra.mxu0 0
        %6712 = vmatprep.subr.bf16.mxu0 0
        %6713 = vmatpush1.bf16.msra.mxu0 %v6673
        %6714 = vmatprep.subr.bf16.mxu0 0
        %6715 = vmatpush1.bf16.msra.mxu0 %v6672
        %6716 = vmatprep.subr.bf16.mxu0 0
        %6717 = vmatpush2.bf16.msra.mxu0 0
        %6718 = vmatprep.subr.bf16.mxu0 0
        %6719 = vmatpush2.bf16.msra.mxu0 0
        %6720 = vmatprep.subr.bf16.mxu0 0
        %6721 = vmatpush2.bf16.msra.mxu0 0
        %6722 = vmatprep.subr.bf16.mxu0 0
        %6723 = vmatpush2.bf16.msra.mxu0 0
        %6724 = vmatprep.subr.bf16.mxu0 0
        %6725 = vmatpush2.bf16.msra.mxu0 0
        %6726 = vmatprep.subr.bf16.mxu0 0
        %6727 = vmatpush2.bf16.msra.mxu0 0
        %6728 = vmatprep.subr.bf16.mxu0 0
        %6729 = vmatpush2.bf16.msra.mxu0 0
        %6730 = vmatprep.subr.bf16.mxu0 0
        %6731 = vmatpush2.bf16.msra.mxu0 0
        %6732 = vmatprep.mubr.bf16.mxu0 0
        %6733 = vmatmul.mubr.bf16.gmra.mxu0 %v6677
        %v6734 = vpop.f32.mrf.mxu0
        %v6735 = vadd.f32 %v6662, %v6734
        %v6736 = vpop.f32.mrf.mxu0
        %v6737 = vpop.f32.mrf.mxu0
        %v6738 = vadd.f32 %v6662, %v6737
        %v6739 = vpop.f32.mrf.mxu0
        %6740 = vmatprep.mubr.bf16.mxu0 0
        %6741 = vmatmul.mubr.bf16.gmra.mxu0 %v6680
        %v6742 = vpop.f32.mrf.mxu0
        %v6743 = vadd.f32 %v6662, %v6742
        %v6744 = vpop.f32.mrf.mxu0
        %v6745 = vpop.f32.mrf.mxu0
        %v6746 = vadd.f32 %v6662, %v6745
        %v6747 = vpop.f32.mrf.mxu0
        %6748 = vmatprep.mubr.bf16.mxu0 0
        %6749 = vmatmul.mubr.bf16.gmra.mxu0 %v6683
        %v6750 = vpop.f32.mrf.mxu0
        %v6751 = vadd.f32 %v6662, %v6750
        %v6752 = vpop.f32.mrf.mxu0
        %v6753 = vpop.f32.mrf.mxu0
        %v6754 = vadd.f32 %v6662, %v6753
        %v6755 = vpop.f32.mrf.mxu0
        %6756 = vmatprep.mubr.bf16.mxu0 0
        %6757 = vmatmul.mubr.bf16.gmra.mxu0 %v6686
        %v6758 = vpop.f32.mrf.mxu0
        %v6759 = vadd.f32 %v6662, %v6758
        %v6760 = vpop.f32.mrf.mxu0
        %v6761 = vpop.f32.mrf.mxu0
        %v6762 = vadd.f32 %v6662, %v6761
        %v6763 = vpop.f32.mrf.mxu0
        %6764 = vmatprep.mubr.bf16.mxu0 0
        %6765 = vmatmul.mubr.bf16.gmra.mxu0 %v6689
        %v6766 = vpop.f32.mrf.mxu0
        %v6767 = vadd.f32 %v6662, %v6766
        %v6768 = vpop.f32.mrf.mxu0
        %v6769 = vpop.f32.mrf.mxu0
        %v6770 = vadd.f32 %v6662, %v6769
        %v6771 = vpop.f32.mrf.mxu0
        %6772 = vmatprep.mubr.bf16.mxu0 0
        %6773 = vmatmul.mubr.bf16.gmra.mxu0 %v6692
        %v6774 = vpop.f32.mrf.mxu0
        %v6775 = vadd.f32 %v6662, %v6774
        %v6776 = vpop.f32.mrf.mxu0
        %v6777 = vpop.f32.mrf.mxu0
        %v6778 = vadd.f32 %v6662, %v6777
        %v6779 = vpop.f32.mrf.mxu0
        %6780 = vmatprep.mubr.bf16.mxu0 0
        %6781 = vmatmul.mubr.bf16.gmra.mxu0 %v6695
        %v6782 = vpop.f32.mrf.mxu0
        %v6783 = vadd.f32 %v6662, %v6782
        %v6784 = vpop.f32.mrf.mxu0
        %v6785 = vpop.f32.mrf.mxu0
        %v6786 = vadd.f32 %v6662, %v6785
        %v6787 = vpop.f32.mrf.mxu0
        %6788 = vmatprep.mubr.bf16.mxu0 0
        %6789 = vmatmul.mubr.bf16.gmra.mxu0 %v6698
        %v6790 = vpop.f32.mrf.mxu0
        %v6791 = vadd.f32 %v6662, %v6790
        %v6792 = vpop.f32.mrf.mxu0
        %v6793 = vpop.f32.mrf.mxu0
        %v6794 = vadd.f32 %v6662, %v6793
        %v6795 = vpop.f32.mrf.mxu0
        %6796 = vdwg.mxu0
        %v6797 = vmax.f32 %v6735, 0.0
        %v6798 = vmax.f32 %v6738, 0.0
        %v6799 = vmax.f32 %v6743, 0.0
        %v6800 = vmax.f32 %v6746, 0.0
        %v6801 = vmax.f32 %v6751, 0.0
        %v6802 = vmax.f32 %v6754, 0.0
        %v6803 = vmax.f32 %v6759, 0.0
        %v6804 = vmax.f32 %v6762, 0.0
        %v6805 = vmax.f32 %v6767, 0.0
        %v6806 = vmax.f32 %v6770, 0.0
        %v6807 = vmax.f32 %v6775, 0.0
        %v6808 = vmax.f32 %v6778, 0.0
        %v6809 = vmax.f32 %v6783, 0.0
        %v6810 = vmax.f32 %v6786, 0.0
        %v6811 = vmax.f32 %v6791, 0.0
        %v6812 = vmax.f32 %v6794, 0.0
        %v6813 = vpack.c.bf16 %v6798, %v6797
        %v6814 = vpack.c.bf16 %v6800, %v6799
        %v6815 = vpack.c.bf16 %v6802, %v6801
        %v6816 = vpack.c.bf16 %v6804, %v6803
        %v6817 = vpack.c.bf16 %v6806, %v6805
        %v6818 = vpack.c.bf16 %v6808, %v6807
        %v6819 = vpack.c.bf16 %v6810, %v6809
        %v6820 = vpack.c.bf16 %v6812, %v6811
        %s6821 = scalar_lea.vmem %s15, 32
        %v6822 = vld [vmem:[%s6821] sm:$0xf]
        %v6823 = vld [vmem:[%s6821 + $0x4] sm:$0xf]
        %v6824 = vld [vmem:[%s6821 + $0x8] sm:$0xf]
        %v6825 = vld [vmem:[%s6821 + $0xc] sm:$0xf]
        %v6826 = vld [vmem:[%s6821 + $0x10] sm:$0xf]
        %v6827 = vld [vmem:[%s6821 + $0x14] sm:$0xf]
        %v6828 = vld [vmem:[%s6821 + $0x18] sm:$0xf]
        %v6829 = vld [vmem:[%s6821 + $0x1c] sm:$0xf]
        %s6830 = scalar_lea.vmem %s16, 1
        %v6831 = vld [vmem:[%s6830] sm:$0x1]
        %v6833 = vlaneseq
        %v6834 = vshrl.u32 %v6833, 7
        %v6835 = vsub.s32 0, %v6834
        %v6836 = vrot.slane %v6831, %v6835
        %v6846 = vunpack.c.l.b16 %v6822
        %v6847 = vunpack.c.l.b16 %v6823
        %v6848 = vunpack.c.l.b16 %v6824
        %v6849 = vunpack.c.l.b16 %v6825
        %v6850 = vunpack.c.l.b16 %v6826
        %v6851 = vunpack.c.l.b16 %v6827
        %v6852 = vunpack.c.l.b16 %v6828
        %v6853 = vunpack.c.l.b16 %v6829
        %v6854 = vpack.c.b16 %v6847, %v6846
        %v6855 = vpack.c.b16 %v6849, %v6848
        %v6856 = vpack.c.b16 %v6851, %v6850
        %v6857 = vpack.c.b16 %v6853, %v6852
        %v6863 = vsel %vm3631, %v6813, 0
        %v6866 = vsel %vm3631, %v6814, 0
        %v6869 = vsel %vm3631, %v6815, 0
        %v6872 = vsel %vm3631, %v6816, 0
        %v6875 = vsel %vm3631, %v6817, 0
        %v6878 = vsel %vm3631, %v6818, 0
        %v6881 = vsel %vm3631, %v6819, 0
        %v6884 = vsel %vm3631, %v6820, 0
        %6886 = vmatprep.subr.bf16.mxu0 0
        %6887 = vmatpush1.bf16.msra.mxu0 0
        %6888 = vmatprep.subr.bf16.mxu0 0
        %6889 = vmatpush1.bf16.msra.mxu0 0
        %6890 = vmatprep.subr.bf16.mxu0 0
        %6891 = vmatpush1.bf16.msra.mxu0 0
        %6892 = vmatprep.subr.bf16.mxu0 0
        %6893 = vmatpush1.bf16.msra.mxu0 0
        %6894 = vmatprep.subr.bf16.mxu0 0
        %6895 = vmatpush1.bf16.msra.mxu0 %v6857
        %6896 = vmatprep.subr.bf16.mxu0 0
        %6897 = vmatpush1.bf16.msra.mxu0 %v6856
        %6898 = vmatprep.subr.bf16.mxu0 0
        %6899 = vmatpush1.bf16.msra.mxu0 %v6855
        %6900 = vmatprep.subr.bf16.mxu0 0
        %6901 = vmatpush1.bf16.msra.mxu0 %v6854
        %6902 = vmatprep.subr.bf16.mxu0 0
        %6903 = vmatpush2.bf16.msra.mxu0 0
        %6904 = vmatprep.subr.bf16.mxu0 0
        %6905 = vmatpush2.bf16.msra.mxu0 0
        %6906 = vmatprep.subr.bf16.mxu0 0
        %6907 = vmatpush2.bf16.msra.mxu0 0
        %6908 = vmatprep.subr.bf16.mxu0 0
        %6909 = vmatpush2.bf16.msra.mxu0 0
        %6910 = vmatprep.subr.bf16.mxu0 0
        %6911 = vmatpush2.bf16.msra.mxu0 0
        %6912 = vmatprep.subr.bf16.mxu0 0
        %6913 = vmatpush2.bf16.msra.mxu0 0
        %6914 = vmatprep.subr.bf16.mxu0 0
        %6915 = vmatpush2.bf16.msra.mxu0 0
        %6916 = vmatprep.subr.bf16.mxu0 0
        %6917 = vmatpush2.bf16.msra.mxu0 0
        %6918 = vmatprep.mubr.bf16.mxu0 0
        %6919 = vmatmul.mubr.bf16.gmra.mxu0 %v6863
        %v6920 = vpop.f32.mrf.mxu0
        %v6921 = vadd.f32 %v6836, %v6920
        %v6922 = vpop.f32.mrf.mxu0
        %v6923 = vpop.f32.mrf.mxu0
        %v6924 = vadd.f32 %v6836, %v6923
        %v6925 = vpop.f32.mrf.mxu0
        %6926 = vmatprep.mubr.bf16.mxu0 0
        %6927 = vmatmul.mubr.bf16.gmra.mxu0 %v6866
        %v6928 = vpop.f32.mrf.mxu0
        %v6929 = vadd.f32 %v6836, %v6928
        %v6930 = vpop.f32.mrf.mxu0
        %v6931 = vpop.f32.mrf.mxu0
        %v6932 = vadd.f32 %v6836, %v6931
        %v6933 = vpop.f32.mrf.mxu0
        %6934 = vmatprep.mubr.bf16.mxu0 0
        %6935 = vmatmul.mubr.bf16.gmra.mxu0 %v6869
        %v6936 = vpop.f32.mrf.mxu0
        %v6937 = vadd.f32 %v6836, %v6936
        %v6938 = vpop.f32.mrf.mxu0
        %v6939 = vpop.f32.mrf.mxu0
        %v6940 = vadd.f32 %v6836, %v6939
        %v6941 = vpop.f32.mrf.mxu0
        %6942 = vmatprep.mubr.bf16.mxu0 0
        %6943 = vmatmul.mubr.bf16.gmra.mxu0 %v6872
        %v6944 = vpop.f32.mrf.mxu0
        %v6945 = vadd.f32 %v6836, %v6944
        %v6946 = vpop.f32.mrf.mxu0
        %v6947 = vpop.f32.mrf.mxu0
        %v6948 = vadd.f32 %v6836, %v6947
        %v6949 = vpop.f32.mrf.mxu0
        %6950 = vmatprep.mubr.bf16.mxu0 0
        %6951 = vmatmul.mubr.bf16.gmra.mxu0 %v6875
        %v6952 = vpop.f32.mrf.mxu0
        %v6953 = vadd.f32 %v6836, %v6952
        %v6954 = vpop.f32.mrf.mxu0
        %v6955 = vpop.f32.mrf.mxu0
        %v6956 = vadd.f32 %v6836, %v6955
        %v6957 = vpop.f32.mrf.mxu0
        %6958 = vmatprep.mubr.bf16.mxu0 0
        %6959 = vmatmul.mubr.bf16.gmra.mxu0 %v6878
        %v6960 = vpop.f32.mrf.mxu0
        %v6961 = vadd.f32 %v6836, %v6960
        %v6962 = vpop.f32.mrf.mxu0
        %v6963 = vpop.f32.mrf.mxu0
        %v6964 = vadd.f32 %v6836, %v6963
        %v6965 = vpop.f32.mrf.mxu0
        %6966 = vmatprep.mubr.bf16.mxu0 0
        %6967 = vmatmul.mubr.bf16.gmra.mxu0 %v6881
        %v6968 = vpop.f32.mrf.mxu0
        %v6969 = vadd.f32 %v6836, %v6968
        %v6970 = vpop.f32.mrf.mxu0
        %v6971 = vpop.f32.mrf.mxu0
        %v6972 = vadd.f32 %v6836, %v6971
        %v6973 = vpop.f32.mrf.mxu0
        %6974 = vmatprep.mubr.bf16.mxu0 0
        %6975 = vmatmul.mubr.bf16.gmra.mxu0 %v6884
        %v6976 = vpop.f32.mrf.mxu0
        %v6977 = vadd.f32 %v6836, %v6976
        %v6978 = vpop.f32.mrf.mxu0
        %v6979 = vpop.f32.mrf.mxu0
        %v6980 = vadd.f32 %v6836, %v6979
        %v6981 = vpop.f32.mrf.mxu0
        %6982 = vdwg.mxu0
        %v6983 = vadd.f32 %v6627, %v6921
        %v6984 = vadd.f32 %v6628, %v6924
        %v6985 = vadd.f32 %v6629, %v6929
        %v6986 = vadd.f32 %v6630, %v6932
        %v6987 = vadd.f32 %v6631, %v6937
        %v6988 = vadd.f32 %v6632, %v6940
        %v6989 = vadd.f32 %v6633, %v6945
        %v6990 = vadd.f32 %v6634, %v6948
        %v6991 = vadd.f32 %v6635, %v6953
        %v6992 = vadd.f32 %v6636, %v6956
        %v6993 = vadd.f32 %v6637, %v6961
        %v6994 = vadd.f32 %v6638, %v6964
        %v6995 = vadd.f32 %v6639, %v6969
        %v6996 = vadd.f32 %v6640, %v6972
        %v6997 = vadd.f32 %v6641, %v6977
        %v6998 = vadd.f32 %v6642, %v6980
        %s6999 = scalar_lea.vmem %s11, 1
        %v7000 = vld [vmem:[%s6999] sm:$0x1]
        %s7001 = scalar_lea.vmem %s12, 1
        %v7002 = vld [vmem:[%s7001] sm:$0x1]
        %v7003 = vsel %vm828, %v6983, 0.0
        %7004 = vadd.xlane.f32.xlu0 %v7003
        %v7005 = vpop.xlane.xlu0 %7004
        %v7006 = vsel %vm828, %v6984, 0.0
        %7007 = vadd.xlane.f32.xlu0 %v7006
        %v7008 = vpop.xlane.xlu0 %7007
        %v7009 = vsel %vm828, %v6985, 0.0
        %7010 = vadd.xlane.f32.xlu0 %v7009
        %v7011 = vpop.xlane.xlu0 %7010
        %v7012 = vsel %vm828, %v6986, 0.0
        %7013 = vadd.xlane.f32.xlu0 %v7012
        %v7014 = vpop.xlane.xlu0 %7013
        %v7015 = vsel %vm828, %v6987, 0.0
        %7016 = vadd.xlane.f32.xlu0 %v7015
        %v7017 = vpop.xlane.xlu0 %7016
        %v7018 = vsel %vm828, %v6988, 0.0
        %7019 = vadd.xlane.f32.xlu0 %v7018
        %v7020 = vpop.xlane.xlu0 %7019
        %v7021 = vsel %vm828, %v6989, 0.0
        %7022 = vadd.xlane.f32.xlu0 %v7021
        %v7023 = vpop.xlane.xlu0 %7022
        %v7024 = vsel %vm828, %v6990, 0.0
        %7025 = vadd.xlane.f32.xlu0 %v7024
        %v7026 = vpop.xlane.xlu0 %7025
        %v7027 = vsel %vm828, %v6991, 0.0
        %7028 = vadd.xlane.f32.xlu0 %v7027
        %v7029 = vpop.xlane.xlu0 %7028
        %v7030 = vsel %vm828, %v6992, 0.0
        %7031 = vadd.xlane.f32.xlu0 %v7030
        %v7032 = vpop.xlane.xlu0 %7031
        %v7033 = vsel %vm828, %v6993, 0.0
        %7034 = vadd.xlane.f32.xlu0 %v7033
        %v7035 = vpop.xlane.xlu0 %7034
        %v7036 = vsel %vm828, %v6994, 0.0
        %7037 = vadd.xlane.f32.xlu0 %v7036
        %v7038 = vpop.xlane.xlu0 %7037
        %v7039 = vsel %vm828, %v6995, 0.0
        %7040 = vadd.xlane.f32.xlu0 %v7039
        %v7041 = vpop.xlane.xlu0 %7040
        %v7042 = vsel %vm828, %v6996, 0.0
        %7043 = vadd.xlane.f32.xlu0 %v7042
        %v7044 = vpop.xlane.xlu0 %7043
        %v7045 = vsel %vm828, %v6997, 0.0
        %7046 = vadd.xlane.f32.xlu0 %v7045
        %v7047 = vpop.xlane.xlu0 %7046
        %v7048 = vsel %vm828, %v6998, 0.0
        %7049 = vadd.xlane.f32.xlu0 %v7048
        %v7050 = vpop.xlane.xlu0 %7049
        %v7051 = vmul.f32 %v7005, %v3211
        %v7052 = vmul.f32 %v7008, %v3211
        %v7053 = vmul.f32 %v7011, %v3211
        %v7054 = vmul.f32 %v7014, %v3211
        %v7055 = vmul.f32 %v7017, %v3211
        %v7056 = vmul.f32 %v7020, %v3211
        %v7057 = vmul.f32 %v7023, %v3211
        %v7058 = vmul.f32 %v7026, %v3211
        %v7059 = vmul.f32 %v7029, %v3211
        %v7060 = vmul.f32 %v7032, %v3211
        %v7061 = vmul.f32 %v7035, %v3211
        %v7062 = vmul.f32 %v7038, %v3211
        %v7063 = vmul.f32 %v7041, %v3211
        %v7064 = vmul.f32 %v7044, %v3211
        %v7065 = vmul.f32 %v7047, %v3211
        %v7066 = vmul.f32 %v7050, %v3211
        %v7067 = vsub.f32 %v6983, %v7051
        %v7068 = vsub.f32 %v6984, %v7052
        %v7069 = vsub.f32 %v6985, %v7053
        %v7070 = vsub.f32 %v6986, %v7054
        %v7071 = vsub.f32 %v6987, %v7055
        %v7072 = vsub.f32 %v6988, %v7056
        %v7073 = vsub.f32 %v6989, %v7057
        %v7074 = vsub.f32 %v6990, %v7058
        %v7075 = vsub.f32 %v6991, %v7059
        %v7076 = vsub.f32 %v6992, %v7060
        %v7077 = vsub.f32 %v6993, %v7061
        %v7078 = vsub.f32 %v6994, %v7062
        %v7079 = vsub.f32 %v6995, %v7063
        %v7080 = vsub.f32 %v6996, %v7064
        %v7081 = vsub.f32 %v6997, %v7065
        %v7082 = vsub.f32 %v6998, %v7066
        %v7083 = vmul.f32 %v7067, %v7067
        %v7084 = vmul.f32 %v7068, %v7068
        %v7085 = vmul.f32 %v7069, %v7069
        %v7086 = vmul.f32 %v7070, %v7070
        %v7087 = vmul.f32 %v7071, %v7071
        %v7088 = vmul.f32 %v7072, %v7072
        %v7089 = vmul.f32 %v7073, %v7073
        %v7090 = vmul.f32 %v7074, %v7074
        %v7091 = vmul.f32 %v7075, %v7075
        %v7092 = vmul.f32 %v7076, %v7076
        %v7093 = vmul.f32 %v7077, %v7077
        %v7094 = vmul.f32 %v7078, %v7078
        %v7095 = vmul.f32 %v7079, %v7079
        %v7096 = vmul.f32 %v7080, %v7080
        %v7097 = vmul.f32 %v7081, %v7081
        %v7098 = vmul.f32 %v7082, %v7082
        %v7099 = vsel %vm828, %v7083, 0.0
        %7100 = vadd.xlane.f32.xlu0 %v7099
        %v7101 = vpop.xlane.xlu0 %7100
        %v7102 = vsel %vm828, %v7084, 0.0
        %7103 = vadd.xlane.f32.xlu0 %v7102
        %v7104 = vpop.xlane.xlu0 %7103
        %v7105 = vsel %vm828, %v7085, 0.0
        %7106 = vadd.xlane.f32.xlu0 %v7105
        %v7107 = vpop.xlane.xlu0 %7106
        %v7108 = vsel %vm828, %v7086, 0.0
        %7109 = vadd.xlane.f32.xlu0 %v7108
        %v7110 = vpop.xlane.xlu0 %7109
        %v7111 = vsel %vm828, %v7087, 0.0
        %7112 = vadd.xlane.f32.xlu0 %v7111
        %v7113 = vpop.xlane.xlu0 %7112
        %v7114 = vsel %vm828, %v7088, 0.0
        %7115 = vadd.xlane.f32.xlu0 %v7114
        %v7116 = vpop.xlane.xlu0 %7115
        %v7117 = vsel %vm828, %v7089, 0.0
        %7118 = vadd.xlane.f32.xlu0 %v7117
        %v7119 = vpop.xlane.xlu0 %7118
        %v7120 = vsel %vm828, %v7090, 0.0
        %7121 = vadd.xlane.f32.xlu0 %v7120
        %v7122 = vpop.xlane.xlu0 %7121
        %v7123 = vsel %vm828, %v7091, 0.0
        %7124 = vadd.xlane.f32.xlu0 %v7123
        %v7125 = vpop.xlane.xlu0 %7124
        %v7126 = vsel %vm828, %v7092, 0.0
        %7127 = vadd.xlane.f32.xlu0 %v7126
        %v7128 = vpop.xlane.xlu0 %7127
        %v7129 = vsel %vm828, %v7093, 0.0
        %7130 = vadd.xlane.f32.xlu0 %v7129
        %v7131 = vpop.xlane.xlu0 %7130
        %v7132 = vsel %vm828, %v7094, 0.0
        %7133 = vadd.xlane.f32.xlu0 %v7132
        %v7134 = vpop.xlane.xlu0 %7133
        %v7135 = vsel %vm828, %v7095, 0.0
        %7136 = vadd.xlane.f32.xlu0 %v7135
        %v7137 = vpop.xlane.xlu0 %7136
        %v7138 = vsel %vm828, %v7096, 0.0
        %7139 = vadd.xlane.f32.xlu0 %v7138
        %v7140 = vpop.xlane.xlu0 %7139
        %v7141 = vsel %vm828, %v7097, 0.0
        %7142 = vadd.xlane.f32.xlu0 %v7141
        %v7143 = vpop.xlane.xlu0 %7142
        %v7144 = vsel %vm828, %v7098, 0.0
        %7145 = vadd.xlane.f32.xlu0 %v7144
        %v7146 = vpop.xlane.xlu0 %7145
        %v7147 = vmul.f32 %v7101, %v3211
        %v7148 = vmul.f32 %v7104, %v3211
        %v7149 = vmul.f32 %v7107, %v3211
        %v7150 = vmul.f32 %v7110, %v3211
        %v7151 = vmul.f32 %v7113, %v3211
        %v7152 = vmul.f32 %v7116, %v3211
        %v7153 = vmul.f32 %v7119, %v3211
        %v7154 = vmul.f32 %v7122, %v3211
        %v7155 = vmul.f32 %v7125, %v3211
        %v7156 = vmul.f32 %v7128, %v3211
        %v7157 = vmul.f32 %v7131, %v3211
        %v7158 = vmul.f32 %v7134, %v3211
        %v7159 = vmul.f32 %v7137, %v3211
        %v7160 = vmul.f32 %v7140, %v3211
        %v7161 = vmul.f32 %v7143, %v3211
        %v7162 = vmul.f32 %v7146, %v3211
        %v7163 = vadd.f32 %v7147, 1e-05
        %v7164 = vadd.f32 %v7148, 1e-05
        %v7165 = vadd.f32 %v7149, 1e-05
        %v7166 = vadd.f32 %v7150, 1e-05
        %v7167 = vadd.f32 %v7151, 1e-05
        %v7168 = vadd.f32 %v7152, 1e-05
        %v7169 = vadd.f32 %v7153, 1e-05
        %v7170 = vadd.f32 %v7154, 1e-05
        %v7171 = vadd.f32 %v7155, 1e-05
        %v7172 = vadd.f32 %v7156, 1e-05
        %v7173 = vadd.f32 %v7157, 1e-05
        %v7174 = vadd.f32 %v7158, 1e-05
        %v7175 = vadd.f32 %v7159, 1e-05
        %v7176 = vadd.f32 %v7160, 1e-05
        %v7177 = vadd.f32 %v7161, 1e-05
        %v7178 = vadd.f32 %v7162, 1e-05
        %v7179 = vrsqrt.pop %v7163
        %v7180 = vrsqrt.pop %v7164
        %v7181 = vrsqrt.pop %v7165
        %v7182 = vrsqrt.pop %v7166
        %v7183 = vrsqrt.pop %v7167
        %v7184 = vrsqrt.pop %v7168
        %v7185 = vrsqrt.pop %v7169
        %v7186 = vrsqrt.pop %v7170
        %v7187 = vrsqrt.pop %v7171
        %v7188 = vrsqrt.pop %v7172
        %v7189 = vrsqrt.pop %v7173
        %v7190 = vrsqrt.pop %v7174
        %v7191 = vrsqrt.pop %v7175
        %v7192 = vrsqrt.pop %v7176
        %v7193 = vrsqrt.pop %v7177
        %v7194 = vrsqrt.pop %v7178
        %v7195 = vmul.f32 %v7067, %v7179
        %v7196 = vmul.f32 %v7068, %v7180
        %v7197 = vmul.f32 %v7069, %v7181
        %v7198 = vmul.f32 %v7070, %v7182
        %v7199 = vmul.f32 %v7071, %v7183
        %v7200 = vmul.f32 %v7072, %v7184
        %v7201 = vmul.f32 %v7073, %v7185
        %v7202 = vmul.f32 %v7074, %v7186
        %v7203 = vmul.f32 %v7075, %v7187
        %v7204 = vmul.f32 %v7076, %v7188
        %v7205 = vmul.f32 %v7077, %v7189
        %v7206 = vmul.f32 %v7078, %v7190
        %v7207 = vmul.f32 %v7079, %v7191
        %v7208 = vmul.f32 %v7080, %v7192
        %v7209 = vmul.f32 %v7081, %v7193
        %v7210 = vmul.f32 %v7082, %v7194
        %v7212 = vlaneseq
        %v7213 = vshrl.u32 %v7212, 7
        %v7214 = vsub.s32 0, %v7213
        %v7215 = vrot.slane %v7000, %v7214
        %v7217 = vmul.f32 %v7195, %v7215
        %v7218 = vmul.f32 %v7196, %v7215
        %v7219 = vmul.f32 %v7197, %v7215
        %v7220 = vmul.f32 %v7198, %v7215
        %v7221 = vmul.f32 %v7199, %v7215
        %v7222 = vmul.f32 %v7200, %v7215
        %v7223 = vmul.f32 %v7201, %v7215
        %v7224 = vmul.f32 %v7202, %v7215
        %v7225 = vmul.f32 %v7203, %v7215
        %v7226 = vmul.f32 %v7204, %v7215
        %v7227 = vmul.f32 %v7205, %v7215
        %v7228 = vmul.f32 %v7206, %v7215
        %v7229 = vmul.f32 %v7207, %v7215
        %v7230 = vmul.f32 %v7208, %v7215
        %v7231 = vmul.f32 %v7209, %v7215
        %v7232 = vmul.f32 %v7210, %v7215
        %v7234 = vlaneseq
        %v7235 = vshrl.u32 %v7234, 7
        %v7236 = vsub.s32 0, %v7235
        %v7237 = vrot.slane %v7002, %v7236
        %v7239 = vadd.f32 %v7217, %v7237
        %v7240 = vadd.f32 %v7218, %v7237
        %v7241 = vadd.f32 %v7219, %v7237
        %v7242 = vadd.f32 %v7220, %v7237
        %v7243 = vadd.f32 %v7221, %v7237
        %v7244 = vadd.f32 %v7222, %v7237
        %v7245 = vadd.f32 %v7223, %v7237
        %v7246 = vadd.f32 %v7224, %v7237
        %v7247 = vadd.f32 %v7225, %v7237
        %v7248 = vadd.f32 %v7226, %v7237
        %v7249 = vadd.f32 %v7227, %v7237
        %v7250 = vadd.f32 %v7228, %v7237
        %v7251 = vadd.f32 %v7229, %v7237
        %v7252 = vadd.f32 %v7230, %v7237
        %v7253 = vadd.f32 %v7231, %v7237
        %v7254 = vadd.f32 %v7232, %v7237
        %7255 = vst.msk [vmem:[%s610] sm:$0xff] %vm828, %v7239
        %7256 = vst.msk [vmem:[%s610 + $0x8] sm:$0xff] %vm828, %v7240
        %7257 = vst.msk [vmem:[%s610 + $0x10] sm:$0xff] %vm828, %v7241
        %7258 = vst.msk [vmem:[%s610 + $0x18] sm:$0xff] %vm828, %v7242
        %7259 = vst.msk [vmem:[%s610 + $0x20] sm:$0xff] %vm828, %v7243
        %7260 = vst.msk [vmem:[%s610 + $0x28] sm:$0xff] %vm828, %v7244
        %7261 = vst.msk [vmem:[%s610 + $0x30] sm:$0xff] %vm828, %v7245
        %7262 = vst.msk [vmem:[%s610 + $0x38] sm:$0xff] %vm828, %v7246
        %7263 = vst.msk [vmem:[%s610 + $0x40] sm:$0xff] %vm828, %v7247
        %7264 = vst.msk [vmem:[%s610 + $0x48] sm:$0xff] %vm828, %v7248
        %7265 = vst.msk [vmem:[%s610 + $0x50] sm:$0xff] %vm828, %v7249
        %7266 = vst.msk [vmem:[%s610 + $0x58] sm:$0xff] %vm828, %v7250
        %7267 = vst.msk [vmem:[%s610 + $0x60] sm:$0xff] %vm828, %v7251
        %7268 = vst.msk [vmem:[%s610 + $0x68] sm:$0xff] %vm828, %v7252
        %7269 = vst.msk [vmem:[%s610 + $0x70] sm:$0xff] %vm828, %v7253
        %7270 = vst.msk [vmem:[%s610 + $0x78] sm:$0xff] %vm828, %v7254
        %v7271 = vld [vmem:[%s3] sm:$0xf]
        %v7272 = vld [vmem:[%s3 + $0x4] sm:$0xf]
        %v7273 = vpack.c.bf16 %v7240, %v7239
        %v7274 = vpack.c.bf16 %v7242, %v7241
        %v7275 = vpack.c.bf16 %v7244, %v7243
        %v7276 = vpack.c.bf16 %v7246, %v7245
        %v7277 = vpack.c.bf16 %v7248, %v7247
        %v7278 = vpack.c.bf16 %v7250, %v7249
        %v7279 = vpack.c.bf16 %v7252, %v7251
        %v7280 = vpack.c.bf16 %v7254, %v7253
        %v7283 = vunpack.c.l.b16 %v7271
        %v7284 = vunpack.c.l.b16 %v7272
        %v7285 = vpack.c.b16 %v7284, %v7283
        %7287 = vmatprep.subr.bf16.mxu0 0
        %7288 = vmatpush1.bf16.msra.mxu0 %v7280
        %7289 = vmatprep.subr.bf16.mxu0 0
        %7290 = vmatpush1.bf16.msra.mxu0 %v7279
        %7291 = vmatprep.subr.bf16.mxu0 0
        %7292 = vmatpush1.bf16.msra.mxu0 %v7278
        %7293 = vmatprep.subr.bf16.mxu0 0
        %7294 = vmatpush1.bf16.msra.mxu0 %v7277
        %7295 = vmatprep.subr.bf16.mxu0 0
        %7296 = vmatpush1.bf16.msra.mxu0 %v7276
        %7297 = vmatprep.subr.bf16.mxu0 0
        %7298 = vmatpush1.bf16.msra.mxu0 %v7275
        %7299 = vmatprep.subr.bf16.mxu0 0
        %7300 = vmatpush1.bf16.msra.mxu0 %v7274
        %7301 = vmatprep.subr.bf16.mxu0 0
        %7302 = vmatpush1.bf16.msra.mxu0 %v7273
        %7303 = vmatprep.subr.bf16.mxu0 0
        %7304 = vmatpush2.bf16.msra.mxu0 0
        %7305 = vmatprep.subr.bf16.mxu0 0
        %7306 = vmatpush2.bf16.msra.mxu0 0
        %7307 = vmatprep.subr.bf16.mxu0 0
        %7308 = vmatpush2.bf16.msra.mxu0 0
        %7309 = vmatprep.subr.bf16.mxu0 0
        %7310 = vmatpush2.bf16.msra.mxu0 0
        %7311 = vmatprep.subr.bf16.mxu0 0
        %7312 = vmatpush2.bf16.msra.mxu0 0
        %7313 = vmatprep.subr.bf16.mxu0 0
        %7314 = vmatpush2.bf16.msra.mxu0 0
        %7315 = vmatprep.subr.bf16.mxu0 0
        %7316 = vmatpush2.bf16.msra.mxu0 0
        %7317 = vmatprep.subr.bf16.mxu0 0
        %7318 = vmatpush2.bf16.msra.mxu0 0
        %7319 = vmatprep.mubr.bf16.mxu0 0
        %7320 = vmatmul.mubr.bf16.gmra.mxu0 %v7285
        %v7321 = vpop.f32.mrf.mxu0
        %v7322 = vadd.f32 0.0, %v7321
        %v7323 = vpop.f32.mrf.mxu0
        %v7324 = vpop.f32.mrf.mxu0
        %v7325 = vadd.f32 0.0, %v7324
        %v7326 = vpop.f32.mrf.mxu0
        %7327 = vdwg.mxu0
        %7328 = vst.msk [vmem:[%s593] sm:$0xff] %vm828, %v7322
        %7329 = vst.msk [vmem:[%s593 + $0x8] sm:$0xff] %vm828, %v7325
        %s7330 = smul.u32 16, %s33
        %p7331 = scmp.lt.s32.totalorder %s7330, 31
        %s7332 = scalar_select %p7331, %s7330, 31
        %s7333 = smul.addr %s7332, 8
        %s7334 = scalar_lea.vmem %s17, %s7333
        %s7335 = sand.u32 %s434, 1
        %s7336 = scalar_lea.sflag [#allocation3], %s7335
        %s7337 = sand.u32 %s434, 1
        %s7338 = smul.addr %s7337, 16
        %s7339 = scalar_lea.vmem [#allocation2], %s7338
        // Predicated region
        $region89: #{tpu_custom_call.1} parent=87 // pred_check
          %p7340 = pneg %p418
        $region90: #{tpu_custom_call.1} parent=87 // pred_check_branch
          %7342 = sbr.rel (%p7340) target = $region92
        $region91: #{tpu_custom_call.1} parent=87 // pred_region
          %s7343 = smul.u32 16, %s33
        $region92: #{tpu_custom_call.1} parent=87 // pred_fallthru
          _
        // Predicated region
        $region93: #{tpu_custom_call.1} parent=87 // pred_check
          %p7344 = pneg %p444
        $region94: #{tpu_custom_call.1} parent=87 // pred_check_branch
          %7346 = sbr.rel (%p7344) target = $region96
        $region95: #{tpu_custom_call.1} parent=87 // pred_region
          %s7347 = smul.u32 2, %s33
          %s7349 = ssub.s32 256, 256
          %7350 = vsyncadd %s7336, %s7349
          %s7351 = smul.addr %s7347, 128
          %s7352 = scalar_lea.hbm %s18, %s7351
          %s7353 = sshll.u32 %s7339, 4
          %s7354 = int_to_ptr.vmem [resolvable:$true] %s7353
          %7359 = dma.vmem_to_hbm [thread:$0]  %s7354, 256, %s7352, %s7336, 128, 128, 8
        $region96: #{tpu_custom_call.1} parent=87 // pred_fallthru
          _
      $region88: #{tpu_custom_call.1} parent=5 // pred_fallthru
        _
      %p7360 = scmp.le.s32.totalorder 2, %s28
      // Predicated region
      $region97: #{tpu_custom_call.1} parent=5 // pred_check
        %p7361 = pneg %p7360
      $region98: #{tpu_custom_call.1} parent=5 // pred_check_branch
        %7363 = sbr.rel (%p7361) target = $region100
      $region99: #{tpu_custom_call.1} parent=5 // pred_region
        %s7364 = ssub.s32 %s28, 2
        // Predicated region
        $region101: #{tpu_custom_call.1} parent=99 // pred_check
          %p7365 = pneg %p424
        $region102: #{tpu_custom_call.1} parent=99 // pred_check_branch
          %7367 = sbr.rel (%p7365) target = $region104
        $region103: #{tpu_custom_call.1} parent=99 // pred_region
          %s7368 = smul.u32 16, %s34
          %p7369 = scmp.lt.s32.totalorder %s7368, 31
          %s7370 = scalar_select %p7369, %s7368, 31
          %s7371 = smul.addr %s7370, 8
          %s7372 = scalar_lea.vmem %s17, %s7371
        $region104: #{tpu_custom_call.1} parent=99 // pred_fallthru
          _
        // Predicated region
        $region105: #{tpu_custom_call.1} parent=99 // pred_check
          %p7373 = pneg %p450
        $region106: #{tpu_custom_call.1} parent=99 // pred_check_branch
          %7375 = sbr.rel (%p7373) target = $region108
        $region107: #{tpu_custom_call.1} parent=99 // pred_region
          %s7376 = sand.u32 %s435, 1
          %s7377 = scalar_lea.sflag [#allocation3], %s7376
          %s7378 = sand.u32 %s435, 1
          %s7379 = smul.addr %s7378, 16
          %s7380 = scalar_lea.vmem [#allocation2], %s7379
          %7381 = dma.done %s7377, 256
        $region108: #{tpu_custom_call.1} parent=99 // pred_fallthru
          _
      $region100: #{tpu_custom_call.1} parent=5 // pred_fallthru
        _
    $region6: #{tpu_custom_call.1} parent=1 // loop_footer
      %s32 = sadd.s32 1, %s28
    $region7: #{tpu_custom_call.1} parent=1 // loop_footer_branch
      %27 = sbr.rel target = $region3
    $region8: #{tpu_custom_call.1} parent=1 // loop_exit
      _
    %7382 = vsyncpa [#allocation3], 1
    %s7383 = scalar_lea.sflag [#allocation3], 1
    %7384 = vsyncpa %s7383, 1

</llo_original>
